<compile_context>
chip_gen: v7x
topology: tpu7x:2x2x1
jax: 0.10.0
libtpu: 0.0.40
codegen_flags: <defaults>
</compile_context>

<pallas_src>
import functools

import jax
import jax.numpy as jnp
from jax import lax
from jax.experimental import pallas as pl
from jax.experimental.pallas import tpu as pltpu

GP = 128      # gate pitch: each LSTM gate padded to its own 128-lane block
CNN_W = 128   # lane width of the packed CNN parameter slab


def _sigmoid(x):
    # Exact sigmoid via tanh: stays on the (otherwise idle) EUP slot and avoids
    # the multi-instruction VALU Newton divide of 1/(1+exp(-x)).
    return 0.5 * (jnp.tanh(0.5 * x) + 1.0)


def _colstm_kernel(ids_ref, cnn_ref, lstm_ref, out_ref, xw_ref, *,
                   B, S, V, E, NF, kernel_sizes, H, T, off):
    """Fused KimCNN + BiLSTM + Linear forward.

    ids_ref : (B*S, 1) int32 token ids (row = b*S + s)
    cnn_ref : (cnn_rows, CNN_W) f32 packed embedding table + conv weights/biases
    lstm_ref: (lstm_rows, 4*GP) f32 packed gate-padded LSTM + fc weights + h0/c0
    out_ref : (B, 3) f32
    xw_ref  : (T, B, 4*GP) f32 VMEM scratch for the hoisted input projections
    """
    f32 = jnp.float32

    # ---------------- KimCNN -------------------------------------------------
    # Embedding lookup as a one-hot matmul (gather-free, MXU-friendly).
    ids = ids_ref[...]                                             # (B*S, 1)
    onehot = (ids == lax.broadcasted_iota(jnp.int32, (B * S, V), 1)).astype(f32)
    emb_tbl = cnn_ref[off["emb"]:off["emb"] + V, 0:E]              # (V, E)
    emb = jnp.dot(onehot, emb_tbl, preferred_element_type=f32)     # (B*S, E)

    feat_rows = []
    for b in range(B):                                             # B=2, static
        emb_b = emb[b * S:(b + 1) * S, :]                          # (S, E)
        pooled = []
        for ki, K in enumerate(kernel_sizes):
            L = S - K + 1
            w0 = off["conv_w"][ki]
            acc = jnp.zeros((L, NF), f32)
            for k in range(K):                 # Conv2d(K, E) as K shifted matmuls
                wkt = cnn_ref[w0 + k * E:w0 + (k + 1) * E, 0:NF]   # (E, NF)
                acc = acc + jnp.dot(emb_b[k:k + L, :], wkt,
                                    preferred_element_type=f32)
            b0 = off["conv_b"][ki]
            acc = acc + cnn_ref[b0:b0 + 1, 0:NF]                   # + bias
            acc = jnp.maximum(acc, 0.0)                            # ReLU
            pooled.append(jnp.max(acc, axis=0, keepdims=True))     # time max-pool
        feat_rows.append(jnp.concatenate(pooled, axis=1))          # (1, T)
    feat = jnp.concatenate(feat_rows, axis=0)                      # (B, T)
    # TODO(synk): nn.Dropout on the CNN features is modeled in eval mode
    # (identity); single-layer nn.LSTM dropout is a PyTorch no-op anyway.

    # ---------------- BiLSTM -------------------------------------------------
    wih_f = lstm_ref[off["wih_f"]:off["wih_f"] + 1, :]             # (1, 4*GP)
    b_f = lstm_ref[off["b_f"]:off["b_f"] + 1, :]
    wih_b = lstm_ref[off["wih_b"]:off["wih_b"] + 1, :]
    b_b = lstm_ref[off["b_b"]:off["b_b"] + 1, :]
    whh_f = lstm_ref[off["whh_f"]:off["whh_f"] + H, :]             # (H, 4*GP)
    whh_b = lstm_ref[off["whh_b"]:off["whh_b"] + H, :]
    h0_f = lstm_ref[off["h0"]:off["h0"] + B, 0:H]                  # (B, H)
    h0_b = lstm_ref[off["h0"] + B:off["h0"] + 2 * B, 0:H]
    c0_f = lstm_ref[off["c0"]:off["c0"] + B, 0:H]
    c0_b = lstm_ref[off["c0"] + B:off["c0"] + 2 * B, 0:H]

    def cell(gates, c):
        # PyTorch gate order (i, f, g, o); each slice starts on a 128-lane
        # (vreg) boundary thanks to gate padding -> no lane rotations.
        i_g = _sigmoid(gates[:, 0 * GP:0 * GP + H])
        f_g = _sigmoid(gates[:, 1 * GP:1 * GP + H])
        g_g = jnp.tanh(gates[:, 2 * GP:2 * GP + H])
        o_g = _sigmoid(gates[:, 3 * GP:3 * GP + H])
        c_new = f_g * c + i_g * g_g
        return o_g * jnp.tanh(c_new), c_new

    # Reverse direction: output[-1] of the reverse LSTM is a single step on
    # x[T-1] starting from (h0[1], c0[1]).  It is independent of the forward
    # recurrence, so it is issued before the serial loop and hides under it.
    gates_b = (feat[:, T - 1:T] * wih_b + b_b
               + jnp.dot(h0_b, whh_b, preferred_element_type=f32))
    h_bwd, _ = cell(gates_b, c0_b)

    # Hoisted input projections: x_t * W_ih + (b_ih + b_hh) for all T steps,
    # computed off the recurrence's critical chain and parked in VMEM scratch.
    for t in range(T):
        xw_ref[t] = feat[:, t:t + 1] * wih_f + b_f                 # (B, 4*GP)

    # Forward recurrence, fully unrolled (T static): each step is just
    # matmul(h, W_hh) + precomputed xw -> nonlinearities.
    h, c = h0_f, c0_f
    for t in range(T):
        gates = xw_ref[t] + jnp.dot(h, whh_f, preferred_element_type=f32)
        h, c = cell(gates, c)

    # ---------------- fc: Linear(2H, 3) --------------------------------------
    fcw = lstm_ref[off["fcw"]:off["fcw"] + 2 * H, 0:3]             # (2H, 3)
    fcb = lstm_ref[off["fcb"]:off["fcb"] + 1, 0:3]                 # (1, 3)
    feat_cat = jnp.concatenate([h, h_bwd], axis=-1)                # (B, 2H)
    out_ref[...] = jnp.dot(feat_cat, fcw, preferred_element_type=f32) + fcb


# ------------------------- wrapper-side packing -------------------------------

def _layout(B, V, E, NF, kernel_sizes, H):
    """Static row offsets inside the two packed parameter slabs."""
    off = {}
    r = 0
    off["wih_f"] = r; r += 1
    off["b_f"] = r; r += 1
    off["wih_b"] = r; r += 1
    off["b_b"] = r; r += 1
    off["whh_f"] = r; r += H
    off["whh_b"] = r; r += H
    off["h0"] = r; r += 2 * B
    off["c0"] = r; r += 2 * B
    off["fcw"] = r; r += 2 * H
    off["fcb"] = r; r += 1
    lstm_rows = r

    r = 0
    off["emb"] = r; r += V
    off["conv_w"], off["conv_b"] = [], []
    for K in kernel_sizes:
        off["conv_w"].append(r); r += K * E
        off["conv_b"].append(r); r += 1
    cnn_rows = r
    return off, lstm_rows, cnn_rows


def _pad_gates(w, H):
    """(..., 4H) -> (..., 4*GP): gate g occupies columns [g*GP, g*GP + H)."""
    parts = []
    for g_idx in range(4):
        blk = w[..., g_idx * H:(g_idx + 1) * H]
        parts.append(blk)
        parts.append(jnp.zeros(blk.shape[:-1] + (GP - H,), w.dtype))
    return jnp.concatenate(parts, axis=-1)


def init_params(key, V, E, NF, kernel_sizes, H):
    """Parameters in their natural (PyTorch) shapes, deterministic."""
    keys = iter(jax.random.split(key, 64))

    def u(shape, bound):
        return jax.random.uniform(next(keys), shape, jnp.float32, -bound, bound)

    emb_tbl = jax.random.normal(next(keys), (V, E), jnp.float32)
    conv_ws, conv_bs = [], []
    for K in kernel_sizes:
        bound = 1.0 / float(K * E) ** 0.5
        conv_ws.append(u((NF, 1, K, E), bound))
        conv_bs.append(u((NF,), bound))
    kl = 1.0 / float(H) ** 0.5
    wih_f = u((4 * H, 1), kl); whh_f = u((4 * H, H), kl)
    bih_f = u((4 * H,), kl);   bhh_f = u((4 * H,), kl)
    wih_b = u((4 * H, 1), kl); whh_b = u((4 * H, H), kl)
    bih_b = u((4 * H,), kl);   bhh_b = u((4 * H,), kl)
    kf = 1.0 / float(2 * H) ** 0.5
    fcw = u((3, 2 * H), kf);   fcb = u((3,), kf)
    return dict(emb=emb_tbl, conv_ws=conv_ws, conv_bs=conv_bs,
                wih_f=wih_f, whh_f=whh_f, bih_f=bih_f, bhh_f=bhh_f,
                wih_b=wih_b, whh_b=whh_b, bih_b=bih_b, bhh_b=bhh_b,
                fcw=fcw, fcb=fcb)


def pack_params(params, h0, c0, *, B, V, E, NF, kernel_sizes, H):
    assert H <= GP and max(E, NF) <= CNN_W
    off, lstm_rows, cnn_rows = _layout(B, V, E, NF, kernel_sizes, H)

    def put(slab, row, arr):
        return slab.at[row:row + arr.shape[0], 0:arr.shape[1]].set(arr)

    lstm = jnp.zeros((lstm_rows, 4 * GP), jnp.float32)
    lstm = put(lstm, off["wih_f"], _pad_gates(params["wih_f"].T, H))
    lstm = put(lstm, off["b_f"],
               _pad_gates((params["bih_f"] + params["bhh_f"])[None, :], H))
    lstm = put(lstm, off["wih_b"], _pad_gates(params["wih_b"].T, H))
    lstm = put(lstm, off["b_b"],
               _pad_gates((params["bih_b"] + params["bhh_b"])[None, :], H))
    lstm = put(lstm, off["whh_f"], _pad_gates(params["whh_f"].T, H))
    lstm = put(lstm, off["whh_b"], _pad_gates(params["whh_b"].T, H))
    lstm = put(lstm, off["h0"], h0.reshape(2 * B, H))
    lstm = put(lstm, off["c0"], c0.reshape(2 * B, H))
    lstm = put(lstm, off["fcw"], params["fcw"].T)
    lstm = put(lstm, off["fcb"], params["fcb"][None, :])

    cnn = jnp.zeros((cnn_rows, CNN_W), jnp.float32)
    cnn = put(cnn, off["emb"], params["emb"])
    for ki, K in enumerate(kernel_sizes):
        w = params["conv_ws"][ki]                               # (NF, 1, K, E)
        # row k*E + e, col f  ==  weight[f, 0, k, e]
        wkt = jnp.transpose(w[:, 0, :, :], (1, 2, 0)).reshape(K * E, NF)
        cnn = put(cnn, off["conv_w"][ki], wkt)
        cnn = put(cnn, off["conv_b"][ki], params["conv_bs"][ki][None, :])
    return lstm, cnn, off


def make_colstm_forward(params, h0, c0, *, B, S, V, E, NF, kernel_sizes, H):
    T = len(kernel_sizes) * NF        # BiLSTM sequence length = #CNN features
    lstm_pack, cnn_pack, off = pack_params(params, h0, c0, B=B, V=V, E=E,
                                           NF=NF, kernel_sizes=kernel_sizes, H=H)
    kernel = functools.partial(_colstm_kernel, B=B, S=S, V=V, E=E, NF=NF,
                               kernel_sizes=tuple(kernel_sizes), H=H, T=T, off=off)
    vmem = pl.BlockSpec(memory_space=pltpu.MemorySpace.VMEM)
    call = pl.pallas_call(
        kernel,
        out_shape=jax.ShapeDtypeStruct((B, 3), jnp.float32),
        in_specs=[vmem, vmem, vmem],
        out_specs=vmem,
        scratch_shapes=[pltpu.VMEM((T, B, 4 * GP), jnp.float32)],
        # No grid: shapes are tiny and the recurrence is serial.  At realistic
        # batch sizes a ("parallel",) batch grid axis would shard across v7x's
        # two TensorCores.
    )

    @jax.jit
    def forward(token_ids):            # token_ids == x[0] in CoLSTM.forward
        ids2 = token_ids.reshape(B * S, 1).astype(jnp.int32)
        return call(ids2, cnn_pack, lstm_pack)

    return forward


if __name__ == "__main__":
    # Small config consistent with CoLSTM(input_size=V, n_filters, kernel_size,
    # embedding_dim, hidden_size): vocab 32, 8 filters, kernel sizes (3, 4),
    # embedding dim 8, hidden 32, batch 2, sequence length 16.
    B, S = 2, 16
    V, E, NF, kernel_sizes, H = 32, 8, 8, (3, 4), 32

    key = jax.random.PRNGKey(0)
    k_ids, k_h, k_c, k_p = jax.random.split(key, 4)
    token_ids = jax.random.randint(k_ids, (B, S), 0, V, dtype=jnp.int32)
    x = (token_ids,)                   # CoLSTM.forward input; KimCNN uses x[0]

    # The PyTorch BiLSTM draws torch.randn h0/c0 on every call; they are made
    # deterministic inputs here.
    h0 = jax.random.normal(k_h, (2, B, H), jnp.float32)
    c0 = jax.random.normal(k_c, (2, B, H), jnp.float32)

    params = init_params(k_p, V, E, NF, kernel_sizes, H)
    forward = make_colstm_forward(params, h0, c0, B=B, S=S, V=V, E=E, NF=NF,
                                  kernel_sizes=kernel_sizes, H=H)

    out = forward(x[0])
    jax.block_until_ready(out)
    assert out.shape == (B, 3) and out.dtype == jnp.float32
    print("KERNEL_OK")
</pallas_src>

<mosaic_0001>
module attributes {stable_mosaic.version = 11 : i64} {
  func.func @_colstm_kernel(%arg0: memref<32x1xi32, #tpu.memory_space<vmem>>, %arg1: memref<90x128xf32, #tpu.memory_space<vmem>>, %arg2: memref<141x512xf32, #tpu.memory_space<vmem>>, %arg3: memref<2x3xf32, #tpu.memory_space<vmem>>, %arg4: memref<16x2x512xf32, #tpu.memory_space<vmem>>) attributes {dimension_semantics = [], scalar_prefetch = 0 : i64, scratch_operands = 1 : i64, tpu.core_type = #tpu.core_type<tc>} {
    %c0 = arith.constant 0 : index
    %c0_0 = arith.constant 0 : index
    %0 = vector.load %arg0[%c0, %c0_0] : memref<32x1xi32, #tpu.memory_space<vmem>>, vector<32x1xi32>
    %1 = tpu.iota {dimensions = array<i32: 1>} : vector<32x32xi32>
    %2 = vector.broadcast %0 : vector<32x1xi32> to vector<32x32xi32>
    %3 = arith.cmpi eq, %2, %1 : vector<32x32xi32>
    %4 = arith.extui %3 : vector<32x32xi1> to vector<32x32xi32>
    %5 = arith.sitofp %4 : vector<32x32xi32> to vector<32x32xf32>
    %c0_1 = arith.constant 0 : index
    %c0_2 = arith.constant 0 : index
    %6 = vector.load %arg1[%c0_1, %c0_2] : memref<90x128xf32, #tpu.memory_space<vmem>>, vector<32x8xf32>
    %cst = arith.constant dense<0.000000e+00> : vector<32x8xf32>
    %7 = tpu.matmul %5, %6, %cst {dimension_numbers = #tpu.dot_dimension_numbers<[1], [0], [0], [1], [0, 0, 1, 1], [], []>} : vector<32x32xf32>, vector<32x8xf32>, vector<32x8xf32> -> vector<32x8xf32>
    %8 = vector.extract_strided_slice %7 {offsets = [0, 0], sizes = [16, 8], strides = [1, 1]} : vector<32x8xf32> to vector<16x8xf32>
    %cst_3 = arith.constant 0.000000e+00 : f32
    %9 = vector.broadcast %cst_3 : f32 to vector<14x8xf32>
    %c32 = arith.constant 32 : index
    %c0_4 = arith.constant 0 : index
    %10 = vector.load %arg1[%c32, %c0_4] : memref<90x128xf32, #tpu.memory_space<vmem>>, vector<8x8xf32>
    %11 = vector.extract_strided_slice %8 {offsets = [0, 0], sizes = [14, 8], strides = [1, 1]} : vector<16x8xf32> to vector<14x8xf32>
    %cst_5 = arith.constant dense<0.000000e+00> : vector<14x8xf32>
    %12 = tpu.matmul %11, %10, %cst_5 {dimension_numbers = #tpu.dot_dimension_numbers<[1], [0], [0], [1], [0, 0, 1, 1], [], []>} : vector<14x8xf32>, vector<8x8xf32>, vector<14x8xf32> -> vector<14x8xf32>
    %13 = arith.addf %9, %12 : vector<14x8xf32>
    %c40 = arith.constant 40 : index
    %c0_6 = arith.constant 0 : index
    %14 = vector.load %arg1[%c40, %c0_6] : memref<90x128xf32, #tpu.memory_space<vmem>>, vector<8x8xf32>
    %15 = vector.extract_strided_slice %8 {offsets = [1, 0], sizes = [14, 8], strides = [1, 1]} : vector<16x8xf32> to vector<14x8xf32>
    %cst_7 = arith.constant dense<0.000000e+00> : vector<14x8xf32>
    %16 = tpu.matmul %15, %14, %cst_7 {dimension_numbers = #tpu.dot_dimension_numbers<[1], [0], [0], [1], [0, 0, 1, 1], [], []>} : vector<14x8xf32>, vector<8x8xf32>, vector<14x8xf32> -> vector<14x8xf32>
    %17 = arith.addf %13, %16 : vector<14x8xf32>
    %c48 = arith.constant 48 : index
    %c0_8 = arith.constant 0 : index
    %18 = vector.load %arg1[%c48, %c0_8] : memref<90x128xf32, #tpu.memory_space<vmem>>, vector<8x8xf32>
    %19 = vector.extract_strided_slice %8 {offsets = [2, 0], sizes = [14, 8], strides = [1, 1]} : vector<16x8xf32> to vector<14x8xf32>
    %cst_9 = arith.constant dense<0.000000e+00> : vector<14x8xf32>
    %20 = tpu.matmul %19, %18, %cst_9 {dimension_numbers = #tpu.dot_dimension_numbers<[1], [0], [0], [1], [0, 0, 1, 1], [], []>} : vector<14x8xf32>, vector<8x8xf32>, vector<14x8xf32> -> vector<14x8xf32>
    %21 = arith.addf %17, %20 : vector<14x8xf32>
    %c56 = arith.constant 56 : index
    %c0_10 = arith.constant 0 : index
    %22 = vector.load %arg1[%c56, %c0_10] : memref<90x128xf32, #tpu.memory_space<vmem>>, vector<1x8xf32>
    %23 = vector.broadcast %22 : vector<1x8xf32> to vector<14x8xf32>
    %24 = arith.addf %21, %23 : vector<14x8xf32>
    %cst_11 = arith.constant 0.000000e+00 : f32
    %25 = vector.broadcast %cst_11 : f32 to vector<14x8xf32>
    %26 = arith.maximumf %24, %25 : vector<14x8xf32>
    %cst_12 = arith.constant dense<0xFF800000> : vector<8xf32>
    %27 = vector.multi_reduction <maximumf>, %26, %cst_12 [0] : vector<14x8xf32> to vector<8xf32>
    %28 = vector.shape_cast %27 : vector<8xf32> to vector<1x8xf32>
    %cst_13 = arith.constant 0.000000e+00 : f32
    %29 = vector.broadcast %cst_13 : f32 to vector<13x8xf32>
    %c57 = arith.constant 57 : index
    %c0_14 = arith.constant 0 : index
    %30 = vector.load %arg1[%c57, %c0_14] : memref<90x128xf32, #tpu.memory_space<vmem>>, vector<8x8xf32>
    %31 = vector.extract_strided_slice %8 {offsets = [0, 0], sizes = [13, 8], strides = [1, 1]} : vector<16x8xf32> to vector<13x8xf32>
    %cst_15 = arith.constant dense<0.000000e+00> : vector<13x8xf32>
    %32 = tpu.matmul %31, %30, %cst_15 {dimension_numbers = #tpu.dot_dimension_numbers<[1], [0], [0], [1], [0, 0, 1, 1], [], []>} : vector<13x8xf32>, vector<8x8xf32>, vector<13x8xf32> -> vector<13x8xf32>
    %33 = arith.addf %29, %32 : vector<13x8xf32>
    %c65 = arith.constant 65 : index
    %c0_16 = arith.constant 0 : index
    %34 = vector.load %arg1[%c65, %c0_16] : memref<90x128xf32, #tpu.memory_space<vmem>>, vector<8x8xf32>
    %35 = vector.extract_strided_slice %8 {offsets = [1, 0], sizes = [13, 8], strides = [1, 1]} : vector<16x8xf32> to vector<13x8xf32>
    %cst_17 = arith.constant dense<0.000000e+00> : vector<13x8xf32>
    %36 = tpu.matmul %35, %34, %cst_17 {dimension_numbers = #tpu.dot_dimension_numbers<[1], [0], [0], [1], [0, 0, 1, 1], [], []>} : vector<13x8xf32>, vector<8x8xf32>, vector<13x8xf32> -> vector<13x8xf32>
    %37 = arith.addf %33, %36 : vector<13x8xf32>
    %c73 = arith.constant 73 : index
    %c0_18 = arith.constant 0 : index
    %38 = vector.load %arg1[%c73, %c0_18] : memref<90x128xf32, #tpu.memory_space<vmem>>, vector<8x8xf32>
    %39 = vector.extract_strided_slice %8 {offsets = [2, 0], sizes = [13, 8], strides = [1, 1]} : vector<16x8xf32> to vector<13x8xf32>
    %cst_19 = arith.constant dense<0.000000e+00> : vector<13x8xf32>
    %40 = tpu.matmul %39, %38, %cst_19 {dimension_numbers = #tpu.dot_dimension_numbers<[1], [0], [0], [1], [0, 0, 1, 1], [], []>} : vector<13x8xf32>, vector<8x8xf32>, vector<13x8xf32> -> vector<13x8xf32>
    %41 = arith.addf %37, %40 : vector<13x8xf32>
    %c81 = arith.constant 81 : index
    %c0_20 = arith.constant 0 : index
    %42 = vector.load %arg1[%c81, %c0_20] : memref<90x128xf32, #tpu.memory_space<vmem>>, vector<8x8xf32>
    %43 = vector.extract_strided_slice %8 {offsets = [3, 0], sizes = [13, 8], strides = [1, 1]} : vector<16x8xf32> to vector<13x8xf32>
    %cst_21 = arith.constant dense<0.000000e+00> : vector<13x8xf32>
    %44 = tpu.matmul %43, %42, %cst_21 {dimension_numbers = #tpu.dot_dimension_numbers<[1], [0], [0], [1], [0, 0, 1, 1], [], []>} : vector<13x8xf32>, vector<8x8xf32>, vector<13x8xf32> -> vector<13x8xf32>
    %45 = arith.addf %41, %44 : vector<13x8xf32>
    %c89 = arith.constant 89 : index
    %c0_22 = arith.constant 0 : index
    %46 = vector.load %arg1[%c89, %c0_22] : memref<90x128xf32, #tpu.memory_space<vmem>>, vector<1x8xf32>
    %47 = vector.broadcast %46 : vector<1x8xf32> to vector<13x8xf32>
    %48 = arith.addf %45, %47 : vector<13x8xf32>
    %cst_23 = arith.constant 0.000000e+00 : f32
    %49 = vector.broadcast %cst_23 : f32 to vector<13x8xf32>
    %50 = arith.maximumf %48, %49 : vector<13x8xf32>
    %cst_24 = arith.constant dense<0xFF800000> : vector<8xf32>
    %51 = vector.multi_reduction <maximumf>, %50, %cst_24 [0] : vector<13x8xf32> to vector<8xf32>
    %52 = vector.shape_cast %51 : vector<8xf32> to vector<1x8xf32>
    %53 = tpu.concatenate %28, %52 in 1 : vector<1x8xf32>, vector<1x8xf32> -> vector<1x16xf32>
    %54 = vector.extract_strided_slice %7 {offsets = [16, 0], sizes = [16, 8], strides = [1, 1]} : vector<32x8xf32> to vector<16x8xf32>
    %cst_25 = arith.constant 0.000000e+00 : f32
    %55 = vector.broadcast %cst_25 : f32 to vector<14x8xf32>
    %c32_26 = arith.constant 32 : index
    %c0_27 = arith.constant 0 : index
    %56 = vector.load %arg1[%c32_26, %c0_27] : memref<90x128xf32, #tpu.memory_space<vmem>>, vector<8x8xf32>
    %57 = vector.extract_strided_slice %54 {offsets = [0, 0], sizes = [14, 8], strides = [1, 1]} : vector<16x8xf32> to vector<14x8xf32>
    %cst_28 = arith.constant dense<0.000000e+00> : vector<14x8xf32>
    %58 = tpu.matmul %57, %56, %cst_28 {dimension_numbers = #tpu.dot_dimension_numbers<[1], [0], [0], [1], [0, 0, 1, 1], [], []>} : vector<14x8xf32>, vector<8x8xf32>, vector<14x8xf32> -> vector<14x8xf32>
    %59 = arith.addf %55, %58 : vector<14x8xf32>
    %c40_29 = arith.constant 40 : index
    %c0_30 = arith.constant 0 : index
    %60 = vector.load %arg1[%c40_29, %c0_30] : memref<90x128xf32, #tpu.memory_space<vmem>>, vector<8x8xf32>
    %61 = vector.extract_strided_slice %54 {offsets = [1, 0], sizes = [14, 8], strides = [1, 1]} : vector<16x8xf32> to vector<14x8xf32>
    %cst_31 = arith.constant dense<0.000000e+00> : vector<14x8xf32>
    %62 = tpu.matmul %61, %60, %cst_31 {dimension_numbers = #tpu.dot_dimension_numbers<[1], [0], [0], [1], [0, 0, 1, 1], [], []>} : vector<14x8xf32>, vector<8x8xf32>, vector<14x8xf32> -> vector<14x8xf32>
    %63 = arith.addf %59, %62 : vector<14x8xf32>
    %c48_32 = arith.constant 48 : index
    %c0_33 = arith.constant 0 : index
    %64 = vector.load %arg1[%c48_32, %c0_33] : memref<90x128xf32, #tpu.memory_space<vmem>>, vector<8x8xf32>
    %65 = vector.extract_strided_slice %54 {offsets = [2, 0], sizes = [14, 8], strides = [1, 1]} : vector<16x8xf32> to vector<14x8xf32>
    %cst_34 = arith.constant dense<0.000000e+00> : vector<14x8xf32>
    %66 = tpu.matmul %65, %64, %cst_34 {dimension_numbers = #tpu.dot_dimension_numbers<[1], [0], [0], [1], [0, 0, 1, 1], [], []>} : vector<14x8xf32>, vector<8x8xf32>, vector<14x8xf32> -> vector<14x8xf32>
    %67 = arith.addf %63, %66 : vector<14x8xf32>
    %c56_35 = arith.constant 56 : index
    %c0_36 = arith.constant 0 : index
    %68 = vector.load %arg1[%c56_35, %c0_36] : memref<90x128xf32, #tpu.memory_space<vmem>>, vector<1x8xf32>
    %69 = vector.broadcast %68 : vector<1x8xf32> to vector<14x8xf32>
    %70 = arith.addf %67, %69 : vector<14x8xf32>
    %cst_37 = arith.constant 0.000000e+00 : f32
    %71 = vector.broadcast %cst_37 : f32 to vector<14x8xf32>
    %72 = arith.maximumf %70, %71 : vector<14x8xf32>
    %cst_38 = arith.constant dense<0xFF800000> : vector<8xf32>
    %73 = vector.multi_reduction <maximumf>, %72, %cst_38 [0] : vector<14x8xf32> to vector<8xf32>
    %74 = vector.shape_cast %73 : vector<8xf32> to vector<1x8xf32>
    %cst_39 = arith.constant 0.000000e+00 : f32
    %75 = vector.broadcast %cst_39 : f32 to vector<13x8xf32>
    %c57_40 = arith.constant 57 : index
    %c0_41 = arith.constant 0 : index
    %76 = vector.load %arg1[%c57_40, %c0_41] : memref<90x128xf32, #tpu.memory_space<vmem>>, vector<8x8xf32>
    %77 = vector.extract_strided_slice %54 {offsets = [0, 0], sizes = [13, 8], strides = [1, 1]} : vector<16x8xf32> to vector<13x8xf32>
    %cst_42 = arith.constant dense<0.000000e+00> : vector<13x8xf32>
    %78 = tpu.matmul %77, %76, %cst_42 {dimension_numbers = #tpu.dot_dimension_numbers<[1], [0], [0], [1], [0, 0, 1, 1], [], []>} : vector<13x8xf32>, vector<8x8xf32>, vector<13x8xf32> -> vector<13x8xf32>
    %79 = arith.addf %75, %78 : vector<13x8xf32>
    %c65_43 = arith.constant 65 : index
    %c0_44 = arith.constant 0 : index
    %80 = vector.load %arg1[%c65_43, %c0_44] : memref<90x128xf32, #tpu.memory_space<vmem>>, vector<8x8xf32>
    %81 = vector.extract_strided_slice %54 {offsets = [1, 0], sizes = [13, 8], strides = [1, 1]} : vector<16x8xf32> to vector<13x8xf32>
    %cst_45 = arith.constant dense<0.000000e+00> : vector<13x8xf32>
    %82 = tpu.matmul %81, %80, %cst_45 {dimension_numbers = #tpu.dot_dimension_numbers<[1], [0], [0], [1], [0, 0, 1, 1], [], []>} : vector<13x8xf32>, vector<8x8xf32>, vector<13x8xf32> -> vector<13x8xf32>
    %83 = arith.addf %79, %82 : vector<13x8xf32>
    %c73_46 = arith.constant 73 : index
    %c0_47 = arith.constant 0 : index
    %84 = vector.load %arg1[%c73_46, %c0_47] : memref<90x128xf32, #tpu.memory_space<vmem>>, vector<8x8xf32>
    %85 = vector.extract_strided_slice %54 {offsets = [2, 0], sizes = [13, 8], strides = [1, 1]} : vector<16x8xf32> to vector<13x8xf32>
    %cst_48 = arith.constant dense<0.000000e+00> : vector<13x8xf32>
    %86 = tpu.matmul %85, %84, %cst_48 {dimension_numbers = #tpu.dot_dimension_numbers<[1], [0], [0], [1], [0, 0, 1, 1], [], []>} : vector<13x8xf32>, vector<8x8xf32>, vector<13x8xf32> -> vector<13x8xf32>
    %87 = arith.addf %83, %86 : vector<13x8xf32>
    %c81_49 = arith.constant 81 : index
    %c0_50 = arith.constant 0 : index
    %88 = vector.load %arg1[%c81_49, %c0_50] : memref<90x128xf32, #tpu.memory_space<vmem>>, vector<8x8xf32>
    %89 = vector.extract_strided_slice %54 {offsets = [3, 0], sizes = [13, 8], strides = [1, 1]} : vector<16x8xf32> to vector<13x8xf32>
    %cst_51 = arith.constant dense<0.000000e+00> : vector<13x8xf32>
    %90 = tpu.matmul %89, %88, %cst_51 {dimension_numbers = #tpu.dot_dimension_numbers<[1], [0], [0], [1], [0, 0, 1, 1], [], []>} : vector<13x8xf32>, vector<8x8xf32>, vector<13x8xf32> -> vector<13x8xf32>
    %91 = arith.addf %87, %90 : vector<13x8xf32>
    %c89_52 = arith.constant 89 : index
    %c0_53 = arith.constant 0 : index
    %92 = vector.load %arg1[%c89_52, %c0_53] : memref<90x128xf32, #tpu.memory_space<vmem>>, vector<1x8xf32>
    %93 = vector.broadcast %92 : vector<1x8xf32> to vector<13x8xf32>
    %94 = arith.addf %91, %93 : vector<13x8xf32>
    %cst_54 = arith.constant 0.000000e+00 : f32
    %95 = vector.broadcast %cst_54 : f32 to vector<13x8xf32>
    %96 = arith.maximumf %94, %95 : vector<13x8xf32>
    %cst_55 = arith.constant dense<0xFF800000> : vector<8xf32>
    %97 = vector.multi_reduction <maximumf>, %96, %cst_55 [0] : vector<13x8xf32> to vector<8xf32>
    %98 = vector.shape_cast %97 : vector<8xf32> to vector<1x8xf32>
    %99 = tpu.concatenate %74, %98 in 1 : vector<1x8xf32>, vector<1x8xf32> -> vector<1x16xf32>
    %100 = tpu.concatenate %53, %99 in 0 : vector<1x16xf32>, vector<1x16xf32> -> vector<2x16xf32>
    %c0_56 = arith.constant 0 : index
    %c0_57 = arith.constant 0 : index
    %101 = vector.load %arg2[%c0_56, %c0_57] : memref<141x512xf32, #tpu.memory_space<vmem>>, vector<1x512xf32>
    %c1 = arith.constant 1 : index
    %c0_58 = arith.constant 0 : index
    %102 = vector.load %arg2[%c1, %c0_58] : memref<141x512xf32, #tpu.memory_space<vmem>>, vector<1x512xf32>
    %c2 = arith.constant 2 : index
    %c0_59 = arith.constant 0 : index
    %103 = vector.load %arg2[%c2, %c0_59] : memref<141x512xf32, #tpu.memory_space<vmem>>, vector<1x512xf32>
    %c3 = arith.constant 3 : index
    %c0_60 = arith.constant 0 : index
    %104 = vector.load %arg2[%c3, %c0_60] : memref<141x512xf32, #tpu.memory_space<vmem>>, vector<1x512xf32>
    %c4 = arith.constant 4 : index
    %c0_61 = arith.constant 0 : index
    %105 = vector.load %arg2[%c4, %c0_61] : memref<141x512xf32, #tpu.memory_space<vmem>>, vector<32x512xf32>
    %c36 = arith.constant 36 : index
    %c0_62 = arith.constant 0 : index
    %106 = vector.load %arg2[%c36, %c0_62] : memref<141x512xf32, #tpu.memory_space<vmem>>, vector<32x512xf32>
    %c68 = arith.constant 68 : index
    %c0_63 = arith.constant 0 : index
    %107 = vector.load %arg2[%c68, %c0_63] : memref<141x512xf32, #tpu.memory_space<vmem>>, vector<2x32xf32>
    %c70 = arith.constant 70 : index
    %c0_64 = arith.constant 0 : index
    %108 = vector.load %arg2[%c70, %c0_64] : memref<141x512xf32, #tpu.memory_space<vmem>>, vector<2x32xf32>
    %c72 = arith.constant 72 : index
    %c0_65 = arith.constant 0 : index
    %109 = vector.load %arg2[%c72, %c0_65] : memref<141x512xf32, #tpu.memory_space<vmem>>, vector<2x32xf32>
    %c74 = arith.constant 74 : index
    %c0_66 = arith.constant 0 : index
    %110 = vector.load %arg2[%c74, %c0_66] : memref<141x512xf32, #tpu.memory_space<vmem>>, vector<2x32xf32>
    %111 = vector.extract_strided_slice %100 {offsets = [0, 15], sizes = [2, 1], strides = [1, 1]} : vector<2x16xf32> to vector<2x1xf32>
    %112 = vector.broadcast %111 : vector<2x1xf32> to vector<2x512xf32>
    %113 = vector.broadcast %103 : vector<1x512xf32> to vector<2x512xf32>
    %114 = arith.mulf %112, %113 : vector<2x512xf32>
    %115 = vector.broadcast %104 : vector<1x512xf32> to vector<2x512xf32>
    %116 = arith.addf %114, %115 : vector<2x512xf32>
    %cst_67 = arith.constant dense<0.000000e+00> : vector<2x512xf32>
    %117 = tpu.matmul %108, %106, %cst_67 {dimension_numbers = #tpu.dot_dimension_numbers<[1], [0], [0], [1], [0, 0, 1, 1], [], []>} : vector<2x32xf32>, vector<32x512xf32>, vector<2x512xf32> -> vector<2x512xf32>
    %118 = arith.addf %116, %117 : vector<2x512xf32>
    %119 = vector.extract_strided_slice %118 {offsets = [0, 0], sizes = [2, 32], strides = [1, 1]} : vector<2x512xf32> to vector<2x32xf32>
    %cst_68 = arith.constant 5.000000e-01 : f32
    %120 = vector.broadcast %cst_68 : f32 to vector<2x32xf32>
    %121 = arith.mulf %120, %119 : vector<2x32xf32>
    %122 = math.tanh %121 : vector<2x32xf32>
    %cst_69 = arith.constant 1.000000e+00 : f32
    %123 = vector.broadcast %cst_69 : f32 to vector<2x32xf32>
    %124 = arith.addf %122, %123 : vector<2x32xf32>
    %cst_70 = arith.constant 5.000000e-01 : f32
    %125 = vector.broadcast %cst_70 : f32 to vector<2x32xf32>
    %126 = arith.mulf %125, %124 : vector<2x32xf32>
    %127 = vector.extract_strided_slice %118 {offsets = [0, 128], sizes = [2, 32], strides = [1, 1]} : vector<2x512xf32> to vector<2x32xf32>
    %cst_71 = arith.constant 5.000000e-01 : f32
    %128 = vector.broadcast %cst_71 : f32 to vector<2x32xf32>
    %129 = arith.mulf %128, %127 : vector<2x32xf32>
    %130 = math.tanh %129 : vector<2x32xf32>
    %cst_72 = arith.constant 1.000000e+00 : f32
    %131 = vector.broadcast %cst_72 : f32 to vector<2x32xf32>
    %132 = arith.addf %130, %131 : vector<2x32xf32>
    %cst_73 = arith.constant 5.000000e-01 : f32
    %133 = vector.broadcast %cst_73 : f32 to vector<2x32xf32>
    %134 = arith.mulf %133, %132 : vector<2x32xf32>
    %135 = vector.extract_strided_slice %118 {offsets = [0, 256], sizes = [2, 32], strides = [1, 1]} : vector<2x512xf32> to vector<2x32xf32>
    %136 = math.tanh %135 : vector<2x32xf32>
    %137 = vector.extract_strided_slice %118 {offsets = [0, 384], sizes = [2, 32], strides = [1, 1]} : vector<2x512xf32> to vector<2x32xf32>
    %cst_74 = arith.constant 5.000000e-01 : f32
    %138 = vector.broadcast %cst_74 : f32 to vector<2x32xf32>
    %139 = arith.mulf %138, %137 : vector<2x32xf32>
    %140 = math.tanh %139 : vector<2x32xf32>
    %cst_75 = arith.constant 1.000000e+00 : f32
    %141 = vector.broadcast %cst_75 : f32 to vector<2x32xf32>
    %142 = arith.addf %140, %141 : vector<2x32xf32>
    %cst_76 = arith.constant 5.000000e-01 : f32
    %143 = vector.broadcast %cst_76 : f32 to vector<2x32xf32>
    %144 = arith.mulf %143, %142 : vector<2x32xf32>
    %145 = arith.mulf %134, %110 : vector<2x32xf32>
    %146 = arith.mulf %126, %136 : vector<2x32xf32>
    %147 = arith.addf %145, %146 : vector<2x32xf32>
    %148 = math.tanh %147 : vector<2x32xf32>
    %149 = arith.mulf %144, %148 : vector<2x32xf32>
    %150 = vector.extract_strided_slice %100 {offsets = [0, 0], sizes = [2, 1], strides = [1, 1]} : vector<2x16xf32> to vector<2x1xf32>
    %151 = vector.broadcast %150 : vector<2x1xf32> to vector<2x512xf32>
    %152 = vector.broadcast %101 : vector<1x512xf32> to vector<2x512xf32>
    %153 = arith.mulf %151, %152 : vector<2x512xf32>
    %154 = vector.broadcast %102 : vector<1x512xf32> to vector<2x512xf32>
    %155 = arith.addf %153, %154 : vector<2x512xf32>
    %c0_77 = arith.constant 0 : index
    %c0_78 = arith.constant 0 : index
    %c0_79 = arith.constant 0 : index
    %156 = vector.load %arg4[%c0_77, %c0_78, %c0_79] : memref<16x2x512xf32, #tpu.memory_space<vmem>>, vector<1x2x512xf32>
    %157 = vector.shape_cast %156 : vector<1x2x512xf32> to vector<2x512xf32>
    %158 = vector.shape_cast %155 : vector<2x512xf32> to vector<1x2x512xf32>
    tpu.vector_store %arg4[%c0_77, %c0_78, %c0_79], %158 {strides = array<i32>} : memref<16x2x512xf32, #tpu.memory_space<vmem>>, vector<1x2x512xf32>,
    %159 = vector.extract_strided_slice %100 {offsets = [0, 1], sizes = [2, 1], strides = [1, 1]} : vector<2x16xf32> to vector<2x1xf32>
    %160 = vector.broadcast %159 : vector<2x1xf32> to vector<2x512xf32>
    %161 = vector.broadcast %101 : vector<1x512xf32> to vector<2x512xf32>
    %162 = arith.mulf %160, %161 : vector<2x512xf32>
    %163 = vector.broadcast %102 : vector<1x512xf32> to vector<2x512xf32>
    %164 = arith.addf %162, %163 : vector<2x512xf32>
    %c1_80 = arith.constant 1 : index
    %c0_81 = arith.constant 0 : index
    %c0_82 = arith.constant 0 : index
    %165 = vector.load %arg4[%c1_80, %c0_81, %c0_82] : memref<16x2x512xf32, #tpu.memory_space<vmem>>, vector<1x2x512xf32>
    %166 = vector.shape_cast %165 : vector<1x2x512xf32> to vector<2x512xf32>
    %167 = vector.shape_cast %164 : vector<2x512xf32> to vector<1x2x512xf32>
    tpu.vector_store %arg4[%c1_80, %c0_81, %c0_82], %167 {strides = array<i32>} : memref<16x2x512xf32, #tpu.memory_space<vmem>>, vector<1x2x512xf32>,
    %168 = vector.extract_strided_slice %100 {offsets = [0, 2], sizes = [2, 1], strides = [1, 1]} : vector<2x16xf32> to vector<2x1xf32>
    %169 = vector.broadcast %168 : vector<2x1xf32> to vector<2x512xf32>
    %170 = vector.broadcast %101 : vector<1x512xf32> to vector<2x512xf32>
    %171 = arith.mulf %169, %170 : vector<2x512xf32>
    %172 = vector.broadcast %102 : vector<1x512xf32> to vector<2x512xf32>
    %173 = arith.addf %171, %172 : vector<2x512xf32>
    %c2_83 = arith.constant 2 : index
    %c0_84 = arith.constant 0 : index
    %c0_85 = arith.constant 0 : index
    %174 = vector.load %arg4[%c2_83, %c0_84, %c0_85] : memref<16x2x512xf32, #tpu.memory_space<vmem>>, vector<1x2x512xf32>
    %175 = vector.shape_cast %174 : vector<1x2x512xf32> to vector<2x512xf32>
    %176 = vector.shape_cast %173 : vector<2x512xf32> to vector<1x2x512xf32>
    tpu.vector_store %arg4[%c2_83, %c0_84, %c0_85], %176 {strides = array<i32>} : memref<16x2x512xf32, #tpu.memory_space<vmem>>, vector<1x2x512xf32>,
    %177 = vector.extract_strided_slice %100 {offsets = [0, 3], sizes = [2, 1], strides = [1, 1]} : vector<2x16xf32> to vector<2x1xf32>
    %178 = vector.broadcast %177 : vector<2x1xf32> to vector<2x512xf32>
    %179 = vector.broadcast %101 : vector<1x512xf32> to vector<2x512xf32>
    %180 = arith.mulf %178, %179 : vector<2x512xf32>
    %181 = vector.broadcast %102 : vector<1x512xf32> to vector<2x512xf32>
    %182 = arith.addf %180, %181 : vector<2x512xf32>
    %c3_86 = arith.constant 3 : index
    %c0_87 = arith.constant 0 : index
    %c0_88 = arith.constant 0 : index
    %183 = vector.load %arg4[%c3_86, %c0_87, %c0_88] : memref<16x2x512xf32, #tpu.memory_space<vmem>>, vector<1x2x512xf32>
    %184 = vector.shape_cast %183 : vector<1x2x512xf32> to vector<2x512xf32>
    %185 = vector.shape_cast %182 : vector<2x512xf32> to vector<1x2x512xf32>
    tpu.vector_store %arg4[%c3_86, %c0_87, %c0_88], %185 {strides = array<i32>} : memref<16x2x512xf32, #tpu.memory_space<vmem>>, vector<1x2x512xf32>,
    %186 = vector.extract_strided_slice %100 {offsets = [0, 4], sizes = [2, 1], strides = [1, 1]} : vector<2x16xf32> to vector<2x1xf32>
    %187 = vector.broadcast %186 : vector<2x1xf32> to vector<2x512xf32>
    %188 = vector.broadcast %101 : vector<1x512xf32> to vector<2x512xf32>
    %189 = arith.mulf %187, %188 : vector<2x512xf32>
    %190 = vector.broadcast %102 : vector<1x512xf32> to vector<2x512xf32>
    %191 = arith.addf %189, %190 : vector<2x512xf32>
    %c4_89 = arith.constant 4 : index
    %c0_90 = arith.constant 0 : index
    %c0_91 = arith.constant 0 : index
    %192 = vector.load %arg4[%c4_89, %c0_90, %c0_91] : memref<16x2x512xf32, #tpu.memory_space<vmem>>, vector<1x2x512xf32>
    %193 = vector.shape_cast %192 : vector<1x2x512xf32> to vector<2x512xf32>
    %194 = vector.shape_cast %191 : vector<2x512xf32> to vector<1x2x512xf32>
    tpu.vector_store %arg4[%c4_89, %c0_90, %c0_91], %194 {strides = array<i32>} : memref<16x2x512xf32, #tpu.memory_space<vmem>>, vector<1x2x512xf32>,
    %195 = vector.extract_strided_slice %100 {offsets = [0, 5], sizes = [2, 1], strides = [1, 1]} : vector<2x16xf32> to vector<2x1xf32>
    %196 = vector.broadcast %195 : vector<2x1xf32> to vector<2x512xf32>
    %197 = vector.broadcast %101 : vector<1x512xf32> to vector<2x512xf32>
    %198 = arith.mulf %196, %197 : vector<2x512xf32>
    %199 = vector.broadcast %102 : vector<1x512xf32> to vector<2x512xf32>
    %200 = arith.addf %198, %199 : vector<2x512xf32>
    %c5 = arith.constant 5 : index
    %c0_92 = arith.constant 0 : index
    %c0_93 = arith.constant 0 : index
    %201 = vector.load %arg4[%c5, %c0_92, %c0_93] : memref<16x2x512xf32, #tpu.memory_space<vmem>>, vector<1x2x512xf32>
    %202 = vector.shape_cast %201 : vector<1x2x512xf32> to vector<2x512xf32>
    %203 = vector.shape_cast %200 : vector<2x512xf32> to vector<1x2x512xf32>
    tpu.vector_store %arg4[%c5, %c0_92, %c0_93], %203 {strides = array<i32>} : memref<16x2x512xf32, #tpu.memory_space<vmem>>, vector<1x2x512xf32>,
    %204 = vector.extract_strided_slice %100 {offsets = [0, 6], sizes = [2, 1], strides = [1, 1]} : vector<2x16xf32> to vector<2x1xf32>
    %205 = vector.broadcast %204 : vector<2x1xf32> to vector<2x512xf32>
    %206 = vector.broadcast %101 : vector<1x512xf32> to vector<2x512xf32>
    %207 = arith.mulf %205, %206 : vector<2x512xf32>
    %208 = vector.broadcast %102 : vector<1x512xf32> to vector<2x512xf32>
    %209 = arith.addf %207, %208 : vector<2x512xf32>
    %c6 = arith.constant 6 : index
    %c0_94 = arith.constant 0 : index
    %c0_95 = arith.constant 0 : index
    %210 = vector.load %arg4[%c6, %c0_94, %c0_95] : memref<16x2x512xf32, #tpu.memory_space<vmem>>, vector<1x2x512xf32>
    %211 = vector.shape_cast %210 : vector<1x2x512xf32> to vector<2x512xf32>
    %212 = vector.shape_cast %209 : vector<2x512xf32> to vector<1x2x512xf32>
    tpu.vector_store %arg4[%c6, %c0_94, %c0_95], %212 {strides = array<i32>} : memref<16x2x512xf32, #tpu.memory_space<vmem>>, vector<1x2x512xf32>,
    %213 = vector.extract_strided_slice %100 {offsets = [0, 7], sizes = [2, 1], strides = [1, 1]} : vector<2x16xf32> to vector<2x1xf32>
    %214 = vector.broadcast %213 : vector<2x1xf32> to vector<2x512xf32>
    %215 = vector.broadcast %101 : vector<1x512xf32> to vector<2x512xf32>
    %216 = arith.mulf %214, %215 : vector<2x512xf32>
    %217 = vector.broadcast %102 : vector<1x512xf32> to vector<2x512xf32>
    %218 = arith.addf %216, %217 : vector<2x512xf32>
    %c7 = arith.constant 7 : index
    %c0_96 = arith.constant 0 : index
    %c0_97 = arith.constant 0 : index
    %219 = vector.load %arg4[%c7, %c0_96, %c0_97] : memref<16x2x512xf32, #tpu.memory_space<vmem>>, vector<1x2x512xf32>
    %220 = vector.shape_cast %219 : vector<1x2x512xf32> to vector<2x512xf32>
    %221 = vector.shape_cast %218 : vector<2x512xf32> to vector<1x2x512xf32>
    tpu.vector_store %arg4[%c7, %c0_96, %c0_97], %221 {strides = array<i32>} : memref<16x2x512xf32, #tpu.memory_space<vmem>>, vector<1x2x512xf32>,
    %222 = vector.extract_strided_slice %100 {offsets = [0, 8], sizes = [2, 1], strides = [1, 1]} : vector<2x16xf32> to vector<2x1xf32>
    %223 = vector.broadcast %222 : vector<2x1xf32> to vector<2x512xf32>
    %224 = vector.broadcast %101 : vector<1x512xf32> to vector<2x512xf32>
    %225 = arith.mulf %223, %224 : vector<2x512xf32>
    %226 = vector.broadcast %102 : vector<1x512xf32> to vector<2x512xf32>
    %227 = arith.addf %225, %226 : vector<2x512xf32>
    %c8 = arith.constant 8 : index
    %c0_98 = arith.constant 0 : index
    %c0_99 = arith.constant 0 : index
    %228 = vector.load %arg4[%c8, %c0_98, %c0_99] : memref<16x2x512xf32, #tpu.memory_space<vmem>>, vector<1x2x512xf32>
    %229 = vector.shape_cast %228 : vector<1x2x512xf32> to vector<2x512xf32>
    %230 = vector.shape_cast %227 : vector<2x512xf32> to vector<1x2x512xf32>
    tpu.vector_store %arg4[%c8, %c0_98, %c0_99], %230 {strides = array<i32>} : memref<16x2x512xf32, #tpu.memory_space<vmem>>, vector<1x2x512xf32>,
    %231 = vector.extract_strided_slice %100 {offsets = [0, 9], sizes = [2, 1], strides = [1, 1]} : vector<2x16xf32> to vector<2x1xf32>
    %232 = vector.broadcast %231 : vector<2x1xf32> to vector<2x512xf32>
    %233 = vector.broadcast %101 : vector<1x512xf32> to vector<2x512xf32>
    %234 = arith.mulf %232, %233 : vector<2x512xf32>
    %235 = vector.broadcast %102 : vector<1x512xf32> to vector<2x512xf32>
    %236 = arith.addf %234, %235 : vector<2x512xf32>
    %c9 = arith.constant 9 : index
    %c0_100 = arith.constant 0 : index
    %c0_101 = arith.constant 0 : index
    %237 = vector.load %arg4[%c9, %c0_100, %c0_101] : memref<16x2x512xf32, #tpu.memory_space<vmem>>, vector<1x2x512xf32>
    %238 = vector.shape_cast %237 : vector<1x2x512xf32> to vector<2x512xf32>
    %239 = vector.shape_cast %236 : vector<2x512xf32> to vector<1x2x512xf32>
    tpu.vector_store %arg4[%c9, %c0_100, %c0_101], %239 {strides = array<i32>} : memref<16x2x512xf32, #tpu.memory_space<vmem>>, vector<1x2x512xf32>,
    %240 = vector.extract_strided_slice %100 {offsets = [0, 10], sizes = [2, 1], strides = [1, 1]} : vector<2x16xf32> to vector<2x1xf32>
    %241 = vector.broadcast %240 : vector<2x1xf32> to vector<2x512xf32>
    %242 = vector.broadcast %101 : vector<1x512xf32> to vector<2x512xf32>
    %243 = arith.mulf %241, %242 : vector<2x512xf32>
    %244 = vector.broadcast %102 : vector<1x512xf32> to vector<2x512xf32>
    %245 = arith.addf %243, %244 : vector<2x512xf32>
    %c10 = arith.constant 10 : index
    %c0_102 = arith.constant 0 : index
    %c0_103 = arith.constant 0 : index
    %246 = vector.load %arg4[%c10, %c0_102, %c0_103] : memref<16x2x512xf32, #tpu.memory_space<vmem>>, vector<1x2x512xf32>
    %247 = vector.shape_cast %246 : vector<1x2x512xf32> to vector<2x512xf32>
    %248 = vector.shape_cast %245 : vector<2x512xf32> to vector<1x2x512xf32>
    tpu.vector_store %arg4[%c10, %c0_102, %c0_103], %248 {strides = array<i32>} : memref<16x2x512xf32, #tpu.memory_space<vmem>>, vector<1x2x512xf32>,
    %249 = vector.extract_strided_slice %100 {offsets = [0, 11], sizes = [2, 1], strides = [1, 1]} : vector<2x16xf32> to vector<2x1xf32>
    %250 = vector.broadcast %249 : vector<2x1xf32> to vector<2x512xf32>
    %251 = vector.broadcast %101 : vector<1x512xf32> to vector<2x512xf32>
    %252 = arith.mulf %250, %251 : vector<2x512xf32>
    %253 = vector.broadcast %102 : vector<1x512xf32> to vector<2x512xf32>
    %254 = arith.addf %252, %253 : vector<2x512xf32>
    %c11 = arith.constant 11 : index
    %c0_104 = arith.constant 0 : index
    %c0_105 = arith.constant 0 : index
    %255 = vector.load %arg4[%c11, %c0_104, %c0_105] : memref<16x2x512xf32, #tpu.memory_space<vmem>>, vector<1x2x512xf32>
    %256 = vector.shape_cast %255 : vector<1x2x512xf32> to vector<2x512xf32>
    %257 = vector.shape_cast %254 : vector<2x512xf32> to vector<1x2x512xf32>
    tpu.vector_store %arg4[%c11, %c0_104, %c0_105], %257 {strides = array<i32>} : memref<16x2x512xf32, #tpu.memory_space<vmem>>, vector<1x2x512xf32>,
    %258 = vector.extract_strided_slice %100 {offsets = [0, 12], sizes = [2, 1], strides = [1, 1]} : vector<2x16xf32> to vector<2x1xf32>
    %259 = vector.broadcast %258 : vector<2x1xf32> to vector<2x512xf32>
    %260 = vector.broadcast %101 : vector<1x512xf32> to vector<2x512xf32>
    %261 = arith.mulf %259, %260 : vector<2x512xf32>
    %262 = vector.broadcast %102 : vector<1x512xf32> to vector<2x512xf32>
    %263 = arith.addf %261, %262 : vector<2x512xf32>
    %c12 = arith.constant 12 : index
    %c0_106 = arith.constant 0 : index
    %c0_107 = arith.constant 0 : index
    %264 = vector.load %arg4[%c12, %c0_106, %c0_107] : memref<16x2x512xf32, #tpu.memory_space<vmem>>, vector<1x2x512xf32>
    %265 = vector.shape_cast %264 : vector<1x2x512xf32> to vector<2x512xf32>
    %266 = vector.shape_cast %263 : vector<2x512xf32> to vector<1x2x512xf32>
    tpu.vector_store %arg4[%c12, %c0_106, %c0_107], %266 {strides = array<i32>} : memref<16x2x512xf32, #tpu.memory_space<vmem>>, vector<1x2x512xf32>,
    %267 = vector.extract_strided_slice %100 {offsets = [0, 13], sizes = [2, 1], strides = [1, 1]} : vector<2x16xf32> to vector<2x1xf32>
    %268 = vector.broadcast %267 : vector<2x1xf32> to vector<2x512xf32>
    %269 = vector.broadcast %101 : vector<1x512xf32> to vector<2x512xf32>
    %270 = arith.mulf %268, %269 : vector<2x512xf32>
    %271 = vector.broadcast %102 : vector<1x512xf32> to vector<2x512xf32>
    %272 = arith.addf %270, %271 : vector<2x512xf32>
    %c13 = arith.constant 13 : index
    %c0_108 = arith.constant 0 : index
    %c0_109 = arith.constant 0 : index
    %273 = vector.load %arg4[%c13, %c0_108, %c0_109] : memref<16x2x512xf32, #tpu.memory_space<vmem>>, vector<1x2x512xf32>
    %274 = vector.shape_cast %273 : vector<1x2x512xf32> to vector<2x512xf32>
    %275 = vector.shape_cast %272 : vector<2x512xf32> to vector<1x2x512xf32>
    tpu.vector_store %arg4[%c13, %c0_108, %c0_109], %275 {strides = array<i32>} : memref<16x2x512xf32, #tpu.memory_space<vmem>>, vector<1x2x512xf32>,
    %276 = vector.extract_strided_slice %100 {offsets = [0, 14], sizes = [2, 1], strides = [1, 1]} : vector<2x16xf32> to vector<2x1xf32>
    %277 = vector.broadcast %276 : vector<2x1xf32> to vector<2x512xf32>
    %278 = vector.broadcast %101 : vector<1x512xf32> to vector<2x512xf32>
    %279 = arith.mulf %277, %278 : vector<2x512xf32>
    %280 = vector.broadcast %102 : vector<1x512xf32> to vector<2x512xf32>
    %281 = arith.addf %279, %280 : vector<2x512xf32>
    %c14 = arith.constant 14 : index
    %c0_110 = arith.constant 0 : index
    %c0_111 = arith.constant 0 : index
    %282 = vector.load %arg4[%c14, %c0_110, %c0_111] : memref<16x2x512xf32, #tpu.memory_space<vmem>>, vector<1x2x512xf32>
    %283 = vector.shape_cast %282 : vector<1x2x512xf32> to vector<2x512xf32>
    %284 = vector.shape_cast %281 : vector<2x512xf32> to vector<1x2x512xf32>
    tpu.vector_store %arg4[%c14, %c0_110, %c0_111], %284 {strides = array<i32>} : memref<16x2x512xf32, #tpu.memory_space<vmem>>, vector<1x2x512xf32>,
    %285 = vector.extract_strided_slice %100 {offsets = [0, 15], sizes = [2, 1], strides = [1, 1]} : vector<2x16xf32> to vector<2x1xf32>
    %286 = vector.broadcast %285 : vector<2x1xf32> to vector<2x512xf32>
    %287 = vector.broadcast %101 : vector<1x512xf32> to vector<2x512xf32>
    %288 = arith.mulf %286, %287 : vector<2x512xf32>
    %289 = vector.broadcast %102 : vector<1x512xf32> to vector<2x512xf32>
    %290 = arith.addf %288, %289 : vector<2x512xf32>
    %c15 = arith.constant 15 : index
    %c0_112 = arith.constant 0 : index
    %c0_113 = arith.constant 0 : index
    %291 = vector.load %arg4[%c15, %c0_112, %c0_113] : memref<16x2x512xf32, #tpu.memory_space<vmem>>, vector<1x2x512xf32>
    %292 = vector.shape_cast %291 : vector<1x2x512xf32> to vector<2x512xf32>
    %293 = vector.shape_cast %290 : vector<2x512xf32> to vector<1x2x512xf32>
    tpu.vector_store %arg4[%c15, %c0_112, %c0_113], %293 {strides = array<i32>} : memref<16x2x512xf32, #tpu.memory_space<vmem>>, vector<1x2x512xf32>,
    %c0_114 = arith.constant 0 : index
    %c0_115 = arith.constant 0 : index
    %c0_116 = arith.constant 0 : index
    %294 = vector.load %arg4[%c0_114, %c0_115, %c0_116] : memref<16x2x512xf32, #tpu.memory_space<vmem>>, vector<1x2x512xf32>
    %295 = vector.shape_cast %294 : vector<1x2x512xf32> to vector<2x512xf32>
    %cst_117 = arith.constant dense<0.000000e+00> : vector<2x512xf32>
    %296 = tpu.matmul %107, %105, %cst_117 {dimension_numbers = #tpu.dot_dimension_numbers<[1], [0], [0], [1], [0, 0, 1, 1], [], []>} : vector<2x32xf32>, vector<32x512xf32>, vector<2x512xf32> -> vector<2x512xf32>
    %297 = arith.addf %295, %296 : vector<2x512xf32>
    %298 = vector.extract_strided_slice %297 {offsets = [0, 0], sizes = [2, 32], strides = [1, 1]} : vector<2x512xf32> to vector<2x32xf32>
    %cst_118 = arith.constant 5.000000e-01 : f32
    %299 = vector.broadcast %cst_118 : f32 to vector<2x32xf32>
    %300 = arith.mulf %299, %298 : vector<2x32xf32>
    %301 = math.tanh %300 : vector<2x32xf32>
    %cst_119 = arith.constant 1.000000e+00 : f32
    %302 = vector.broadcast %cst_119 : f32 to vector<2x32xf32>
    %303 = arith.addf %301, %302 : vector<2x32xf32>
    %cst_120 = arith.constant 5.000000e-01 : f32
    %304 = vector.broadcast %cst_120 : f32 to vector<2x32xf32>
    %305 = arith.mulf %304, %303 : vector<2x32xf32>
    %306 = vector.extract_strided_slice %297 {offsets = [0, 128], sizes = [2, 32], strides = [1, 1]} : vector<2x512xf32> to vector<2x32xf32>
    %cst_121 = arith.constant 5.000000e-01 : f32
    %307 = vector.broadcast %cst_121 : f32 to vector<2x32xf32>
    %308 = arith.mulf %307, %306 : vector<2x32xf32>
    %309 = math.tanh %308 : vector<2x32xf32>
    %cst_122 = arith.constant 1.000000e+00 : f32
    %310 = vector.broadcast %cst_122 : f32 to vector<2x32xf32>
    %311 = arith.addf %309, %310 : vector<2x32xf32>
    %cst_123 = arith.constant 5.000000e-01 : f32
    %312 = vector.broadcast %cst_123 : f32 to vector<2x32xf32>
    %313 = arith.mulf %312, %311 : vector<2x32xf32>
    %314 = vector.extract_strided_slice %297 {offsets = [0, 256], sizes = [2, 32], strides = [1, 1]} : vector<2x512xf32> to vector<2x32xf32>
    %315 = math.tanh %314 : vector<2x32xf32>
    %316 = vector.extract_strided_slice %297 {offsets = [0, 384], sizes = [2, 32], strides = [1, 1]} : vector<2x512xf32> to vector<2x32xf32>
    %cst_124 = arith.constant 5.000000e-01 : f32
    %317 = vector.broadcast %cst_124 : f32 to vector<2x32xf32>
    %318 = arith.mulf %317, %316 : vector<2x32xf32>
    %319 = math.tanh %318 : vector<2x32xf32>
    %cst_125 = arith.constant 1.000000e+00 : f32
    %320 = vector.broadcast %cst_125 : f32 to vector<2x32xf32>
    %321 = arith.addf %319, %320 : vector<2x32xf32>
    %cst_126 = arith.constant 5.000000e-01 : f32
    %322 = vector.broadcast %cst_126 : f32 to vector<2x32xf32>
    %323 = arith.mulf %322, %321 : vector<2x32xf32>
    %324 = arith.mulf %313, %109 : vector<2x32xf32>
    %325 = arith.mulf %305, %315 : vector<2x32xf32>
    %326 = arith.addf %324, %325 : vector<2x32xf32>
    %327 = math.tanh %326 : vector<2x32xf32>
    %328 = arith.mulf %323, %327 : vector<2x32xf32>
    %c1_127 = arith.constant 1 : index
    %c0_128 = arith.constant 0 : index
    %c0_129 = arith.constant 0 : index
    %329 = vector.load %arg4[%c1_127, %c0_128, %c0_129] : memref<16x2x512xf32, #tpu.memory_space<vmem>>, vector<1x2x512xf32>
    %330 = vector.shape_cast %329 : vector<1x2x512xf32> to vector<2x512xf32>
    %cst_130 = arith.constant dense<0.000000e+00> : vector<2x512xf32>
    %331 = tpu.matmul %328, %105, %cst_130 {dimension_numbers = #tpu.dot_dimension_numbers<[1], [0], [0], [1], [0, 0, 1, 1], [], []>} : vector<2x32xf32>, vector<32x512xf32>, vector<2x512xf32> -> vector<2x512xf32>
    %332 = arith.addf %330, %331 : vector<2x512xf32>
    %333 = vector.extract_strided_slice %332 {offsets = [0, 0], sizes = [2, 32], strides = [1, 1]} : vector<2x512xf32> to vector<2x32xf32>
    %cst_131 = arith.constant 5.000000e-01 : f32
    %334 = vector.broadcast %cst_131 : f32 to vector<2x32xf32>
    %335 = arith.mulf %334, %333 : vector<2x32xf32>
    %336 = math.tanh %335 : vector<2x32xf32>
    %cst_132 = arith.constant 1.000000e+00 : f32
    %337 = vector.broadcast %cst_132 : f32 to vector<2x32xf32>
    %338 = arith.addf %336, %337 : vector<2x32xf32>
    %cst_133 = arith.constant 5.000000e-01 : f32
    %339 = vector.broadcast %cst_133 : f32 to vector<2x32xf32>
    %340 = arith.mulf %339, %338 : vector<2x32xf32>
    %341 = vector.extract_strided_slice %332 {offsets = [0, 128], sizes = [2, 32], strides = [1, 1]} : vector<2x512xf32> to vector<2x32xf32>
    %cst_134 = arith.constant 5.000000e-01 : f32
    %342 = vector.broadcast %cst_134 : f32 to vector<2x32xf32>
    %343 = arith.mulf %342, %341 : vector<2x32xf32>
    %344 = math.tanh %343 : vector<2x32xf32>
    %cst_135 = arith.constant 1.000000e+00 : f32
    %345 = vector.broadcast %cst_135 : f32 to vector<2x32xf32>
    %346 = arith.addf %344, %345 : vector<2x32xf32>
    %cst_136 = arith.constant 5.000000e-01 : f32
    %347 = vector.broadcast %cst_136 : f32 to vector<2x32xf32>
    %348 = arith.mulf %347, %346 : vector<2x32xf32>
    %349 = vector.extract_strided_slice %332 {offsets = [0, 256], sizes = [2, 32], strides = [1, 1]} : vector<2x512xf32> to vector<2x32xf32>
    %350 = math.tanh %349 : vector<2x32xf32>
    %351 = vector.extract_strided_slice %332 {offsets = [0, 384], sizes = [2, 32], strides = [1, 1]} : vector<2x512xf32> to vector<2x32xf32>
    %cst_137 = arith.constant 5.000000e-01 : f32
    %352 = vector.broadcast %cst_137 : f32 to vector<2x32xf32>
    %353 = arith.mulf %352, %351 : vector<2x32xf32>
    %354 = math.tanh %353 : vector<2x32xf32>
    %cst_138 = arith.constant 1.000000e+00 : f32
    %355 = vector.broadcast %cst_138 : f32 to vector<2x32xf32>
    %356 = arith.addf %354, %355 : vector<2x32xf32>
    %cst_139 = arith.constant 5.000000e-01 : f32
    %357 = vector.broadcast %cst_139 : f32 to vector<2x32xf32>
    %358 = arith.mulf %357, %356 : vector<2x32xf32>
    %359 = arith.mulf %348, %326 : vector<2x32xf32>
    %360 = arith.mulf %340, %350 : vector<2x32xf32>
    %361 = arith.addf %359, %360 : vector<2x32xf32>
    %362 = math.tanh %361 : vector<2x32xf32>
    %363 = arith.mulf %358, %362 : vector<2x32xf32>
    %c2_140 = arith.constant 2 : index
    %c0_141 = arith.constant 0 : index
    %c0_142 = arith.constant 0 : index
    %364 = vector.load %arg4[%c2_140, %c0_141, %c0_142] : memref<16x2x512xf32, #tpu.memory_space<vmem>>, vector<1x2x512xf32>
    %365 = vector.shape_cast %364 : vector<1x2x512xf32> to vector<2x512xf32>
    %cst_143 = arith.constant dense<0.000000e+00> : vector<2x512xf32>
    %366 = tpu.matmul %363, %105, %cst_143 {dimension_numbers = #tpu.dot_dimension_numbers<[1], [0], [0], [1], [0, 0, 1, 1], [], []>} : vector<2x32xf32>, vector<32x512xf32>, vector<2x512xf32> -> vector<2x512xf32>
    %367 = arith.addf %365, %366 : vector<2x512xf32>
    %368 = vector.extract_strided_slice %367 {offsets = [0, 0], sizes = [2, 32], strides = [1, 1]} : vector<2x512xf32> to vector<2x32xf32>
    %cst_144 = arith.constant 5.000000e-01 : f32
    %369 = vector.broadcast %cst_144 : f32 to vector<2x32xf32>
    %370 = arith.mulf %369, %368 : vector<2x32xf32>
    %371 = math.tanh %370 : vector<2x32xf32>
    %cst_145 = arith.constant 1.000000e+00 : f32
    %372 = vector.broadcast %cst_145 : f32 to vector<2x32xf32>
    %373 = arith.addf %371, %372 : vector<2x32xf32>
    %cst_146 = arith.constant 5.000000e-01 : f32
    %374 = vector.broadcast %cst_146 : f32 to vector<2x32xf32>
    %375 = arith.mulf %374, %373 : vector<2x32xf32>
    %376 = vector.extract_strided_slice %367 {offsets = [0, 128], sizes = [2, 32], strides = [1, 1]} : vector<2x512xf32> to vector<2x32xf32>
    %cst_147 = arith.constant 5.000000e-01 : f32
    %377 = vector.broadcast %cst_147 : f32 to vector<2x32xf32>
    %378 = arith.mulf %377, %376 : vector<2x32xf32>
    %379 = math.tanh %378 : vector<2x32xf32>
    %cst_148 = arith.constant 1.000000e+00 : f32
    %380 = vector.broadcast %cst_148 : f32 to vector<2x32xf32>
    %381 = arith.addf %379, %380 : vector<2x32xf32>
    %cst_149 = arith.constant 5.000000e-01 : f32
    %382 = vector.broadcast %cst_149 : f32 to vector<2x32xf32>
    %383 = arith.mulf %382, %381 : vector<2x32xf32>
    %384 = vector.extract_strided_slice %367 {offsets = [0, 256], sizes = [2, 32], strides = [1, 1]} : vector<2x512xf32> to vector<2x32xf32>
    %385 = math.tanh %384 : vector<2x32xf32>
    %386 = vector.extract_strided_slice %367 {offsets = [0, 384], sizes = [2, 32], strides = [1, 1]} : vector<2x512xf32> to vector<2x32xf32>
    %cst_150 = arith.constant 5.000000e-01 : f32
    %387 = vector.broadcast %cst_150 : f32 to vector<2x32xf32>
    %388 = arith.mulf %387, %386 : vector<2x32xf32>
    %389 = math.tanh %388 : vector<2x32xf32>
    %cst_151 = arith.constant 1.000000e+00 : f32
    %390 = vector.broadcast %cst_151 : f32 to vector<2x32xf32>
    %391 = arith.addf %389, %390 : vector<2x32xf32>
    %cst_152 = arith.constant 5.000000e-01 : f32
    %392 = vector.broadcast %cst_152 : f32 to vector<2x32xf32>
    %393 = arith.mulf %392, %391 : vector<2x32xf32>
    %394 = arith.mulf %383, %361 : vector<2x32xf32>
    %395 = arith.mulf %375, %385 : vector<2x32xf32>
    %396 = arith.addf %394, %395 : vector<2x32xf32>
    %397 = math.tanh %396 : vector<2x32xf32>
    %398 = arith.mulf %393, %397 : vector<2x32xf32>
    %c3_153 = arith.constant 3 : index
    %c0_154 = arith.constant 0 : index
    %c0_155 = arith.constant 0 : index
    %399 = vector.load %arg4[%c3_153, %c0_154, %c0_155] : memref<16x2x512xf32, #tpu.memory_space<vmem>>, vector<1x2x512xf32>
    %400 = vector.shape_cast %399 : vector<1x2x512xf32> to vector<2x512xf32>
    %cst_156 = arith.constant dense<0.000000e+00> : vector<2x512xf32>
    %401 = tpu.matmul %398, %105, %cst_156 {dimension_numbers = #tpu.dot_dimension_numbers<[1], [0], [0], [1], [0, 0, 1, 1], [], []>} : vector<2x32xf32>, vector<32x512xf32>, vector<2x512xf32> -> vector<2x512xf32>
    %402 = arith.addf %400, %401 : vector<2x512xf32>
    %403 = vector.extract_strided_slice %402 {offsets = [0, 0], sizes = [2, 32], strides = [1, 1]} : vector<2x512xf32> to vector<2x32xf32>
    %cst_157 = arith.constant 5.000000e-01 : f32
    %404 = vector.broadcast %cst_157 : f32 to vector<2x32xf32>
    %405 = arith.mulf %404, %403 : vector<2x32xf32>
    %406 = math.tanh %405 : vector<2x32xf32>
    %cst_158 = arith.constant 1.000000e+00 : f32
    %407 = vector.broadcast %cst_158 : f32 to vector<2x32xf32>
    %408 = arith.addf %406, %407 : vector<2x32xf32>
    %cst_159 = arith.constant 5.000000e-01 : f32
    %409 = vector.broadcast %cst_159 : f32 to vector<2x32xf32>
    %410 = arith.mulf %409, %408 : vector<2x32xf32>
    %411 = vector.extract_strided_slice %402 {offsets = [0, 128], sizes = [2, 32], strides = [1, 1]} : vector<2x512xf32> to vector<2x32xf32>
    %cst_160 = arith.constant 5.000000e-01 : f32
    %412 = vector.broadcast %cst_160 : f32 to vector<2x32xf32>
    %413 = arith.mulf %412, %411 : vector<2x32xf32>
    %414 = math.tanh %413 : vector<2x32xf32>
    %cst_161 = arith.constant 1.000000e+00 : f32
    %415 = vector.broadcast %cst_161 : f32 to vector<2x32xf32>
    %416 = arith.addf %414, %415 : vector<2x32xf32>
    %cst_162 = arith.constant 5.000000e-01 : f32
    %417 = vector.broadcast %cst_162 : f32 to vector<2x32xf32>
    %418 = arith.mulf %417, %416 : vector<2x32xf32>
    %419 = vector.extract_strided_slice %402 {offsets = [0, 256], sizes = [2, 32], strides = [1, 1]} : vector<2x512xf32> to vector<2x32xf32>
    %420 = math.tanh %419 : vector<2x32xf32>
    %421 = vector.extract_strided_slice %402 {offsets = [0, 384], sizes = [2, 32], strides = [1, 1]} : vector<2x512xf32> to vector<2x32xf32>
    %cst_163 = arith.constant 5.000000e-01 : f32
    %422 = vector.broadcast %cst_163 : f32 to vector<2x32xf32>
    %423 = arith.mulf %422, %421 : vector<2x32xf32>
    %424 = math.tanh %423 : vector<2x32xf32>
    %cst_164 = arith.constant 1.000000e+00 : f32
    %425 = vector.broadcast %cst_164 : f32 to vector<2x32xf32>
    %426 = arith.addf %424, %425 : vector<2x32xf32>
    %cst_165 = arith.constant 5.000000e-01 : f32
    %427 = vector.broadcast %cst_165 : f32 to vector<2x32xf32>
    %428 = arith.mulf %427, %426 : vector<2x32xf32>
    %429 = arith.mulf %418, %396 : vector<2x32xf32>
    %430 = arith.mulf %410, %420 : vector<2x32xf32>
    %431 = arith.addf %429, %430 : vector<2x32xf32>
    %432 = math.tanh %431 : vector<2x32xf32>
    %433 = arith.mulf %428, %432 : vector<2x32xf32>
    %c4_166 = arith.constant 4 : index
    %c0_167 = arith.constant 0 : index
    %c0_168 = arith.constant 0 : index
    %434 = vector.load %arg4[%c4_166, %c0_167, %c0_168] : memref<16x2x512xf32, #tpu.memory_space<vmem>>, vector<1x2x512xf32>
    %435 = vector.shape_cast %434 : vector<1x2x512xf32> to vector<2x512xf32>
    %cst_169 = arith.constant dense<0.000000e+00> : vector<2x512xf32>
    %436 = tpu.matmul %433, %105, %cst_169 {dimension_numbers = #tpu.dot_dimension_numbers<[1], [0], [0], [1], [0, 0, 1, 1], [], []>} : vector<2x32xf32>, vector<32x512xf32>, vector<2x512xf32> -> vector<2x512xf32>
    %437 = arith.addf %435, %436 : vector<2x512xf32>
    %438 = vector.extract_strided_slice %437 {offsets = [0, 0], sizes = [2, 32], strides = [1, 1]} : vector<2x512xf32> to vector<2x32xf32>
    %cst_170 = arith.constant 5.000000e-01 : f32
    %439 = vector.broadcast %cst_170 : f32 to vector<2x32xf32>
    %440 = arith.mulf %439, %438 : vector<2x32xf32>
    %441 = math.tanh %440 : vector<2x32xf32>
    %cst_171 = arith.constant 1.000000e+00 : f32
    %442 = vector.broadcast %cst_171 : f32 to vector<2x32xf32>
    %443 = arith.addf %441, %442 : vector<2x32xf32>
    %cst_172 = arith.constant 5.000000e-01 : f32
    %444 = vector.broadcast %cst_172 : f32 to vector<2x32xf32>
    %445 = arith.mulf %444, %443 : vector<2x32xf32>
    %446 = vector.extract_strided_slice %437 {offsets = [0, 128], sizes = [2, 32], strides = [1, 1]} : vector<2x512xf32> to vector<2x32xf32>
    %cst_173 = arith.constant 5.000000e-01 : f32
    %447 = vector.broadcast %cst_173 : f32 to vector<2x32xf32>
    %448 = arith.mulf %447, %446 : vector<2x32xf32>
    %449 = math.tanh %448 : vector<2x32xf32>
    %cst_174 = arith.constant 1.000000e+00 : f32
    %450 = vector.broadcast %cst_174 : f32 to vector<2x32xf32>
    %451 = arith.addf %449, %450 : vector<2x32xf32>
    %cst_175 = arith.constant 5.000000e-01 : f32
    %452 = vector.broadcast %cst_175 : f32 to vector<2x32xf32>
    %453 = arith.mulf %452, %451 : vector<2x32xf32>
    %454 = vector.extract_strided_slice %437 {offsets = [0, 256], sizes = [2, 32], strides = [1, 1]} : vector<2x512xf32> to vector<2x32xf32>
    %455 = math.tanh %454 : vector<2x32xf32>
    %456 = vector.extract_strided_slice %437 {offsets = [0, 384], sizes = [2, 32], strides = [1, 1]} : vector<2x512xf32> to vector<2x32xf32>
    %cst_176 = arith.constant 5.000000e-01 : f32
    %457 = vector.broadcast %cst_176 : f32 to vector<2x32xf32>
    %458 = arith.mulf %457, %456 : vector<2x32xf32>
    %459 = math.tanh %458 : vector<2x32xf32>
    %cst_177 = arith.constant 1.000000e+00 : f32
    %460 = vector.broadcast %cst_177 : f32 to vector<2x32xf32>
    %461 = arith.addf %459, %460 : vector<2x32xf32>
    %cst_178 = arith.constant 5.000000e-01 : f32
    %462 = vector.broadcast %cst_178 : f32 to vector<2x32xf32>
    %463 = arith.mulf %462, %461 : vector<2x32xf32>
    %464 = arith.mulf %453, %431 : vector<2x32xf32>
    %465 = arith.mulf %445, %455 : vector<2x32xf32>
    %466 = arith.addf %464, %465 : vector<2x32xf32>
    %467 = math.tanh %466 : vector<2x32xf32>
    %468 = arith.mulf %463, %467 : vector<2x32xf32>
    %c5_179 = arith.constant 5 : index
    %c0_180 = arith.constant 0 : index
    %c0_181 = arith.constant 0 : index
    %469 = vector.load %arg4[%c5_179, %c0_180, %c0_181] : memref<16x2x512xf32, #tpu.memory_space<vmem>>, vector<1x2x512xf32>
    %470 = vector.shape_cast %469 : vector<1x2x512xf32> to vector<2x512xf32>
    %cst_182 = arith.constant dense<0.000000e+00> : vector<2x512xf32>
    %471 = tpu.matmul %468, %105, %cst_182 {dimension_numbers = #tpu.dot_dimension_numbers<[1], [0], [0], [1], [0, 0, 1, 1], [], []>} : vector<2x32xf32>, vector<32x512xf32>, vector<2x512xf32> -> vector<2x512xf32>
    %472 = arith.addf %470, %471 : vector<2x512xf32>
    %473 = vector.extract_strided_slice %472 {offsets = [0, 0], sizes = [2, 32], strides = [1, 1]} : vector<2x512xf32> to vector<2x32xf32>
    %cst_183 = arith.constant 5.000000e-01 : f32
    %474 = vector.broadcast %cst_183 : f32 to vector<2x32xf32>
    %475 = arith.mulf %474, %473 : vector<2x32xf32>
    %476 = math.tanh %475 : vector<2x32xf32>
    %cst_184 = arith.constant 1.000000e+00 : f32
    %477 = vector.broadcast %cst_184 : f32 to vector<2x32xf32>
    %478 = arith.addf %476, %477 : vector<2x32xf32>
    %cst_185 = arith.constant 5.000000e-01 : f32
    %479 = vector.broadcast %cst_185 : f32 to vector<2x32xf32>
    %480 = arith.mulf %479, %478 : vector<2x32xf32>
    %481 = vector.extract_strided_slice %472 {offsets = [0, 128], sizes = [2, 32], strides = [1, 1]} : vector<2x512xf32> to vector<2x32xf32>
    %cst_186 = arith.constant 5.000000e-01 : f32
    %482 = vector.broadcast %cst_186 : f32 to vector<2x32xf32>
    %483 = arith.mulf %482, %481 : vector<2x32xf32>
    %484 = math.tanh %483 : vector<2x32xf32>
    %cst_187 = arith.constant 1.000000e+00 : f32
    %485 = vector.broadcast %cst_187 : f32 to vector<2x32xf32>
    %486 = arith.addf %484, %485 : vector<2x32xf32>
    %cst_188 = arith.constant 5.000000e-01 : f32
    %487 = vector.broadcast %cst_188 : f32 to vector<2x32xf32>
    %488 = arith.mulf %487, %486 : vector<2x32xf32>
    %489 = vector.extract_strided_slice %472 {offsets = [0, 256], sizes = [2, 32], strides = [1, 1]} : vector<2x512xf32> to vector<2x32xf32>
    %490 = math.tanh %489 : vector<2x32xf32>
    %491 = vector.extract_strided_slice %472 {offsets = [0, 384], sizes = [2, 32], strides = [1, 1]} : vector<2x512xf32> to vector<2x32xf32>
    %cst_189 = arith.constant 5.000000e-01 : f32
    %492 = vector.broadcast %cst_189 : f32 to vector<2x32xf32>
    %493 = arith.mulf %492, %491 : vector<2x32xf32>
    %494 = math.tanh %493 : vector<2x32xf32>
    %cst_190 = arith.constant 1.000000e+00 : f32
    %495 = vector.broadcast %cst_190 : f32 to vector<2x32xf32>
    %496 = arith.addf %494, %495 : vector<2x32xf32>
    %cst_191 = arith.constant 5.000000e-01 : f32
    %497 = vector.broadcast %cst_191 : f32 to vector<2x32xf32>
    %498 = arith.mulf %497, %496 : vector<2x32xf32>
    %499 = arith.mulf %488, %466 : vector<2x32xf32>
    %500 = arith.mulf %480, %490 : vector<2x32xf32>
    %501 = arith.addf %499, %500 : vector<2x32xf32>
    %502 = math.tanh %501 : vector<2x32xf32>
    %503 = arith.mulf %498, %502 : vector<2x32xf32>
    %c6_192 = arith.constant 6 : index
    %c0_193 = arith.constant 0 : index
    %c0_194 = arith.constant 0 : index
    %504 = vector.load %arg4[%c6_192, %c0_193, %c0_194] : memref<16x2x512xf32, #tpu.memory_space<vmem>>, vector<1x2x512xf32>
    %505 = vector.shape_cast %504 : vector<1x2x512xf32> to vector<2x512xf32>
    %cst_195 = arith.constant dense<0.000000e+00> : vector<2x512xf32>
    %506 = tpu.matmul %503, %105, %cst_195 {dimension_numbers = #tpu.dot_dimension_numbers<[1], [0], [0], [1], [0, 0, 1, 1], [], []>} : vector<2x32xf32>, vector<32x512xf32>, vector<2x512xf32> -> vector<2x512xf32>
    %507 = arith.addf %505, %506 : vector<2x512xf32>
    %508 = vector.extract_strided_slice %507 {offsets = [0, 0], sizes = [2, 32], strides = [1, 1]} : vector<2x512xf32> to vector<2x32xf32>
    %cst_196 = arith.constant 5.000000e-01 : f32
    %509 = vector.broadcast %cst_196 : f32 to vector<2x32xf32>
    %510 = arith.mulf %509, %508 : vector<2x32xf32>
    %511 = math.tanh %510 : vector<2x32xf32>
    %cst_197 = arith.constant 1.000000e+00 : f32
    %512 = vector.broadcast %cst_197 : f32 to vector<2x32xf32>
    %513 = arith.addf %511, %512 : vector<2x32xf32>
    %cst_198 = arith.constant 5.000000e-01 : f32
    %514 = vector.broadcast %cst_198 : f32 to vector<2x32xf32>
    %515 = arith.mulf %514, %513 : vector<2x32xf32>
    %516 = vector.extract_strided_slice %507 {offsets = [0, 128], sizes = [2, 32], strides = [1, 1]} : vector<2x512xf32> to vector<2x32xf32>
    %cst_199 = arith.constant 5.000000e-01 : f32
    %517 = vector.broadcast %cst_199 : f32 to vector<2x32xf32>
    %518 = arith.mulf %517, %516 : vector<2x32xf32>
    %519 = math.tanh %518 : vector<2x32xf32>
    %cst_200 = arith.constant 1.000000e+00 : f32
    %520 = vector.broadcast %cst_200 : f32 to vector<2x32xf32>
    %521 = arith.addf %519, %520 : vector<2x32xf32>
    %cst_201 = arith.constant 5.000000e-01 : f32
    %522 = vector.broadcast %cst_201 : f32 to vector<2x32xf32>
    %523 = arith.mulf %522, %521 : vector<2x32xf32>
    %524 = vector.extract_strided_slice %507 {offsets = [0, 256], sizes = [2, 32], strides = [1, 1]} : vector<2x512xf32> to vector<2x32xf32>
    %525 = math.tanh %524 : vector<2x32xf32>
    %526 = vector.extract_strided_slice %507 {offsets = [0, 384], sizes = [2, 32], strides = [1, 1]} : vector<2x512xf32> to vector<2x32xf32>
    %cst_202 = arith.constant 5.000000e-01 : f32
    %527 = vector.broadcast %cst_202 : f32 to vector<2x32xf32>
    %528 = arith.mulf %527, %526 : vector<2x32xf32>
    %529 = math.tanh %528 : vector<2x32xf32>
    %cst_203 = arith.constant 1.000000e+00 : f32
    %530 = vector.broadcast %cst_203 : f32 to vector<2x32xf32>
    %531 = arith.addf %529, %530 : vector<2x32xf32>
    %cst_204 = arith.constant 5.000000e-01 : f32
    %532 = vector.broadcast %cst_204 : f32 to vector<2x32xf32>
    %533 = arith.mulf %532, %531 : vector<2x32xf32>
    %534 = arith.mulf %523, %501 : vector<2x32xf32>
    %535 = arith.mulf %515, %525 : vector<2x32xf32>
    %536 = arith.addf %534, %535 : vector<2x32xf32>
    %537 = math.tanh %536 : vector<2x32xf32>
    %538 = arith.mulf %533, %537 : vector<2x32xf32>
    %c7_205 = arith.constant 7 : index
    %c0_206 = arith.constant 0 : index
    %c0_207 = arith.constant 0 : index
    %539 = vector.load %arg4[%c7_205, %c0_206, %c0_207] : memref<16x2x512xf32, #tpu.memory_space<vmem>>, vector<1x2x512xf32>
    %540 = vector.shape_cast %539 : vector<1x2x512xf32> to vector<2x512xf32>
    %cst_208 = arith.constant dense<0.000000e+00> : vector<2x512xf32>
    %541 = tpu.matmul %538, %105, %cst_208 {dimension_numbers = #tpu.dot_dimension_numbers<[1], [0], [0], [1], [0, 0, 1, 1], [], []>} : vector<2x32xf32>, vector<32x512xf32>, vector<2x512xf32> -> vector<2x512xf32>
    %542 = arith.addf %540, %541 : vector<2x512xf32>
    %543 = vector.extract_strided_slice %542 {offsets = [0, 0], sizes = [2, 32], strides = [1, 1]} : vector<2x512xf32> to vector<2x32xf32>
    %cst_209 = arith.constant 5.000000e-01 : f32
    %544 = vector.broadcast %cst_209 : f32 to vector<2x32xf32>
    %545 = arith.mulf %544, %543 : vector<2x32xf32>
    %546 = math.tanh %545 : vector<2x32xf32>
    %cst_210 = arith.constant 1.000000e+00 : f32
    %547 = vector.broadcast %cst_210 : f32 to vector<2x32xf32>
    %548 = arith.addf %546, %547 : vector<2x32xf32>
    %cst_211 = arith.constant 5.000000e-01 : f32
    %549 = vector.broadcast %cst_211 : f32 to vector<2x32xf32>
    %550 = arith.mulf %549, %548 : vector<2x32xf32>
    %551 = vector.extract_strided_slice %542 {offsets = [0, 128], sizes = [2, 32], strides = [1, 1]} : vector<2x512xf32> to vector<2x32xf32>
    %cst_212 = arith.constant 5.000000e-01 : f32
    %552 = vector.broadcast %cst_212 : f32 to vector<2x32xf32>
    %553 = arith.mulf %552, %551 : vector<2x32xf32>
    %554 = math.tanh %553 : vector<2x32xf32>
    %cst_213 = arith.constant 1.000000e+00 : f32
    %555 = vector.broadcast %cst_213 : f32 to vector<2x32xf32>
    %556 = arith.addf %554, %555 : vector<2x32xf32>
    %cst_214 = arith.constant 5.000000e-01 : f32
    %557 = vector.broadcast %cst_214 : f32 to vector<2x32xf32>
    %558 = arith.mulf %557, %556 : vector<2x32xf32>
    %559 = vector.extract_strided_slice %542 {offsets = [0, 256], sizes = [2, 32], strides = [1, 1]} : vector<2x512xf32> to vector<2x32xf32>
    %560 = math.tanh %559 : vector<2x32xf32>
    %561 = vector.extract_strided_slice %542 {offsets = [0, 384], sizes = [2, 32], strides = [1, 1]} : vector<2x512xf32> to vector<2x32xf32>
    %cst_215 = arith.constant 5.000000e-01 : f32
    %562 = vector.broadcast %cst_215 : f32 to vector<2x32xf32>
    %563 = arith.mulf %562, %561 : vector<2x32xf32>
    %564 = math.tanh %563 : vector<2x32xf32>
    %cst_216 = arith.constant 1.000000e+00 : f32
    %565 = vector.broadcast %cst_216 : f32 to vector<2x32xf32>
    %566 = arith.addf %564, %565 : vector<2x32xf32>
    %cst_217 = arith.constant 5.000000e-01 : f32
    %567 = vector.broadcast %cst_217 : f32 to vector<2x32xf32>
    %568 = arith.mulf %567, %566 : vector<2x32xf32>
    %569 = arith.mulf %558, %536 : vector<2x32xf32>
    %570 = arith.mulf %550, %560 : vector<2x32xf32>
    %571 = arith.addf %569, %570 : vector<2x32xf32>
    %572 = math.tanh %571 : vector<2x32xf32>
    %573 = arith.mulf %568, %572 : vector<2x32xf32>
    %c8_218 = arith.constant 8 : index
    %c0_219 = arith.constant 0 : index
    %c0_220 = arith.constant 0 : index
    %574 = vector.load %arg4[%c8_218, %c0_219, %c0_220] : memref<16x2x512xf32, #tpu.memory_space<vmem>>, vector<1x2x512xf32>
    %575 = vector.shape_cast %574 : vector<1x2x512xf32> to vector<2x512xf32>
    %cst_221 = arith.constant dense<0.000000e+00> : vector<2x512xf32>
    %576 = tpu.matmul %573, %105, %cst_221 {dimension_numbers = #tpu.dot_dimension_numbers<[1], [0], [0], [1], [0, 0, 1, 1], [], []>} : vector<2x32xf32>, vector<32x512xf32>, vector<2x512xf32> -> vector<2x512xf32>
    %577 = arith.addf %575, %576 : vector<2x512xf32>
    %578 = vector.extract_strided_slice %577 {offsets = [0, 0], sizes = [2, 32], strides = [1, 1]} : vector<2x512xf32> to vector<2x32xf32>
    %cst_222 = arith.constant 5.000000e-01 : f32
    %579 = vector.broadcast %cst_222 : f32 to vector<2x32xf32>
    %580 = arith.mulf %579, %578 : vector<2x32xf32>
    %581 = math.tanh %580 : vector<2x32xf32>
    %cst_223 = arith.constant 1.000000e+00 : f32
    %582 = vector.broadcast %cst_223 : f32 to vector<2x32xf32>
    %583 = arith.addf %581, %582 : vector<2x32xf32>
    %cst_224 = arith.constant 5.000000e-01 : f32
    %584 = vector.broadcast %cst_224 : f32 to vector<2x32xf32>
    %585 = arith.mulf %584, %583 : vector<2x32xf32>
    %586 = vector.extract_strided_slice %577 {offsets = [0, 128], sizes = [2, 32], strides = [1, 1]} : vector<2x512xf32> to vector<2x32xf32>
    %cst_225 = arith.constant 5.000000e-01 : f32
    %587 = vector.broadcast %cst_225 : f32 to vector<2x32xf32>
    %588 = arith.mulf %587, %586 : vector<2x32xf32>
    %589 = math.tanh %588 : vector<2x32xf32>
    %cst_226 = arith.constant 1.000000e+00 : f32
    %590 = vector.broadcast %cst_226 : f32 to vector<2x32xf32>
    %591 = arith.addf %589, %590 : vector<2x32xf32>
    %cst_227 = arith.constant 5.000000e-01 : f32
    %592 = vector.broadcast %cst_227 : f32 to vector<2x32xf32>
    %593 = arith.mulf %592, %591 : vector<2x32xf32>
    %594 = vector.extract_strided_slice %577 {offsets = [0, 256], sizes = [2, 32], strides = [1, 1]} : vector<2x512xf32> to vector<2x32xf32>
    %595 = math.tanh %594 : vector<2x32xf32>
    %596 = vector.extract_strided_slice %577 {offsets = [0, 384], sizes = [2, 32], strides = [1, 1]} : vector<2x512xf32> to vector<2x32xf32>
    %cst_228 = arith.constant 5.000000e-01 : f32
    %597 = vector.broadcast %cst_228 : f32 to vector<2x32xf32>
    %598 = arith.mulf %597, %596 : vector<2x32xf32>
    %599 = math.tanh %598 : vector<2x32xf32>
    %cst_229 = arith.constant 1.000000e+00 : f32
    %600 = vector.broadcast %cst_229 : f32 to vector<2x32xf32>
    %601 = arith.addf %599, %600 : vector<2x32xf32>
    %cst_230 = arith.constant 5.000000e-01 : f32
    %602 = vector.broadcast %cst_230 : f32 to vector<2x32xf32>
    %603 = arith.mulf %602, %601 : vector<2x32xf32>
    %604 = arith.mulf %593, %571 : vector<2x32xf32>
    %605 = arith.mulf %585, %595 : vector<2x32xf32>
    %606 = arith.addf %604, %605 : vector<2x32xf32>
    %607 = math.tanh %606 : vector<2x32xf32>
    %608 = arith.mulf %603, %607 : vector<2x32xf32>
    %c9_231 = arith.constant 9 : index
    %c0_232 = arith.constant 0 : index
    %c0_233 = arith.constant 0 : index
    %609 = vector.load %arg4[%c9_231, %c0_232, %c0_233] : memref<16x2x512xf32, #tpu.memory_space<vmem>>, vector<1x2x512xf32>
    %610 = vector.shape_cast %609 : vector<1x2x512xf32> to vector<2x512xf32>
    %cst_234 = arith.constant dense<0.000000e+00> : vector<2x512xf32>
    %611 = tpu.matmul %608, %105, %cst_234 {dimension_numbers = #tpu.dot_dimension_numbers<[1], [0], [0], [1], [0, 0, 1, 1], [], []>} : vector<2x32xf32>, vector<32x512xf32>, vector<2x512xf32> -> vector<2x512xf32>
    %612 = arith.addf %610, %611 : vector<2x512xf32>
    %613 = vector.extract_strided_slice %612 {offsets = [0, 0], sizes = [2, 32], strides = [1, 1]} : vector<2x512xf32> to vector<2x32xf32>
    %cst_235 = arith.constant 5.000000e-01 : f32
    %614 = vector.broadcast %cst_235 : f32 to vector<2x32xf32>
    %615 = arith.mulf %614, %613 : vector<2x32xf32>
    %616 = math.tanh %615 : vector<2x32xf32>
    %cst_236 = arith.constant 1.000000e+00 : f32
    %617 = vector.broadcast %cst_236 : f32 to vector<2x32xf32>
    %618 = arith.addf %616, %617 : vector<2x32xf32>
    %cst_237 = arith.constant 5.000000e-01 : f32
    %619 = vector.broadcast %cst_237 : f32 to vector<2x32xf32>
    %620 = arith.mulf %619, %618 : vector<2x32xf32>
    %621 = vector.extract_strided_slice %612 {offsets = [0, 128], sizes = [2, 32], strides = [1, 1]} : vector<2x512xf32> to vector<2x32xf32>
    %cst_238 = arith.constant 5.000000e-01 : f32
    %622 = vector.broadcast %cst_238 : f32 to vector<2x32xf32>
    %623 = arith.mulf %622, %621 : vector<2x32xf32>
    %624 = math.tanh %623 : vector<2x32xf32>
    %cst_239 = arith.constant 1.000000e+00 : f32
    %625 = vector.broadcast %cst_239 : f32 to vector<2x32xf32>
    %626 = arith.addf %624, %625 : vector<2x32xf32>
    %cst_240 = arith.constant 5.000000e-01 : f32
    %627 = vector.broadcast %cst_240 : f32 to vector<2x32xf32>
    %628 = arith.mulf %627, %626 : vector<2x32xf32>
    %629 = vector.extract_strided_slice %612 {offsets = [0, 256], sizes = [2, 32], strides = [1, 1]} : vector<2x512xf32> to vector<2x32xf32>
    %630 = math.tanh %629 : vector<2x32xf32>
    %631 = vector.extract_strided_slice %612 {offsets = [0, 384], sizes = [2, 32], strides = [1, 1]} : vector<2x512xf32> to vector<2x32xf32>
    %cst_241 = arith.constant 5.000000e-01 : f32
    %632 = vector.broadcast %cst_241 : f32 to vector<2x32xf32>
    %633 = arith.mulf %632, %631 : vector<2x32xf32>
    %634 = math.tanh %633 : vector<2x32xf32>
    %cst_242 = arith.constant 1.000000e+00 : f32
    %635 = vector.broadcast %cst_242 : f32 to vector<2x32xf32>
    %636 = arith.addf %634, %635 : vector<2x32xf32>
    %cst_243 = arith.constant 5.000000e-01 : f32
    %637 = vector.broadcast %cst_243 : f32 to vector<2x32xf32>
    %638 = arith.mulf %637, %636 : vector<2x32xf32>
    %639 = arith.mulf %628, %606 : vector<2x32xf32>
    %640 = arith.mulf %620, %630 : vector<2x32xf32>
    %641 = arith.addf %639, %640 : vector<2x32xf32>
    %642 = math.tanh %641 : vector<2x32xf32>
    %643 = arith.mulf %638, %642 : vector<2x32xf32>
    %c10_244 = arith.constant 10 : index
    %c0_245 = arith.constant 0 : index
    %c0_246 = arith.constant 0 : index
    %644 = vector.load %arg4[%c10_244, %c0_245, %c0_246] : memref<16x2x512xf32, #tpu.memory_space<vmem>>, vector<1x2x512xf32>
    %645 = vector.shape_cast %644 : vector<1x2x512xf32> to vector<2x512xf32>
    %cst_247 = arith.constant dense<0.000000e+00> : vector<2x512xf32>
    %646 = tpu.matmul %643, %105, %cst_247 {dimension_numbers = #tpu.dot_dimension_numbers<[1], [0], [0], [1], [0, 0, 1, 1], [], []>} : vector<2x32xf32>, vector<32x512xf32>, vector<2x512xf32> -> vector<2x512xf32>
    %647 = arith.addf %645, %646 : vector<2x512xf32>
    %648 = vector.extract_strided_slice %647 {offsets = [0, 0], sizes = [2, 32], strides = [1, 1]} : vector<2x512xf32> to vector<2x32xf32>
    %cst_248 = arith.constant 5.000000e-01 : f32
    %649 = vector.broadcast %cst_248 : f32 to vector<2x32xf32>
    %650 = arith.mulf %649, %648 : vector<2x32xf32>
    %651 = math.tanh %650 : vector<2x32xf32>
    %cst_249 = arith.constant 1.000000e+00 : f32
    %652 = vector.broadcast %cst_249 : f32 to vector<2x32xf32>
    %653 = arith.addf %651, %652 : vector<2x32xf32>
    %cst_250 = arith.constant 5.000000e-01 : f32
    %654 = vector.broadcast %cst_250 : f32 to vector<2x32xf32>
    %655 = arith.mulf %654, %653 : vector<2x32xf32>
    %656 = vector.extract_strided_slice %647 {offsets = [0, 128], sizes = [2, 32], strides = [1, 1]} : vector<2x512xf32> to vector<2x32xf32>
    %cst_251 = arith.constant 5.000000e-01 : f32
    %657 = vector.broadcast %cst_251 : f32 to vector<2x32xf32>
    %658 = arith.mulf %657, %656 : vector<2x32xf32>
    %659 = math.tanh %658 : vector<2x32xf32>
    %cst_252 = arith.constant 1.000000e+00 : f32
    %660 = vector.broadcast %cst_252 : f32 to vector<2x32xf32>
    %661 = arith.addf %659, %660 : vector<2x32xf32>
    %cst_253 = arith.constant 5.000000e-01 : f32
    %662 = vector.broadcast %cst_253 : f32 to vector<2x32xf32>
    %663 = arith.mulf %662, %661 : vector<2x32xf32>
    %664 = vector.extract_strided_slice %647 {offsets = [0, 256], sizes = [2, 32], strides = [1, 1]} : vector<2x512xf32> to vector<2x32xf32>
    %665 = math.tanh %664 : vector<2x32xf32>
    %666 = vector.extract_strided_slice %647 {offsets = [0, 384], sizes = [2, 32], strides = [1, 1]} : vector<2x512xf32> to vector<2x32xf32>
    %cst_254 = arith.constant 5.000000e-01 : f32
    %667 = vector.broadcast %cst_254 : f32 to vector<2x32xf32>
    %668 = arith.mulf %667, %666 : vector<2x32xf32>
    %669 = math.tanh %668 : vector<2x32xf32>
    %cst_255 = arith.constant 1.000000e+00 : f32
    %670 = vector.broadcast %cst_255 : f32 to vector<2x32xf32>
    %671 = arith.addf %669, %670 : vector<2x32xf32>
    %cst_256 = arith.constant 5.000000e-01 : f32
    %672 = vector.broadcast %cst_256 : f32 to vector<2x32xf32>
    %673 = arith.mulf %672, %671 : vector<2x32xf32>
    %674 = arith.mulf %663, %641 : vector<2x32xf32>
    %675 = arith.mulf %655, %665 : vector<2x32xf32>
    %676 = arith.addf %674, %675 : vector<2x32xf32>
    %677 = math.tanh %676 : vector<2x32xf32>
    %678 = arith.mulf %673, %677 : vector<2x32xf32>
    %c11_257 = arith.constant 11 : index
    %c0_258 = arith.constant 0 : index
    %c0_259 = arith.constant 0 : index
    %679 = vector.load %arg4[%c11_257, %c0_258, %c0_259] : memref<16x2x512xf32, #tpu.memory_space<vmem>>, vector<1x2x512xf32>
    %680 = vector.shape_cast %679 : vector<1x2x512xf32> to vector<2x512xf32>
    %cst_260 = arith.constant dense<0.000000e+00> : vector<2x512xf32>
    %681 = tpu.matmul %678, %105, %cst_260 {dimension_numbers = #tpu.dot_dimension_numbers<[1], [0], [0], [1], [0, 0, 1, 1], [], []>} : vector<2x32xf32>, vector<32x512xf32>, vector<2x512xf32> -> vector<2x512xf32>
    %682 = arith.addf %680, %681 : vector<2x512xf32>
    %683 = vector.extract_strided_slice %682 {offsets = [0, 0], sizes = [2, 32], strides = [1, 1]} : vector<2x512xf32> to vector<2x32xf32>
    %cst_261 = arith.constant 5.000000e-01 : f32
    %684 = vector.broadcast %cst_261 : f32 to vector<2x32xf32>
    %685 = arith.mulf %684, %683 : vector<2x32xf32>
    %686 = math.tanh %685 : vector<2x32xf32>
    %cst_262 = arith.constant 1.000000e+00 : f32
    %687 = vector.broadcast %cst_262 : f32 to vector<2x32xf32>
    %688 = arith.addf %686, %687 : vector<2x32xf32>
    %cst_263 = arith.constant 5.000000e-01 : f32
    %689 = vector.broadcast %cst_263 : f32 to vector<2x32xf32>
    %690 = arith.mulf %689, %688 : vector<2x32xf32>
    %691 = vector.extract_strided_slice %682 {offsets = [0, 128], sizes = [2, 32], strides = [1, 1]} : vector<2x512xf32> to vector<2x32xf32>
    %cst_264 = arith.constant 5.000000e-01 : f32
    %692 = vector.broadcast %cst_264 : f32 to vector<2x32xf32>
    %693 = arith.mulf %692, %691 : vector<2x32xf32>
    %694 = math.tanh %693 : vector<2x32xf32>
    %cst_265 = arith.constant 1.000000e+00 : f32
    %695 = vector.broadcast %cst_265 : f32 to vector<2x32xf32>
    %696 = arith.addf %694, %695 : vector<2x32xf32>
    %cst_266 = arith.constant 5.000000e-01 : f32
    %697 = vector.broadcast %cst_266 : f32 to vector<2x32xf32>
    %698 = arith.mulf %697, %696 : vector<2x32xf32>
    %699 = vector.extract_strided_slice %682 {offsets = [0, 256], sizes = [2, 32], strides = [1, 1]} : vector<2x512xf32> to vector<2x32xf32>
    %700 = math.tanh %699 : vector<2x32xf32>
    %701 = vector.extract_strided_slice %682 {offsets = [0, 384], sizes = [2, 32], strides = [1, 1]} : vector<2x512xf32> to vector<2x32xf32>
    %cst_267 = arith.constant 5.000000e-01 : f32
    %702 = vector.broadcast %cst_267 : f32 to vector<2x32xf32>
    %703 = arith.mulf %702, %701 : vector<2x32xf32>
    %704 = math.tanh %703 : vector<2x32xf32>
    %cst_268 = arith.constant 1.000000e+00 : f32
    %705 = vector.broadcast %cst_268 : f32 to vector<2x32xf32>
    %706 = arith.addf %704, %705 : vector<2x32xf32>
    %cst_269 = arith.constant 5.000000e-01 : f32
    %707 = vector.broadcast %cst_269 : f32 to vector<2x32xf32>
    %708 = arith.mulf %707, %706 : vector<2x32xf32>
    %709 = arith.mulf %698, %676 : vector<2x32xf32>
    %710 = arith.mulf %690, %700 : vector<2x32xf32>
    %711 = arith.addf %709, %710 : vector<2x32xf32>
    %712 = math.tanh %711 : vector<2x32xf32>
    %713 = arith.mulf %708, %712 : vector<2x32xf32>
    %c12_270 = arith.constant 12 : index
    %c0_271 = arith.constant 0 : index
    %c0_272 = arith.constant 0 : index
    %714 = vector.load %arg4[%c12_270, %c0_271, %c0_272] : memref<16x2x512xf32, #tpu.memory_space<vmem>>, vector<1x2x512xf32>
    %715 = vector.shape_cast %714 : vector<1x2x512xf32> to vector<2x512xf32>
    %cst_273 = arith.constant dense<0.000000e+00> : vector<2x512xf32>
    %716 = tpu.matmul %713, %105, %cst_273 {dimension_numbers = #tpu.dot_dimension_numbers<[1], [0], [0], [1], [0, 0, 1, 1], [], []>} : vector<2x32xf32>, vector<32x512xf32>, vector<2x512xf32> -> vector<2x512xf32>
    %717 = arith.addf %715, %716 : vector<2x512xf32>
    %718 = vector.extract_strided_slice %717 {offsets = [0, 0], sizes = [2, 32], strides = [1, 1]} : vector<2x512xf32> to vector<2x32xf32>
    %cst_274 = arith.constant 5.000000e-01 : f32
    %719 = vector.broadcast %cst_274 : f32 to vector<2x32xf32>
    %720 = arith.mulf %719, %718 : vector<2x32xf32>
    %721 = math.tanh %720 : vector<2x32xf32>
    %cst_275 = arith.constant 1.000000e+00 : f32
    %722 = vector.broadcast %cst_275 : f32 to vector<2x32xf32>
    %723 = arith.addf %721, %722 : vector<2x32xf32>
    %cst_276 = arith.constant 5.000000e-01 : f32
    %724 = vector.broadcast %cst_276 : f32 to vector<2x32xf32>
    %725 = arith.mulf %724, %723 : vector<2x32xf32>
    %726 = vector.extract_strided_slice %717 {offsets = [0, 128], sizes = [2, 32], strides = [1, 1]} : vector<2x512xf32> to vector<2x32xf32>
    %cst_277 = arith.constant 5.000000e-01 : f32
    %727 = vector.broadcast %cst_277 : f32 to vector<2x32xf32>
    %728 = arith.mulf %727, %726 : vector<2x32xf32>
    %729 = math.tanh %728 : vector<2x32xf32>
    %cst_278 = arith.constant 1.000000e+00 : f32
    %730 = vector.broadcast %cst_278 : f32 to vector<2x32xf32>
    %731 = arith.addf %729, %730 : vector<2x32xf32>
    %cst_279 = arith.constant 5.000000e-01 : f32
    %732 = vector.broadcast %cst_279 : f32 to vector<2x32xf32>
    %733 = arith.mulf %732, %731 : vector<2x32xf32>
    %734 = vector.extract_strided_slice %717 {offsets = [0, 256], sizes = [2, 32], strides = [1, 1]} : vector<2x512xf32> to vector<2x32xf32>
    %735 = math.tanh %734 : vector<2x32xf32>
    %736 = vector.extract_strided_slice %717 {offsets = [0, 384], sizes = [2, 32], strides = [1, 1]} : vector<2x512xf32> to vector<2x32xf32>
    %cst_280 = arith.constant 5.000000e-01 : f32
    %737 = vector.broadcast %cst_280 : f32 to vector<2x32xf32>
    %738 = arith.mulf %737, %736 : vector<2x32xf32>
    %739 = math.tanh %738 : vector<2x32xf32>
    %cst_281 = arith.constant 1.000000e+00 : f32
    %740 = vector.broadcast %cst_281 : f32 to vector<2x32xf32>
    %741 = arith.addf %739, %740 : vector<2x32xf32>
    %cst_282 = arith.constant 5.000000e-01 : f32
    %742 = vector.broadcast %cst_282 : f32 to vector<2x32xf32>
    %743 = arith.mulf %742, %741 : vector<2x32xf32>
    %744 = arith.mulf %733, %711 : vector<2x32xf32>
    %745 = arith.mulf %725, %735 : vector<2x32xf32>
    %746 = arith.addf %744, %745 : vector<2x32xf32>
    %747 = math.tanh %746 : vector<2x32xf32>
    %748 = arith.mulf %743, %747 : vector<2x32xf32>
    %c13_283 = arith.constant 13 : index
    %c0_284 = arith.constant 0 : index
    %c0_285 = arith.constant 0 : index
    %749 = vector.load %arg4[%c13_283, %c0_284, %c0_285] : memref<16x2x512xf32, #tpu.memory_space<vmem>>, vector<1x2x512xf32>
    %750 = vector.shape_cast %749 : vector<1x2x512xf32> to vector<2x512xf32>
    %cst_286 = arith.constant dense<0.000000e+00> : vector<2x512xf32>
    %751 = tpu.matmul %748, %105, %cst_286 {dimension_numbers = #tpu.dot_dimension_numbers<[1], [0], [0], [1], [0, 0, 1, 1], [], []>} : vector<2x32xf32>, vector<32x512xf32>, vector<2x512xf32> -> vector<2x512xf32>
    %752 = arith.addf %750, %751 : vector<2x512xf32>
    %753 = vector.extract_strided_slice %752 {offsets = [0, 0], sizes = [2, 32], strides = [1, 1]} : vector<2x512xf32> to vector<2x32xf32>
    %cst_287 = arith.constant 5.000000e-01 : f32
    %754 = vector.broadcast %cst_287 : f32 to vector<2x32xf32>
    %755 = arith.mulf %754, %753 : vector<2x32xf32>
    %756 = math.tanh %755 : vector<2x32xf32>
    %cst_288 = arith.constant 1.000000e+00 : f32
    %757 = vector.broadcast %cst_288 : f32 to vector<2x32xf32>
    %758 = arith.addf %756, %757 : vector<2x32xf32>
    %cst_289 = arith.constant 5.000000e-01 : f32
    %759 = vector.broadcast %cst_289 : f32 to vector<2x32xf32>
    %760 = arith.mulf %759, %758 : vector<2x32xf32>
    %761 = vector.extract_strided_slice %752 {offsets = [0, 128], sizes = [2, 32], strides = [1, 1]} : vector<2x512xf32> to vector<2x32xf32>
    %cst_290 = arith.constant 5.000000e-01 : f32
    %762 = vector.broadcast %cst_290 : f32 to vector<2x32xf32>
    %763 = arith.mulf %762, %761 : vector<2x32xf32>
    %764 = math.tanh %763 : vector<2x32xf32>
    %cst_291 = arith.constant 1.000000e+00 : f32
    %765 = vector.broadcast %cst_291 : f32 to vector<2x32xf32>
    %766 = arith.addf %764, %765 : vector<2x32xf32>
    %cst_292 = arith.constant 5.000000e-01 : f32
    %767 = vector.broadcast %cst_292 : f32 to vector<2x32xf32>
    %768 = arith.mulf %767, %766 : vector<2x32xf32>
    %769 = vector.extract_strided_slice %752 {offsets = [0, 256], sizes = [2, 32], strides = [1, 1]} : vector<2x512xf32> to vector<2x32xf32>
    %770 = math.tanh %769 : vector<2x32xf32>
    %771 = vector.extract_strided_slice %752 {offsets = [0, 384], sizes = [2, 32], strides = [1, 1]} : vector<2x512xf32> to vector<2x32xf32>
    %cst_293 = arith.constant 5.000000e-01 : f32
    %772 = vector.broadcast %cst_293 : f32 to vector<2x32xf32>
    %773 = arith.mulf %772, %771 : vector<2x32xf32>
    %774 = math.tanh %773 : vector<2x32xf32>
    %cst_294 = arith.constant 1.000000e+00 : f32
    %775 = vector.broadcast %cst_294 : f32 to vector<2x32xf32>
    %776 = arith.addf %774, %775 : vector<2x32xf32>
    %cst_295 = arith.constant 5.000000e-01 : f32
    %777 = vector.broadcast %cst_295 : f32 to vector<2x32xf32>
    %778 = arith.mulf %777, %776 : vector<2x32xf32>
    %779 = arith.mulf %768, %746 : vector<2x32xf32>
    %780 = arith.mulf %760, %770 : vector<2x32xf32>
    %781 = arith.addf %779, %780 : vector<2x32xf32>
    %782 = math.tanh %781 : vector<2x32xf32>
    %783 = arith.mulf %778, %782 : vector<2x32xf32>
    %c14_296 = arith.constant 14 : index
    %c0_297 = arith.constant 0 : index
    %c0_298 = arith.constant 0 : index
    %784 = vector.load %arg4[%c14_296, %c0_297, %c0_298] : memref<16x2x512xf32, #tpu.memory_space<vmem>>, vector<1x2x512xf32>
    %785 = vector.shape_cast %784 : vector<1x2x512xf32> to vector<2x512xf32>
    %cst_299 = arith.constant dense<0.000000e+00> : vector<2x512xf32>
    %786 = tpu.matmul %783, %105, %cst_299 {dimension_numbers = #tpu.dot_dimension_numbers<[1], [0], [0], [1], [0, 0, 1, 1], [], []>} : vector<2x32xf32>, vector<32x512xf32>, vector<2x512xf32> -> vector<2x512xf32>
    %787 = arith.addf %785, %786 : vector<2x512xf32>
    %788 = vector.extract_strided_slice %787 {offsets = [0, 0], sizes = [2, 32], strides = [1, 1]} : vector<2x512xf32> to vector<2x32xf32>
    %cst_300 = arith.constant 5.000000e-01 : f32
    %789 = vector.broadcast %cst_300 : f32 to vector<2x32xf32>
    %790 = arith.mulf %789, %788 : vector<2x32xf32>
    %791 = math.tanh %790 : vector<2x32xf32>
    %cst_301 = arith.constant 1.000000e+00 : f32
    %792 = vector.broadcast %cst_301 : f32 to vector<2x32xf32>
    %793 = arith.addf %791, %792 : vector<2x32xf32>
    %cst_302 = arith.constant 5.000000e-01 : f32
    %794 = vector.broadcast %cst_302 : f32 to vector<2x32xf32>
    %795 = arith.mulf %794, %793 : vector<2x32xf32>
    %796 = vector.extract_strided_slice %787 {offsets = [0, 128], sizes = [2, 32], strides = [1, 1]} : vector<2x512xf32> to vector<2x32xf32>
    %cst_303 = arith.constant 5.000000e-01 : f32
    %797 = vector.broadcast %cst_303 : f32 to vector<2x32xf32>
    %798 = arith.mulf %797, %796 : vector<2x32xf32>
    %799 = math.tanh %798 : vector<2x32xf32>
    %cst_304 = arith.constant 1.000000e+00 : f32
    %800 = vector.broadcast %cst_304 : f32 to vector<2x32xf32>
    %801 = arith.addf %799, %800 : vector<2x32xf32>
    %cst_305 = arith.constant 5.000000e-01 : f32
    %802 = vector.broadcast %cst_305 : f32 to vector<2x32xf32>
    %803 = arith.mulf %802, %801 : vector<2x32xf32>
    %804 = vector.extract_strided_slice %787 {offsets = [0, 256], sizes = [2, 32], strides = [1, 1]} : vector<2x512xf32> to vector<2x32xf32>
    %805 = math.tanh %804 : vector<2x32xf32>
    %806 = vector.extract_strided_slice %787 {offsets = [0, 384], sizes = [2, 32], strides = [1, 1]} : vector<2x512xf32> to vector<2x32xf32>
    %cst_306 = arith.constant 5.000000e-01 : f32
    %807 = vector.broadcast %cst_306 : f32 to vector<2x32xf32>
    %808 = arith.mulf %807, %806 : vector<2x32xf32>
    %809 = math.tanh %808 : vector<2x32xf32>
    %cst_307 = arith.constant 1.000000e+00 : f32
    %810 = vector.broadcast %cst_307 : f32 to vector<2x32xf32>
    %811 = arith.addf %809, %810 : vector<2x32xf32>
    %cst_308 = arith.constant 5.000000e-01 : f32
    %812 = vector.broadcast %cst_308 : f32 to vector<2x32xf32>
    %813 = arith.mulf %812, %811 : vector<2x32xf32>
    %814 = arith.mulf %803, %781 : vector<2x32xf32>
    %815 = arith.mulf %795, %805 : vector<2x32xf32>
    %816 = arith.addf %814, %815 : vector<2x32xf32>
    %817 = math.tanh %816 : vector<2x32xf32>
    %818 = arith.mulf %813, %817 : vector<2x32xf32>
    %c15_309 = arith.constant 15 : index
    %c0_310 = arith.constant 0 : index
    %c0_311 = arith.constant 0 : index
    %819 = vector.load %arg4[%c15_309, %c0_310, %c0_311] : memref<16x2x512xf32, #tpu.memory_space<vmem>>, vector<1x2x512xf32>
    %820 = vector.shape_cast %819 : vector<1x2x512xf32> to vector<2x512xf32>
    %cst_312 = arith.constant dense<0.000000e+00> : vector<2x512xf32>
    %821 = tpu.matmul %818, %105, %cst_312 {dimension_numbers = #tpu.dot_dimension_numbers<[1], [0], [0], [1], [0, 0, 1, 1], [], []>} : vector<2x32xf32>, vector<32x512xf32>, vector<2x512xf32> -> vector<2x512xf32>
    %822 = arith.addf %820, %821 : vector<2x512xf32>
    %823 = vector.extract_strided_slice %822 {offsets = [0, 0], sizes = [2, 32], strides = [1, 1]} : vector<2x512xf32> to vector<2x32xf32>
    %cst_313 = arith.constant 5.000000e-01 : f32
    %824 = vector.broadcast %cst_313 : f32 to vector<2x32xf32>
    %825 = arith.mulf %824, %823 : vector<2x32xf32>
    %826 = math.tanh %825 : vector<2x32xf32>
    %cst_314 = arith.constant 1.000000e+00 : f32
    %827 = vector.broadcast %cst_314 : f32 to vector<2x32xf32>
    %828 = arith.addf %826, %827 : vector<2x32xf32>
    %cst_315 = arith.constant 5.000000e-01 : f32
    %829 = vector.broadcast %cst_315 : f32 to vector<2x32xf32>
    %830 = arith.mulf %829, %828 : vector<2x32xf32>
    %831 = vector.extract_strided_slice %822 {offsets = [0, 128], sizes = [2, 32], strides = [1, 1]} : vector<2x512xf32> to vector<2x32xf32>
    %cst_316 = arith.constant 5.000000e-01 : f32
    %832 = vector.broadcast %cst_316 : f32 to vector<2x32xf32>
    %833 = arith.mulf %832, %831 : vector<2x32xf32>
    %834 = math.tanh %833 : vector<2x32xf32>
    %cst_317 = arith.constant 1.000000e+00 : f32
    %835 = vector.broadcast %cst_317 : f32 to vector<2x32xf32>
    %836 = arith.addf %834, %835 : vector<2x32xf32>
    %cst_318 = arith.constant 5.000000e-01 : f32
    %837 = vector.broadcast %cst_318 : f32 to vector<2x32xf32>
    %838 = arith.mulf %837, %836 : vector<2x32xf32>
    %839 = vector.extract_strided_slice %822 {offsets = [0, 256], sizes = [2, 32], strides = [1, 1]} : vector<2x512xf32> to vector<2x32xf32>
    %840 = math.tanh %839 : vector<2x32xf32>
    %841 = vector.extract_strided_slice %822 {offsets = [0, 384], sizes = [2, 32], strides = [1, 1]} : vector<2x512xf32> to vector<2x32xf32>
    %cst_319 = arith.constant 5.000000e-01 : f32
    %842 = vector.broadcast %cst_319 : f32 to vector<2x32xf32>
    %843 = arith.mulf %842, %841 : vector<2x32xf32>
    %844 = math.tanh %843 : vector<2x32xf32>
    %cst_320 = arith.constant 1.000000e+00 : f32
    %845 = vector.broadcast %cst_320 : f32 to vector<2x32xf32>
    %846 = arith.addf %844, %845 : vector<2x32xf32>
    %cst_321 = arith.constant 5.000000e-01 : f32
    %847 = vector.broadcast %cst_321 : f32 to vector<2x32xf32>
    %848 = arith.mulf %847, %846 : vector<2x32xf32>
    %849 = arith.mulf %838, %816 : vector<2x32xf32>
    %850 = arith.mulf %830, %840 : vector<2x32xf32>
    %851 = arith.addf %849, %850 : vector<2x32xf32>
    %852 = math.tanh %851 : vector<2x32xf32>
    %853 = arith.mulf %848, %852 : vector<2x32xf32>
    %c76 = arith.constant 76 : index
    %c0_322 = arith.constant 0 : index
    %854 = vector.load %arg2[%c76, %c0_322] : memref<141x512xf32, #tpu.memory_space<vmem>>, vector<64x3xf32>
    %c140 = arith.constant 140 : index
    %c0_323 = arith.constant 0 : index
    %855 = vector.load %arg2[%c140, %c0_323] : memref<141x512xf32, #tpu.memory_space<vmem>>, vector<1x3xf32>
    %856 = tpu.concatenate %853, %149 in 1 : vector<2x32xf32>, vector<2x32xf32> -> vector<2x64xf32>
    %cst_324 = arith.constant dense<0.000000e+00> : vector<2x3xf32>
    %857 = tpu.matmul %856, %854, %cst_324 {dimension_numbers = #tpu.dot_dimension_numbers<[1], [0], [0], [1], [0, 0, 1, 1], [], []>} : vector<2x64xf32>, vector<64x3xf32>, vector<2x3xf32> -> vector<2x3xf32>
    %858 = vector.broadcast %855 : vector<1x3xf32> to vector<2x3xf32>
    %859 = arith.addf %857, %858 : vector<2x3xf32>
    %c0_325 = arith.constant 0 : index
    %c0_326 = arith.constant 0 : index
    %860 = vector.load %arg3[%c0_325, %c0_326] : memref<2x3xf32, #tpu.memory_space<vmem>>, vector<2x3xf32>
    tpu.vector_store %arg3[%c0_325, %c0_326], %859 {strides = array<i32>} : memref<2x3xf32, #tpu.memory_space<vmem>>, vector<2x3xf32>,
    return
  }
}

</mosaic_0001>

<llo_original>
// kernel: forward.1
$region0: #{forward.1}
  #allocation0 [shape = 'u32[]', space=smem, size = 0x4, offset = 0x4, fixed_abs, tag = 'smem constant byte address 0x4 - core index']
  #allocation1 [shape = 'u32[144,128]{1,0:T(1,128)}', space=vmem, size = 0x12000, scoped, tag = 'internal scratch']
  #allocation2 [shape = 'f32[16,2,512]{2,1,0:T(2,128)}', space=vmem, size = 0x10000, scoped, tag = 'scratch operand']
  %s0 = inlined_call_operand.vmem [shape: s32[32,1], index: 0, kind: input, shape index: {}]
  %s1 = inlined_call_operand.hbm [shape: f32[90,128], index: 1, kind: input, shape index: {}]
  %s2 = inlined_call_operand.hbm [shape: f32[141,512], index: 2, kind: input, shape index: {}]
  %s3 = inlined_call_operand.hbm [shape: f32[2,3], index: 3, kind: output, shape index: {}]
  %s4 = sld [smem:[#allocation0]]
  $region30: #{forward.1} parent=0
    _
  %s6 = ssub.s32 1, %s4
  %s7 = scalar_select 0, %s6, %s4
  $region1: #{forward.1} parent=0
    #allocation3 [shape = 'u8[49152]{0}', space=vmem, size = 0xc000, scoped, tag = 'input window, operand 1, single buffered']
    #allocation4 [shape = 's32[1]{0}', space=sflag, size = 0x4, scoped, tag = 'scoped memory for forward.1']
    #allocation5 [shape = 's32[1]{0}', space=sflag, size = 0x4, scoped, tag = 'scoped memory for forward.1']
    #allocation6 [shape = 'u8[294912]{0}', space=vmem, size = 0x48000, scoped, tag = 'input window, operand 2, single buffered']
    #allocation7 [shape = 's32[1]{0}', space=sflag, size = 0x4, scoped, tag = 'scoped memory for forward.1']
    #allocation8 [shape = 'u8[1024]{0}', space=vmem, size = 0x400, scoped, tag = 'output window, operand 0, single buffered']
    %8 = vsyncpa [#allocation4], 0
    %9 = vsyncpa [#allocation7], 0
    %10 = vsyncpa [#allocation5], 0
    // Predicated region
    $region2: #{forward.1} parent=1 // pred_check
      _
    $region3: #{forward.1} parent=1 // pred_check_branch
      %12 = sbr.rel (0) target = $region5
    $region4: #{forward.1} parent=1 // pred_region
      _
    $region5: #{forward.1} parent=1 // pred_fallthru
      _
    // Predicated region
    $region6: #{forward.1} parent=1 // pred_check
      _
    $region7: #{forward.1} parent=1 // pred_check_branch
      %14 = sbr.rel (0) target = $region9
    $region8: #{forward.1} parent=1 // pred_region
      %s16 = ssub.s32 1536, 1536
      %17 = vsyncadd [#allocation4], %s16
      %s18 = sshll.u32 [#allocation3], 4
      %s19 = int_to_ptr.vmem [resolvable:$true] %s18
      %24 = dma.hbm_to_vmem [thread:$0]  %s1, 1536, %s19, [#allocation4], 128, 128, 8
    $region9: #{forward.1} parent=1 // pred_fallthru
      _
    // Predicated region
    $region10: #{forward.1} parent=1 // pred_check
      _
    $region11: #{forward.1} parent=1 // pred_check_branch
      %26 = sbr.rel (0) target = $region13
    $region12: #{forward.1} parent=1 // pred_region
      %s28 = ssub.s32 9216, 9216
      %29 = vsyncadd [#allocation7], %s28
      %s30 = sshll.u32 [#allocation6], 4
      %s31 = int_to_ptr.vmem [resolvable:$true] %s30
      %36 = dma.hbm_to_vmem [thread:$0]  %s2, 9216, %s31, [#allocation7], 512, 512, 32
    $region13: #{forward.1} parent=1 // pred_fallthru
      _
    // Predicated region
    $region14: #{forward.1} parent=1 // pred_check
      _
    $region15: #{forward.1} parent=1 // pred_check_branch
      %38 = sbr.rel (0) target = $region17
    $region16: #{forward.1} parent=1 // pred_region
      %39 = dma.done [#allocation4], 1536
    $region17: #{forward.1} parent=1 // pred_fallthru
      _
    // Predicated region
    $region18: #{forward.1} parent=1 // pred_check
      _
    $region19: #{forward.1} parent=1 // pred_check_branch
      %41 = sbr.rel (0) target = $region21
    $region20: #{forward.1} parent=1 // pred_region
      %42 = dma.done [#allocation7], 9216
    $region21: #{forward.1} parent=1 // pred_fallthru
      _
    %v43 = vld [vmem:[%s0] sm:$0xff]
    %v44 = vld [vmem:[%s0 + $0x8] sm:$0xff]
    %v45 = vld [vmem:[%s0 + $0x10] sm:$0xff]
    %v46 = vld [vmem:[%s0 + $0x18] sm:$0xff]
    %v47 = vlaneseq
    %v48 = vand.u32 %v47, 127
    %49 = vset.pattern.permute.xlu0 0
    %50 = vperm.xlu0 %49, %v43
    %v51 = vpop.permute.xlu0 %50
    %52 = vset.pattern.permute.xlu0 0
    %53 = vperm.xlu0 %52, %v44
    %v54 = vpop.permute.xlu0 %53
    %55 = vset.pattern.permute.xlu0 0
    %56 = vperm.xlu0 %55, %v45
    %v57 = vpop.permute.xlu0 %56
    %58 = vset.pattern.permute.xlu0 0
    %59 = vperm.xlu0 %58, %v46
    %v60 = vpop.permute.xlu0 %59
    %vm61 = vcmp.eq.s32.totalorder %v51, %v48
    %vm62 = vcmp.eq.s32.totalorder %v54, %v48
    %vm63 = vcmp.eq.s32.totalorder %v57, %v48
    %vm64 = vcmp.eq.s32.totalorder %v60, %v48
    %v65 = vsel %vm61, 1, 0
    %v66 = vsel %vm62, 1, 0
    %v67 = vsel %vm63, 1, 0
    %v68 = vsel %vm64, 1, 0
    %v69 = vcvt.s32.f32 %v65
    %v70 = vcvt.s32.f32 %v66
    %v71 = vcvt.s32.f32 %v67
    %v72 = vcvt.s32.f32 %v68
    %v73 = vld [vmem:[#allocation3] sm:$0xff]
    %v74 = vld [vmem:[#allocation3 + $0x8] sm:$0xff]
    %v75 = vld [vmem:[#allocation3 + $0x10] sm:$0xff]
    %v76 = vld [vmem:[#allocation3 + $0x18] sm:$0xff]
    %vm77 = vcmask 261120
    %v79 = vsel %vm77, %v69, 0
    %v82 = vsel %vm77, %v70, 0
    %v85 = vsel %vm77, %v71, 0
    %v88 = vsel %vm77, %v72, 0
    %90 = vmatprep.subr.mxu0 0.0
    %91 = vmatpush1.msra.mxu0 %v73
    %92 = vmatprep.subr.mxu0 0.0
    %93 = vmatpush1.msra.mxu0 %v74
    %94 = vmatprep.subr.mxu0 0.0
    %95 = vmatpush1.msra.mxu0 %v75
    %96 = vmatprep.subr.mxu0 0.0
    %97 = vmatpush1.msra.mxu0 %v76
    %98 = vmatprep.subr.mxu0 0.0
    %99 = vmatpush1.msra.mxu0 0.0
    %100 = vmatprep.subr.mxu0 0.0
    %101 = vmatpush1.msra.mxu0 0.0
    %102 = vmatprep.subr.mxu0 0.0
    %103 = vmatpush1.msra.mxu0 0.0
    %104 = vmatprep.subr.mxu0 0.0
    %105 = vmatpush1.msra.mxu0 0.0
    %106 = vmatprep.subr.mxu0 0.0
    %107 = vmatpush1.msra.mxu0 0.0
    %108 = vmatprep.subr.mxu0 0.0
    %109 = vmatpush1.msra.mxu0 0.0
    %110 = vmatprep.subr.mxu0 0.0
    %111 = vmatpush1.msra.mxu0 0.0
    %112 = vmatprep.subr.mxu0 0.0
    %113 = vmatpush1.msra.mxu0 0.0
    %114 = vmatprep.subr.mxu0 0.0
    %115 = vmatpush1.msra.mxu0 0.0
    %116 = vmatprep.subr.mxu0 0.0
    %117 = vmatpush1.msra.mxu0 0.0
    %118 = vmatprep.subr.mxu0 0.0
    %119 = vmatpush1.msra.mxu0 0.0
    %120 = vmatprep.subr.mxu0 0.0
    %121 = vmatpush1.msra.mxu0 0.0
    %122 = vmatprep.subr.mxu0 0.0
    %123 = vmatpush1.msra.mxu0 0.0
    %124 = vmatprep.subr.mxu0 0.0
    %125 = vmatpush1.msra.mxu0 0.0
    %126 = vmatprep.subr.mxu0 0.0
    %127 = vmatpush1.msra.mxu0 0.0
    %128 = vmatprep.subr.mxu0 0.0
    %129 = vmatpush1.msra.mxu0 0.0
    %130 = vmatprep.subr.mxu0 0.0
    %131 = vmatpush1.msra.mxu0 0.0
    %132 = vmatprep.subr.mxu0 0.0
    %133 = vmatpush1.msra.mxu0 0.0
    %134 = vmatprep.subr.mxu0 0.0
    %135 = vmatpush1.msra.mxu0 0.0
    %136 = vmatprep.subr.mxu0 0.0
    %137 = vmatpush1.msra.mxu0 0.0
    %138 = vmatprep.subr.mxu0 0.0
    %139 = vmatpush1.msra.mxu0 0.0
    %140 = vmatprep.subr.mxu0 0.0
    %141 = vmatpush1.msra.mxu0 0.0
    %142 = vmatprep.subr.mxu0 0.0
    %143 = vmatpush1.msra.mxu0 0.0
    %144 = vmatprep.subr.mxu0 0.0
    %145 = vmatpush1.msra.mxu0 0.0
    %146 = vmatprep.subr.mxu0 0.0
    %147 = vmatpush1.msra.mxu0 0.0
    %148 = vmatprep.subr.mxu0 0.0
    %149 = vmatpush1.msra.mxu0 0.0
    %150 = vmatprep.subr.mxu0 0.0
    %151 = vmatpush1.msra.mxu0 0.0
    %152 = vmatprep.subr.mxu0 0.0
    %153 = vmatpush1.msra.mxu0 0.0
    %154 = vmatprep.mubr.f32.mxu0 0.0
    %155 = vmatmul.mubr.f32.gmra.mrb[0].mxu0 %v79
    %v156 = vpop.f32.mrb[0].mxu0
    %v157 = vadd.f32 0.0, %v156
    %v158 = vpop.f32.mrb[0].mxu0
    %159 = vmatprep.mubr.f32.mxu0 0.0
    %160 = vmatmul.mubr.f32.gmra.mrb[0].mxu0 %v82
    %v161 = vpop.f32.mrb[0].mxu0
    %v162 = vadd.f32 0.0, %v161
    %v163 = vpop.f32.mrb[0].mxu0
    %164 = vmatprep.mubr.f32.mxu0 0.0
    %165 = vmatmul.mubr.f32.gmra.mrb[0].mxu0 %v85
    %v166 = vpop.f32.mrb[0].mxu0
    %v167 = vadd.f32 0.0, %v166
    %v168 = vpop.f32.mrb[0].mxu0
    %169 = vmatprep.mubr.f32.mxu0 0.0
    %170 = vmatmul.mubr.f32.gmra.mrb[0].mxu0 %v88
    %v171 = vpop.f32.mrb[0].mxu0
    %v172 = vadd.f32 0.0, %v171
    %v173 = vpop.f32.mrb[0].mxu0
    %174 = vdwg.mxu0
    %v175 = vld [vmem:[#allocation3 + $0x20] sm:$0xff]
    %v176 = vld [vmem:[#allocation3 + $0x28] sm:$0xff]
    %vm179 = vcmask 1046528
    %v180 = vrot.slane %v157, 1
    %v181 = vrot.slane %v162, 1
    %v182 = vsel %vm179, %v180, %v181
    %vm183 = vcmask 64512
    %v184 = vsel %vm183, %v182, 0
    %v186 = vsel %vm183, %v181, 0
    %188 = vmatprep.subr.mxu0 0.0
    %189 = vmatpush1.msra.mxu0 %v176
    %190 = vmatprep.subr.mxu0 0.0
    %191 = vmatpush1.msra.mxu0 0.0
    %192 = vmatprep.subr.mxu0 0.0
    %193 = vmatpush1.msra.mxu0 0.0
    %194 = vmatprep.subr.mxu0 0.0
    %195 = vmatpush1.msra.mxu0 0.0
    %196 = vmatprep.subr.mxu0 0.0
    %197 = vmatpush1.msra.mxu0 0.0
    %198 = vmatprep.subr.mxu0 0.0
    %199 = vmatpush1.msra.mxu0 0.0
    %200 = vmatprep.subr.mxu0 0.0
    %201 = vmatpush1.msra.mxu0 0.0
    %202 = vmatprep.subr.mxu0 0.0
    %203 = vmatpush1.msra.mxu0 0.0
    %204 = vmatprep.subr.mxu0 0.0
    %205 = vmatpush1.msra.mxu0 0.0
    %206 = vmatprep.subr.mxu0 0.0
    %207 = vmatpush1.msra.mxu0 0.0
    %208 = vmatprep.subr.mxu0 0.0
    %209 = vmatpush1.msra.mxu0 0.0
    %210 = vmatprep.subr.mxu0 0.0
    %211 = vmatpush1.msra.mxu0 0.0
    %212 = vmatprep.subr.mxu0 0.0
    %213 = vmatpush1.msra.mxu0 0.0
    %214 = vmatprep.subr.mxu0 0.0
    %215 = vmatpush1.msra.mxu0 0.0
    %216 = vmatprep.subr.mxu0 0.0
    %217 = vmatpush1.msra.mxu0 0.0
    %218 = vmatprep.subr.mxu0 0.0
    %219 = vmatpush1.msra.mxu0 0.0
    %220 = vmatprep.subr.mxu0 0.0
    %221 = vmatpush1.msra.mxu0 0.0
    %222 = vmatprep.subr.mxu0 0.0
    %223 = vmatpush1.msra.mxu0 0.0
    %224 = vmatprep.subr.mxu0 0.0
    %225 = vmatpush1.msra.mxu0 0.0
    %226 = vmatprep.subr.mxu0 0.0
    %227 = vmatpush1.msra.mxu0 0.0
    %228 = vmatprep.subr.mxu0 0.0
    %229 = vmatpush1.msra.mxu0 0.0
    %230 = vmatprep.subr.mxu0 0.0
    %231 = vmatpush1.msra.mxu0 0.0
    %232 = vmatprep.subr.mxu0 0.0
    %233 = vmatpush1.msra.mxu0 0.0
    %234 = vmatprep.subr.mxu0 0.0
    %235 = vmatpush1.msra.mxu0 0.0
    %236 = vmatprep.subr.mxu0 0.0
    %237 = vmatpush1.msra.mxu0 0.0
    %238 = vmatprep.subr.mxu0 0.0
    %239 = vmatpush1.msra.mxu0 0.0
    %240 = vmatprep.subr.mxu0 0.0
    %241 = vmatpush1.msra.mxu0 0.0
    %242 = vmatprep.subr.mxu0 0.0
    %243 = vmatpush1.msra.mxu0 0.0
    %244 = vmatprep.subr.mxu0 0.0
    %245 = vmatpush1.msra.mxu0 0.0
    %246 = vmatprep.subr.mxu0 0.0
    %247 = vmatpush1.msra.mxu0 0.0
    %248 = vmatprep.subr.mxu0 0.0
    %249 = vmatpush1.msra.mxu0 0.0
    %250 = vmatprep.subr.mxu0 0.0
    %251 = vmatpush1.msra.mxu0 0.0
    %252 = vmatprep.mubr.f32.mxu0 0.0
    %253 = vmatmul.mubr.f32.gmra.mrb[0].mxu0 %v184
    %v254 = vpop.f32.mrb[0].mxu0
    %v255 = vadd.f32 0.0, %v254
    %v256 = vpop.f32.mrb[0].mxu0
    %257 = vmatprep.mubr.f32.mxu0 0.0
    %258 = vmatmul.mubr.f32.gmra.mrb[0].mxu0 %v186
    %v259 = vpop.f32.mrb[0].mxu0
    %v260 = vadd.f32 0.0, %v259
    %v261 = vpop.f32.mrb[0].mxu0
    %262 = vdwg.mxu0
    %v263 = vsel %vm183, %v157, 0
    %v265 = vsel %vm183, %v162, 0
    %267 = vmatprep.subr.mxu0 0.0
    %268 = vmatpush1.msra.mxu0 %v175
    %269 = vmatprep.subr.mxu0 0.0
    %270 = vmatpush1.msra.mxu0 0.0
    %271 = vmatprep.subr.mxu0 0.0
    %272 = vmatpush1.msra.mxu0 0.0
    %273 = vmatprep.subr.mxu0 0.0
    %274 = vmatpush1.msra.mxu0 0.0
    %275 = vmatprep.subr.mxu0 0.0
    %276 = vmatpush1.msra.mxu0 0.0
    %277 = vmatprep.subr.mxu0 0.0
    %278 = vmatpush1.msra.mxu0 0.0
    %279 = vmatprep.subr.mxu0 0.0
    %280 = vmatpush1.msra.mxu0 0.0
    %281 = vmatprep.subr.mxu0 0.0
    %282 = vmatpush1.msra.mxu0 0.0
    %283 = vmatprep.subr.mxu0 0.0
    %284 = vmatpush1.msra.mxu0 0.0
    %285 = vmatprep.subr.mxu0 0.0
    %286 = vmatpush1.msra.mxu0 0.0
    %287 = vmatprep.subr.mxu0 0.0
    %288 = vmatpush1.msra.mxu0 0.0
    %289 = vmatprep.subr.mxu0 0.0
    %290 = vmatpush1.msra.mxu0 0.0
    %291 = vmatprep.subr.mxu0 0.0
    %292 = vmatpush1.msra.mxu0 0.0
    %293 = vmatprep.subr.mxu0 0.0
    %294 = vmatpush1.msra.mxu0 0.0
    %295 = vmatprep.subr.mxu0 0.0
    %296 = vmatpush1.msra.mxu0 0.0
    %297 = vmatprep.subr.mxu0 0.0
    %298 = vmatpush1.msra.mxu0 0.0
    %299 = vmatprep.subr.mxu0 0.0
    %300 = vmatpush1.msra.mxu0 0.0
    %301 = vmatprep.subr.mxu0 0.0
    %302 = vmatpush1.msra.mxu0 0.0
    %303 = vmatprep.subr.mxu0 0.0
    %304 = vmatpush1.msra.mxu0 0.0
    %305 = vmatprep.subr.mxu0 0.0
    %306 = vmatpush1.msra.mxu0 0.0
    %307 = vmatprep.subr.mxu0 0.0
    %308 = vmatpush1.msra.mxu0 0.0
    %309 = vmatprep.subr.mxu0 0.0
    %310 = vmatpush1.msra.mxu0 0.0
    %311 = vmatprep.subr.mxu0 0.0
    %312 = vmatpush1.msra.mxu0 0.0
    %313 = vmatprep.subr.mxu0 0.0
    %314 = vmatpush1.msra.mxu0 0.0
    %315 = vmatprep.subr.mxu0 0.0
    %316 = vmatpush1.msra.mxu0 0.0
    %317 = vmatprep.subr.mxu0 0.0
    %318 = vmatpush1.msra.mxu0 0.0
    %319 = vmatprep.subr.mxu0 0.0
    %320 = vmatpush1.msra.mxu0 0.0
    %321 = vmatprep.subr.mxu0 0.0
    %322 = vmatpush1.msra.mxu0 0.0
    %323 = vmatprep.subr.mxu0 0.0
    %324 = vmatpush1.msra.mxu0 0.0
    %325 = vmatprep.subr.mxu0 0.0
    %326 = vmatpush1.msra.mxu0 0.0
    %327 = vmatprep.subr.mxu0 0.0
    %328 = vmatpush1.msra.mxu0 0.0
    %329 = vmatprep.subr.mxu0 0.0
    %330 = vmatpush1.msra.mxu0 0.0
    %331 = vmatprep.mubr.f32.mxu0 0.0
    %332 = vmatmul.mubr.f32.gmra.mrb[0].mxu0 %v263
    %v333 = vpop.f32.mrb[0].mxu0
    %v334 = vadd.f32 %v255, %v333
    %v335 = vpop.f32.mrb[0].mxu0
    %336 = vmatprep.mubr.f32.mxu0 0.0
    %337 = vmatmul.mubr.f32.gmra.mrb[0].mxu0 %v265
    %v338 = vpop.f32.mrb[0].mxu0
    %v339 = vadd.f32 %v260, %v338
    %v340 = vpop.f32.mrb[0].mxu0
    %341 = vdwg.mxu0
    %v342 = vld [vmem:[#allocation3 + $0x30] sm:$0xff]
    %vm343 = vcmask 1045504
    %v344 = vrot.slane %v157, 2
    %v345 = vrot.slane %v162, 2
    %v346 = vsel %vm343, %v344, %v345
    %v347 = vsel %vm183, %v346, 0
    %v349 = vsel %vm183, %v345, 0
    %351 = vmatprep.subr.mxu0 0.0
    %352 = vmatpush1.msra.mxu0 %v342
    %353 = vmatprep.subr.mxu0 0.0
    %354 = vmatpush1.msra.mxu0 0.0
    %355 = vmatprep.subr.mxu0 0.0
    %356 = vmatpush1.msra.mxu0 0.0
    %357 = vmatprep.subr.mxu0 0.0
    %358 = vmatpush1.msra.mxu0 0.0
    %359 = vmatprep.subr.mxu0 0.0
    %360 = vmatpush1.msra.mxu0 0.0
    %361 = vmatprep.subr.mxu0 0.0
    %362 = vmatpush1.msra.mxu0 0.0
    %363 = vmatprep.subr.mxu0 0.0
    %364 = vmatpush1.msra.mxu0 0.0
    %365 = vmatprep.subr.mxu0 0.0
    %366 = vmatpush1.msra.mxu0 0.0
    %367 = vmatprep.subr.mxu0 0.0
    %368 = vmatpush1.msra.mxu0 0.0
    %369 = vmatprep.subr.mxu0 0.0
    %370 = vmatpush1.msra.mxu0 0.0
    %371 = vmatprep.subr.mxu0 0.0
    %372 = vmatpush1.msra.mxu0 0.0
    %373 = vmatprep.subr.mxu0 0.0
    %374 = vmatpush1.msra.mxu0 0.0
    %375 = vmatprep.subr.mxu0 0.0
    %376 = vmatpush1.msra.mxu0 0.0
    %377 = vmatprep.subr.mxu0 0.0
    %378 = vmatpush1.msra.mxu0 0.0
    %379 = vmatprep.subr.mxu0 0.0
    %380 = vmatpush1.msra.mxu0 0.0
    %381 = vmatprep.subr.mxu0 0.0
    %382 = vmatpush1.msra.mxu0 0.0
    %383 = vmatprep.subr.mxu0 0.0
    %384 = vmatpush1.msra.mxu0 0.0
    %385 = vmatprep.subr.mxu0 0.0
    %386 = vmatpush1.msra.mxu0 0.0
    %387 = vmatprep.subr.mxu0 0.0
    %388 = vmatpush1.msra.mxu0 0.0
    %389 = vmatprep.subr.mxu0 0.0
    %390 = vmatpush1.msra.mxu0 0.0
    %391 = vmatprep.subr.mxu0 0.0
    %392 = vmatpush1.msra.mxu0 0.0
    %393 = vmatprep.subr.mxu0 0.0
    %394 = vmatpush1.msra.mxu0 0.0
    %395 = vmatprep.subr.mxu0 0.0
    %396 = vmatpush1.msra.mxu0 0.0
    %397 = vmatprep.subr.mxu0 0.0
    %398 = vmatpush1.msra.mxu0 0.0
    %399 = vmatprep.subr.mxu0 0.0
    %400 = vmatpush1.msra.mxu0 0.0
    %401 = vmatprep.subr.mxu0 0.0
    %402 = vmatpush1.msra.mxu0 0.0
    %403 = vmatprep.subr.mxu0 0.0
    %404 = vmatpush1.msra.mxu0 0.0
    %405 = vmatprep.subr.mxu0 0.0
    %406 = vmatpush1.msra.mxu0 0.0
    %407 = vmatprep.subr.mxu0 0.0
    %408 = vmatpush1.msra.mxu0 0.0
    %409 = vmatprep.subr.mxu0 0.0
    %410 = vmatpush1.msra.mxu0 0.0
    %411 = vmatprep.subr.mxu0 0.0
    %412 = vmatpush1.msra.mxu0 0.0
    %413 = vmatprep.subr.mxu0 0.0
    %414 = vmatpush1.msra.mxu0 0.0
    %415 = vmatprep.mubr.f32.mxu0 0.0
    %416 = vmatmul.mubr.f32.gmra.mrb[0].mxu0 %v347
    %v417 = vpop.f32.mrb[0].mxu0
    %v418 = vadd.f32 0.0, %v417
    %v419 = vpop.f32.mrb[0].mxu0
    %420 = vmatprep.mubr.f32.mxu0 0.0
    %421 = vmatmul.mubr.f32.gmra.mrb[0].mxu0 %v349
    %v422 = vpop.f32.mrb[0].mxu0
    %v423 = vadd.f32 0.0, %v422
    %v424 = vpop.f32.mrb[0].mxu0
    %425 = vdwg.mxu0
    %v426 = vadd.f32 %v334, %v418
    %v427 = vadd.f32 %v339, %v423
    %v428 = vld [vmem:[#allocation3 + $0x38] sm:$0x1]
    %v429 = vlaneseq
    %v430 = vshrl.u32 %v429, 7
    %v431 = vsub.s32 0, %v430
    %v432 = vrot.slane %v428, %v431
    %v433 = vadd.f32 %v426, %v432
    %v434 = vadd.f32 %v427, %v432
    %v435 = vmax.f32 %v433, 0.0
    %v436 = vmax.f32 %v434, 0.0
    %v437 = vsel %vm183, %v435, -inf
    %vm438 = vcmask 62464
    %v439 = vsel %vm438, %v436, -inf
    %v440 = vmax.f32 %v437, %v439
    %v441 = vrot.slane %v440, 4
    %v442 = vmax.f32 %v440, %v441
    %v443 = vrot.slane %v442, 2
    %v444 = vmax.f32 %v442, %v443
    %v445 = vrot.slane %v444, 1
    %v446 = vmax.f32 %v444, %v445
    %v447 = vld [vmem:[#allocation3 + $0x39] sm:$0xff]
    %v448 = vld [vmem:[#allocation3 + $0x41] sm:$0xff]
    %449 = vmatprep.subr.mxu0 0.0
    %450 = vmatpush1.msra.mxu0 %v448
    %451 = vmatprep.subr.mxu0 0.0
    %452 = vmatpush1.msra.mxu0 0.0
    %453 = vmatprep.subr.mxu0 0.0
    %454 = vmatpush1.msra.mxu0 0.0
    %455 = vmatprep.subr.mxu0 0.0
    %456 = vmatpush1.msra.mxu0 0.0
    %457 = vmatprep.subr.mxu0 0.0
    %458 = vmatpush1.msra.mxu0 0.0
    %459 = vmatprep.subr.mxu0 0.0
    %460 = vmatpush1.msra.mxu0 0.0
    %461 = vmatprep.subr.mxu0 0.0
    %462 = vmatpush1.msra.mxu0 0.0
    %463 = vmatprep.subr.mxu0 0.0
    %464 = vmatpush1.msra.mxu0 0.0
    %465 = vmatprep.subr.mxu0 0.0
    %466 = vmatpush1.msra.mxu0 0.0
    %467 = vmatprep.subr.mxu0 0.0
    %468 = vmatpush1.msra.mxu0 0.0
    %469 = vmatprep.subr.mxu0 0.0
    %470 = vmatpush1.msra.mxu0 0.0
    %471 = vmatprep.subr.mxu0 0.0
    %472 = vmatpush1.msra.mxu0 0.0
    %473 = vmatprep.subr.mxu0 0.0
    %474 = vmatpush1.msra.mxu0 0.0
    %475 = vmatprep.subr.mxu0 0.0
    %476 = vmatpush1.msra.mxu0 0.0
    %477 = vmatprep.subr.mxu0 0.0
    %478 = vmatpush1.msra.mxu0 0.0
    %479 = vmatprep.subr.mxu0 0.0
    %480 = vmatpush1.msra.mxu0 0.0
    %481 = vmatprep.subr.mxu0 0.0
    %482 = vmatpush1.msra.mxu0 0.0
    %483 = vmatprep.subr.mxu0 0.0
    %484 = vmatpush1.msra.mxu0 0.0
    %485 = vmatprep.subr.mxu0 0.0
    %486 = vmatpush1.msra.mxu0 0.0
    %487 = vmatprep.subr.mxu0 0.0
    %488 = vmatpush1.msra.mxu0 0.0
    %489 = vmatprep.subr.mxu0 0.0
    %490 = vmatpush1.msra.mxu0 0.0
    %491 = vmatprep.subr.mxu0 0.0
    %492 = vmatpush1.msra.mxu0 0.0
    %493 = vmatprep.subr.mxu0 0.0
    %494 = vmatpush1.msra.mxu0 0.0
    %495 = vmatprep.subr.mxu0 0.0
    %496 = vmatpush1.msra.mxu0 0.0
    %497 = vmatprep.subr.mxu0 0.0
    %498 = vmatpush1.msra.mxu0 0.0
    %499 = vmatprep.subr.mxu0 0.0
    %500 = vmatpush1.msra.mxu0 0.0
    %501 = vmatprep.subr.mxu0 0.0
    %502 = vmatpush1.msra.mxu0 0.0
    %503 = vmatprep.subr.mxu0 0.0
    %504 = vmatpush1.msra.mxu0 0.0
    %505 = vmatprep.subr.mxu0 0.0
    %506 = vmatpush1.msra.mxu0 0.0
    %507 = vmatprep.subr.mxu0 0.0
    %508 = vmatpush1.msra.mxu0 0.0
    %509 = vmatprep.subr.mxu0 0.0
    %510 = vmatpush1.msra.mxu0 0.0
    %511 = vmatprep.subr.mxu0 0.0
    %512 = vmatpush1.msra.mxu0 0.0
    %513 = vmatprep.mubr.f32.mxu0 0.0
    %514 = vmatmul.mubr.f32.gmra.mrb[0].mxu0 %v184
    %v515 = vpop.f32.mrb[0].mxu0
    %v516 = vadd.f32 0.0, %v515
    %v517 = vpop.f32.mrb[0].mxu0
    %518 = vmatprep.mubr.f32.mxu0 0.0
    %519 = vmatmul.mubr.f32.gmra.mrb[0].mxu0 %v186
    %v520 = vpop.f32.mrb[0].mxu0
    %v521 = vadd.f32 0.0, %v520
    %v522 = vpop.f32.mrb[0].mxu0
    %523 = vdwg.mxu0
    %524 = vmatprep.subr.mxu0 0.0
    %525 = vmatpush1.msra.mxu0 %v447
    %526 = vmatprep.subr.mxu0 0.0
    %527 = vmatpush1.msra.mxu0 0.0
    %528 = vmatprep.subr.mxu0 0.0
    %529 = vmatpush1.msra.mxu0 0.0
    %530 = vmatprep.subr.mxu0 0.0
    %531 = vmatpush1.msra.mxu0 0.0
    %532 = vmatprep.subr.mxu0 0.0
    %533 = vmatpush1.msra.mxu0 0.0
    %534 = vmatprep.subr.mxu0 0.0
    %535 = vmatpush1.msra.mxu0 0.0
    %536 = vmatprep.subr.mxu0 0.0
    %537 = vmatpush1.msra.mxu0 0.0
    %538 = vmatprep.subr.mxu0 0.0
    %539 = vmatpush1.msra.mxu0 0.0
    %540 = vmatprep.subr.mxu0 0.0
    %541 = vmatpush1.msra.mxu0 0.0
    %542 = vmatprep.subr.mxu0 0.0
    %543 = vmatpush1.msra.mxu0 0.0
    %544 = vmatprep.subr.mxu0 0.0
    %545 = vmatpush1.msra.mxu0 0.0
    %546 = vmatprep.subr.mxu0 0.0
    %547 = vmatpush1.msra.mxu0 0.0
    %548 = vmatprep.subr.mxu0 0.0
    %549 = vmatpush1.msra.mxu0 0.0
    %550 = vmatprep.subr.mxu0 0.0
    %551 = vmatpush1.msra.mxu0 0.0
    %552 = vmatprep.subr.mxu0 0.0
    %553 = vmatpush1.msra.mxu0 0.0
    %554 = vmatprep.subr.mxu0 0.0
    %555 = vmatpush1.msra.mxu0 0.0
    %556 = vmatprep.subr.mxu0 0.0
    %557 = vmatpush1.msra.mxu0 0.0
    %558 = vmatprep.subr.mxu0 0.0
    %559 = vmatpush1.msra.mxu0 0.0
    %560 = vmatprep.subr.mxu0 0.0
    %561 = vmatpush1.msra.mxu0 0.0
    %562 = vmatprep.subr.mxu0 0.0
    %563 = vmatpush1.msra.mxu0 0.0
    %564 = vmatprep.subr.mxu0 0.0
    %565 = vmatpush1.msra.mxu0 0.0
    %566 = vmatprep.subr.mxu0 0.0
    %567 = vmatpush1.msra.mxu0 0.0
    %568 = vmatprep.subr.mxu0 0.0
    %569 = vmatpush1.msra.mxu0 0.0
    %570 = vmatprep.subr.mxu0 0.0
    %571 = vmatpush1.msra.mxu0 0.0
    %572 = vmatprep.subr.mxu0 0.0
    %573 = vmatpush1.msra.mxu0 0.0
    %574 = vmatprep.subr.mxu0 0.0
    %575 = vmatpush1.msra.mxu0 0.0
    %576 = vmatprep.subr.mxu0 0.0
    %577 = vmatpush1.msra.mxu0 0.0
    %578 = vmatprep.subr.mxu0 0.0
    %579 = vmatpush1.msra.mxu0 0.0
    %580 = vmatprep.subr.mxu0 0.0
    %581 = vmatpush1.msra.mxu0 0.0
    %582 = vmatprep.subr.mxu0 0.0
    %583 = vmatpush1.msra.mxu0 0.0
    %584 = vmatprep.subr.mxu0 0.0
    %585 = vmatpush1.msra.mxu0 0.0
    %586 = vmatprep.subr.mxu0 0.0
    %587 = vmatpush1.msra.mxu0 0.0
    %588 = vmatprep.mubr.f32.mxu0 0.0
    %589 = vmatmul.mubr.f32.gmra.mrb[0].mxu0 %v263
    %v590 = vpop.f32.mrb[0].mxu0
    %v591 = vadd.f32 %v516, %v590
    %v592 = vpop.f32.mrb[0].mxu0
    %593 = vmatprep.mubr.f32.mxu0 0.0
    %594 = vmatmul.mubr.f32.gmra.mrb[0].mxu0 %v265
    %v595 = vpop.f32.mrb[0].mxu0
    %v596 = vadd.f32 %v521, %v595
    %v597 = vpop.f32.mrb[0].mxu0
    %598 = vdwg.mxu0
    %v599 = vld [vmem:[#allocation3 + $0x49] sm:$0xff]
    %600 = vmatprep.subr.mxu0 0.0
    %601 = vmatpush1.msra.mxu0 %v599
    %602 = vmatprep.subr.mxu0 0.0
    %603 = vmatpush1.msra.mxu0 0.0
    %604 = vmatprep.subr.mxu0 0.0
    %605 = vmatpush1.msra.mxu0 0.0
    %606 = vmatprep.subr.mxu0 0.0
    %607 = vmatpush1.msra.mxu0 0.0
    %608 = vmatprep.subr.mxu0 0.0
    %609 = vmatpush1.msra.mxu0 0.0
    %610 = vmatprep.subr.mxu0 0.0
    %611 = vmatpush1.msra.mxu0 0.0
    %612 = vmatprep.subr.mxu0 0.0
    %613 = vmatpush1.msra.mxu0 0.0
    %614 = vmatprep.subr.mxu0 0.0
    %615 = vmatpush1.msra.mxu0 0.0
    %616 = vmatprep.subr.mxu0 0.0
    %617 = vmatpush1.msra.mxu0 0.0
    %618 = vmatprep.subr.mxu0 0.0
    %619 = vmatpush1.msra.mxu0 0.0
    %620 = vmatprep.subr.mxu0 0.0
    %621 = vmatpush1.msra.mxu0 0.0
    %622 = vmatprep.subr.mxu0 0.0
    %623 = vmatpush1.msra.mxu0 0.0
    %624 = vmatprep.subr.mxu0 0.0
    %625 = vmatpush1.msra.mxu0 0.0
    %626 = vmatprep.subr.mxu0 0.0
    %627 = vmatpush1.msra.mxu0 0.0
    %628 = vmatprep.subr.mxu0 0.0
    %629 = vmatpush1.msra.mxu0 0.0
    %630 = vmatprep.subr.mxu0 0.0
    %631 = vmatpush1.msra.mxu0 0.0
    %632 = vmatprep.subr.mxu0 0.0
    %633 = vmatpush1.msra.mxu0 0.0
    %634 = vmatprep.subr.mxu0 0.0
    %635 = vmatpush1.msra.mxu0 0.0
    %636 = vmatprep.subr.mxu0 0.0
    %637 = vmatpush1.msra.mxu0 0.0
    %638 = vmatprep.subr.mxu0 0.0
    %639 = vmatpush1.msra.mxu0 0.0
    %640 = vmatprep.subr.mxu0 0.0
    %641 = vmatpush1.msra.mxu0 0.0
    %642 = vmatprep.subr.mxu0 0.0
    %643 = vmatpush1.msra.mxu0 0.0
    %644 = vmatprep.subr.mxu0 0.0
    %645 = vmatpush1.msra.mxu0 0.0
    %646 = vmatprep.subr.mxu0 0.0
    %647 = vmatpush1.msra.mxu0 0.0
    %648 = vmatprep.subr.mxu0 0.0
    %649 = vmatpush1.msra.mxu0 0.0
    %650 = vmatprep.subr.mxu0 0.0
    %651 = vmatpush1.msra.mxu0 0.0
    %652 = vmatprep.subr.mxu0 0.0
    %653 = vmatpush1.msra.mxu0 0.0
    %654 = vmatprep.subr.mxu0 0.0
    %655 = vmatpush1.msra.mxu0 0.0
    %656 = vmatprep.subr.mxu0 0.0
    %657 = vmatpush1.msra.mxu0 0.0
    %658 = vmatprep.subr.mxu0 0.0
    %659 = vmatpush1.msra.mxu0 0.0
    %660 = vmatprep.subr.mxu0 0.0
    %661 = vmatpush1.msra.mxu0 0.0
    %662 = vmatprep.subr.mxu0 0.0
    %663 = vmatpush1.msra.mxu0 0.0
    %664 = vmatprep.mubr.f32.mxu0 0.0
    %665 = vmatmul.mubr.f32.gmra.mrb[0].mxu0 %v347
    %v666 = vpop.f32.mrb[0].mxu0
    %v667 = vadd.f32 0.0, %v666
    %v668 = vpop.f32.mrb[0].mxu0
    %669 = vmatprep.mubr.f32.mxu0 0.0
    %670 = vmatmul.mubr.f32.gmra.mrb[0].mxu0 %v349
    %v671 = vpop.f32.mrb[0].mxu0
    %v672 = vadd.f32 0.0, %v671
    %v673 = vpop.f32.mrb[0].mxu0
    %674 = vdwg.mxu0
    %v675 = vadd.f32 %v591, %v667
    %v676 = vadd.f32 %v596, %v672
    %v677 = vld [vmem:[#allocation3 + $0x51] sm:$0xff]
    %vm678 = vcmask 1044480
    %v679 = vrot.slane %v157, 3
    %v680 = vrot.slane %v162, 3
    %v681 = vsel %vm678, %v679, %v680
    %v682 = vsel %vm183, %v681, 0
    %v684 = vsel %vm183, %v680, 0
    %686 = vmatprep.subr.mxu0 0.0
    %687 = vmatpush1.msra.mxu0 %v677
    %688 = vmatprep.subr.mxu0 0.0
    %689 = vmatpush1.msra.mxu0 0.0
    %690 = vmatprep.subr.mxu0 0.0
    %691 = vmatpush1.msra.mxu0 0.0
    %692 = vmatprep.subr.mxu0 0.0
    %693 = vmatpush1.msra.mxu0 0.0
    %694 = vmatprep.subr.mxu0 0.0
    %695 = vmatpush1.msra.mxu0 0.0
    %696 = vmatprep.subr.mxu0 0.0
    %697 = vmatpush1.msra.mxu0 0.0
    %698 = vmatprep.subr.mxu0 0.0
    %699 = vmatpush1.msra.mxu0 0.0
    %700 = vmatprep.subr.mxu0 0.0
    %701 = vmatpush1.msra.mxu0 0.0
    %702 = vmatprep.subr.mxu0 0.0
    %703 = vmatpush1.msra.mxu0 0.0
    %704 = vmatprep.subr.mxu0 0.0
    %705 = vmatpush1.msra.mxu0 0.0
    %706 = vmatprep.subr.mxu0 0.0
    %707 = vmatpush1.msra.mxu0 0.0
    %708 = vmatprep.subr.mxu0 0.0
    %709 = vmatpush1.msra.mxu0 0.0
    %710 = vmatprep.subr.mxu0 0.0
    %711 = vmatpush1.msra.mxu0 0.0
    %712 = vmatprep.subr.mxu0 0.0
    %713 = vmatpush1.msra.mxu0 0.0
    %714 = vmatprep.subr.mxu0 0.0
    %715 = vmatpush1.msra.mxu0 0.0
    %716 = vmatprep.subr.mxu0 0.0
    %717 = vmatpush1.msra.mxu0 0.0
    %718 = vmatprep.subr.mxu0 0.0
    %719 = vmatpush1.msra.mxu0 0.0
    %720 = vmatprep.subr.mxu0 0.0
    %721 = vmatpush1.msra.mxu0 0.0
    %722 = vmatprep.subr.mxu0 0.0
    %723 = vmatpush1.msra.mxu0 0.0
    %724 = vmatprep.subr.mxu0 0.0
    %725 = vmatpush1.msra.mxu0 0.0
    %726 = vmatprep.subr.mxu0 0.0
    %727 = vmatpush1.msra.mxu0 0.0
    %728 = vmatprep.subr.mxu0 0.0
    %729 = vmatpush1.msra.mxu0 0.0
    %730 = vmatprep.subr.mxu0 0.0
    %731 = vmatpush1.msra.mxu0 0.0
    %732 = vmatprep.subr.mxu0 0.0
    %733 = vmatpush1.msra.mxu0 0.0
    %734 = vmatprep.subr.mxu0 0.0
    %735 = vmatpush1.msra.mxu0 0.0
    %736 = vmatprep.subr.mxu0 0.0
    %737 = vmatpush1.msra.mxu0 0.0
    %738 = vmatprep.subr.mxu0 0.0
    %739 = vmatpush1.msra.mxu0 0.0
    %740 = vmatprep.subr.mxu0 0.0
    %741 = vmatpush1.msra.mxu0 0.0
    %742 = vmatprep.subr.mxu0 0.0
    %743 = vmatpush1.msra.mxu0 0.0
    %744 = vmatprep.subr.mxu0 0.0
    %745 = vmatpush1.msra.mxu0 0.0
    %746 = vmatprep.subr.mxu0 0.0
    %747 = vmatpush1.msra.mxu0 0.0
    %748 = vmatprep.subr.mxu0 0.0
    %749 = vmatpush1.msra.mxu0 0.0
    %750 = vmatprep.mubr.f32.mxu0 0.0
    %751 = vmatmul.mubr.f32.gmra.mrb[0].mxu0 %v682
    %v752 = vpop.f32.mrb[0].mxu0
    %v753 = vadd.f32 0.0, %v752
    %v754 = vpop.f32.mrb[0].mxu0
    %755 = vmatprep.mubr.f32.mxu0 0.0
    %756 = vmatmul.mubr.f32.gmra.mrb[0].mxu0 %v684
    %v757 = vpop.f32.mrb[0].mxu0
    %v758 = vadd.f32 0.0, %v757
    %v759 = vpop.f32.mrb[0].mxu0
    %760 = vdwg.mxu0
    %v761 = vadd.f32 %v675, %v753
    %v762 = vadd.f32 %v676, %v758
    %v763 = vld [vmem:[#allocation3 + $0x59] sm:$0x1]
    %v764 = vlaneseq
    %v765 = vshrl.u32 %v764, 7
    %v766 = vsub.s32 0, %v765
    %v767 = vrot.slane %v763, %v766
    %v768 = vadd.f32 %v761, %v767
    %v769 = vadd.f32 %v762, %v767
    %v770 = vmax.f32 %v768, 0.0
    %v771 = vmax.f32 %v769, 0.0
    %v772 = vsel %vm183, %v770, -inf
    %vm773 = vcmask 61440
    %v774 = vsel %vm773, %v771, -inf
    %v775 = vmax.f32 %v772, %v774
    %v776 = vrot.slane %v775, 4
    %v777 = vmax.f32 %v775, %v776
    %v778 = vrot.slane %v777, 2
    %v779 = vmax.f32 %v777, %v778
    %v780 = vrot.slane %v779, 1
    %v781 = vmax.f32 %v779, %v780
    %783 = vrot.lane.b32.xlu0 %v781, 8
    %v784 = vpop.permute.xlu0 %783
    %v786 = vsel %vm183, %v446, %v784
    %v789 = vrot.slane %v167, 1
    %v790 = vrot.slane %v172, 1
    %v791 = vsel %vm179, %v789, %v790
    %v792 = vsel %vm183, %v791, 0
    %v794 = vsel %vm183, %v790, 0
    %796 = vmatprep.subr.mxu0 0.0
    %797 = vmatpush1.msra.mxu0 %v176
    %798 = vmatprep.subr.mxu0 0.0
    %799 = vmatpush1.msra.mxu0 0.0
    %800 = vmatprep.subr.mxu0 0.0
    %801 = vmatpush1.msra.mxu0 0.0
    %802 = vmatprep.subr.mxu0 0.0
    %803 = vmatpush1.msra.mxu0 0.0
    %804 = vmatprep.subr.mxu0 0.0
    %805 = vmatpush1.msra.mxu0 0.0
    %806 = vmatprep.subr.mxu0 0.0
    %807 = vmatpush1.msra.mxu0 0.0
    %808 = vmatprep.subr.mxu0 0.0
    %809 = vmatpush1.msra.mxu0 0.0
    %810 = vmatprep.subr.mxu0 0.0
    %811 = vmatpush1.msra.mxu0 0.0
    %812 = vmatprep.subr.mxu0 0.0
    %813 = vmatpush1.msra.mxu0 0.0
    %814 = vmatprep.subr.mxu0 0.0
    %815 = vmatpush1.msra.mxu0 0.0
    %816 = vmatprep.subr.mxu0 0.0
    %817 = vmatpush1.msra.mxu0 0.0
    %818 = vmatprep.subr.mxu0 0.0
    %819 = vmatpush1.msra.mxu0 0.0
    %820 = vmatprep.subr.mxu0 0.0
    %821 = vmatpush1.msra.mxu0 0.0
    %822 = vmatprep.subr.mxu0 0.0
    %823 = vmatpush1.msra.mxu0 0.0
    %824 = vmatprep.subr.mxu0 0.0
    %825 = vmatpush1.msra.mxu0 0.0
    %826 = vmatprep.subr.mxu0 0.0
    %827 = vmatpush1.msra.mxu0 0.0
    %828 = vmatprep.subr.mxu0 0.0
    %829 = vmatpush1.msra.mxu0 0.0
    %830 = vmatprep.subr.mxu0 0.0
    %831 = vmatpush1.msra.mxu0 0.0
    %832 = vmatprep.subr.mxu0 0.0
    %833 = vmatpush1.msra.mxu0 0.0
    %834 = vmatprep.subr.mxu0 0.0
    %835 = vmatpush1.msra.mxu0 0.0
    %836 = vmatprep.subr.mxu0 0.0
    %837 = vmatpush1.msra.mxu0 0.0
    %838 = vmatprep.subr.mxu0 0.0
    %839 = vmatpush1.msra.mxu0 0.0
    %840 = vmatprep.subr.mxu0 0.0
    %841 = vmatpush1.msra.mxu0 0.0
    %842 = vmatprep.subr.mxu0 0.0
    %843 = vmatpush1.msra.mxu0 0.0
    %844 = vmatprep.subr.mxu0 0.0
    %845 = vmatpush1.msra.mxu0 0.0
    %846 = vmatprep.subr.mxu0 0.0
    %847 = vmatpush1.msra.mxu0 0.0
    %848 = vmatprep.subr.mxu0 0.0
    %849 = vmatpush1.msra.mxu0 0.0
    %850 = vmatprep.subr.mxu0 0.0
    %851 = vmatpush1.msra.mxu0 0.0
    %852 = vmatprep.subr.mxu0 0.0
    %853 = vmatpush1.msra.mxu0 0.0
    %854 = vmatprep.subr.mxu0 0.0
    %855 = vmatpush1.msra.mxu0 0.0
    %856 = vmatprep.subr.mxu0 0.0
    %857 = vmatpush1.msra.mxu0 0.0
    %858 = vmatprep.subr.mxu0 0.0
    %859 = vmatpush1.msra.mxu0 0.0
    %860 = vmatprep.mubr.f32.mxu0 0.0
    %861 = vmatmul.mubr.f32.gmra.mrb[0].mxu0 %v792
    %v862 = vpop.f32.mrb[0].mxu0
    %v863 = vadd.f32 0.0, %v862
    %v864 = vpop.f32.mrb[0].mxu0
    %865 = vmatprep.mubr.f32.mxu0 0.0
    %866 = vmatmul.mubr.f32.gmra.mrb[0].mxu0 %v794
    %v867 = vpop.f32.mrb[0].mxu0
    %v868 = vadd.f32 0.0, %v867
    %v869 = vpop.f32.mrb[0].mxu0
    %870 = vdwg.mxu0
    %v871 = vsel %vm183, %v167, 0
    %v873 = vsel %vm183, %v172, 0
    %875 = vmatprep.subr.mxu0 0.0
    %876 = vmatpush1.msra.mxu0 %v175
    %877 = vmatprep.subr.mxu0 0.0
    %878 = vmatpush1.msra.mxu0 0.0
    %879 = vmatprep.subr.mxu0 0.0
    %880 = vmatpush1.msra.mxu0 0.0
    %881 = vmatprep.subr.mxu0 0.0
    %882 = vmatpush1.msra.mxu0 0.0
    %883 = vmatprep.subr.mxu0 0.0
    %884 = vmatpush1.msra.mxu0 0.0
    %885 = vmatprep.subr.mxu0 0.0
    %886 = vmatpush1.msra.mxu0 0.0
    %887 = vmatprep.subr.mxu0 0.0
    %888 = vmatpush1.msra.mxu0 0.0
    %889 = vmatprep.subr.mxu0 0.0
    %890 = vmatpush1.msra.mxu0 0.0
    %891 = vmatprep.subr.mxu0 0.0
    %892 = vmatpush1.msra.mxu0 0.0
    %893 = vmatprep.subr.mxu0 0.0
    %894 = vmatpush1.msra.mxu0 0.0
    %895 = vmatprep.subr.mxu0 0.0
    %896 = vmatpush1.msra.mxu0 0.0
    %897 = vmatprep.subr.mxu0 0.0
    %898 = vmatpush1.msra.mxu0 0.0
    %899 = vmatprep.subr.mxu0 0.0
    %900 = vmatpush1.msra.mxu0 0.0
    %901 = vmatprep.subr.mxu0 0.0
    %902 = vmatpush1.msra.mxu0 0.0
    %903 = vmatprep.subr.mxu0 0.0
    %904 = vmatpush1.msra.mxu0 0.0
    %905 = vmatprep.subr.mxu0 0.0
    %906 = vmatpush1.msra.mxu0 0.0
    %907 = vmatprep.subr.mxu0 0.0
    %908 = vmatpush1.msra.mxu0 0.0
    %909 = vmatprep.subr.mxu0 0.0
    %910 = vmatpush1.msra.mxu0 0.0
    %911 = vmatprep.subr.mxu0 0.0
    %912 = vmatpush1.msra.mxu0 0.0
    %913 = vmatprep.subr.mxu0 0.0
    %914 = vmatpush1.msra.mxu0 0.0
    %915 = vmatprep.subr.mxu0 0.0
    %916 = vmatpush1.msra.mxu0 0.0
    %917 = vmatprep.subr.mxu0 0.0
    %918 = vmatpush1.msra.mxu0 0.0
    %919 = vmatprep.subr.mxu0 0.0
    %920 = vmatpush1.msra.mxu0 0.0
    %921 = vmatprep.subr.mxu0 0.0
    %922 = vmatpush1.msra.mxu0 0.0
    %923 = vmatprep.subr.mxu0 0.0
    %924 = vmatpush1.msra.mxu0 0.0
    %925 = vmatprep.subr.mxu0 0.0
    %926 = vmatpush1.msra.mxu0 0.0
    %927 = vmatprep.subr.mxu0 0.0
    %928 = vmatpush1.msra.mxu0 0.0
    %929 = vmatprep.subr.mxu0 0.0
    %930 = vmatpush1.msra.mxu0 0.0
    %931 = vmatprep.subr.mxu0 0.0
    %932 = vmatpush1.msra.mxu0 0.0
    %933 = vmatprep.subr.mxu0 0.0
    %934 = vmatpush1.msra.mxu0 0.0
    %935 = vmatprep.subr.mxu0 0.0
    %936 = vmatpush1.msra.mxu0 0.0
    %937 = vmatprep.subr.mxu0 0.0
    %938 = vmatpush1.msra.mxu0 0.0
    %939 = vmatprep.mubr.f32.mxu0 0.0
    %940 = vmatmul.mubr.f32.gmra.mrb[0].mxu0 %v871
    %v941 = vpop.f32.mrb[0].mxu0
    %v942 = vadd.f32 %v863, %v941
    %v943 = vpop.f32.mrb[0].mxu0
    %944 = vmatprep.mubr.f32.mxu0 0.0
    %945 = vmatmul.mubr.f32.gmra.mrb[0].mxu0 %v873
    %v946 = vpop.f32.mrb[0].mxu0
    %v947 = vadd.f32 %v868, %v946
    %v948 = vpop.f32.mrb[0].mxu0
    %949 = vdwg.mxu0
    %v950 = vrot.slane %v167, 2
    %v951 = vrot.slane %v172, 2
    %v952 = vsel %vm343, %v950, %v951
    %v953 = vsel %vm183, %v952, 0
    %v955 = vsel %vm183, %v951, 0
    %957 = vmatprep.subr.mxu0 0.0
    %958 = vmatpush1.msra.mxu0 %v342
    %959 = vmatprep.subr.mxu0 0.0
    %960 = vmatpush1.msra.mxu0 0.0
    %961 = vmatprep.subr.mxu0 0.0
    %962 = vmatpush1.msra.mxu0 0.0
    %963 = vmatprep.subr.mxu0 0.0
    %964 = vmatpush1.msra.mxu0 0.0
    %965 = vmatprep.subr.mxu0 0.0
    %966 = vmatpush1.msra.mxu0 0.0
    %967 = vmatprep.subr.mxu0 0.0
    %968 = vmatpush1.msra.mxu0 0.0
    %969 = vmatprep.subr.mxu0 0.0
    %970 = vmatpush1.msra.mxu0 0.0
    %971 = vmatprep.subr.mxu0 0.0
    %972 = vmatpush1.msra.mxu0 0.0
    %973 = vmatprep.subr.mxu0 0.0
    %974 = vmatpush1.msra.mxu0 0.0
    %975 = vmatprep.subr.mxu0 0.0
    %976 = vmatpush1.msra.mxu0 0.0
    %977 = vmatprep.subr.mxu0 0.0
    %978 = vmatpush1.msra.mxu0 0.0
    %979 = vmatprep.subr.mxu0 0.0
    %980 = vmatpush1.msra.mxu0 0.0
    %981 = vmatprep.subr.mxu0 0.0
    %982 = vmatpush1.msra.mxu0 0.0
    %983 = vmatprep.subr.mxu0 0.0
    %984 = vmatpush1.msra.mxu0 0.0
    %985 = vmatprep.subr.mxu0 0.0
    %986 = vmatpush1.msra.mxu0 0.0
    %987 = vmatprep.subr.mxu0 0.0
    %988 = vmatpush1.msra.mxu0 0.0
    %989 = vmatprep.subr.mxu0 0.0
    %990 = vmatpush1.msra.mxu0 0.0
    %991 = vmatprep.subr.mxu0 0.0
    %992 = vmatpush1.msra.mxu0 0.0
    %993 = vmatprep.subr.mxu0 0.0
    %994 = vmatpush1.msra.mxu0 0.0
    %995 = vmatprep.subr.mxu0 0.0
    %996 = vmatpush1.msra.mxu0 0.0
    %997 = vmatprep.subr.mxu0 0.0
    %998 = vmatpush1.msra.mxu0 0.0
    %999 = vmatprep.subr.mxu0 0.0
    %1000 = vmatpush1.msra.mxu0 0.0
    %1001 = vmatprep.subr.mxu0 0.0
    %1002 = vmatpush1.msra.mxu0 0.0
    %1003 = vmatprep.subr.mxu0 0.0
    %1004 = vmatpush1.msra.mxu0 0.0
    %1005 = vmatprep.subr.mxu0 0.0
    %1006 = vmatpush1.msra.mxu0 0.0
    %1007 = vmatprep.subr.mxu0 0.0
    %1008 = vmatpush1.msra.mxu0 0.0
    %1009 = vmatprep.subr.mxu0 0.0
    %1010 = vmatpush1.msra.mxu0 0.0
    %1011 = vmatprep.subr.mxu0 0.0
    %1012 = vmatpush1.msra.mxu0 0.0
    %1013 = vmatprep.subr.mxu0 0.0
    %1014 = vmatpush1.msra.mxu0 0.0
    %1015 = vmatprep.subr.mxu0 0.0
    %1016 = vmatpush1.msra.mxu0 0.0
    %1017 = vmatprep.subr.mxu0 0.0
    %1018 = vmatpush1.msra.mxu0 0.0
    %1019 = vmatprep.subr.mxu0 0.0
    %1020 = vmatpush1.msra.mxu0 0.0
    %1021 = vmatprep.mubr.f32.mxu0 0.0
    %1022 = vmatmul.mubr.f32.gmra.mrb[0].mxu0 %v953
    %v1023 = vpop.f32.mrb[0].mxu0
    %v1024 = vadd.f32 0.0, %v1023
    %v1025 = vpop.f32.mrb[0].mxu0
    %1026 = vmatprep.mubr.f32.mxu0 0.0
    %1027 = vmatmul.mubr.f32.gmra.mrb[0].mxu0 %v955
    %v1028 = vpop.f32.mrb[0].mxu0
    %v1029 = vadd.f32 0.0, %v1028
    %v1030 = vpop.f32.mrb[0].mxu0
    %1031 = vdwg.mxu0
    %v1032 = vadd.f32 %v942, %v1024
    %v1033 = vadd.f32 %v947, %v1029
    %v1034 = vadd.f32 %v1032, %v432
    %v1035 = vadd.f32 %v1033, %v432
    %v1036 = vmax.f32 %v1034, 0.0
    %v1037 = vmax.f32 %v1035, 0.0
    %v1038 = vsel %vm183, %v1036, -inf
    %v1039 = vsel %vm438, %v1037, -inf
    %v1040 = vmax.f32 %v1038, %v1039
    %v1041 = vrot.slane %v1040, 4
    %v1042 = vmax.f32 %v1040, %v1041
    %v1043 = vrot.slane %v1042, 2
    %v1044 = vmax.f32 %v1042, %v1043
    %v1045 = vrot.slane %v1044, 1
    %v1046 = vmax.f32 %v1044, %v1045
    %1047 = vmatprep.subr.mxu0 0.0
    %1048 = vmatpush1.msra.mxu0 %v448
    %1049 = vmatprep.subr.mxu0 0.0
    %1050 = vmatpush1.msra.mxu0 0.0
    %1051 = vmatprep.subr.mxu0 0.0
    %1052 = vmatpush1.msra.mxu0 0.0
    %1053 = vmatprep.subr.mxu0 0.0
    %1054 = vmatpush1.msra.mxu0 0.0
    %1055 = vmatprep.subr.mxu0 0.0
    %1056 = vmatpush1.msra.mxu0 0.0
    %1057 = vmatprep.subr.mxu0 0.0
    %1058 = vmatpush1.msra.mxu0 0.0
    %1059 = vmatprep.subr.mxu0 0.0
    %1060 = vmatpush1.msra.mxu0 0.0
    %1061 = vmatprep.subr.mxu0 0.0
    %1062 = vmatpush1.msra.mxu0 0.0
    %1063 = vmatprep.subr.mxu0 0.0
    %1064 = vmatpush1.msra.mxu0 0.0
    %1065 = vmatprep.subr.mxu0 0.0
    %1066 = vmatpush1.msra.mxu0 0.0
    %1067 = vmatprep.subr.mxu0 0.0
    %1068 = vmatpush1.msra.mxu0 0.0
    %1069 = vmatprep.subr.mxu0 0.0
    %1070 = vmatpush1.msra.mxu0 0.0
    %1071 = vmatprep.subr.mxu0 0.0
    %1072 = vmatpush1.msra.mxu0 0.0
    %1073 = vmatprep.subr.mxu0 0.0
    %1074 = vmatpush1.msra.mxu0 0.0
    %1075 = vmatprep.subr.mxu0 0.0
    %1076 = vmatpush1.msra.mxu0 0.0
    %1077 = vmatprep.subr.mxu0 0.0
    %1078 = vmatpush1.msra.mxu0 0.0
    %1079 = vmatprep.subr.mxu0 0.0
    %1080 = vmatpush1.msra.mxu0 0.0
    %1081 = vmatprep.subr.mxu0 0.0
    %1082 = vmatpush1.msra.mxu0 0.0
    %1083 = vmatprep.subr.mxu0 0.0
    %1084 = vmatpush1.msra.mxu0 0.0
    %1085 = vmatprep.subr.mxu0 0.0
    %1086 = vmatpush1.msra.mxu0 0.0
    %1087 = vmatprep.subr.mxu0 0.0
    %1088 = vmatpush1.msra.mxu0 0.0
    %1089 = vmatprep.subr.mxu0 0.0
    %1090 = vmatpush1.msra.mxu0 0.0
    %1091 = vmatprep.subr.mxu0 0.0
    %1092 = vmatpush1.msra.mxu0 0.0
    %1093 = vmatprep.subr.mxu0 0.0
    %1094 = vmatpush1.msra.mxu0 0.0
    %1095 = vmatprep.subr.mxu0 0.0
    %1096 = vmatpush1.msra.mxu0 0.0
    %1097 = vmatprep.subr.mxu0 0.0
    %1098 = vmatpush1.msra.mxu0 0.0
    %1099 = vmatprep.subr.mxu0 0.0
    %1100 = vmatpush1.msra.mxu0 0.0
    %1101 = vmatprep.subr.mxu0 0.0
    %1102 = vmatpush1.msra.mxu0 0.0
    %1103 = vmatprep.subr.mxu0 0.0
    %1104 = vmatpush1.msra.mxu0 0.0
    %1105 = vmatprep.subr.mxu0 0.0
    %1106 = vmatpush1.msra.mxu0 0.0
    %1107 = vmatprep.subr.mxu0 0.0
    %1108 = vmatpush1.msra.mxu0 0.0
    %1109 = vmatprep.subr.mxu0 0.0
    %1110 = vmatpush1.msra.mxu0 0.0
    %1111 = vmatprep.mubr.f32.mxu0 0.0
    %1112 = vmatmul.mubr.f32.gmra.mrb[0].mxu0 %v792
    %v1113 = vpop.f32.mrb[0].mxu0
    %v1114 = vadd.f32 0.0, %v1113
    %v1115 = vpop.f32.mrb[0].mxu0
    %1116 = vmatprep.mubr.f32.mxu0 0.0
    %1117 = vmatmul.mubr.f32.gmra.mrb[0].mxu0 %v794
    %v1118 = vpop.f32.mrb[0].mxu0
    %v1119 = vadd.f32 0.0, %v1118
    %v1120 = vpop.f32.mrb[0].mxu0
    %1121 = vdwg.mxu0
    %1122 = vmatprep.subr.mxu0 0.0
    %1123 = vmatpush1.msra.mxu0 %v447
    %1124 = vmatprep.subr.mxu0 0.0
    %1125 = vmatpush1.msra.mxu0 0.0
    %1126 = vmatprep.subr.mxu0 0.0
    %1127 = vmatpush1.msra.mxu0 0.0
    %1128 = vmatprep.subr.mxu0 0.0
    %1129 = vmatpush1.msra.mxu0 0.0
    %1130 = vmatprep.subr.mxu0 0.0
    %1131 = vmatpush1.msra.mxu0 0.0
    %1132 = vmatprep.subr.mxu0 0.0
    %1133 = vmatpush1.msra.mxu0 0.0
    %1134 = vmatprep.subr.mxu0 0.0
    %1135 = vmatpush1.msra.mxu0 0.0
    %1136 = vmatprep.subr.mxu0 0.0
    %1137 = vmatpush1.msra.mxu0 0.0
    %1138 = vmatprep.subr.mxu0 0.0
    %1139 = vmatpush1.msra.mxu0 0.0
    %1140 = vmatprep.subr.mxu0 0.0
    %1141 = vmatpush1.msra.mxu0 0.0
    %1142 = vmatprep.subr.mxu0 0.0
    %1143 = vmatpush1.msra.mxu0 0.0
    %1144 = vmatprep.subr.mxu0 0.0
    %1145 = vmatpush1.msra.mxu0 0.0
    %1146 = vmatprep.subr.mxu0 0.0
    %1147 = vmatpush1.msra.mxu0 0.0
    %1148 = vmatprep.subr.mxu0 0.0
    %1149 = vmatpush1.msra.mxu0 0.0
    %1150 = vmatprep.subr.mxu0 0.0
    %1151 = vmatpush1.msra.mxu0 0.0
    %1152 = vmatprep.subr.mxu0 0.0
    %1153 = vmatpush1.msra.mxu0 0.0
    %1154 = vmatprep.subr.mxu0 0.0
    %1155 = vmatpush1.msra.mxu0 0.0
    %1156 = vmatprep.subr.mxu0 0.0
    %1157 = vmatpush1.msra.mxu0 0.0
    %1158 = vmatprep.subr.mxu0 0.0
    %1159 = vmatpush1.msra.mxu0 0.0
    %1160 = vmatprep.subr.mxu0 0.0
    %1161 = vmatpush1.msra.mxu0 0.0
    %1162 = vmatprep.subr.mxu0 0.0
    %1163 = vmatpush1.msra.mxu0 0.0
    %1164 = vmatprep.subr.mxu0 0.0
    %1165 = vmatpush1.msra.mxu0 0.0
    %1166 = vmatprep.subr.mxu0 0.0
    %1167 = vmatpush1.msra.mxu0 0.0
    %1168 = vmatprep.subr.mxu0 0.0
    %1169 = vmatpush1.msra.mxu0 0.0
    %1170 = vmatprep.subr.mxu0 0.0
    %1171 = vmatpush1.msra.mxu0 0.0
    %1172 = vmatprep.subr.mxu0 0.0
    %1173 = vmatpush1.msra.mxu0 0.0
    %1174 = vmatprep.subr.mxu0 0.0
    %1175 = vmatpush1.msra.mxu0 0.0
    %1176 = vmatprep.subr.mxu0 0.0
    %1177 = vmatpush1.msra.mxu0 0.0
    %1178 = vmatprep.subr.mxu0 0.0
    %1179 = vmatpush1.msra.mxu0 0.0
    %1180 = vmatprep.subr.mxu0 0.0
    %1181 = vmatpush1.msra.mxu0 0.0
    %1182 = vmatprep.subr.mxu0 0.0
    %1183 = vmatpush1.msra.mxu0 0.0
    %1184 = vmatprep.subr.mxu0 0.0
    %1185 = vmatpush1.msra.mxu0 0.0
    %1186 = vmatprep.mubr.f32.mxu0 0.0
    %1187 = vmatmul.mubr.f32.gmra.mrb[0].mxu0 %v871
    %v1188 = vpop.f32.mrb[0].mxu0
    %v1189 = vadd.f32 %v1114, %v1188
    %v1190 = vpop.f32.mrb[0].mxu0
    %1191 = vmatprep.mubr.f32.mxu0 0.0
    %1192 = vmatmul.mubr.f32.gmra.mrb[0].mxu0 %v873
    %v1193 = vpop.f32.mrb[0].mxu0
    %v1194 = vadd.f32 %v1119, %v1193
    %v1195 = vpop.f32.mrb[0].mxu0
    %1196 = vdwg.mxu0
    %1197 = vmatprep.subr.mxu0 0.0
    %1198 = vmatpush1.msra.mxu0 %v599
    %1199 = vmatprep.subr.mxu0 0.0
    %1200 = vmatpush1.msra.mxu0 0.0
    %1201 = vmatprep.subr.mxu0 0.0
    %1202 = vmatpush1.msra.mxu0 0.0
    %1203 = vmatprep.subr.mxu0 0.0
    %1204 = vmatpush1.msra.mxu0 0.0
    %1205 = vmatprep.subr.mxu0 0.0
    %1206 = vmatpush1.msra.mxu0 0.0
    %1207 = vmatprep.subr.mxu0 0.0
    %1208 = vmatpush1.msra.mxu0 0.0
    %1209 = vmatprep.subr.mxu0 0.0
    %1210 = vmatpush1.msra.mxu0 0.0
    %1211 = vmatprep.subr.mxu0 0.0
    %1212 = vmatpush1.msra.mxu0 0.0
    %1213 = vmatprep.subr.mxu0 0.0
    %1214 = vmatpush1.msra.mxu0 0.0
    %1215 = vmatprep.subr.mxu0 0.0
    %1216 = vmatpush1.msra.mxu0 0.0
    %1217 = vmatprep.subr.mxu0 0.0
    %1218 = vmatpush1.msra.mxu0 0.0
    %1219 = vmatprep.subr.mxu0 0.0
    %1220 = vmatpush1.msra.mxu0 0.0
    %1221 = vmatprep.subr.mxu0 0.0
    %1222 = vmatpush1.msra.mxu0 0.0
    %1223 = vmatprep.subr.mxu0 0.0
    %1224 = vmatpush1.msra.mxu0 0.0
    %1225 = vmatprep.subr.mxu0 0.0
    %1226 = vmatpush1.msra.mxu0 0.0
    %1227 = vmatprep.subr.mxu0 0.0
    %1228 = vmatpush1.msra.mxu0 0.0
    %1229 = vmatprep.subr.mxu0 0.0
    %1230 = vmatpush1.msra.mxu0 0.0
    %1231 = vmatprep.subr.mxu0 0.0
    %1232 = vmatpush1.msra.mxu0 0.0
    %1233 = vmatprep.subr.mxu0 0.0
    %1234 = vmatpush1.msra.mxu0 0.0
    %1235 = vmatprep.subr.mxu0 0.0
    %1236 = vmatpush1.msra.mxu0 0.0
    %1237 = vmatprep.subr.mxu0 0.0
    %1238 = vmatpush1.msra.mxu0 0.0
    %1239 = vmatprep.subr.mxu0 0.0
    %1240 = vmatpush1.msra.mxu0 0.0
    %1241 = vmatprep.subr.mxu0 0.0
    %1242 = vmatpush1.msra.mxu0 0.0
    %1243 = vmatprep.subr.mxu0 0.0
    %1244 = vmatpush1.msra.mxu0 0.0
    %1245 = vmatprep.subr.mxu0 0.0
    %1246 = vmatpush1.msra.mxu0 0.0
    %1247 = vmatprep.subr.mxu0 0.0
    %1248 = vmatpush1.msra.mxu0 0.0
    %1249 = vmatprep.subr.mxu0 0.0
    %1250 = vmatpush1.msra.mxu0 0.0
    %1251 = vmatprep.subr.mxu0 0.0
    %1252 = vmatpush1.msra.mxu0 0.0
    %1253 = vmatprep.subr.mxu0 0.0
    %1254 = vmatpush1.msra.mxu0 0.0
    %1255 = vmatprep.subr.mxu0 0.0
    %1256 = vmatpush1.msra.mxu0 0.0
    %1257 = vmatprep.subr.mxu0 0.0
    %1258 = vmatpush1.msra.mxu0 0.0
    %1259 = vmatprep.subr.mxu0 0.0
    %1260 = vmatpush1.msra.mxu0 0.0
    %1261 = vmatprep.mubr.f32.mxu0 0.0
    %1262 = vmatmul.mubr.f32.gmra.mrb[0].mxu0 %v953
    %v1263 = vpop.f32.mrb[0].mxu0
    %v1264 = vadd.f32 0.0, %v1263
    %v1265 = vpop.f32.mrb[0].mxu0
    %1266 = vmatprep.mubr.f32.mxu0 0.0
    %1267 = vmatmul.mubr.f32.gmra.mrb[0].mxu0 %v955
    %v1268 = vpop.f32.mrb[0].mxu0
    %v1269 = vadd.f32 0.0, %v1268
    %v1270 = vpop.f32.mrb[0].mxu0
    %1271 = vdwg.mxu0
    %v1272 = vadd.f32 %v1189, %v1264
    %v1273 = vadd.f32 %v1194, %v1269
    %v1274 = vrot.slane %v167, 3
    %v1275 = vrot.slane %v172, 3
    %v1276 = vsel %vm678, %v1274, %v1275
    %v1277 = vsel %vm183, %v1276, 0
    %v1279 = vsel %vm183, %v1275, 0
    %1281 = vmatprep.subr.mxu0 0.0
    %1282 = vmatpush1.msra.mxu0 %v677
    %1283 = vmatprep.subr.mxu0 0.0
    %1284 = vmatpush1.msra.mxu0 0.0
    %1285 = vmatprep.subr.mxu0 0.0
    %1286 = vmatpush1.msra.mxu0 0.0
    %1287 = vmatprep.subr.mxu0 0.0
    %1288 = vmatpush1.msra.mxu0 0.0
    %1289 = vmatprep.subr.mxu0 0.0
    %1290 = vmatpush1.msra.mxu0 0.0
    %1291 = vmatprep.subr.mxu0 0.0
    %1292 = vmatpush1.msra.mxu0 0.0
    %1293 = vmatprep.subr.mxu0 0.0
    %1294 = vmatpush1.msra.mxu0 0.0
    %1295 = vmatprep.subr.mxu0 0.0
    %1296 = vmatpush1.msra.mxu0 0.0
    %1297 = vmatprep.subr.mxu0 0.0
    %1298 = vmatpush1.msra.mxu0 0.0
    %1299 = vmatprep.subr.mxu0 0.0
    %1300 = vmatpush1.msra.mxu0 0.0
    %1301 = vmatprep.subr.mxu0 0.0
    %1302 = vmatpush1.msra.mxu0 0.0
    %1303 = vmatprep.subr.mxu0 0.0
    %1304 = vmatpush1.msra.mxu0 0.0
    %1305 = vmatprep.subr.mxu0 0.0
    %1306 = vmatpush1.msra.mxu0 0.0
    %1307 = vmatprep.subr.mxu0 0.0
    %1308 = vmatpush1.msra.mxu0 0.0
    %1309 = vmatprep.subr.mxu0 0.0
    %1310 = vmatpush1.msra.mxu0 0.0
    %1311 = vmatprep.subr.mxu0 0.0
    %1312 = vmatpush1.msra.mxu0 0.0
    %1313 = vmatprep.subr.mxu0 0.0
    %1314 = vmatpush1.msra.mxu0 0.0
    %1315 = vmatprep.subr.mxu0 0.0
    %1316 = vmatpush1.msra.mxu0 0.0
    %1317 = vmatprep.subr.mxu0 0.0
    %1318 = vmatpush1.msra.mxu0 0.0
    %1319 = vmatprep.subr.mxu0 0.0
    %1320 = vmatpush1.msra.mxu0 0.0
    %1321 = vmatprep.subr.mxu0 0.0
    %1322 = vmatpush1.msra.mxu0 0.0
    %1323 = vmatprep.subr.mxu0 0.0
    %1324 = vmatpush1.msra.mxu0 0.0
    %1325 = vmatprep.subr.mxu0 0.0
    %1326 = vmatpush1.msra.mxu0 0.0
    %1327 = vmatprep.subr.mxu0 0.0
    %1328 = vmatpush1.msra.mxu0 0.0
    %1329 = vmatprep.subr.mxu0 0.0
    %1330 = vmatpush1.msra.mxu0 0.0
    %1331 = vmatprep.subr.mxu0 0.0
    %1332 = vmatpush1.msra.mxu0 0.0
    %1333 = vmatprep.subr.mxu0 0.0
    %1334 = vmatpush1.msra.mxu0 0.0
    %1335 = vmatprep.subr.mxu0 0.0
    %1336 = vmatpush1.msra.mxu0 0.0
    %1337 = vmatprep.subr.mxu0 0.0
    %1338 = vmatpush1.msra.mxu0 0.0
    %1339 = vmatprep.subr.mxu0 0.0
    %1340 = vmatpush1.msra.mxu0 0.0
    %1341 = vmatprep.subr.mxu0 0.0
    %1342 = vmatpush1.msra.mxu0 0.0
    %1343 = vmatprep.subr.mxu0 0.0
    %1344 = vmatpush1.msra.mxu0 0.0
    %1345 = vmatprep.mubr.f32.mxu0 0.0
    %1346 = vmatmul.mubr.f32.gmra.mrb[0].mxu0 %v1277
    %v1347 = vpop.f32.mrb[0].mxu0
    %v1348 = vadd.f32 0.0, %v1347
    %v1349 = vpop.f32.mrb[0].mxu0
    %1350 = vmatprep.mubr.f32.mxu0 0.0
    %1351 = vmatmul.mubr.f32.gmra.mrb[0].mxu0 %v1279
    %v1352 = vpop.f32.mrb[0].mxu0
    %v1353 = vadd.f32 0.0, %v1352
    %v1354 = vpop.f32.mrb[0].mxu0
    %1355 = vdwg.mxu0
    %v1356 = vadd.f32 %v1272, %v1348
    %v1357 = vadd.f32 %v1273, %v1353
    %v1358 = vadd.f32 %v1356, %v767
    %v1359 = vadd.f32 %v1357, %v767
    %v1360 = vmax.f32 %v1358, 0.0
    %v1361 = vmax.f32 %v1359, 0.0
    %v1362 = vsel %vm183, %v1360, -inf
    %v1363 = vsel %vm773, %v1361, -inf
    %v1364 = vmax.f32 %v1362, %v1363
    %v1365 = vrot.slane %v1364, 4
    %v1366 = vmax.f32 %v1364, %v1365
    %v1367 = vrot.slane %v1366, 2
    %v1368 = vmax.f32 %v1366, %v1367
    %v1369 = vrot.slane %v1368, 1
    %v1370 = vmax.f32 %v1368, %v1369
    %1372 = vrot.lane.b32.xlu0 %v1370, 8
    %v1373 = vpop.permute.xlu0 %1372
    %v1375 = vsel %vm183, %v1046, %v1373
    %v1377 = vrot.slane %v1375, 7
    %vm1379 = vcmask 1040384
    %v1380 = vsel %vm1379, %v786, %v1377
    %v1381 = vld [vmem:[#allocation6] ss:$8 sm:$0xf]
    %s1382 = scalar_lea.vmem [#allocation6], 1
    %v1383 = vld [vmem:[%s1382] ss:$8 sm:$0xf]
    %s1384 = scalar_lea.vmem [#allocation6], 2
    %v1385 = vld [vmem:[%s1384] ss:$8 sm:$0xf]
    %s1386 = scalar_lea.vmem [#allocation6], 3
    %v1387 = vld [vmem:[%s1386] ss:$8 sm:$0xf]
    %v1388 = vld [vmem:[#allocation6] sm:$0xf0]
    %v1389 = vld [vmem:[#allocation6 + $0x8] sm:$0xf0]
    %v1390 = vld [vmem:[#allocation6 + $0x10] sm:$0xf0]
    %v1391 = vld [vmem:[#allocation6 + $0x18] sm:$0xf0]
    %v1392 = vld [vmem:[#allocation6 + $0x20] sm:$0xff]
    %v1393 = vld [vmem:[#allocation6 + $0x28] sm:$0xff]
    %v1394 = vld [vmem:[#allocation6 + $0x30] sm:$0xff]
    %v1395 = vld [vmem:[#allocation6 + $0x38] sm:$0xff]
    %v1396 = vld [vmem:[#allocation6 + $0x40] sm:$0xff]
    %v1397 = vld [vmem:[#allocation6 + $0x48] sm:$0xff]
    %v1398 = vld [vmem:[#allocation6 + $0x50] sm:$0xff]
    %v1399 = vld [vmem:[#allocation6 + $0x58] sm:$0xff]
    %v1400 = vld [vmem:[#allocation6 + $0x60] sm:$0xff]
    %v1401 = vld [vmem:[#allocation6 + $0x68] sm:$0xff]
    %v1402 = vld [vmem:[#allocation6 + $0x70] sm:$0xff]
    %v1403 = vld [vmem:[#allocation6 + $0x78] sm:$0xff]
    %v1404 = vld [vmem:[#allocation6 + $0x80] sm:$0xf]
    %v1405 = vld [vmem:[#allocation6 + $0x88] sm:$0xf]
    %v1406 = vld [vmem:[#allocation6 + $0x90] sm:$0xf]
    %v1407 = vld [vmem:[#allocation6 + $0x98] sm:$0xf]
    %v1408 = vld [vmem:[#allocation6 + $0x80] sm:$0xf0]
    %v1409 = vld [vmem:[#allocation6 + $0x88] sm:$0xf0]
    %v1410 = vld [vmem:[#allocation6 + $0x90] sm:$0xf0]
    %v1411 = vld [vmem:[#allocation6 + $0x98] sm:$0xf0]
    %v1412 = vld [vmem:[#allocation6 + $0xa0] sm:$0xff]
    %v1413 = vld [vmem:[#allocation6 + $0xa8] sm:$0xff]
    %v1414 = vld [vmem:[#allocation6 + $0xb0] sm:$0xff]
    %v1415 = vld [vmem:[#allocation6 + $0xb8] sm:$0xff]
    %v1416 = vld [vmem:[#allocation6 + $0xc0] sm:$0xff]
    %v1417 = vld [vmem:[#allocation6 + $0xc8] sm:$0xff]
    %v1418 = vld [vmem:[#allocation6 + $0xd0] sm:$0xff]
    %v1419 = vld [vmem:[#allocation6 + $0xd8] sm:$0xff]
    %v1420 = vld [vmem:[#allocation6 + $0xe0] sm:$0xff]
    %v1421 = vld [vmem:[#allocation6 + $0xe8] sm:$0xff]
    %v1422 = vld [vmem:[#allocation6 + $0xf0] sm:$0xff]
    %v1423 = vld [vmem:[#allocation6 + $0xf8] sm:$0xff]
    %v1424 = vld [vmem:[#allocation6 + $0x100] sm:$0xf]
    %v1425 = vld [vmem:[#allocation6 + $0x108] sm:$0xf]
    %v1426 = vld [vmem:[#allocation6 + $0x110] sm:$0xf]
    %v1427 = vld [vmem:[#allocation6 + $0x118] sm:$0xf]
    %v1428 = vld [vmem:[#allocation6 + $0x100] sm:$0x30]
    %v1429 = vld [vmem:[#allocation6 + $0x100] sm:$0xc0]
    %v1430 = vld [vmem:[#allocation6 + $0x120] sm:$0x3]
    %v1431 = vld [vmem:[#allocation6 + $0x120] sm:$0xc]
    %1433 = vset.pattern.permute.xlu0 15
    %1434 = vperm.xlu0 %1433, %v1380
    %v1435 = vpop.permute.xlu0 %1434
    %v1438 = vlaneseq
    %v1439 = vshrl.u32 %v1438, 7
    %v1440 = vsub.s32 0, %v1439
    %v1441 = vrot.slane %v1385, %v1440
    %v1442 = vlaneseq
    %v1443 = vshrl.u32 %v1442, 7
    %v1444 = vsub.s32 1, %v1443
    %v1445 = vrot.slane %v1385, %v1444
    %v1446 = vlaneseq
    %v1447 = vshrl.u32 %v1446, 7
    %v1448 = vsub.s32 2, %v1447
    %v1449 = vrot.slane %v1385, %v1448
    %v1450 = vlaneseq
    %v1451 = vshrl.u32 %v1450, 7
    %v1452 = vsub.s32 3, %v1451
    %v1453 = vrot.slane %v1385, %v1452
    %v1458 = vmul.f32 %v1435, %v1441
    %v1459 = vmul.f32 %v1435, %v1445
    %v1460 = vmul.f32 %v1435, %v1449
    %v1461 = vmul.f32 %v1435, %v1453
    %v1463 = vlaneseq
    %v1464 = vshrl.u32 %v1463, 7
    %v1465 = vsub.s32 0, %v1464
    %v1466 = vrot.slane %v1387, %v1465
    %v1467 = vlaneseq
    %v1468 = vshrl.u32 %v1467, 7
    %v1469 = vsub.s32 1, %v1468
    %v1470 = vrot.slane %v1387, %v1469
    %v1471 = vlaneseq
    %v1472 = vshrl.u32 %v1471, 7
    %v1473 = vsub.s32 2, %v1472
    %v1474 = vrot.slane %v1387, %v1473
    %v1475 = vlaneseq
    %v1476 = vshrl.u32 %v1475, 7
    %v1477 = vsub.s32 3, %v1476
    %v1478 = vrot.slane %v1387, %v1477
    %v1483 = vadd.f32 %v1458, %v1466
    %v1484 = vadd.f32 %v1459, %v1470
    %v1485 = vadd.f32 %v1460, %v1474
    %v1486 = vadd.f32 %v1461, %v1478
    %v1488 = vrot.slane %v1429, 6
    %vm1509 = vcmask 1043456
    %v1510 = vrot.slane %v1408, 4
    %v1511 = vrot.slane %v1412, 4
    %v1512 = vsel %vm1509, %v1510, %v1511
    %v1513 = vrot.slane %v1409, 4
    %v1514 = vrot.slane %v1413, 4
    %v1515 = vsel %vm1509, %v1513, %v1514
    %v1516 = vrot.slane %v1410, 4
    %v1517 = vrot.slane %v1414, 4
    %v1518 = vsel %vm1509, %v1516, %v1517
    %v1519 = vrot.slane %v1411, 4
    %v1520 = vrot.slane %v1415, 4
    %v1521 = vsel %vm1509, %v1519, %v1520
    %v1522 = vrot.slane %v1416, 4
    %v1523 = vsel %vm1509, %v1511, %v1522
    %v1524 = vrot.slane %v1417, 4
    %v1525 = vsel %vm1509, %v1514, %v1524
    %v1526 = vrot.slane %v1418, 4
    %v1527 = vsel %vm1509, %v1517, %v1526
    %v1528 = vrot.slane %v1419, 4
    %v1529 = vsel %vm1509, %v1520, %v1528
    %v1530 = vrot.slane %v1420, 4
    %v1531 = vsel %vm1509, %v1522, %v1530
    %v1532 = vrot.slane %v1421, 4
    %v1533 = vsel %vm1509, %v1524, %v1532
    %v1534 = vrot.slane %v1422, 4
    %v1535 = vsel %vm1509, %v1526, %v1534
    %v1536 = vrot.slane %v1423, 4
    %v1537 = vsel %vm1509, %v1528, %v1536
    %v1538 = vrot.slane %v1424, 4
    %v1539 = vsel %vm1509, %v1530, %v1538
    %v1540 = vrot.slane %v1425, 4
    %v1541 = vsel %vm1509, %v1532, %v1540
    %v1542 = vrot.slane %v1426, 4
    %v1543 = vsel %vm1509, %v1534, %v1542
    %v1544 = vrot.slane %v1427, 4
    %v1545 = vsel %vm1509, %v1536, %v1544
    %v1562 = vsel %vm77, %v1488, 0
    %1564 = vmatprep.subr.mxu0 %v1515
    %1565 = vmatpush1.msra.mxu0 %v1512
    %1566 = vmatprep.subr.mxu0 %v1525
    %1567 = vmatpush1.msra.mxu0 %v1523
    %1568 = vmatprep.subr.mxu0 %v1533
    %1569 = vmatpush1.msra.mxu0 %v1531
    %1570 = vmatprep.subr.mxu0 %v1541
    %1571 = vmatpush1.msra.mxu0 %v1539
    %1572 = vmatprep.subr.mxu0 0.0
    %1573 = vmatpush1.msra.mxu0 0.0
    %1574 = vmatprep.subr.mxu0 0.0
    %1575 = vmatpush1.msra.mxu0 0.0
    %1576 = vmatprep.subr.mxu0 0.0
    %1577 = vmatpush1.msra.mxu0 0.0
    %1578 = vmatprep.subr.mxu0 0.0
    %1579 = vmatpush1.msra.mxu0 0.0
    %1580 = vmatprep.subr.mxu0 0.0
    %1581 = vmatpush1.msra.mxu0 0.0
    %1582 = vmatprep.subr.mxu0 0.0
    %1583 = vmatpush1.msra.mxu0 0.0
    %1584 = vmatprep.subr.mxu0 0.0
    %1585 = vmatpush1.msra.mxu0 0.0
    %1586 = vmatprep.subr.mxu0 0.0
    %1587 = vmatpush1.msra.mxu0 0.0
    %1588 = vmatprep.subr.mxu0 0.0
    %1589 = vmatpush1.msra.mxu0 0.0
    %1590 = vmatprep.subr.mxu0 0.0
    %1591 = vmatpush1.msra.mxu0 0.0
    %1592 = vmatprep.subr.mxu0 0.0
    %1593 = vmatpush1.msra.mxu0 0.0
    %1594 = vmatprep.subr.mxu0 0.0
    %1595 = vmatpush1.msra.mxu0 0.0
    %1596 = vmatprep.subr.mxu0 0.0
    %1597 = vmatpush1.msra.mxu0 0.0
    %1598 = vmatprep.subr.mxu0 0.0
    %1599 = vmatpush1.msra.mxu0 0.0
    %1600 = vmatprep.subr.mxu0 0.0
    %1601 = vmatpush1.msra.mxu0 0.0
    %1602 = vmatprep.subr.mxu0 0.0
    %1603 = vmatpush1.msra.mxu0 0.0
    %1604 = vmatprep.subr.mxu0 0.0
    %1605 = vmatpush1.msra.mxu0 0.0
    %1606 = vmatprep.subr.mxu0 0.0
    %1607 = vmatpush1.msra.mxu0 0.0
    %1608 = vmatprep.subr.mxu0 0.0
    %1609 = vmatpush1.msra.mxu0 0.0
    %1610 = vmatprep.subr.mxu0 0.0
    %1611 = vmatpush1.msra.mxu0 0.0
    %1612 = vmatprep.subr.mxu0 0.0
    %1613 = vmatpush1.msra.mxu0 0.0
    %1614 = vmatprep.subr.mxu0 0.0
    %1615 = vmatpush1.msra.mxu0 0.0
    %1616 = vmatprep.subr.mxu0 0.0
    %1617 = vmatpush1.msra.mxu0 0.0
    %1618 = vmatprep.subr.mxu0 0.0
    %1619 = vmatpush1.msra.mxu0 0.0
    %1620 = vmatprep.subr.mxu0 0.0
    %1621 = vmatpush1.msra.mxu0 0.0
    %1622 = vmatprep.subr.mxu0 0.0
    %1623 = vmatpush1.msra.mxu0 0.0
    %1624 = vmatprep.subr.mxu0 0.0
    %1625 = vmatpush1.msra.mxu0 0.0
    %1626 = vmatprep.subr.mxu0 0.0
    %1627 = vmatpush1.msra.mxu0 0.0
    %1628 = vmatprep.mubr.f32.mxu0 0.0
    %1629 = vmatmul.mubr.f32.gmra.mrb[0].mxu0 %v1562
    %v1630 = vpop.f32.mrb[0].mxu0
    %v1631 = vadd.f32 0.0, %v1630
    %v1632 = vpop.f32.mrb[0].mxu0
    %v1633 = vadd.f32 0.0, %v1632
    %1634 = vdwg.mxu0
    %1635 = vmatprep.subr.mxu0 %v1521
    %1636 = vmatpush1.msra.mxu0 %v1518
    %1637 = vmatprep.subr.mxu0 %v1529
    %1638 = vmatpush1.msra.mxu0 %v1527
    %1639 = vmatprep.subr.mxu0 %v1537
    %1640 = vmatpush1.msra.mxu0 %v1535
    %1641 = vmatprep.subr.mxu0 %v1545
    %1642 = vmatpush1.msra.mxu0 %v1543
    %1643 = vmatprep.subr.mxu0 0.0
    %1644 = vmatpush1.msra.mxu0 0.0
    %1645 = vmatprep.subr.mxu0 0.0
    %1646 = vmatpush1.msra.mxu0 0.0
    %1647 = vmatprep.subr.mxu0 0.0
    %1648 = vmatpush1.msra.mxu0 0.0
    %1649 = vmatprep.subr.mxu0 0.0
    %1650 = vmatpush1.msra.mxu0 0.0
    %1651 = vmatprep.subr.mxu0 0.0
    %1652 = vmatpush1.msra.mxu0 0.0
    %1653 = vmatprep.subr.mxu0 0.0
    %1654 = vmatpush1.msra.mxu0 0.0
    %1655 = vmatprep.subr.mxu0 0.0
    %1656 = vmatpush1.msra.mxu0 0.0
    %1657 = vmatprep.subr.mxu0 0.0
    %1658 = vmatpush1.msra.mxu0 0.0
    %1659 = vmatprep.subr.mxu0 0.0
    %1660 = vmatpush1.msra.mxu0 0.0
    %1661 = vmatprep.subr.mxu0 0.0
    %1662 = vmatpush1.msra.mxu0 0.0
    %1663 = vmatprep.subr.mxu0 0.0
    %1664 = vmatpush1.msra.mxu0 0.0
    %1665 = vmatprep.subr.mxu0 0.0
    %1666 = vmatpush1.msra.mxu0 0.0
    %1667 = vmatprep.subr.mxu0 0.0
    %1668 = vmatpush1.msra.mxu0 0.0
    %1669 = vmatprep.subr.mxu0 0.0
    %1670 = vmatpush1.msra.mxu0 0.0
    %1671 = vmatprep.subr.mxu0 0.0
    %1672 = vmatpush1.msra.mxu0 0.0
    %1673 = vmatprep.subr.mxu0 0.0
    %1674 = vmatpush1.msra.mxu0 0.0
    %1675 = vmatprep.subr.mxu0 0.0
    %1676 = vmatpush1.msra.mxu0 0.0
    %1677 = vmatprep.subr.mxu0 0.0
    %1678 = vmatpush1.msra.mxu0 0.0
    %1679 = vmatprep.subr.mxu0 0.0
    %1680 = vmatpush1.msra.mxu0 0.0
    %1681 = vmatprep.subr.mxu0 0.0
    %1682 = vmatpush1.msra.mxu0 0.0
    %1683 = vmatprep.subr.mxu0 0.0
    %1684 = vmatpush1.msra.mxu0 0.0
    %1685 = vmatprep.subr.mxu0 0.0
    %1686 = vmatpush1.msra.mxu0 0.0
    %1687 = vmatprep.subr.mxu0 0.0
    %1688 = vmatpush1.msra.mxu0 0.0
    %1689 = vmatprep.subr.mxu0 0.0
    %1690 = vmatpush1.msra.mxu0 0.0
    %1691 = vmatprep.subr.mxu0 0.0
    %1692 = vmatpush1.msra.mxu0 0.0
    %1693 = vmatprep.subr.mxu0 0.0
    %1694 = vmatpush1.msra.mxu0 0.0
    %1695 = vmatprep.subr.mxu0 0.0
    %1696 = vmatpush1.msra.mxu0 0.0
    %1697 = vmatprep.subr.mxu0 0.0
    %1698 = vmatpush1.msra.mxu0 0.0
    %1699 = vmatprep.mubr.f32.mxu0 0.0
    %1700 = vmatmul.mubr.f32.gmra.mrb[0].mxu0 %v1562
    %v1701 = vpop.f32.mrb[0].mxu0
    %v1702 = vadd.f32 0.0, %v1701
    %v1703 = vpop.f32.mrb[0].mxu0
    %v1704 = vadd.f32 0.0, %v1703
    %1705 = vdwg.mxu0
    %v1706 = vadd.f32 %v1483, %v1631
    %v1707 = vadd.f32 %v1484, %v1633
    %v1708 = vadd.f32 %v1485, %v1702
    %v1709 = vadd.f32 %v1486, %v1704
    %v1710 = vmul.f32 %v1706, 0.5
    %v1711 = vtanh.pop %v1710
    %v1712 = vadd.f32 %v1711, 1.0
    %v1713 = vmul.f32 %v1712, 0.5
    %v1714 = vmul.f32 %v1707, 0.5
    %v1715 = vtanh.pop %v1714
    %v1716 = vadd.f32 %v1715, 1.0
    %v1717 = vmul.f32 %v1716, 0.5
    %v1718 = vtanh.pop %v1708
    %v1719 = vmul.f32 %v1709, 0.5
    %v1720 = vtanh.pop %v1719
    %v1721 = vadd.f32 %v1720, 1.0
    %v1722 = vmul.f32 %v1721, 0.5
    %v1724 = vrot.slane %v1431, 2
    %v1726 = vmul.f32 %v1717, %v1724
    %v1727 = vmul.f32 %v1713, %v1718
    %v1728 = vadd.f32 %v1726, %v1727
    %v1729 = vtanh.pop %v1728
    %v1730 = vmul.f32 %v1722, %v1729
    %1731 = vset.pattern.permute.xlu0 0
    %1732 = vperm.xlu0 %1731, %v1380
    %v1733 = vpop.permute.xlu0 %1732
    %v1736 = vlaneseq
    %v1737 = vshrl.u32 %v1736, 7
    %v1738 = vsub.s32 0, %v1737
    %v1739 = vrot.slane %v1381, %v1738
    %v1740 = vlaneseq
    %v1741 = vshrl.u32 %v1740, 7
    %v1742 = vsub.s32 1, %v1741
    %v1743 = vrot.slane %v1381, %v1742
    %v1744 = vlaneseq
    %v1745 = vshrl.u32 %v1744, 7
    %v1746 = vsub.s32 2, %v1745
    %v1747 = vrot.slane %v1381, %v1746
    %v1748 = vlaneseq
    %v1749 = vshrl.u32 %v1748, 7
    %v1750 = vsub.s32 3, %v1749
    %v1751 = vrot.slane %v1381, %v1750
    %v1756 = vmul.f32 %v1733, %v1739
    %v1757 = vmul.f32 %v1733, %v1743
    %v1758 = vmul.f32 %v1733, %v1747
    %v1759 = vmul.f32 %v1733, %v1751
    %v1761 = vlaneseq
    %v1762 = vshrl.u32 %v1761, 7
    %v1763 = vsub.s32 0, %v1762
    %v1764 = vrot.slane %v1383, %v1763
    %v1765 = vlaneseq
    %v1766 = vshrl.u32 %v1765, 7
    %v1767 = vsub.s32 1, %v1766
    %v1768 = vrot.slane %v1383, %v1767
    %v1769 = vlaneseq
    %v1770 = vshrl.u32 %v1769, 7
    %v1771 = vsub.s32 2, %v1770
    %v1772 = vrot.slane %v1383, %v1771
    %v1773 = vlaneseq
    %v1774 = vshrl.u32 %v1773, 7
    %v1775 = vsub.s32 3, %v1774
    %v1776 = vrot.slane %v1383, %v1775
    %v1781 = vadd.f32 %v1756, %v1764
    %v1782 = vadd.f32 %v1757, %v1768
    %v1783 = vadd.f32 %v1758, %v1772
    %v1784 = vadd.f32 %v1759, %v1776
    %v1789 = vcombine.low %v1781, %v1782
    %v1790 = vcombine.low %v1783, %v1784
    %v1792 = vunpack.c.l.s4 1983009808
    %v1793 = vunpack.c.0.s8 %v1792
    %v1794 = vlaneseq
    %v1795 = vshrl.u32 %v1794, 7
    %v1796 = vsub.s32 %v1793, %v1795
    %v1797 = vrot.slane %v1789, %v1796
    %v1799 = vunpack.c.l.s4 1983009808
    %v1800 = vunpack.c.0.s8 %v1799
    %v1801 = vlaneseq
    %v1802 = vshrl.u32 %v1801, 7
    %v1803 = vsub.s32 %v1800, %v1802
    %v1804 = vrot.slane %v1790, %v1803
    %v1805 = vcombine.low %v1797, %v1804
    %1807 = vst [vmem:[#allocation2] sm:$0xff] %v1805
    %1808 = vset.pattern.permute.xlu0 1
    %1809 = vperm.xlu0 %1808, %v1380
    %v1810 = vpop.permute.xlu0 %1809
    %v1812 = vmul.f32 %v1810, %v1739
    %v1813 = vmul.f32 %v1810, %v1743
    %v1814 = vmul.f32 %v1810, %v1747
    %v1815 = vmul.f32 %v1810, %v1751
    %v1816 = vadd.f32 %v1812, %v1764
    %v1817 = vadd.f32 %v1813, %v1768
    %v1818 = vadd.f32 %v1814, %v1772
    %v1819 = vadd.f32 %v1815, %v1776
    %v1824 = vcombine.low %v1816, %v1817
    %v1825 = vcombine.low %v1818, %v1819
    %v1827 = vunpack.c.l.s4 1983009808
    %v1828 = vunpack.c.0.s8 %v1827
    %v1829 = vlaneseq
    %v1830 = vshrl.u32 %v1829, 7
    %v1831 = vsub.s32 %v1828, %v1830
    %v1832 = vrot.slane %v1824, %v1831
    %v1834 = vunpack.c.l.s4 1983009808
    %v1835 = vunpack.c.0.s8 %v1834
    %v1836 = vlaneseq
    %v1837 = vshrl.u32 %v1836, 7
    %v1838 = vsub.s32 %v1835, %v1837
    %v1839 = vrot.slane %v1825, %v1838
    %v1840 = vcombine.low %v1832, %v1839
    %s1842 = scalar_lea.vmem [#allocation2], 8
    %1843 = vst [vmem:[%s1842] sm:$0xff] %v1840
    %1844 = vset.pattern.permute.xlu0 2
    %1845 = vperm.xlu0 %1844, %v1380
    %v1846 = vpop.permute.xlu0 %1845
    %v1848 = vmul.f32 %v1846, %v1739
    %v1849 = vmul.f32 %v1846, %v1743
    %v1850 = vmul.f32 %v1846, %v1747
    %v1851 = vmul.f32 %v1846, %v1751
    %v1852 = vadd.f32 %v1848, %v1764
    %v1853 = vadd.f32 %v1849, %v1768
    %v1854 = vadd.f32 %v1850, %v1772
    %v1855 = vadd.f32 %v1851, %v1776
    %v1860 = vcombine.low %v1852, %v1853
    %v1861 = vcombine.low %v1854, %v1855
    %v1863 = vunpack.c.l.s4 1983009808
    %v1864 = vunpack.c.0.s8 %v1863
    %v1865 = vlaneseq
    %v1866 = vshrl.u32 %v1865, 7
    %v1867 = vsub.s32 %v1864, %v1866
    %v1868 = vrot.slane %v1860, %v1867
    %v1870 = vunpack.c.l.s4 1983009808
    %v1871 = vunpack.c.0.s8 %v1870
    %v1872 = vlaneseq
    %v1873 = vshrl.u32 %v1872, 7
    %v1874 = vsub.s32 %v1871, %v1873
    %v1875 = vrot.slane %v1861, %v1874
    %v1876 = vcombine.low %v1868, %v1875
    %s1878 = scalar_lea.vmem [#allocation2], 16
    %1879 = vst [vmem:[%s1878] sm:$0xff] %v1876
    %1880 = vset.pattern.permute.xlu0 3
    %1881 = vperm.xlu0 %1880, %v1380
    %v1882 = vpop.permute.xlu0 %1881
    %v1884 = vmul.f32 %v1882, %v1739
    %v1885 = vmul.f32 %v1882, %v1743
    %v1886 = vmul.f32 %v1882, %v1747
    %v1887 = vmul.f32 %v1882, %v1751
    %v1888 = vadd.f32 %v1884, %v1764
    %v1889 = vadd.f32 %v1885, %v1768
    %v1890 = vadd.f32 %v1886, %v1772
    %v1891 = vadd.f32 %v1887, %v1776
    %v1896 = vcombine.low %v1888, %v1889
    %v1897 = vcombine.low %v1890, %v1891
    %v1899 = vunpack.c.l.s4 1983009808
    %v1900 = vunpack.c.0.s8 %v1899
    %v1901 = vlaneseq
    %v1902 = vshrl.u32 %v1901, 7
    %v1903 = vsub.s32 %v1900, %v1902
    %v1904 = vrot.slane %v1896, %v1903
    %v1906 = vunpack.c.l.s4 1983009808
    %v1907 = vunpack.c.0.s8 %v1906
    %v1908 = vlaneseq
    %v1909 = vshrl.u32 %v1908, 7
    %v1910 = vsub.s32 %v1907, %v1909
    %v1911 = vrot.slane %v1897, %v1910
    %v1912 = vcombine.low %v1904, %v1911
    %s1914 = scalar_lea.vmem [#allocation2], 24
    %1915 = vst [vmem:[%s1914] sm:$0xff] %v1912
    %1916 = vset.pattern.permute.xlu0 4
    %1917 = vperm.xlu0 %1916, %v1380
    %v1918 = vpop.permute.xlu0 %1917
    %v1920 = vmul.f32 %v1918, %v1739
    %v1921 = vmul.f32 %v1918, %v1743
    %v1922 = vmul.f32 %v1918, %v1747
    %v1923 = vmul.f32 %v1918, %v1751
    %v1924 = vadd.f32 %v1920, %v1764
    %v1925 = vadd.f32 %v1921, %v1768
    %v1926 = vadd.f32 %v1922, %v1772
    %v1927 = vadd.f32 %v1923, %v1776
    %v1932 = vcombine.low %v1924, %v1925
    %v1933 = vcombine.low %v1926, %v1927
    %v1935 = vunpack.c.l.s4 1983009808
    %v1936 = vunpack.c.0.s8 %v1935
    %v1937 = vlaneseq
    %v1938 = vshrl.u32 %v1937, 7
    %v1939 = vsub.s32 %v1936, %v1938
    %v1940 = vrot.slane %v1932, %v1939
    %v1942 = vunpack.c.l.s4 1983009808
    %v1943 = vunpack.c.0.s8 %v1942
    %v1944 = vlaneseq
    %v1945 = vshrl.u32 %v1944, 7
    %v1946 = vsub.s32 %v1943, %v1945
    %v1947 = vrot.slane %v1933, %v1946
    %v1948 = vcombine.low %v1940, %v1947
    %s1950 = scalar_lea.vmem [#allocation2], 32
    %1951 = vst [vmem:[%s1950] sm:$0xff] %v1948
    %1952 = vset.pattern.permute.xlu0 5
    %1953 = vperm.xlu0 %1952, %v1380
    %v1954 = vpop.permute.xlu0 %1953
    %v1956 = vmul.f32 %v1954, %v1739
    %v1957 = vmul.f32 %v1954, %v1743
    %v1958 = vmul.f32 %v1954, %v1747
    %v1959 = vmul.f32 %v1954, %v1751
    %v1960 = vadd.f32 %v1956, %v1764
    %v1961 = vadd.f32 %v1957, %v1768
    %v1962 = vadd.f32 %v1958, %v1772
    %v1963 = vadd.f32 %v1959, %v1776
    %v1968 = vcombine.low %v1960, %v1961
    %v1969 = vcombine.low %v1962, %v1963
    %v1971 = vunpack.c.l.s4 1983009808
    %v1972 = vunpack.c.0.s8 %v1971
    %v1973 = vlaneseq
    %v1974 = vshrl.u32 %v1973, 7
    %v1975 = vsub.s32 %v1972, %v1974
    %v1976 = vrot.slane %v1968, %v1975
    %v1978 = vunpack.c.l.s4 1983009808
    %v1979 = vunpack.c.0.s8 %v1978
    %v1980 = vlaneseq
    %v1981 = vshrl.u32 %v1980, 7
    %v1982 = vsub.s32 %v1979, %v1981
    %v1983 = vrot.slane %v1969, %v1982
    %v1984 = vcombine.low %v1976, %v1983
    %s1986 = scalar_lea.vmem [#allocation2], 40
    %1987 = vst [vmem:[%s1986] sm:$0xff] %v1984
    %1988 = vset.pattern.permute.xlu0 6
    %1989 = vperm.xlu0 %1988, %v1380
    %v1990 = vpop.permute.xlu0 %1989
    %v1992 = vmul.f32 %v1990, %v1739
    %v1993 = vmul.f32 %v1990, %v1743
    %v1994 = vmul.f32 %v1990, %v1747
    %v1995 = vmul.f32 %v1990, %v1751
    %v1996 = vadd.f32 %v1992, %v1764
    %v1997 = vadd.f32 %v1993, %v1768
    %v1998 = vadd.f32 %v1994, %v1772
    %v1999 = vadd.f32 %v1995, %v1776
    %v2004 = vcombine.low %v1996, %v1997
    %v2005 = vcombine.low %v1998, %v1999
    %v2007 = vunpack.c.l.s4 1983009808
    %v2008 = vunpack.c.0.s8 %v2007
    %v2009 = vlaneseq
    %v2010 = vshrl.u32 %v2009, 7
    %v2011 = vsub.s32 %v2008, %v2010
    %v2012 = vrot.slane %v2004, %v2011
    %v2014 = vunpack.c.l.s4 1983009808
    %v2015 = vunpack.c.0.s8 %v2014
    %v2016 = vlaneseq
    %v2017 = vshrl.u32 %v2016, 7
    %v2018 = vsub.s32 %v2015, %v2017
    %v2019 = vrot.slane %v2005, %v2018
    %v2020 = vcombine.low %v2012, %v2019
    %s2022 = scalar_lea.vmem [#allocation2], 48
    %2023 = vst [vmem:[%s2022] sm:$0xff] %v2020
    %2024 = vset.pattern.permute.xlu0 7
    %2025 = vperm.xlu0 %2024, %v1380
    %v2026 = vpop.permute.xlu0 %2025
    %v2028 = vmul.f32 %v2026, %v1739
    %v2029 = vmul.f32 %v2026, %v1743
    %v2030 = vmul.f32 %v2026, %v1747
    %v2031 = vmul.f32 %v2026, %v1751
    %v2032 = vadd.f32 %v2028, %v1764
    %v2033 = vadd.f32 %v2029, %v1768
    %v2034 = vadd.f32 %v2030, %v1772
    %v2035 = vadd.f32 %v2031, %v1776
    %v2040 = vcombine.low %v2032, %v2033
    %v2041 = vcombine.low %v2034, %v2035
    %v2043 = vunpack.c.l.s4 1983009808
    %v2044 = vunpack.c.0.s8 %v2043
    %v2045 = vlaneseq
    %v2046 = vshrl.u32 %v2045, 7
    %v2047 = vsub.s32 %v2044, %v2046
    %v2048 = vrot.slane %v2040, %v2047
    %v2050 = vunpack.c.l.s4 1983009808
    %v2051 = vunpack.c.0.s8 %v2050
    %v2052 = vlaneseq
    %v2053 = vshrl.u32 %v2052, 7
    %v2054 = vsub.s32 %v2051, %v2053
    %v2055 = vrot.slane %v2041, %v2054
    %v2056 = vcombine.low %v2048, %v2055
    %s2058 = scalar_lea.vmem [#allocation2], 56
    %2059 = vst [vmem:[%s2058] sm:$0xff] %v2056
    %2060 = vset.pattern.permute.xlu0 8
    %2061 = vperm.xlu0 %2060, %v1380
    %v2062 = vpop.permute.xlu0 %2061
    %v2064 = vmul.f32 %v2062, %v1739
    %v2065 = vmul.f32 %v2062, %v1743
    %v2066 = vmul.f32 %v2062, %v1747
    %v2067 = vmul.f32 %v2062, %v1751
    %v2068 = vadd.f32 %v2064, %v1764
    %v2069 = vadd.f32 %v2065, %v1768
    %v2070 = vadd.f32 %v2066, %v1772
    %v2071 = vadd.f32 %v2067, %v1776
    %v2076 = vcombine.low %v2068, %v2069
    %v2077 = vcombine.low %v2070, %v2071
    %v2079 = vunpack.c.l.s4 1983009808
    %v2080 = vunpack.c.0.s8 %v2079
    %v2081 = vlaneseq
    %v2082 = vshrl.u32 %v2081, 7
    %v2083 = vsub.s32 %v2080, %v2082
    %v2084 = vrot.slane %v2076, %v2083
    %v2086 = vunpack.c.l.s4 1983009808
    %v2087 = vunpack.c.0.s8 %v2086
    %v2088 = vlaneseq
    %v2089 = vshrl.u32 %v2088, 7
    %v2090 = vsub.s32 %v2087, %v2089
    %v2091 = vrot.slane %v2077, %v2090
    %v2092 = vcombine.low %v2084, %v2091
    %s2094 = scalar_lea.vmem [#allocation2], 64
    %2095 = vst [vmem:[%s2094] sm:$0xff] %v2092
    %2096 = vset.pattern.permute.xlu0 9
    %2097 = vperm.xlu0 %2096, %v1380
    %v2098 = vpop.permute.xlu0 %2097
    %v2100 = vmul.f32 %v2098, %v1739
    %v2101 = vmul.f32 %v2098, %v1743
    %v2102 = vmul.f32 %v2098, %v1747
    %v2103 = vmul.f32 %v2098, %v1751
    %v2104 = vadd.f32 %v2100, %v1764
    %v2105 = vadd.f32 %v2101, %v1768
    %v2106 = vadd.f32 %v2102, %v1772
    %v2107 = vadd.f32 %v2103, %v1776
    %v2112 = vcombine.low %v2104, %v2105
    %v2113 = vcombine.low %v2106, %v2107
    %v2115 = vunpack.c.l.s4 1983009808
    %v2116 = vunpack.c.0.s8 %v2115
    %v2117 = vlaneseq
    %v2118 = vshrl.u32 %v2117, 7
    %v2119 = vsub.s32 %v2116, %v2118
    %v2120 = vrot.slane %v2112, %v2119
    %v2122 = vunpack.c.l.s4 1983009808
    %v2123 = vunpack.c.0.s8 %v2122
    %v2124 = vlaneseq
    %v2125 = vshrl.u32 %v2124, 7
    %v2126 = vsub.s32 %v2123, %v2125
    %v2127 = vrot.slane %v2113, %v2126
    %v2128 = vcombine.low %v2120, %v2127
    %s2130 = scalar_lea.vmem [#allocation2], 72
    %2131 = vst [vmem:[%s2130] sm:$0xff] %v2128
    %2132 = vset.pattern.permute.xlu0 10
    %2133 = vperm.xlu0 %2132, %v1380
    %v2134 = vpop.permute.xlu0 %2133
    %v2136 = vmul.f32 %v2134, %v1739
    %v2137 = vmul.f32 %v2134, %v1743
    %v2138 = vmul.f32 %v2134, %v1747
    %v2139 = vmul.f32 %v2134, %v1751
    %v2140 = vadd.f32 %v2136, %v1764
    %v2141 = vadd.f32 %v2137, %v1768
    %v2142 = vadd.f32 %v2138, %v1772
    %v2143 = vadd.f32 %v2139, %v1776
    %v2148 = vcombine.low %v2140, %v2141
    %v2149 = vcombine.low %v2142, %v2143
    %v2151 = vunpack.c.l.s4 1983009808
    %v2152 = vunpack.c.0.s8 %v2151
    %v2153 = vlaneseq
    %v2154 = vshrl.u32 %v2153, 7
    %v2155 = vsub.s32 %v2152, %v2154
    %v2156 = vrot.slane %v2148, %v2155
    %v2158 = vunpack.c.l.s4 1983009808
    %v2159 = vunpack.c.0.s8 %v2158
    %v2160 = vlaneseq
    %v2161 = vshrl.u32 %v2160, 7
    %v2162 = vsub.s32 %v2159, %v2161
    %v2163 = vrot.slane %v2149, %v2162
    %v2164 = vcombine.low %v2156, %v2163
    %s2166 = scalar_lea.vmem [#allocation2], 80
    %2167 = vst [vmem:[%s2166] sm:$0xff] %v2164
    %2168 = vset.pattern.permute.xlu0 11
    %2169 = vperm.xlu0 %2168, %v1380
    %v2170 = vpop.permute.xlu0 %2169
    %v2172 = vmul.f32 %v2170, %v1739
    %v2173 = vmul.f32 %v2170, %v1743
    %v2174 = vmul.f32 %v2170, %v1747
    %v2175 = vmul.f32 %v2170, %v1751
    %v2176 = vadd.f32 %v2172, %v1764
    %v2177 = vadd.f32 %v2173, %v1768
    %v2178 = vadd.f32 %v2174, %v1772
    %v2179 = vadd.f32 %v2175, %v1776
    %v2184 = vcombine.low %v2176, %v2177
    %v2185 = vcombine.low %v2178, %v2179
    %v2187 = vunpack.c.l.s4 1983009808
    %v2188 = vunpack.c.0.s8 %v2187
    %v2189 = vlaneseq
    %v2190 = vshrl.u32 %v2189, 7
    %v2191 = vsub.s32 %v2188, %v2190
    %v2192 = vrot.slane %v2184, %v2191
    %v2194 = vunpack.c.l.s4 1983009808
    %v2195 = vunpack.c.0.s8 %v2194
    %v2196 = vlaneseq
    %v2197 = vshrl.u32 %v2196, 7
    %v2198 = vsub.s32 %v2195, %v2197
    %v2199 = vrot.slane %v2185, %v2198
    %v2200 = vcombine.low %v2192, %v2199
    %s2202 = scalar_lea.vmem [#allocation2], 88
    %2203 = vst [vmem:[%s2202] sm:$0xff] %v2200
    %2204 = vset.pattern.permute.xlu0 12
    %2205 = vperm.xlu0 %2204, %v1380
    %v2206 = vpop.permute.xlu0 %2205
    %v2208 = vmul.f32 %v2206, %v1739
    %v2209 = vmul.f32 %v2206, %v1743
    %v2210 = vmul.f32 %v2206, %v1747
    %v2211 = vmul.f32 %v2206, %v1751
    %v2212 = vadd.f32 %v2208, %v1764
    %v2213 = vadd.f32 %v2209, %v1768
    %v2214 = vadd.f32 %v2210, %v1772
    %v2215 = vadd.f32 %v2211, %v1776
    %v2220 = vcombine.low %v2212, %v2213
    %v2221 = vcombine.low %v2214, %v2215
    %v2223 = vunpack.c.l.s4 1983009808
    %v2224 = vunpack.c.0.s8 %v2223
    %v2225 = vlaneseq
    %v2226 = vshrl.u32 %v2225, 7
    %v2227 = vsub.s32 %v2224, %v2226
    %v2228 = vrot.slane %v2220, %v2227
    %v2230 = vunpack.c.l.s4 1983009808
    %v2231 = vunpack.c.0.s8 %v2230
    %v2232 = vlaneseq
    %v2233 = vshrl.u32 %v2232, 7
    %v2234 = vsub.s32 %v2231, %v2233
    %v2235 = vrot.slane %v2221, %v2234
    %v2236 = vcombine.low %v2228, %v2235
    %s2238 = scalar_lea.vmem [#allocation2], 96
    %2239 = vst [vmem:[%s2238] sm:$0xff] %v2236
    %2240 = vset.pattern.permute.xlu0 13
    %2241 = vperm.xlu0 %2240, %v1380
    %v2242 = vpop.permute.xlu0 %2241
    %v2244 = vmul.f32 %v2242, %v1739
    %v2245 = vmul.f32 %v2242, %v1743
    %v2246 = vmul.f32 %v2242, %v1747
    %v2247 = vmul.f32 %v2242, %v1751
    %v2248 = vadd.f32 %v2244, %v1764
    %v2249 = vadd.f32 %v2245, %v1768
    %v2250 = vadd.f32 %v2246, %v1772
    %v2251 = vadd.f32 %v2247, %v1776
    %v2256 = vcombine.low %v2248, %v2249
    %v2257 = vcombine.low %v2250, %v2251
    %v2259 = vunpack.c.l.s4 1983009808
    %v2260 = vunpack.c.0.s8 %v2259
    %v2261 = vlaneseq
    %v2262 = vshrl.u32 %v2261, 7
    %v2263 = vsub.s32 %v2260, %v2262
    %v2264 = vrot.slane %v2256, %v2263
    %v2266 = vunpack.c.l.s4 1983009808
    %v2267 = vunpack.c.0.s8 %v2266
    %v2268 = vlaneseq
    %v2269 = vshrl.u32 %v2268, 7
    %v2270 = vsub.s32 %v2267, %v2269
    %v2271 = vrot.slane %v2257, %v2270
    %v2272 = vcombine.low %v2264, %v2271
    %s2274 = scalar_lea.vmem [#allocation2], 104
    %2275 = vst [vmem:[%s2274] sm:$0xff] %v2272
    %2276 = vset.pattern.permute.xlu0 14
    %2277 = vperm.xlu0 %2276, %v1380
    %v2278 = vpop.permute.xlu0 %2277
    %v2280 = vmul.f32 %v2278, %v1739
    %v2281 = vmul.f32 %v2278, %v1743
    %v2282 = vmul.f32 %v2278, %v1747
    %v2283 = vmul.f32 %v2278, %v1751
    %v2284 = vadd.f32 %v2280, %v1764
    %v2285 = vadd.f32 %v2281, %v1768
    %v2286 = vadd.f32 %v2282, %v1772
    %v2287 = vadd.f32 %v2283, %v1776
    %v2292 = vcombine.low %v2284, %v2285
    %v2293 = vcombine.low %v2286, %v2287
    %v2295 = vunpack.c.l.s4 1983009808
    %v2296 = vunpack.c.0.s8 %v2295
    %v2297 = vlaneseq
    %v2298 = vshrl.u32 %v2297, 7
    %v2299 = vsub.s32 %v2296, %v2298
    %v2300 = vrot.slane %v2292, %v2299
    %v2302 = vunpack.c.l.s4 1983009808
    %v2303 = vunpack.c.0.s8 %v2302
    %v2304 = vlaneseq
    %v2305 = vshrl.u32 %v2304, 7
    %v2306 = vsub.s32 %v2303, %v2305
    %v2307 = vrot.slane %v2293, %v2306
    %v2308 = vcombine.low %v2300, %v2307
    %s2310 = scalar_lea.vmem [#allocation2], 112
    %2311 = vst [vmem:[%s2310] sm:$0xff] %v2308
    %v2312 = vmul.f32 %v1435, %v1739
    %v2313 = vmul.f32 %v1435, %v1743
    %v2314 = vmul.f32 %v1435, %v1747
    %v2315 = vmul.f32 %v1435, %v1751
    %v2316 = vadd.f32 %v2312, %v1764
    %v2317 = vadd.f32 %v2313, %v1768
    %v2318 = vadd.f32 %v2314, %v1772
    %v2319 = vadd.f32 %v2315, %v1776
    %v2324 = vcombine.low %v2316, %v2317
    %v2325 = vcombine.low %v2318, %v2319
    %v2327 = vunpack.c.l.s4 1983009808
    %v2328 = vunpack.c.0.s8 %v2327
    %v2329 = vlaneseq
    %v2330 = vshrl.u32 %v2329, 7
    %v2331 = vsub.s32 %v2328, %v2330
    %v2332 = vrot.slane %v2324, %v2331
    %v2334 = vunpack.c.l.s4 1983009808
    %v2335 = vunpack.c.0.s8 %v2334
    %v2336 = vlaneseq
    %v2337 = vshrl.u32 %v2336, 7
    %v2338 = vsub.s32 %v2335, %v2337
    %v2339 = vrot.slane %v2325, %v2338
    %v2340 = vcombine.low %v2332, %v2339
    %s2342 = scalar_lea.vmem [#allocation2], 120
    %2343 = vst [vmem:[%s2342] sm:$0xff] %v2340
    %v2344 = vld [vmem:[#allocation2] sm:$0xff]
    %v2346 = vrot.slane %v1428, 4
    %v2367 = vrot.slane %v1388, 4
    %v2368 = vrot.slane %v1392, 4
    %v2369 = vsel %vm1509, %v2367, %v2368
    %v2370 = vrot.slane %v1389, 4
    %v2371 = vrot.slane %v1393, 4
    %v2372 = vsel %vm1509, %v2370, %v2371
    %v2373 = vrot.slane %v1390, 4
    %v2374 = vrot.slane %v1394, 4
    %v2375 = vsel %vm1509, %v2373, %v2374
    %v2376 = vrot.slane %v1391, 4
    %v2377 = vrot.slane %v1395, 4
    %v2378 = vsel %vm1509, %v2376, %v2377
    %v2379 = vrot.slane %v1396, 4
    %v2380 = vsel %vm1509, %v2368, %v2379
    %v2381 = vrot.slane %v1397, 4
    %v2382 = vsel %vm1509, %v2371, %v2381
    %v2383 = vrot.slane %v1398, 4
    %v2384 = vsel %vm1509, %v2374, %v2383
    %v2385 = vrot.slane %v1399, 4
    %v2386 = vsel %vm1509, %v2377, %v2385
    %v2387 = vrot.slane %v1400, 4
    %v2388 = vsel %vm1509, %v2379, %v2387
    %v2389 = vrot.slane %v1401, 4
    %v2390 = vsel %vm1509, %v2381, %v2389
    %v2391 = vrot.slane %v1402, 4
    %v2392 = vsel %vm1509, %v2383, %v2391
    %v2393 = vrot.slane %v1403, 4
    %v2394 = vsel %vm1509, %v2385, %v2393
    %v2395 = vrot.slane %v1404, 4
    %v2396 = vsel %vm1509, %v2387, %v2395
    %v2397 = vrot.slane %v1405, 4
    %v2398 = vsel %vm1509, %v2389, %v2397
    %v2399 = vrot.slane %v1406, 4
    %v2400 = vsel %vm1509, %v2391, %v2399
    %v2401 = vrot.slane %v1407, 4
    %v2402 = vsel %vm1509, %v2393, %v2401
    %v2419 = vsel %vm77, %v2346, 0
    %2421 = vmatprep.subr.mxu0 %v2372
    %2422 = vmatpush1.msra.mxu0 %v2369
    %2423 = vmatprep.subr.mxu0 %v2382
    %2424 = vmatpush1.msra.mxu0 %v2380
    %2425 = vmatprep.subr.mxu0 %v2390
    %2426 = vmatpush1.msra.mxu0 %v2388
    %2427 = vmatprep.subr.mxu0 %v2398
    %2428 = vmatpush1.msra.mxu0 %v2396
    %2429 = vmatprep.subr.mxu0 0.0
    %2430 = vmatpush1.msra.mxu0 0.0
    %2431 = vmatprep.subr.mxu0 0.0
    %2432 = vmatpush1.msra.mxu0 0.0
    %2433 = vmatprep.subr.mxu0 0.0
    %2434 = vmatpush1.msra.mxu0 0.0
    %2435 = vmatprep.subr.mxu0 0.0
    %2436 = vmatpush1.msra.mxu0 0.0
    %2437 = vmatprep.subr.mxu0 0.0
    %2438 = vmatpush1.msra.mxu0 0.0
    %2439 = vmatprep.subr.mxu0 0.0
    %2440 = vmatpush1.msra.mxu0 0.0
    %2441 = vmatprep.subr.mxu0 0.0
    %2442 = vmatpush1.msra.mxu0 0.0
    %2443 = vmatprep.subr.mxu0 0.0
    %2444 = vmatpush1.msra.mxu0 0.0
    %2445 = vmatprep.subr.mxu0 0.0
    %2446 = vmatpush1.msra.mxu0 0.0
    %2447 = vmatprep.subr.mxu0 0.0
    %2448 = vmatpush1.msra.mxu0 0.0
    %2449 = vmatprep.subr.mxu0 0.0
    %2450 = vmatpush1.msra.mxu0 0.0
    %2451 = vmatprep.subr.mxu0 0.0
    %2452 = vmatpush1.msra.mxu0 0.0
    %2453 = vmatprep.subr.mxu0 0.0
    %2454 = vmatpush1.msra.mxu0 0.0
    %2455 = vmatprep.subr.mxu0 0.0
    %2456 = vmatpush1.msra.mxu0 0.0
    %2457 = vmatprep.subr.mxu0 0.0
    %2458 = vmatpush1.msra.mxu0 0.0
    %2459 = vmatprep.subr.mxu0 0.0
    %2460 = vmatpush1.msra.mxu0 0.0
    %2461 = vmatprep.subr.mxu0 0.0
    %2462 = vmatpush1.msra.mxu0 0.0
    %2463 = vmatprep.subr.mxu0 0.0
    %2464 = vmatpush1.msra.mxu0 0.0
    %2465 = vmatprep.subr.mxu0 0.0
    %2466 = vmatpush1.msra.mxu0 0.0
    %2467 = vmatprep.subr.mxu0 0.0
    %2468 = vmatpush1.msra.mxu0 0.0
    %2469 = vmatprep.subr.mxu0 0.0
    %2470 = vmatpush1.msra.mxu0 0.0
    %2471 = vmatprep.subr.mxu0 0.0
    %2472 = vmatpush1.msra.mxu0 0.0
    %2473 = vmatprep.subr.mxu0 0.0
    %2474 = vmatpush1.msra.mxu0 0.0
    %2475 = vmatprep.subr.mxu0 0.0
    %2476 = vmatpush1.msra.mxu0 0.0
    %2477 = vmatprep.subr.mxu0 0.0
    %2478 = vmatpush1.msra.mxu0 0.0
    %2479 = vmatprep.subr.mxu0 0.0
    %2480 = vmatpush1.msra.mxu0 0.0
    %2481 = vmatprep.subr.mxu0 0.0
    %2482 = vmatpush1.msra.mxu0 0.0
    %2483 = vmatprep.subr.mxu0 0.0
    %2484 = vmatpush1.msra.mxu0 0.0
    %2485 = vmatprep.mubr.f32.mxu0 0.0
    %2486 = vmatmul.mubr.f32.gmra.mrb[0].mxu0 %v2419
    %v2487 = vpop.f32.mrb[0].mxu0
    %v2488 = vadd.f32 0.0, %v2487
    %v2489 = vpop.f32.mrb[0].mxu0
    %v2490 = vadd.f32 0.0, %v2489
    %2491 = vdwg.mxu0
    %2492 = vmatprep.subr.mxu0 %v2378
    %2493 = vmatpush1.msra.mxu0 %v2375
    %2494 = vmatprep.subr.mxu0 %v2386
    %2495 = vmatpush1.msra.mxu0 %v2384
    %2496 = vmatprep.subr.mxu0 %v2394
    %2497 = vmatpush1.msra.mxu0 %v2392
    %2498 = vmatprep.subr.mxu0 %v2402
    %2499 = vmatpush1.msra.mxu0 %v2400
    %2500 = vmatprep.subr.mxu0 0.0
    %2501 = vmatpush1.msra.mxu0 0.0
    %2502 = vmatprep.subr.mxu0 0.0
    %2503 = vmatpush1.msra.mxu0 0.0
    %2504 = vmatprep.subr.mxu0 0.0
    %2505 = vmatpush1.msra.mxu0 0.0
    %2506 = vmatprep.subr.mxu0 0.0
    %2507 = vmatpush1.msra.mxu0 0.0
    %2508 = vmatprep.subr.mxu0 0.0
    %2509 = vmatpush1.msra.mxu0 0.0
    %2510 = vmatprep.subr.mxu0 0.0
    %2511 = vmatpush1.msra.mxu0 0.0
    %2512 = vmatprep.subr.mxu0 0.0
    %2513 = vmatpush1.msra.mxu0 0.0
    %2514 = vmatprep.subr.mxu0 0.0
    %2515 = vmatpush1.msra.mxu0 0.0
    %2516 = vmatprep.subr.mxu0 0.0
    %2517 = vmatpush1.msra.mxu0 0.0
    %2518 = vmatprep.subr.mxu0 0.0
    %2519 = vmatpush1.msra.mxu0 0.0
    %2520 = vmatprep.subr.mxu0 0.0
    %2521 = vmatpush1.msra.mxu0 0.0
    %2522 = vmatprep.subr.mxu0 0.0
    %2523 = vmatpush1.msra.mxu0 0.0
    %2524 = vmatprep.subr.mxu0 0.0
    %2525 = vmatpush1.msra.mxu0 0.0
    %2526 = vmatprep.subr.mxu0 0.0
    %2527 = vmatpush1.msra.mxu0 0.0
    %2528 = vmatprep.subr.mxu0 0.0
    %2529 = vmatpush1.msra.mxu0 0.0
    %2530 = vmatprep.subr.mxu0 0.0
    %2531 = vmatpush1.msra.mxu0 0.0
    %2532 = vmatprep.subr.mxu0 0.0
    %2533 = vmatpush1.msra.mxu0 0.0
    %2534 = vmatprep.subr.mxu0 0.0
    %2535 = vmatpush1.msra.mxu0 0.0
    %2536 = vmatprep.subr.mxu0 0.0
    %2537 = vmatpush1.msra.mxu0 0.0
    %2538 = vmatprep.subr.mxu0 0.0
    %2539 = vmatpush1.msra.mxu0 0.0
    %2540 = vmatprep.subr.mxu0 0.0
    %2541 = vmatpush1.msra.mxu0 0.0
    %2542 = vmatprep.subr.mxu0 0.0
    %2543 = vmatpush1.msra.mxu0 0.0
    %2544 = vmatprep.subr.mxu0 0.0
    %2545 = vmatpush1.msra.mxu0 0.0
    %2546 = vmatprep.subr.mxu0 0.0
    %2547 = vmatpush1.msra.mxu0 0.0
    %2548 = vmatprep.subr.mxu0 0.0
    %2549 = vmatpush1.msra.mxu0 0.0
    %2550 = vmatprep.subr.mxu0 0.0
    %2551 = vmatpush1.msra.mxu0 0.0
    %2552 = vmatprep.subr.mxu0 0.0
    %2553 = vmatpush1.msra.mxu0 0.0
    %2554 = vmatprep.subr.mxu0 0.0
    %2555 = vmatpush1.msra.mxu0 0.0
    %2556 = vmatprep.mubr.f32.mxu0 0.0
    %2557 = vmatmul.mubr.f32.gmra.mrb[0].mxu0 %v2419
    %v2558 = vpop.f32.mrb[0].mxu0
    %v2559 = vadd.f32 0.0, %v2558
    %v2560 = vpop.f32.mrb[0].mxu0
    %v2561 = vadd.f32 0.0, %v2560
    %2562 = vdwg.mxu0
    %v2567 = vcombine.low %v2488, %v2490
    %v2568 = vcombine.low %v2559, %v2561
    %v2570 = vunpack.c.l.s4 1983009808
    %v2571 = vunpack.c.0.s8 %v2570
    %v2572 = vlaneseq
    %v2573 = vshrl.u32 %v2572, 7
    %v2574 = vsub.s32 %v2571, %v2573
    %v2575 = vrot.slane %v2567, %v2574
    %v2577 = vunpack.c.l.s4 1983009808
    %v2578 = vunpack.c.0.s8 %v2577
    %v2579 = vlaneseq
    %v2580 = vshrl.u32 %v2579, 7
    %v2581 = vsub.s32 %v2578, %v2580
    %v2582 = vrot.slane %v2568, %v2581
    %v2583 = vcombine.low %v2575, %v2582
    %v2585 = vadd.f32 %v2344, %v2583
    %v2586 = vmul.f32 %v2585, 0.5
    %v2587 = vtanh.pop %v2586
    %v2588 = vadd.f32 %v2587, 1.0
    %v2589 = vmul.f32 %v2588, 0.5
    %v2591 = vrot.slane %v2585, 2
    %v2593 = vmul.f32 %v2591, 0.5
    %v2594 = vtanh.pop %v2593
    %v2595 = vadd.f32 %v2594, 1.0
    %v2596 = vmul.f32 %v2595, 0.5
    %v2597 = vrot.slane %v2585, 4
    %v2599 = vtanh.pop %v2597
    %v2600 = vrot.slane %v2585, 6
    %v2602 = vmul.f32 %v2600, 0.5
    %v2603 = vtanh.pop %v2602
    %v2604 = vadd.f32 %v2603, 1.0
    %v2605 = vmul.f32 %v2604, 0.5
    %v2606 = vmul.f32 %v2596, %v1430
    %v2607 = vmul.f32 %v2589, %v2599
    %v2608 = vadd.f32 %v2606, %v2607
    %v2609 = vtanh.pop %v2608
    %v2610 = vmul.f32 %v2605, %v2609
    %v2611 = vld [vmem:[%s1842] sm:$0xff]
    %v2613 = vsel %vm77, %v2610, 0
    %2615 = vmatprep.subr.mxu0 %v2372
    %2616 = vmatpush1.msra.mxu0 %v2369
    %2617 = vmatprep.subr.mxu0 %v2382
    %2618 = vmatpush1.msra.mxu0 %v2380
    %2619 = vmatprep.subr.mxu0 %v2390
    %2620 = vmatpush1.msra.mxu0 %v2388
    %2621 = vmatprep.subr.mxu0 %v2398
    %2622 = vmatpush1.msra.mxu0 %v2396
    %2623 = vmatprep.subr.mxu0 0.0
    %2624 = vmatpush1.msra.mxu0 0.0
    %2625 = vmatprep.subr.mxu0 0.0
    %2626 = vmatpush1.msra.mxu0 0.0
    %2627 = vmatprep.subr.mxu0 0.0
    %2628 = vmatpush1.msra.mxu0 0.0
    %2629 = vmatprep.subr.mxu0 0.0
    %2630 = vmatpush1.msra.mxu0 0.0
    %2631 = vmatprep.subr.mxu0 0.0
    %2632 = vmatpush1.msra.mxu0 0.0
    %2633 = vmatprep.subr.mxu0 0.0
    %2634 = vmatpush1.msra.mxu0 0.0
    %2635 = vmatprep.subr.mxu0 0.0
    %2636 = vmatpush1.msra.mxu0 0.0
    %2637 = vmatprep.subr.mxu0 0.0
    %2638 = vmatpush1.msra.mxu0 0.0
    %2639 = vmatprep.subr.mxu0 0.0
    %2640 = vmatpush1.msra.mxu0 0.0
    %2641 = vmatprep.subr.mxu0 0.0
    %2642 = vmatpush1.msra.mxu0 0.0
    %2643 = vmatprep.subr.mxu0 0.0
    %2644 = vmatpush1.msra.mxu0 0.0
    %2645 = vmatprep.subr.mxu0 0.0
    %2646 = vmatpush1.msra.mxu0 0.0
    %2647 = vmatprep.subr.mxu0 0.0
    %2648 = vmatpush1.msra.mxu0 0.0
    %2649 = vmatprep.subr.mxu0 0.0
    %2650 = vmatpush1.msra.mxu0 0.0
    %2651 = vmatprep.subr.mxu0 0.0
    %2652 = vmatpush1.msra.mxu0 0.0
    %2653 = vmatprep.subr.mxu0 0.0
    %2654 = vmatpush1.msra.mxu0 0.0
    %2655 = vmatprep.subr.mxu0 0.0
    %2656 = vmatpush1.msra.mxu0 0.0
    %2657 = vmatprep.subr.mxu0 0.0
    %2658 = vmatpush1.msra.mxu0 0.0
    %2659 = vmatprep.subr.mxu0 0.0
    %2660 = vmatpush1.msra.mxu0 0.0
    %2661 = vmatprep.subr.mxu0 0.0
    %2662 = vmatpush1.msra.mxu0 0.0
    %2663 = vmatprep.subr.mxu0 0.0
    %2664 = vmatpush1.msra.mxu0 0.0
    %2665 = vmatprep.subr.mxu0 0.0
    %2666 = vmatpush1.msra.mxu0 0.0
    %2667 = vmatprep.subr.mxu0 0.0
    %2668 = vmatpush1.msra.mxu0 0.0
    %2669 = vmatprep.subr.mxu0 0.0
    %2670 = vmatpush1.msra.mxu0 0.0
    %2671 = vmatprep.subr.mxu0 0.0
    %2672 = vmatpush1.msra.mxu0 0.0
    %2673 = vmatprep.subr.mxu0 0.0
    %2674 = vmatpush1.msra.mxu0 0.0
    %2675 = vmatprep.subr.mxu0 0.0
    %2676 = vmatpush1.msra.mxu0 0.0
    %2677 = vmatprep.subr.mxu0 0.0
    %2678 = vmatpush1.msra.mxu0 0.0
    %2679 = vmatprep.mubr.f32.mxu0 0.0
    %2680 = vmatmul.mubr.f32.gmra.mrb[0].mxu0 %v2613
    %v2681 = vpop.f32.mrb[0].mxu0
    %v2682 = vadd.f32 0.0, %v2681
    %v2683 = vpop.f32.mrb[0].mxu0
    %v2684 = vadd.f32 0.0, %v2683
    %2685 = vdwg.mxu0
    %2686 = vmatprep.subr.mxu0 %v2378
    %2687 = vmatpush1.msra.mxu0 %v2375
    %2688 = vmatprep.subr.mxu0 %v2386
    %2689 = vmatpush1.msra.mxu0 %v2384
    %2690 = vmatprep.subr.mxu0 %v2394
    %2691 = vmatpush1.msra.mxu0 %v2392
    %2692 = vmatprep.subr.mxu0 %v2402
    %2693 = vmatpush1.msra.mxu0 %v2400
    %2694 = vmatprep.subr.mxu0 0.0
    %2695 = vmatpush1.msra.mxu0 0.0
    %2696 = vmatprep.subr.mxu0 0.0
    %2697 = vmatpush1.msra.mxu0 0.0
    %2698 = vmatprep.subr.mxu0 0.0
    %2699 = vmatpush1.msra.mxu0 0.0
    %2700 = vmatprep.subr.mxu0 0.0
    %2701 = vmatpush1.msra.mxu0 0.0
    %2702 = vmatprep.subr.mxu0 0.0
    %2703 = vmatpush1.msra.mxu0 0.0
    %2704 = vmatprep.subr.mxu0 0.0
    %2705 = vmatpush1.msra.mxu0 0.0
    %2706 = vmatprep.subr.mxu0 0.0
    %2707 = vmatpush1.msra.mxu0 0.0
    %2708 = vmatprep.subr.mxu0 0.0
    %2709 = vmatpush1.msra.mxu0 0.0
    %2710 = vmatprep.subr.mxu0 0.0
    %2711 = vmatpush1.msra.mxu0 0.0
    %2712 = vmatprep.subr.mxu0 0.0
    %2713 = vmatpush1.msra.mxu0 0.0
    %2714 = vmatprep.subr.mxu0 0.0
    %2715 = vmatpush1.msra.mxu0 0.0
    %2716 = vmatprep.subr.mxu0 0.0
    %2717 = vmatpush1.msra.mxu0 0.0
    %2718 = vmatprep.subr.mxu0 0.0
    %2719 = vmatpush1.msra.mxu0 0.0
    %2720 = vmatprep.subr.mxu0 0.0
    %2721 = vmatpush1.msra.mxu0 0.0
    %2722 = vmatprep.subr.mxu0 0.0
    %2723 = vmatpush1.msra.mxu0 0.0
    %2724 = vmatprep.subr.mxu0 0.0
    %2725 = vmatpush1.msra.mxu0 0.0
    %2726 = vmatprep.subr.mxu0 0.0
    %2727 = vmatpush1.msra.mxu0 0.0
    %2728 = vmatprep.subr.mxu0 0.0
    %2729 = vmatpush1.msra.mxu0 0.0
    %2730 = vmatprep.subr.mxu0 0.0
    %2731 = vmatpush1.msra.mxu0 0.0
    %2732 = vmatprep.subr.mxu0 0.0
    %2733 = vmatpush1.msra.mxu0 0.0
    %2734 = vmatprep.subr.mxu0 0.0
    %2735 = vmatpush1.msra.mxu0 0.0
    %2736 = vmatprep.subr.mxu0 0.0
    %2737 = vmatpush1.msra.mxu0 0.0
    %2738 = vmatprep.subr.mxu0 0.0
    %2739 = vmatpush1.msra.mxu0 0.0
    %2740 = vmatprep.subr.mxu0 0.0
    %2741 = vmatpush1.msra.mxu0 0.0
    %2742 = vmatprep.subr.mxu0 0.0
    %2743 = vmatpush1.msra.mxu0 0.0
    %2744 = vmatprep.subr.mxu0 0.0
    %2745 = vmatpush1.msra.mxu0 0.0
    %2746 = vmatprep.subr.mxu0 0.0
    %2747 = vmatpush1.msra.mxu0 0.0
    %2748 = vmatprep.subr.mxu0 0.0
    %2749 = vmatpush1.msra.mxu0 0.0
    %2750 = vmatprep.mubr.f32.mxu0 0.0
    %2751 = vmatmul.mubr.f32.gmra.mrb[0].mxu0 %v2613
    %v2752 = vpop.f32.mrb[0].mxu0
    %v2753 = vadd.f32 0.0, %v2752
    %v2754 = vpop.f32.mrb[0].mxu0
    %v2755 = vadd.f32 0.0, %v2754
    %2756 = vdwg.mxu0
    %v2761 = vcombine.low %v2682, %v2684
    %v2762 = vcombine.low %v2753, %v2755
    %v2764 = vunpack.c.l.s4 1983009808
    %v2765 = vunpack.c.0.s8 %v2764
    %v2766 = vlaneseq
    %v2767 = vshrl.u32 %v2766, 7
    %v2768 = vsub.s32 %v2765, %v2767
    %v2769 = vrot.slane %v2761, %v2768
    %v2771 = vunpack.c.l.s4 1983009808
    %v2772 = vunpack.c.0.s8 %v2771
    %v2773 = vlaneseq
    %v2774 = vshrl.u32 %v2773, 7
    %v2775 = vsub.s32 %v2772, %v2774
    %v2776 = vrot.slane %v2762, %v2775
    %v2777 = vcombine.low %v2769, %v2776
    %v2779 = vadd.f32 %v2611, %v2777
    %v2780 = vmul.f32 %v2779, 0.5
    %v2781 = vtanh.pop %v2780
    %v2782 = vadd.f32 %v2781, 1.0
    %v2783 = vmul.f32 %v2782, 0.5
    %v2785 = vrot.slane %v2779, 2
    %v2787 = vmul.f32 %v2785, 0.5
    %v2788 = vtanh.pop %v2787
    %v2789 = vadd.f32 %v2788, 1.0
    %v2790 = vmul.f32 %v2789, 0.5
    %v2791 = vrot.slane %v2779, 4
    %v2793 = vtanh.pop %v2791
    %v2794 = vrot.slane %v2779, 6
    %v2796 = vmul.f32 %v2794, 0.5
    %v2797 = vtanh.pop %v2796
    %v2798 = vadd.f32 %v2797, 1.0
    %v2799 = vmul.f32 %v2798, 0.5
    %v2800 = vmul.f32 %v2790, %v2608
    %v2801 = vmul.f32 %v2783, %v2793
    %v2802 = vadd.f32 %v2800, %v2801
    %v2803 = vtanh.pop %v2802
    %v2804 = vmul.f32 %v2799, %v2803
    %v2805 = vld [vmem:[%s1878] sm:$0xff]
    %v2807 = vsel %vm77, %v2804, 0
    %2809 = vmatprep.subr.mxu0 %v2372
    %2810 = vmatpush1.msra.mxu0 %v2369
    %2811 = vmatprep.subr.mxu0 %v2382
    %2812 = vmatpush1.msra.mxu0 %v2380
    %2813 = vmatprep.subr.mxu0 %v2390
    %2814 = vmatpush1.msra.mxu0 %v2388
    %2815 = vmatprep.subr.mxu0 %v2398
    %2816 = vmatpush1.msra.mxu0 %v2396
    %2817 = vmatprep.subr.mxu0 0.0
    %2818 = vmatpush1.msra.mxu0 0.0
    %2819 = vmatprep.subr.mxu0 0.0
    %2820 = vmatpush1.msra.mxu0 0.0
    %2821 = vmatprep.subr.mxu0 0.0
    %2822 = vmatpush1.msra.mxu0 0.0
    %2823 = vmatprep.subr.mxu0 0.0
    %2824 = vmatpush1.msra.mxu0 0.0
    %2825 = vmatprep.subr.mxu0 0.0
    %2826 = vmatpush1.msra.mxu0 0.0
    %2827 = vmatprep.subr.mxu0 0.0
    %2828 = vmatpush1.msra.mxu0 0.0
    %2829 = vmatprep.subr.mxu0 0.0
    %2830 = vmatpush1.msra.mxu0 0.0
    %2831 = vmatprep.subr.mxu0 0.0
    %2832 = vmatpush1.msra.mxu0 0.0
    %2833 = vmatprep.subr.mxu0 0.0
    %2834 = vmatpush1.msra.mxu0 0.0
    %2835 = vmatprep.subr.mxu0 0.0
    %2836 = vmatpush1.msra.mxu0 0.0
    %2837 = vmatprep.subr.mxu0 0.0
    %2838 = vmatpush1.msra.mxu0 0.0
    %2839 = vmatprep.subr.mxu0 0.0
    %2840 = vmatpush1.msra.mxu0 0.0
    %2841 = vmatprep.subr.mxu0 0.0
    %2842 = vmatpush1.msra.mxu0 0.0
    %2843 = vmatprep.subr.mxu0 0.0
    %2844 = vmatpush1.msra.mxu0 0.0
    %2845 = vmatprep.subr.mxu0 0.0
    %2846 = vmatpush1.msra.mxu0 0.0
    %2847 = vmatprep.subr.mxu0 0.0
    %2848 = vmatpush1.msra.mxu0 0.0
    %2849 = vmatprep.subr.mxu0 0.0
    %2850 = vmatpush1.msra.mxu0 0.0
    %2851 = vmatprep.subr.mxu0 0.0
    %2852 = vmatpush1.msra.mxu0 0.0
    %2853 = vmatprep.subr.mxu0 0.0
    %2854 = vmatpush1.msra.mxu0 0.0
    %2855 = vmatprep.subr.mxu0 0.0
    %2856 = vmatpush1.msra.mxu0 0.0
    %2857 = vmatprep.subr.mxu0 0.0
    %2858 = vmatpush1.msra.mxu0 0.0
    %2859 = vmatprep.subr.mxu0 0.0
    %2860 = vmatpush1.msra.mxu0 0.0
    %2861 = vmatprep.subr.mxu0 0.0
    %2862 = vmatpush1.msra.mxu0 0.0
    %2863 = vmatprep.subr.mxu0 0.0
    %2864 = vmatpush1.msra.mxu0 0.0
    %2865 = vmatprep.subr.mxu0 0.0
    %2866 = vmatpush1.msra.mxu0 0.0
    %2867 = vmatprep.subr.mxu0 0.0
    %2868 = vmatpush1.msra.mxu0 0.0
    %2869 = vmatprep.subr.mxu0 0.0
    %2870 = vmatpush1.msra.mxu0 0.0
    %2871 = vmatprep.subr.mxu0 0.0
    %2872 = vmatpush1.msra.mxu0 0.0
    %2873 = vmatprep.mubr.f32.mxu0 0.0
    %2874 = vmatmul.mubr.f32.gmra.mrb[0].mxu0 %v2807
    %v2875 = vpop.f32.mrb[0].mxu0
    %v2876 = vadd.f32 0.0, %v2875
    %v2877 = vpop.f32.mrb[0].mxu0
    %v2878 = vadd.f32 0.0, %v2877
    %2879 = vdwg.mxu0
    %2880 = vmatprep.subr.mxu0 %v2378
    %2881 = vmatpush1.msra.mxu0 %v2375
    %2882 = vmatprep.subr.mxu0 %v2386
    %2883 = vmatpush1.msra.mxu0 %v2384
    %2884 = vmatprep.subr.mxu0 %v2394
    %2885 = vmatpush1.msra.mxu0 %v2392
    %2886 = vmatprep.subr.mxu0 %v2402
    %2887 = vmatpush1.msra.mxu0 %v2400
    %2888 = vmatprep.subr.mxu0 0.0
    %2889 = vmatpush1.msra.mxu0 0.0
    %2890 = vmatprep.subr.mxu0 0.0
    %2891 = vmatpush1.msra.mxu0 0.0
    %2892 = vmatprep.subr.mxu0 0.0
    %2893 = vmatpush1.msra.mxu0 0.0
    %2894 = vmatprep.subr.mxu0 0.0
    %2895 = vmatpush1.msra.mxu0 0.0
    %2896 = vmatprep.subr.mxu0 0.0
    %2897 = vmatpush1.msra.mxu0 0.0
    %2898 = vmatprep.subr.mxu0 0.0
    %2899 = vmatpush1.msra.mxu0 0.0
    %2900 = vmatprep.subr.mxu0 0.0
    %2901 = vmatpush1.msra.mxu0 0.0
    %2902 = vmatprep.subr.mxu0 0.0
    %2903 = vmatpush1.msra.mxu0 0.0
    %2904 = vmatprep.subr.mxu0 0.0
    %2905 = vmatpush1.msra.mxu0 0.0
    %2906 = vmatprep.subr.mxu0 0.0
    %2907 = vmatpush1.msra.mxu0 0.0
    %2908 = vmatprep.subr.mxu0 0.0
    %2909 = vmatpush1.msra.mxu0 0.0
    %2910 = vmatprep.subr.mxu0 0.0
    %2911 = vmatpush1.msra.mxu0 0.0
    %2912 = vmatprep.subr.mxu0 0.0
    %2913 = vmatpush1.msra.mxu0 0.0
    %2914 = vmatprep.subr.mxu0 0.0
    %2915 = vmatpush1.msra.mxu0 0.0
    %2916 = vmatprep.subr.mxu0 0.0
    %2917 = vmatpush1.msra.mxu0 0.0
    %2918 = vmatprep.subr.mxu0 0.0
    %2919 = vmatpush1.msra.mxu0 0.0
    %2920 = vmatprep.subr.mxu0 0.0
    %2921 = vmatpush1.msra.mxu0 0.0
    %2922 = vmatprep.subr.mxu0 0.0
    %2923 = vmatpush1.msra.mxu0 0.0
    %2924 = vmatprep.subr.mxu0 0.0
    %2925 = vmatpush1.msra.mxu0 0.0
    %2926 = vmatprep.subr.mxu0 0.0
    %2927 = vmatpush1.msra.mxu0 0.0
    %2928 = vmatprep.subr.mxu0 0.0
    %2929 = vmatpush1.msra.mxu0 0.0
    %2930 = vmatprep.subr.mxu0 0.0
    %2931 = vmatpush1.msra.mxu0 0.0
    %2932 = vmatprep.subr.mxu0 0.0
    %2933 = vmatpush1.msra.mxu0 0.0
    %2934 = vmatprep.subr.mxu0 0.0
    %2935 = vmatpush1.msra.mxu0 0.0
    %2936 = vmatprep.subr.mxu0 0.0
    %2937 = vmatpush1.msra.mxu0 0.0
    %2938 = vmatprep.subr.mxu0 0.0
    %2939 = vmatpush1.msra.mxu0 0.0
    %2940 = vmatprep.subr.mxu0 0.0
    %2941 = vmatpush1.msra.mxu0 0.0
    %2942 = vmatprep.subr.mxu0 0.0
    %2943 = vmatpush1.msra.mxu0 0.0
    %2944 = vmatprep.mubr.f32.mxu0 0.0
    %2945 = vmatmul.mubr.f32.gmra.mrb[0].mxu0 %v2807
    %v2946 = vpop.f32.mrb[0].mxu0
    %v2947 = vadd.f32 0.0, %v2946
    %v2948 = vpop.f32.mrb[0].mxu0
    %v2949 = vadd.f32 0.0, %v2948
    %2950 = vdwg.mxu0
    %v2955 = vcombine.low %v2876, %v2878
    %v2956 = vcombine.low %v2947, %v2949
    %v2958 = vunpack.c.l.s4 1983009808
    %v2959 = vunpack.c.0.s8 %v2958
    %v2960 = vlaneseq
    %v2961 = vshrl.u32 %v2960, 7
    %v2962 = vsub.s32 %v2959, %v2961
    %v2963 = vrot.slane %v2955, %v2962
    %v2965 = vunpack.c.l.s4 1983009808
    %v2966 = vunpack.c.0.s8 %v2965
    %v2967 = vlaneseq
    %v2968 = vshrl.u32 %v2967, 7
    %v2969 = vsub.s32 %v2966, %v2968
    %v2970 = vrot.slane %v2956, %v2969
    %v2971 = vcombine.low %v2963, %v2970
    %v2973 = vadd.f32 %v2805, %v2971
    %v2974 = vmul.f32 %v2973, 0.5
    %v2975 = vtanh.pop %v2974
    %v2976 = vadd.f32 %v2975, 1.0
    %v2977 = vmul.f32 %v2976, 0.5
    %v2979 = vrot.slane %v2973, 2
    %v2981 = vmul.f32 %v2979, 0.5
    %v2982 = vtanh.pop %v2981
    %v2983 = vadd.f32 %v2982, 1.0
    %v2984 = vmul.f32 %v2983, 0.5
    %v2985 = vrot.slane %v2973, 4
    %v2987 = vtanh.pop %v2985
    %v2988 = vrot.slane %v2973, 6
    %v2990 = vmul.f32 %v2988, 0.5
    %v2991 = vtanh.pop %v2990
    %v2992 = vadd.f32 %v2991, 1.0
    %v2993 = vmul.f32 %v2992, 0.5
    %v2994 = vmul.f32 %v2984, %v2802
    %v2995 = vmul.f32 %v2977, %v2987
    %v2996 = vadd.f32 %v2994, %v2995
    %v2997 = vtanh.pop %v2996
    %v2998 = vmul.f32 %v2993, %v2997
    %v2999 = vld [vmem:[%s1914] sm:$0xff]
    %v3001 = vsel %vm77, %v2998, 0
    %3003 = vmatprep.subr.mxu0 %v2372
    %3004 = vmatpush1.msra.mxu0 %v2369
    %3005 = vmatprep.subr.mxu0 %v2382
    %3006 = vmatpush1.msra.mxu0 %v2380
    %3007 = vmatprep.subr.mxu0 %v2390
    %3008 = vmatpush1.msra.mxu0 %v2388
    %3009 = vmatprep.subr.mxu0 %v2398
    %3010 = vmatpush1.msra.mxu0 %v2396
    %3011 = vmatprep.subr.mxu0 0.0
    %3012 = vmatpush1.msra.mxu0 0.0
    %3013 = vmatprep.subr.mxu0 0.0
    %3014 = vmatpush1.msra.mxu0 0.0
    %3015 = vmatprep.subr.mxu0 0.0
    %3016 = vmatpush1.msra.mxu0 0.0
    %3017 = vmatprep.subr.mxu0 0.0
    %3018 = vmatpush1.msra.mxu0 0.0
    %3019 = vmatprep.subr.mxu0 0.0
    %3020 = vmatpush1.msra.mxu0 0.0
    %3021 = vmatprep.subr.mxu0 0.0
    %3022 = vmatpush1.msra.mxu0 0.0
    %3023 = vmatprep.subr.mxu0 0.0
    %3024 = vmatpush1.msra.mxu0 0.0
    %3025 = vmatprep.subr.mxu0 0.0
    %3026 = vmatpush1.msra.mxu0 0.0
    %3027 = vmatprep.subr.mxu0 0.0
    %3028 = vmatpush1.msra.mxu0 0.0
    %3029 = vmatprep.subr.mxu0 0.0
    %3030 = vmatpush1.msra.mxu0 0.0
    %3031 = vmatprep.subr.mxu0 0.0
    %3032 = vmatpush1.msra.mxu0 0.0
    %3033 = vmatprep.subr.mxu0 0.0
    %3034 = vmatpush1.msra.mxu0 0.0
    %3035 = vmatprep.subr.mxu0 0.0
    %3036 = vmatpush1.msra.mxu0 0.0
    %3037 = vmatprep.subr.mxu0 0.0
    %3038 = vmatpush1.msra.mxu0 0.0
    %3039 = vmatprep.subr.mxu0 0.0
    %3040 = vmatpush1.msra.mxu0 0.0
    %3041 = vmatprep.subr.mxu0 0.0
    %3042 = vmatpush1.msra.mxu0 0.0
    %3043 = vmatprep.subr.mxu0 0.0
    %3044 = vmatpush1.msra.mxu0 0.0
    %3045 = vmatprep.subr.mxu0 0.0
    %3046 = vmatpush1.msra.mxu0 0.0
    %3047 = vmatprep.subr.mxu0 0.0
    %3048 = vmatpush1.msra.mxu0 0.0
    %3049 = vmatprep.subr.mxu0 0.0
    %3050 = vmatpush1.msra.mxu0 0.0
    %3051 = vmatprep.subr.mxu0 0.0
    %3052 = vmatpush1.msra.mxu0 0.0
    %3053 = vmatprep.subr.mxu0 0.0
    %3054 = vmatpush1.msra.mxu0 0.0
    %3055 = vmatprep.subr.mxu0 0.0
    %3056 = vmatpush1.msra.mxu0 0.0
    %3057 = vmatprep.subr.mxu0 0.0
    %3058 = vmatpush1.msra.mxu0 0.0
    %3059 = vmatprep.subr.mxu0 0.0
    %3060 = vmatpush1.msra.mxu0 0.0
    %3061 = vmatprep.subr.mxu0 0.0
    %3062 = vmatpush1.msra.mxu0 0.0
    %3063 = vmatprep.subr.mxu0 0.0
    %3064 = vmatpush1.msra.mxu0 0.0
    %3065 = vmatprep.subr.mxu0 0.0
    %3066 = vmatpush1.msra.mxu0 0.0
    %3067 = vmatprep.mubr.f32.mxu0 0.0
    %3068 = vmatmul.mubr.f32.gmra.mrb[0].mxu0 %v3001
    %v3069 = vpop.f32.mrb[0].mxu0
    %v3070 = vadd.f32 0.0, %v3069
    %v3071 = vpop.f32.mrb[0].mxu0
    %v3072 = vadd.f32 0.0, %v3071
    %3073 = vdwg.mxu0
    %3074 = vmatprep.subr.mxu0 %v2378
    %3075 = vmatpush1.msra.mxu0 %v2375
    %3076 = vmatprep.subr.mxu0 %v2386
    %3077 = vmatpush1.msra.mxu0 %v2384
    %3078 = vmatprep.subr.mxu0 %v2394
    %3079 = vmatpush1.msra.mxu0 %v2392
    %3080 = vmatprep.subr.mxu0 %v2402
    %3081 = vmatpush1.msra.mxu0 %v2400
    %3082 = vmatprep.subr.mxu0 0.0
    %3083 = vmatpush1.msra.mxu0 0.0
    %3084 = vmatprep.subr.mxu0 0.0
    %3085 = vmatpush1.msra.mxu0 0.0
    %3086 = vmatprep.subr.mxu0 0.0
    %3087 = vmatpush1.msra.mxu0 0.0
    %3088 = vmatprep.subr.mxu0 0.0
    %3089 = vmatpush1.msra.mxu0 0.0
    %3090 = vmatprep.subr.mxu0 0.0
    %3091 = vmatpush1.msra.mxu0 0.0
    %3092 = vmatprep.subr.mxu0 0.0
    %3093 = vmatpush1.msra.mxu0 0.0
    %3094 = vmatprep.subr.mxu0 0.0
    %3095 = vmatpush1.msra.mxu0 0.0
    %3096 = vmatprep.subr.mxu0 0.0
    %3097 = vmatpush1.msra.mxu0 0.0
    %3098 = vmatprep.subr.mxu0 0.0
    %3099 = vmatpush1.msra.mxu0 0.0
    %3100 = vmatprep.subr.mxu0 0.0
    %3101 = vmatpush1.msra.mxu0 0.0
    %3102 = vmatprep.subr.mxu0 0.0
    %3103 = vmatpush1.msra.mxu0 0.0
    %3104 = vmatprep.subr.mxu0 0.0
    %3105 = vmatpush1.msra.mxu0 0.0
    %3106 = vmatprep.subr.mxu0 0.0
    %3107 = vmatpush1.msra.mxu0 0.0
    %3108 = vmatprep.subr.mxu0 0.0
    %3109 = vmatpush1.msra.mxu0 0.0
    %3110 = vmatprep.subr.mxu0 0.0
    %3111 = vmatpush1.msra.mxu0 0.0
    %3112 = vmatprep.subr.mxu0 0.0
    %3113 = vmatpush1.msra.mxu0 0.0
    %3114 = vmatprep.subr.mxu0 0.0
    %3115 = vmatpush1.msra.mxu0 0.0
    %3116 = vmatprep.subr.mxu0 0.0
    %3117 = vmatpush1.msra.mxu0 0.0
    %3118 = vmatprep.subr.mxu0 0.0
    %3119 = vmatpush1.msra.mxu0 0.0
    %3120 = vmatprep.subr.mxu0 0.0
    %3121 = vmatpush1.msra.mxu0 0.0
    %3122 = vmatprep.subr.mxu0 0.0
    %3123 = vmatpush1.msra.mxu0 0.0
    %3124 = vmatprep.subr.mxu0 0.0
    %3125 = vmatpush1.msra.mxu0 0.0
    %3126 = vmatprep.subr.mxu0 0.0
    %3127 = vmatpush1.msra.mxu0 0.0
    %3128 = vmatprep.subr.mxu0 0.0
    %3129 = vmatpush1.msra.mxu0 0.0
    %3130 = vmatprep.subr.mxu0 0.0
    %3131 = vmatpush1.msra.mxu0 0.0
    %3132 = vmatprep.subr.mxu0 0.0
    %3133 = vmatpush1.msra.mxu0 0.0
    %3134 = vmatprep.subr.mxu0 0.0
    %3135 = vmatpush1.msra.mxu0 0.0
    %3136 = vmatprep.subr.mxu0 0.0
    %3137 = vmatpush1.msra.mxu0 0.0
    %3138 = vmatprep.mubr.f32.mxu0 0.0
    %3139 = vmatmul.mubr.f32.gmra.mrb[0].mxu0 %v3001
    %v3140 = vpop.f32.mrb[0].mxu0
    %v3141 = vadd.f32 0.0, %v3140
    %v3142 = vpop.f32.mrb[0].mxu0
    %v3143 = vadd.f32 0.0, %v3142
    %3144 = vdwg.mxu0
    %v3149 = vcombine.low %v3070, %v3072
    %v3150 = vcombine.low %v3141, %v3143
    %v3152 = vunpack.c.l.s4 1983009808
    %v3153 = vunpack.c.0.s8 %v3152
    %v3154 = vlaneseq
    %v3155 = vshrl.u32 %v3154, 7
    %v3156 = vsub.s32 %v3153, %v3155
    %v3157 = vrot.slane %v3149, %v3156
    %v3159 = vunpack.c.l.s4 1983009808
    %v3160 = vunpack.c.0.s8 %v3159
    %v3161 = vlaneseq
    %v3162 = vshrl.u32 %v3161, 7
    %v3163 = vsub.s32 %v3160, %v3162
    %v3164 = vrot.slane %v3150, %v3163
    %v3165 = vcombine.low %v3157, %v3164
    %v3167 = vadd.f32 %v2999, %v3165
    %v3168 = vmul.f32 %v3167, 0.5
    %v3169 = vtanh.pop %v3168
    %v3170 = vadd.f32 %v3169, 1.0
    %v3171 = vmul.f32 %v3170, 0.5
    %v3173 = vrot.slane %v3167, 2
    %v3175 = vmul.f32 %v3173, 0.5
    %v3176 = vtanh.pop %v3175
    %v3177 = vadd.f32 %v3176, 1.0
    %v3178 = vmul.f32 %v3177, 0.5
    %v3179 = vrot.slane %v3167, 4
    %v3181 = vtanh.pop %v3179
    %v3182 = vrot.slane %v3167, 6
    %v3184 = vmul.f32 %v3182, 0.5
    %v3185 = vtanh.pop %v3184
    %v3186 = vadd.f32 %v3185, 1.0
    %v3187 = vmul.f32 %v3186, 0.5
    %v3188 = vmul.f32 %v3178, %v2996
    %v3189 = vmul.f32 %v3171, %v3181
    %v3190 = vadd.f32 %v3188, %v3189
    %v3191 = vtanh.pop %v3190
    %v3192 = vmul.f32 %v3187, %v3191
    %v3193 = vld [vmem:[%s1950] sm:$0xff]
    %v3195 = vsel %vm77, %v3192, 0
    %3197 = vmatprep.subr.mxu0 %v2372
    %3198 = vmatpush1.msra.mxu0 %v2369
    %3199 = vmatprep.subr.mxu0 %v2382
    %3200 = vmatpush1.msra.mxu0 %v2380
    %3201 = vmatprep.subr.mxu0 %v2390
    %3202 = vmatpush1.msra.mxu0 %v2388
    %3203 = vmatprep.subr.mxu0 %v2398
    %3204 = vmatpush1.msra.mxu0 %v2396
    %3205 = vmatprep.subr.mxu0 0.0
    %3206 = vmatpush1.msra.mxu0 0.0
    %3207 = vmatprep.subr.mxu0 0.0
    %3208 = vmatpush1.msra.mxu0 0.0
    %3209 = vmatprep.subr.mxu0 0.0
    %3210 = vmatpush1.msra.mxu0 0.0
    %3211 = vmatprep.subr.mxu0 0.0
    %3212 = vmatpush1.msra.mxu0 0.0
    %3213 = vmatprep.subr.mxu0 0.0
    %3214 = vmatpush1.msra.mxu0 0.0
    %3215 = vmatprep.subr.mxu0 0.0
    %3216 = vmatpush1.msra.mxu0 0.0
    %3217 = vmatprep.subr.mxu0 0.0
    %3218 = vmatpush1.msra.mxu0 0.0
    %3219 = vmatprep.subr.mxu0 0.0
    %3220 = vmatpush1.msra.mxu0 0.0
    %3221 = vmatprep.subr.mxu0 0.0
    %3222 = vmatpush1.msra.mxu0 0.0
    %3223 = vmatprep.subr.mxu0 0.0
    %3224 = vmatpush1.msra.mxu0 0.0
    %3225 = vmatprep.subr.mxu0 0.0
    %3226 = vmatpush1.msra.mxu0 0.0
    %3227 = vmatprep.subr.mxu0 0.0
    %3228 = vmatpush1.msra.mxu0 0.0
    %3229 = vmatprep.subr.mxu0 0.0
    %3230 = vmatpush1.msra.mxu0 0.0
    %3231 = vmatprep.subr.mxu0 0.0
    %3232 = vmatpush1.msra.mxu0 0.0
    %3233 = vmatprep.subr.mxu0 0.0
    %3234 = vmatpush1.msra.mxu0 0.0
    %3235 = vmatprep.subr.mxu0 0.0
    %3236 = vmatpush1.msra.mxu0 0.0
    %3237 = vmatprep.subr.mxu0 0.0
    %3238 = vmatpush1.msra.mxu0 0.0
    %3239 = vmatprep.subr.mxu0 0.0
    %3240 = vmatpush1.msra.mxu0 0.0
    %3241 = vmatprep.subr.mxu0 0.0
    %3242 = vmatpush1.msra.mxu0 0.0
    %3243 = vmatprep.subr.mxu0 0.0
    %3244 = vmatpush1.msra.mxu0 0.0
    %3245 = vmatprep.subr.mxu0 0.0
    %3246 = vmatpush1.msra.mxu0 0.0
    %3247 = vmatprep.subr.mxu0 0.0
    %3248 = vmatpush1.msra.mxu0 0.0
    %3249 = vmatprep.subr.mxu0 0.0
    %3250 = vmatpush1.msra.mxu0 0.0
    %3251 = vmatprep.subr.mxu0 0.0
    %3252 = vmatpush1.msra.mxu0 0.0
    %3253 = vmatprep.subr.mxu0 0.0
    %3254 = vmatpush1.msra.mxu0 0.0
    %3255 = vmatprep.subr.mxu0 0.0
    %3256 = vmatpush1.msra.mxu0 0.0
    %3257 = vmatprep.subr.mxu0 0.0
    %3258 = vmatpush1.msra.mxu0 0.0
    %3259 = vmatprep.subr.mxu0 0.0
    %3260 = vmatpush1.msra.mxu0 0.0
    %3261 = vmatprep.mubr.f32.mxu0 0.0
    %3262 = vmatmul.mubr.f32.gmra.mrb[0].mxu0 %v3195
    %v3263 = vpop.f32.mrb[0].mxu0
    %v3264 = vadd.f32 0.0, %v3263
    %v3265 = vpop.f32.mrb[0].mxu0
    %v3266 = vadd.f32 0.0, %v3265
    %3267 = vdwg.mxu0
    %3268 = vmatprep.subr.mxu0 %v2378
    %3269 = vmatpush1.msra.mxu0 %v2375
    %3270 = vmatprep.subr.mxu0 %v2386
    %3271 = vmatpush1.msra.mxu0 %v2384
    %3272 = vmatprep.subr.mxu0 %v2394
    %3273 = vmatpush1.msra.mxu0 %v2392
    %3274 = vmatprep.subr.mxu0 %v2402
    %3275 = vmatpush1.msra.mxu0 %v2400
    %3276 = vmatprep.subr.mxu0 0.0
    %3277 = vmatpush1.msra.mxu0 0.0
    %3278 = vmatprep.subr.mxu0 0.0
    %3279 = vmatpush1.msra.mxu0 0.0
    %3280 = vmatprep.subr.mxu0 0.0
    %3281 = vmatpush1.msra.mxu0 0.0
    %3282 = vmatprep.subr.mxu0 0.0
    %3283 = vmatpush1.msra.mxu0 0.0
    %3284 = vmatprep.subr.mxu0 0.0
    %3285 = vmatpush1.msra.mxu0 0.0
    %3286 = vmatprep.subr.mxu0 0.0
    %3287 = vmatpush1.msra.mxu0 0.0
    %3288 = vmatprep.subr.mxu0 0.0
    %3289 = vmatpush1.msra.mxu0 0.0
    %3290 = vmatprep.subr.mxu0 0.0
    %3291 = vmatpush1.msra.mxu0 0.0
    %3292 = vmatprep.subr.mxu0 0.0
    %3293 = vmatpush1.msra.mxu0 0.0
    %3294 = vmatprep.subr.mxu0 0.0
    %3295 = vmatpush1.msra.mxu0 0.0
    %3296 = vmatprep.subr.mxu0 0.0
    %3297 = vmatpush1.msra.mxu0 0.0
    %3298 = vmatprep.subr.mxu0 0.0
    %3299 = vmatpush1.msra.mxu0 0.0
    %3300 = vmatprep.subr.mxu0 0.0
    %3301 = vmatpush1.msra.mxu0 0.0
    %3302 = vmatprep.subr.mxu0 0.0
    %3303 = vmatpush1.msra.mxu0 0.0
    %3304 = vmatprep.subr.mxu0 0.0
    %3305 = vmatpush1.msra.mxu0 0.0
    %3306 = vmatprep.subr.mxu0 0.0
    %3307 = vmatpush1.msra.mxu0 0.0
    %3308 = vmatprep.subr.mxu0 0.0
    %3309 = vmatpush1.msra.mxu0 0.0
    %3310 = vmatprep.subr.mxu0 0.0
    %3311 = vmatpush1.msra.mxu0 0.0
    %3312 = vmatprep.subr.mxu0 0.0
    %3313 = vmatpush1.msra.mxu0 0.0
    %3314 = vmatprep.subr.mxu0 0.0
    %3315 = vmatpush1.msra.mxu0 0.0
    %3316 = vmatprep.subr.mxu0 0.0
    %3317 = vmatpush1.msra.mxu0 0.0
    %3318 = vmatprep.subr.mxu0 0.0
    %3319 = vmatpush1.msra.mxu0 0.0
    %3320 = vmatprep.subr.mxu0 0.0
    %3321 = vmatpush1.msra.mxu0 0.0
    %3322 = vmatprep.subr.mxu0 0.0
    %3323 = vmatpush1.msra.mxu0 0.0
    %3324 = vmatprep.subr.mxu0 0.0
    %3325 = vmatpush1.msra.mxu0 0.0
    %3326 = vmatprep.subr.mxu0 0.0
    %3327 = vmatpush1.msra.mxu0 0.0
    %3328 = vmatprep.subr.mxu0 0.0
    %3329 = vmatpush1.msra.mxu0 0.0
    %3330 = vmatprep.subr.mxu0 0.0
    %3331 = vmatpush1.msra.mxu0 0.0
    %3332 = vmatprep.mubr.f32.mxu0 0.0
    %3333 = vmatmul.mubr.f32.gmra.mrb[0].mxu0 %v3195
    %v3334 = vpop.f32.mrb[0].mxu0
    %v3335 = vadd.f32 0.0, %v3334
    %v3336 = vpop.f32.mrb[0].mxu0
    %v3337 = vadd.f32 0.0, %v3336
    %3338 = vdwg.mxu0
    %v3343 = vcombine.low %v3264, %v3266
    %v3344 = vcombine.low %v3335, %v3337
    %v3346 = vunpack.c.l.s4 1983009808
    %v3347 = vunpack.c.0.s8 %v3346
    %v3348 = vlaneseq
    %v3349 = vshrl.u32 %v3348, 7
    %v3350 = vsub.s32 %v3347, %v3349
    %v3351 = vrot.slane %v3343, %v3350
    %v3353 = vunpack.c.l.s4 1983009808
    %v3354 = vunpack.c.0.s8 %v3353
    %v3355 = vlaneseq
    %v3356 = vshrl.u32 %v3355, 7
    %v3357 = vsub.s32 %v3354, %v3356
    %v3358 = vrot.slane %v3344, %v3357
    %v3359 = vcombine.low %v3351, %v3358
    %v3361 = vadd.f32 %v3193, %v3359
    %v3362 = vmul.f32 %v3361, 0.5
    %v3363 = vtanh.pop %v3362
    %v3364 = vadd.f32 %v3363, 1.0
    %v3365 = vmul.f32 %v3364, 0.5
    %v3367 = vrot.slane %v3361, 2
    %v3369 = vmul.f32 %v3367, 0.5
    %v3370 = vtanh.pop %v3369
    %v3371 = vadd.f32 %v3370, 1.0
    %v3372 = vmul.f32 %v3371, 0.5
    %v3373 = vrot.slane %v3361, 4
    %v3375 = vtanh.pop %v3373
    %v3376 = vrot.slane %v3361, 6
    %v3378 = vmul.f32 %v3376, 0.5
    %v3379 = vtanh.pop %v3378
    %v3380 = vadd.f32 %v3379, 1.0
    %v3381 = vmul.f32 %v3380, 0.5
    %v3382 = vmul.f32 %v3372, %v3190
    %v3383 = vmul.f32 %v3365, %v3375
    %v3384 = vadd.f32 %v3382, %v3383
    %v3385 = vtanh.pop %v3384
    %v3386 = vmul.f32 %v3381, %v3385
    %v3387 = vld [vmem:[%s1986] sm:$0xff]
    %v3389 = vsel %vm77, %v3386, 0
    %3391 = vmatprep.subr.mxu0 %v2372
    %3392 = vmatpush1.msra.mxu0 %v2369
    %3393 = vmatprep.subr.mxu0 %v2382
    %3394 = vmatpush1.msra.mxu0 %v2380
    %3395 = vmatprep.subr.mxu0 %v2390
    %3396 = vmatpush1.msra.mxu0 %v2388
    %3397 = vmatprep.subr.mxu0 %v2398
    %3398 = vmatpush1.msra.mxu0 %v2396
    %3399 = vmatprep.subr.mxu0 0.0
    %3400 = vmatpush1.msra.mxu0 0.0
    %3401 = vmatprep.subr.mxu0 0.0
    %3402 = vmatpush1.msra.mxu0 0.0
    %3403 = vmatprep.subr.mxu0 0.0
    %3404 = vmatpush1.msra.mxu0 0.0
    %3405 = vmatprep.subr.mxu0 0.0
    %3406 = vmatpush1.msra.mxu0 0.0
    %3407 = vmatprep.subr.mxu0 0.0
    %3408 = vmatpush1.msra.mxu0 0.0
    %3409 = vmatprep.subr.mxu0 0.0
    %3410 = vmatpush1.msra.mxu0 0.0
    %3411 = vmatprep.subr.mxu0 0.0
    %3412 = vmatpush1.msra.mxu0 0.0
    %3413 = vmatprep.subr.mxu0 0.0
    %3414 = vmatpush1.msra.mxu0 0.0
    %3415 = vmatprep.subr.mxu0 0.0
    %3416 = vmatpush1.msra.mxu0 0.0
    %3417 = vmatprep.subr.mxu0 0.0
    %3418 = vmatpush1.msra.mxu0 0.0
    %3419 = vmatprep.subr.mxu0 0.0
    %3420 = vmatpush1.msra.mxu0 0.0
    %3421 = vmatprep.subr.mxu0 0.0
    %3422 = vmatpush1.msra.mxu0 0.0
    %3423 = vmatprep.subr.mxu0 0.0
    %3424 = vmatpush1.msra.mxu0 0.0
    %3425 = vmatprep.subr.mxu0 0.0
    %3426 = vmatpush1.msra.mxu0 0.0
    %3427 = vmatprep.subr.mxu0 0.0
    %3428 = vmatpush1.msra.mxu0 0.0
    %3429 = vmatprep.subr.mxu0 0.0
    %3430 = vmatpush1.msra.mxu0 0.0
    %3431 = vmatprep.subr.mxu0 0.0
    %3432 = vmatpush1.msra.mxu0 0.0
    %3433 = vmatprep.subr.mxu0 0.0
    %3434 = vmatpush1.msra.mxu0 0.0
    %3435 = vmatprep.subr.mxu0 0.0
    %3436 = vmatpush1.msra.mxu0 0.0
    %3437 = vmatprep.subr.mxu0 0.0
    %3438 = vmatpush1.msra.mxu0 0.0
    %3439 = vmatprep.subr.mxu0 0.0
    %3440 = vmatpush1.msra.mxu0 0.0
    %3441 = vmatprep.subr.mxu0 0.0
    %3442 = vmatpush1.msra.mxu0 0.0
    %3443 = vmatprep.subr.mxu0 0.0
    %3444 = vmatpush1.msra.mxu0 0.0
    %3445 = vmatprep.subr.mxu0 0.0
    %3446 = vmatpush1.msra.mxu0 0.0
    %3447 = vmatprep.subr.mxu0 0.0
    %3448 = vmatpush1.msra.mxu0 0.0
    %3449 = vmatprep.subr.mxu0 0.0
    %3450 = vmatpush1.msra.mxu0 0.0
    %3451 = vmatprep.subr.mxu0 0.0
    %3452 = vmatpush1.msra.mxu0 0.0
    %3453 = vmatprep.subr.mxu0 0.0
    %3454 = vmatpush1.msra.mxu0 0.0
    %3455 = vmatprep.mubr.f32.mxu0 0.0
    %3456 = vmatmul.mubr.f32.gmra.mrb[0].mxu0 %v3389
    %v3457 = vpop.f32.mrb[0].mxu0
    %v3458 = vadd.f32 0.0, %v3457
    %v3459 = vpop.f32.mrb[0].mxu0
    %v3460 = vadd.f32 0.0, %v3459
    %3461 = vdwg.mxu0
    %3462 = vmatprep.subr.mxu0 %v2378
    %3463 = vmatpush1.msra.mxu0 %v2375
    %3464 = vmatprep.subr.mxu0 %v2386
    %3465 = vmatpush1.msra.mxu0 %v2384
    %3466 = vmatprep.subr.mxu0 %v2394
    %3467 = vmatpush1.msra.mxu0 %v2392
    %3468 = vmatprep.subr.mxu0 %v2402
    %3469 = vmatpush1.msra.mxu0 %v2400
    %3470 = vmatprep.subr.mxu0 0.0
    %3471 = vmatpush1.msra.mxu0 0.0
    %3472 = vmatprep.subr.mxu0 0.0
    %3473 = vmatpush1.msra.mxu0 0.0
    %3474 = vmatprep.subr.mxu0 0.0
    %3475 = vmatpush1.msra.mxu0 0.0
    %3476 = vmatprep.subr.mxu0 0.0
    %3477 = vmatpush1.msra.mxu0 0.0
    %3478 = vmatprep.subr.mxu0 0.0
    %3479 = vmatpush1.msra.mxu0 0.0
    %3480 = vmatprep.subr.mxu0 0.0
    %3481 = vmatpush1.msra.mxu0 0.0
    %3482 = vmatprep.subr.mxu0 0.0
    %3483 = vmatpush1.msra.mxu0 0.0
    %3484 = vmatprep.subr.mxu0 0.0
    %3485 = vmatpush1.msra.mxu0 0.0
    %3486 = vmatprep.subr.mxu0 0.0
    %3487 = vmatpush1.msra.mxu0 0.0
    %3488 = vmatprep.subr.mxu0 0.0
    %3489 = vmatpush1.msra.mxu0 0.0
    %3490 = vmatprep.subr.mxu0 0.0
    %3491 = vmatpush1.msra.mxu0 0.0
    %3492 = vmatprep.subr.mxu0 0.0
    %3493 = vmatpush1.msra.mxu0 0.0
    %3494 = vmatprep.subr.mxu0 0.0
    %3495 = vmatpush1.msra.mxu0 0.0
    %3496 = vmatprep.subr.mxu0 0.0
    %3497 = vmatpush1.msra.mxu0 0.0
    %3498 = vmatprep.subr.mxu0 0.0
    %3499 = vmatpush1.msra.mxu0 0.0
    %3500 = vmatprep.subr.mxu0 0.0
    %3501 = vmatpush1.msra.mxu0 0.0
    %3502 = vmatprep.subr.mxu0 0.0
    %3503 = vmatpush1.msra.mxu0 0.0
    %3504 = vmatprep.subr.mxu0 0.0
    %3505 = vmatpush1.msra.mxu0 0.0
    %3506 = vmatprep.subr.mxu0 0.0
    %3507 = vmatpush1.msra.mxu0 0.0
    %3508 = vmatprep.subr.mxu0 0.0
    %3509 = vmatpush1.msra.mxu0 0.0
    %3510 = vmatprep.subr.mxu0 0.0
    %3511 = vmatpush1.msra.mxu0 0.0
    %3512 = vmatprep.subr.mxu0 0.0
    %3513 = vmatpush1.msra.mxu0 0.0
    %3514 = vmatprep.subr.mxu0 0.0
    %3515 = vmatpush1.msra.mxu0 0.0
    %3516 = vmatprep.subr.mxu0 0.0
    %3517 = vmatpush1.msra.mxu0 0.0
    %3518 = vmatprep.subr.mxu0 0.0
    %3519 = vmatpush1.msra.mxu0 0.0
    %3520 = vmatprep.subr.mxu0 0.0
    %3521 = vmatpush1.msra.mxu0 0.0
    %3522 = vmatprep.subr.mxu0 0.0
    %3523 = vmatpush1.msra.mxu0 0.0
    %3524 = vmatprep.subr.mxu0 0.0
    %3525 = vmatpush1.msra.mxu0 0.0
    %3526 = vmatprep.mubr.f32.mxu0 0.0
    %3527 = vmatmul.mubr.f32.gmra.mrb[0].mxu0 %v3389
    %v3528 = vpop.f32.mrb[0].mxu0
    %v3529 = vadd.f32 0.0, %v3528
    %v3530 = vpop.f32.mrb[0].mxu0
    %v3531 = vadd.f32 0.0, %v3530
    %3532 = vdwg.mxu0
    %v3537 = vcombine.low %v3458, %v3460
    %v3538 = vcombine.low %v3529, %v3531
    %v3540 = vunpack.c.l.s4 1983009808
    %v3541 = vunpack.c.0.s8 %v3540
    %v3542 = vlaneseq
    %v3543 = vshrl.u32 %v3542, 7
    %v3544 = vsub.s32 %v3541, %v3543
    %v3545 = vrot.slane %v3537, %v3544
    %v3547 = vunpack.c.l.s4 1983009808
    %v3548 = vunpack.c.0.s8 %v3547
    %v3549 = vlaneseq
    %v3550 = vshrl.u32 %v3549, 7
    %v3551 = vsub.s32 %v3548, %v3550
    %v3552 = vrot.slane %v3538, %v3551
    %v3553 = vcombine.low %v3545, %v3552
    %v3555 = vadd.f32 %v3387, %v3553
    %v3556 = vmul.f32 %v3555, 0.5
    %v3557 = vtanh.pop %v3556
    %v3558 = vadd.f32 %v3557, 1.0
    %v3559 = vmul.f32 %v3558, 0.5
    %v3561 = vrot.slane %v3555, 2
    %v3563 = vmul.f32 %v3561, 0.5
    %v3564 = vtanh.pop %v3563
    %v3565 = vadd.f32 %v3564, 1.0
    %v3566 = vmul.f32 %v3565, 0.5
    %v3567 = vrot.slane %v3555, 4
    %v3569 = vtanh.pop %v3567
    %v3570 = vrot.slane %v3555, 6
    %v3572 = vmul.f32 %v3570, 0.5
    %v3573 = vtanh.pop %v3572
    %v3574 = vadd.f32 %v3573, 1.0
    %v3575 = vmul.f32 %v3574, 0.5
    %v3576 = vmul.f32 %v3566, %v3384
    %v3577 = vmul.f32 %v3559, %v3569
    %v3578 = vadd.f32 %v3576, %v3577
    %v3579 = vtanh.pop %v3578
    %v3580 = vmul.f32 %v3575, %v3579
    %v3581 = vld [vmem:[%s2022] sm:$0xff]
    %v3583 = vsel %vm77, %v3580, 0
    %3585 = vmatprep.subr.mxu0 %v2372
    %3586 = vmatpush1.msra.mxu0 %v2369
    %3587 = vmatprep.subr.mxu0 %v2382
    %3588 = vmatpush1.msra.mxu0 %v2380
    %3589 = vmatprep.subr.mxu0 %v2390
    %3590 = vmatpush1.msra.mxu0 %v2388
    %3591 = vmatprep.subr.mxu0 %v2398
    %3592 = vmatpush1.msra.mxu0 %v2396
    %3593 = vmatprep.subr.mxu0 0.0
    %3594 = vmatpush1.msra.mxu0 0.0
    %3595 = vmatprep.subr.mxu0 0.0
    %3596 = vmatpush1.msra.mxu0 0.0
    %3597 = vmatprep.subr.mxu0 0.0
    %3598 = vmatpush1.msra.mxu0 0.0
    %3599 = vmatprep.subr.mxu0 0.0
    %3600 = vmatpush1.msra.mxu0 0.0
    %3601 = vmatprep.subr.mxu0 0.0
    %3602 = vmatpush1.msra.mxu0 0.0
    %3603 = vmatprep.subr.mxu0 0.0
    %3604 = vmatpush1.msra.mxu0 0.0
    %3605 = vmatprep.subr.mxu0 0.0
    %3606 = vmatpush1.msra.mxu0 0.0
    %3607 = vmatprep.subr.mxu0 0.0
    %3608 = vmatpush1.msra.mxu0 0.0
    %3609 = vmatprep.subr.mxu0 0.0
    %3610 = vmatpush1.msra.mxu0 0.0
    %3611 = vmatprep.subr.mxu0 0.0
    %3612 = vmatpush1.msra.mxu0 0.0
    %3613 = vmatprep.subr.mxu0 0.0
    %3614 = vmatpush1.msra.mxu0 0.0
    %3615 = vmatprep.subr.mxu0 0.0
    %3616 = vmatpush1.msra.mxu0 0.0
    %3617 = vmatprep.subr.mxu0 0.0
    %3618 = vmatpush1.msra.mxu0 0.0
    %3619 = vmatprep.subr.mxu0 0.0
    %3620 = vmatpush1.msra.mxu0 0.0
    %3621 = vmatprep.subr.mxu0 0.0
    %3622 = vmatpush1.msra.mxu0 0.0
    %3623 = vmatprep.subr.mxu0 0.0
    %3624 = vmatpush1.msra.mxu0 0.0
    %3625 = vmatprep.subr.mxu0 0.0
    %3626 = vmatpush1.msra.mxu0 0.0
    %3627 = vmatprep.subr.mxu0 0.0
    %3628 = vmatpush1.msra.mxu0 0.0
    %3629 = vmatprep.subr.mxu0 0.0
    %3630 = vmatpush1.msra.mxu0 0.0
    %3631 = vmatprep.subr.mxu0 0.0
    %3632 = vmatpush1.msra.mxu0 0.0
    %3633 = vmatprep.subr.mxu0 0.0
    %3634 = vmatpush1.msra.mxu0 0.0
    %3635 = vmatprep.subr.mxu0 0.0
    %3636 = vmatpush1.msra.mxu0 0.0
    %3637 = vmatprep.subr.mxu0 0.0
    %3638 = vmatpush1.msra.mxu0 0.0
    %3639 = vmatprep.subr.mxu0 0.0
    %3640 = vmatpush1.msra.mxu0 0.0
    %3641 = vmatprep.subr.mxu0 0.0
    %3642 = vmatpush1.msra.mxu0 0.0
    %3643 = vmatprep.subr.mxu0 0.0
    %3644 = vmatpush1.msra.mxu0 0.0
    %3645 = vmatprep.subr.mxu0 0.0
    %3646 = vmatpush1.msra.mxu0 0.0
    %3647 = vmatprep.subr.mxu0 0.0
    %3648 = vmatpush1.msra.mxu0 0.0
    %3649 = vmatprep.mubr.f32.mxu0 0.0
    %3650 = vmatmul.mubr.f32.gmra.mrb[0].mxu0 %v3583
    %v3651 = vpop.f32.mrb[0].mxu0
    %v3652 = vadd.f32 0.0, %v3651
    %v3653 = vpop.f32.mrb[0].mxu0
    %v3654 = vadd.f32 0.0, %v3653
    %3655 = vdwg.mxu0
    %3656 = vmatprep.subr.mxu0 %v2378
    %3657 = vmatpush1.msra.mxu0 %v2375
    %3658 = vmatprep.subr.mxu0 %v2386
    %3659 = vmatpush1.msra.mxu0 %v2384
    %3660 = vmatprep.subr.mxu0 %v2394
    %3661 = vmatpush1.msra.mxu0 %v2392
    %3662 = vmatprep.subr.mxu0 %v2402
    %3663 = vmatpush1.msra.mxu0 %v2400
    %3664 = vmatprep.subr.mxu0 0.0
    %3665 = vmatpush1.msra.mxu0 0.0
    %3666 = vmatprep.subr.mxu0 0.0
    %3667 = vmatpush1.msra.mxu0 0.0
    %3668 = vmatprep.subr.mxu0 0.0
    %3669 = vmatpush1.msra.mxu0 0.0
    %3670 = vmatprep.subr.mxu0 0.0
    %3671 = vmatpush1.msra.mxu0 0.0
    %3672 = vmatprep.subr.mxu0 0.0
    %3673 = vmatpush1.msra.mxu0 0.0
    %3674 = vmatprep.subr.mxu0 0.0
    %3675 = vmatpush1.msra.mxu0 0.0
    %3676 = vmatprep.subr.mxu0 0.0
    %3677 = vmatpush1.msra.mxu0 0.0
    %3678 = vmatprep.subr.mxu0 0.0
    %3679 = vmatpush1.msra.mxu0 0.0
    %3680 = vmatprep.subr.mxu0 0.0
    %3681 = vmatpush1.msra.mxu0 0.0
    %3682 = vmatprep.subr.mxu0 0.0
    %3683 = vmatpush1.msra.mxu0 0.0
    %3684 = vmatprep.subr.mxu0 0.0
    %3685 = vmatpush1.msra.mxu0 0.0
    %3686 = vmatprep.subr.mxu0 0.0
    %3687 = vmatpush1.msra.mxu0 0.0
    %3688 = vmatprep.subr.mxu0 0.0
    %3689 = vmatpush1.msra.mxu0 0.0
    %3690 = vmatprep.subr.mxu0 0.0
    %3691 = vmatpush1.msra.mxu0 0.0
    %3692 = vmatprep.subr.mxu0 0.0
    %3693 = vmatpush1.msra.mxu0 0.0
    %3694 = vmatprep.subr.mxu0 0.0
    %3695 = vmatpush1.msra.mxu0 0.0
    %3696 = vmatprep.subr.mxu0 0.0
    %3697 = vmatpush1.msra.mxu0 0.0
    %3698 = vmatprep.subr.mxu0 0.0
    %3699 = vmatpush1.msra.mxu0 0.0
    %3700 = vmatprep.subr.mxu0 0.0
    %3701 = vmatpush1.msra.mxu0 0.0
    %3702 = vmatprep.subr.mxu0 0.0
    %3703 = vmatpush1.msra.mxu0 0.0
    %3704 = vmatprep.subr.mxu0 0.0
    %3705 = vmatpush1.msra.mxu0 0.0
    %3706 = vmatprep.subr.mxu0 0.0
    %3707 = vmatpush1.msra.mxu0 0.0
    %3708 = vmatprep.subr.mxu0 0.0
    %3709 = vmatpush1.msra.mxu0 0.0
    %3710 = vmatprep.subr.mxu0 0.0
    %3711 = vmatpush1.msra.mxu0 0.0
    %3712 = vmatprep.subr.mxu0 0.0
    %3713 = vmatpush1.msra.mxu0 0.0
    %3714 = vmatprep.subr.mxu0 0.0
    %3715 = vmatpush1.msra.mxu0 0.0
    %3716 = vmatprep.subr.mxu0 0.0
    %3717 = vmatpush1.msra.mxu0 0.0
    %3718 = vmatprep.subr.mxu0 0.0
    %3719 = vmatpush1.msra.mxu0 0.0
    %3720 = vmatprep.mubr.f32.mxu0 0.0
    %3721 = vmatmul.mubr.f32.gmra.mrb[0].mxu0 %v3583
    %v3722 = vpop.f32.mrb[0].mxu0
    %v3723 = vadd.f32 0.0, %v3722
    %v3724 = vpop.f32.mrb[0].mxu0
    %v3725 = vadd.f32 0.0, %v3724
    %3726 = vdwg.mxu0
    %v3731 = vcombine.low %v3652, %v3654
    %v3732 = vcombine.low %v3723, %v3725
    %v3734 = vunpack.c.l.s4 1983009808
    %v3735 = vunpack.c.0.s8 %v3734
    %v3736 = vlaneseq
    %v3737 = vshrl.u32 %v3736, 7
    %v3738 = vsub.s32 %v3735, %v3737
    %v3739 = vrot.slane %v3731, %v3738
    %v3741 = vunpack.c.l.s4 1983009808
    %v3742 = vunpack.c.0.s8 %v3741
    %v3743 = vlaneseq
    %v3744 = vshrl.u32 %v3743, 7
    %v3745 = vsub.s32 %v3742, %v3744
    %v3746 = vrot.slane %v3732, %v3745
    %v3747 = vcombine.low %v3739, %v3746
    %v3749 = vadd.f32 %v3581, %v3747
    %v3750 = vmul.f32 %v3749, 0.5
    %v3751 = vtanh.pop %v3750
    %v3752 = vadd.f32 %v3751, 1.0
    %v3753 = vmul.f32 %v3752, 0.5
    %v3755 = vrot.slane %v3749, 2
    %v3757 = vmul.f32 %v3755, 0.5
    %v3758 = vtanh.pop %v3757
    %v3759 = vadd.f32 %v3758, 1.0
    %v3760 = vmul.f32 %v3759, 0.5
    %v3761 = vrot.slane %v3749, 4
    %v3763 = vtanh.pop %v3761
    %v3764 = vrot.slane %v3749, 6
    %v3766 = vmul.f32 %v3764, 0.5
    %v3767 = vtanh.pop %v3766
    %v3768 = vadd.f32 %v3767, 1.0
    %v3769 = vmul.f32 %v3768, 0.5
    %v3770 = vmul.f32 %v3760, %v3578
    %v3771 = vmul.f32 %v3753, %v3763
    %v3772 = vadd.f32 %v3770, %v3771
    %v3773 = vtanh.pop %v3772
    %v3774 = vmul.f32 %v3769, %v3773
    %v3775 = vld [vmem:[%s2058] sm:$0xff]
    %v3777 = vsel %vm77, %v3774, 0
    %3779 = vmatprep.subr.mxu0 %v2372
    %3780 = vmatpush1.msra.mxu0 %v2369
    %3781 = vmatprep.subr.mxu0 %v2382
    %3782 = vmatpush1.msra.mxu0 %v2380
    %3783 = vmatprep.subr.mxu0 %v2390
    %3784 = vmatpush1.msra.mxu0 %v2388
    %3785 = vmatprep.subr.mxu0 %v2398
    %3786 = vmatpush1.msra.mxu0 %v2396
    %3787 = vmatprep.subr.mxu0 0.0
    %3788 = vmatpush1.msra.mxu0 0.0
    %3789 = vmatprep.subr.mxu0 0.0
    %3790 = vmatpush1.msra.mxu0 0.0
    %3791 = vmatprep.subr.mxu0 0.0
    %3792 = vmatpush1.msra.mxu0 0.0
    %3793 = vmatprep.subr.mxu0 0.0
    %3794 = vmatpush1.msra.mxu0 0.0
    %3795 = vmatprep.subr.mxu0 0.0
    %3796 = vmatpush1.msra.mxu0 0.0
    %3797 = vmatprep.subr.mxu0 0.0
    %3798 = vmatpush1.msra.mxu0 0.0
    %3799 = vmatprep.subr.mxu0 0.0
    %3800 = vmatpush1.msra.mxu0 0.0
    %3801 = vmatprep.subr.mxu0 0.0
    %3802 = vmatpush1.msra.mxu0 0.0
    %3803 = vmatprep.subr.mxu0 0.0
    %3804 = vmatpush1.msra.mxu0 0.0
    %3805 = vmatprep.subr.mxu0 0.0
    %3806 = vmatpush1.msra.mxu0 0.0
    %3807 = vmatprep.subr.mxu0 0.0
    %3808 = vmatpush1.msra.mxu0 0.0
    %3809 = vmatprep.subr.mxu0 0.0
    %3810 = vmatpush1.msra.mxu0 0.0
    %3811 = vmatprep.subr.mxu0 0.0
    %3812 = vmatpush1.msra.mxu0 0.0
    %3813 = vmatprep.subr.mxu0 0.0
    %3814 = vmatpush1.msra.mxu0 0.0
    %3815 = vmatprep.subr.mxu0 0.0
    %3816 = vmatpush1.msra.mxu0 0.0
    %3817 = vmatprep.subr.mxu0 0.0
    %3818 = vmatpush1.msra.mxu0 0.0
    %3819 = vmatprep.subr.mxu0 0.0
    %3820 = vmatpush1.msra.mxu0 0.0
    %3821 = vmatprep.subr.mxu0 0.0
    %3822 = vmatpush1.msra.mxu0 0.0
    %3823 = vmatprep.subr.mxu0 0.0
    %3824 = vmatpush1.msra.mxu0 0.0
    %3825 = vmatprep.subr.mxu0 0.0
    %3826 = vmatpush1.msra.mxu0 0.0
    %3827 = vmatprep.subr.mxu0 0.0
    %3828 = vmatpush1.msra.mxu0 0.0
    %3829 = vmatprep.subr.mxu0 0.0
    %3830 = vmatpush1.msra.mxu0 0.0
    %3831 = vmatprep.subr.mxu0 0.0
    %3832 = vmatpush1.msra.mxu0 0.0
    %3833 = vmatprep.subr.mxu0 0.0
    %3834 = vmatpush1.msra.mxu0 0.0
    %3835 = vmatprep.subr.mxu0 0.0
    %3836 = vmatpush1.msra.mxu0 0.0
    %3837 = vmatprep.subr.mxu0 0.0
    %3838 = vmatpush1.msra.mxu0 0.0
    %3839 = vmatprep.subr.mxu0 0.0
    %3840 = vmatpush1.msra.mxu0 0.0
    %3841 = vmatprep.subr.mxu0 0.0
    %3842 = vmatpush1.msra.mxu0 0.0
    %3843 = vmatprep.mubr.f32.mxu0 0.0
    %3844 = vmatmul.mubr.f32.gmra.mrb[0].mxu0 %v3777
    %v3845 = vpop.f32.mrb[0].mxu0
    %v3846 = vadd.f32 0.0, %v3845
    %v3847 = vpop.f32.mrb[0].mxu0
    %v3848 = vadd.f32 0.0, %v3847
    %3849 = vdwg.mxu0
    %3850 = vmatprep.subr.mxu0 %v2378
    %3851 = vmatpush1.msra.mxu0 %v2375
    %3852 = vmatprep.subr.mxu0 %v2386
    %3853 = vmatpush1.msra.mxu0 %v2384
    %3854 = vmatprep.subr.mxu0 %v2394
    %3855 = vmatpush1.msra.mxu0 %v2392
    %3856 = vmatprep.subr.mxu0 %v2402
    %3857 = vmatpush1.msra.mxu0 %v2400
    %3858 = vmatprep.subr.mxu0 0.0
    %3859 = vmatpush1.msra.mxu0 0.0
    %3860 = vmatprep.subr.mxu0 0.0
    %3861 = vmatpush1.msra.mxu0 0.0
    %3862 = vmatprep.subr.mxu0 0.0
    %3863 = vmatpush1.msra.mxu0 0.0
    %3864 = vmatprep.subr.mxu0 0.0
    %3865 = vmatpush1.msra.mxu0 0.0
    %3866 = vmatprep.subr.mxu0 0.0
    %3867 = vmatpush1.msra.mxu0 0.0
    %3868 = vmatprep.subr.mxu0 0.0
    %3869 = vmatpush1.msra.mxu0 0.0
    %3870 = vmatprep.subr.mxu0 0.0
    %3871 = vmatpush1.msra.mxu0 0.0
    %3872 = vmatprep.subr.mxu0 0.0
    %3873 = vmatpush1.msra.mxu0 0.0
    %3874 = vmatprep.subr.mxu0 0.0
    %3875 = vmatpush1.msra.mxu0 0.0
    %3876 = vmatprep.subr.mxu0 0.0
    %3877 = vmatpush1.msra.mxu0 0.0
    %3878 = vmatprep.subr.mxu0 0.0
    %3879 = vmatpush1.msra.mxu0 0.0
    %3880 = vmatprep.subr.mxu0 0.0
    %3881 = vmatpush1.msra.mxu0 0.0
    %3882 = vmatprep.subr.mxu0 0.0
    %3883 = vmatpush1.msra.mxu0 0.0
    %3884 = vmatprep.subr.mxu0 0.0
    %3885 = vmatpush1.msra.mxu0 0.0
    %3886 = vmatprep.subr.mxu0 0.0
    %3887 = vmatpush1.msra.mxu0 0.0
    %3888 = vmatprep.subr.mxu0 0.0
    %3889 = vmatpush1.msra.mxu0 0.0
    %3890 = vmatprep.subr.mxu0 0.0
    %3891 = vmatpush1.msra.mxu0 0.0
    %3892 = vmatprep.subr.mxu0 0.0
    %3893 = vmatpush1.msra.mxu0 0.0
    %3894 = vmatprep.subr.mxu0 0.0
    %3895 = vmatpush1.msra.mxu0 0.0
    %3896 = vmatprep.subr.mxu0 0.0
    %3897 = vmatpush1.msra.mxu0 0.0
    %3898 = vmatprep.subr.mxu0 0.0
    %3899 = vmatpush1.msra.mxu0 0.0
    %3900 = vmatprep.subr.mxu0 0.0
    %3901 = vmatpush1.msra.mxu0 0.0
    %3902 = vmatprep.subr.mxu0 0.0
    %3903 = vmatpush1.msra.mxu0 0.0
    %3904 = vmatprep.subr.mxu0 0.0
    %3905 = vmatpush1.msra.mxu0 0.0
    %3906 = vmatprep.subr.mxu0 0.0
    %3907 = vmatpush1.msra.mxu0 0.0
    %3908 = vmatprep.subr.mxu0 0.0
    %3909 = vmatpush1.msra.mxu0 0.0
    %3910 = vmatprep.subr.mxu0 0.0
    %3911 = vmatpush1.msra.mxu0 0.0
    %3912 = vmatprep.subr.mxu0 0.0
    %3913 = vmatpush1.msra.mxu0 0.0
    %3914 = vmatprep.mubr.f32.mxu0 0.0
    %3915 = vmatmul.mubr.f32.gmra.mrb[0].mxu0 %v3777
    %v3916 = vpop.f32.mrb[0].mxu0
    %v3917 = vadd.f32 0.0, %v3916
    %v3918 = vpop.f32.mrb[0].mxu0
    %v3919 = vadd.f32 0.0, %v3918
    %3920 = vdwg.mxu0
    %v3925 = vcombine.low %v3846, %v3848
    %v3926 = vcombine.low %v3917, %v3919
    %v3928 = vunpack.c.l.s4 1983009808
    %v3929 = vunpack.c.0.s8 %v3928
    %v3930 = vlaneseq
    %v3931 = vshrl.u32 %v3930, 7
    %v3932 = vsub.s32 %v3929, %v3931
    %v3933 = vrot.slane %v3925, %v3932
    %v3935 = vunpack.c.l.s4 1983009808
    %v3936 = vunpack.c.0.s8 %v3935
    %v3937 = vlaneseq
    %v3938 = vshrl.u32 %v3937, 7
    %v3939 = vsub.s32 %v3936, %v3938
    %v3940 = vrot.slane %v3926, %v3939
    %v3941 = vcombine.low %v3933, %v3940
    %v3943 = vadd.f32 %v3775, %v3941
    %v3944 = vmul.f32 %v3943, 0.5
    %v3945 = vtanh.pop %v3944
    %v3946 = vadd.f32 %v3945, 1.0
    %v3947 = vmul.f32 %v3946, 0.5
    %v3949 = vrot.slane %v3943, 2
    %v3951 = vmul.f32 %v3949, 0.5
    %v3952 = vtanh.pop %v3951
    %v3953 = vadd.f32 %v3952, 1.0
    %v3954 = vmul.f32 %v3953, 0.5
    %v3955 = vrot.slane %v3943, 4
    %v3957 = vtanh.pop %v3955
    %v3958 = vrot.slane %v3943, 6
    %v3960 = vmul.f32 %v3958, 0.5
    %v3961 = vtanh.pop %v3960
    %v3962 = vadd.f32 %v3961, 1.0
    %v3963 = vmul.f32 %v3962, 0.5
    %v3964 = vmul.f32 %v3954, %v3772
    %v3965 = vmul.f32 %v3947, %v3957
    %v3966 = vadd.f32 %v3964, %v3965
    %v3967 = vtanh.pop %v3966
    %v3968 = vmul.f32 %v3963, %v3967
    %v3969 = vld [vmem:[%s2094] sm:$0xff]
    %v3971 = vsel %vm77, %v3968, 0
    %3973 = vmatprep.subr.mxu0 %v2372
    %3974 = vmatpush1.msra.mxu0 %v2369
    %3975 = vmatprep.subr.mxu0 %v2382
    %3976 = vmatpush1.msra.mxu0 %v2380
    %3977 = vmatprep.subr.mxu0 %v2390
    %3978 = vmatpush1.msra.mxu0 %v2388
    %3979 = vmatprep.subr.mxu0 %v2398
    %3980 = vmatpush1.msra.mxu0 %v2396
    %3981 = vmatprep.subr.mxu0 0.0
    %3982 = vmatpush1.msra.mxu0 0.0
    %3983 = vmatprep.subr.mxu0 0.0
    %3984 = vmatpush1.msra.mxu0 0.0
    %3985 = vmatprep.subr.mxu0 0.0
    %3986 = vmatpush1.msra.mxu0 0.0
    %3987 = vmatprep.subr.mxu0 0.0
    %3988 = vmatpush1.msra.mxu0 0.0
    %3989 = vmatprep.subr.mxu0 0.0
    %3990 = vmatpush1.msra.mxu0 0.0
    %3991 = vmatprep.subr.mxu0 0.0
    %3992 = vmatpush1.msra.mxu0 0.0
    %3993 = vmatprep.subr.mxu0 0.0
    %3994 = vmatpush1.msra.mxu0 0.0
    %3995 = vmatprep.subr.mxu0 0.0
    %3996 = vmatpush1.msra.mxu0 0.0
    %3997 = vmatprep.subr.mxu0 0.0
    %3998 = vmatpush1.msra.mxu0 0.0
    %3999 = vmatprep.subr.mxu0 0.0
    %4000 = vmatpush1.msra.mxu0 0.0
    %4001 = vmatprep.subr.mxu0 0.0
    %4002 = vmatpush1.msra.mxu0 0.0
    %4003 = vmatprep.subr.mxu0 0.0
    %4004 = vmatpush1.msra.mxu0 0.0
    %4005 = vmatprep.subr.mxu0 0.0
    %4006 = vmatpush1.msra.mxu0 0.0
    %4007 = vmatprep.subr.mxu0 0.0
    %4008 = vmatpush1.msra.mxu0 0.0
    %4009 = vmatprep.subr.mxu0 0.0
    %4010 = vmatpush1.msra.mxu0 0.0
    %4011 = vmatprep.subr.mxu0 0.0
    %4012 = vmatpush1.msra.mxu0 0.0
    %4013 = vmatprep.subr.mxu0 0.0
    %4014 = vmatpush1.msra.mxu0 0.0
    %4015 = vmatprep.subr.mxu0 0.0
    %4016 = vmatpush1.msra.mxu0 0.0
    %4017 = vmatprep.subr.mxu0 0.0
    %4018 = vmatpush1.msra.mxu0 0.0
    %4019 = vmatprep.subr.mxu0 0.0
    %4020 = vmatpush1.msra.mxu0 0.0
    %4021 = vmatprep.subr.mxu0 0.0
    %4022 = vmatpush1.msra.mxu0 0.0
    %4023 = vmatprep.subr.mxu0 0.0
    %4024 = vmatpush1.msra.mxu0 0.0
    %4025 = vmatprep.subr.mxu0 0.0
    %4026 = vmatpush1.msra.mxu0 0.0
    %4027 = vmatprep.subr.mxu0 0.0
    %4028 = vmatpush1.msra.mxu0 0.0
    %4029 = vmatprep.subr.mxu0 0.0
    %4030 = vmatpush1.msra.mxu0 0.0
    %4031 = vmatprep.subr.mxu0 0.0
    %4032 = vmatpush1.msra.mxu0 0.0
    %4033 = vmatprep.subr.mxu0 0.0
    %4034 = vmatpush1.msra.mxu0 0.0
    %4035 = vmatprep.subr.mxu0 0.0
    %4036 = vmatpush1.msra.mxu0 0.0
    %4037 = vmatprep.mubr.f32.mxu0 0.0
    %4038 = vmatmul.mubr.f32.gmra.mrb[0].mxu0 %v3971
    %v4039 = vpop.f32.mrb[0].mxu0
    %v4040 = vadd.f32 0.0, %v4039
    %v4041 = vpop.f32.mrb[0].mxu0
    %v4042 = vadd.f32 0.0, %v4041
    %4043 = vdwg.mxu0
    %4044 = vmatprep.subr.mxu0 %v2378
    %4045 = vmatpush1.msra.mxu0 %v2375
    %4046 = vmatprep.subr.mxu0 %v2386
    %4047 = vmatpush1.msra.mxu0 %v2384
    %4048 = vmatprep.subr.mxu0 %v2394
    %4049 = vmatpush1.msra.mxu0 %v2392
    %4050 = vmatprep.subr.mxu0 %v2402
    %4051 = vmatpush1.msra.mxu0 %v2400
    %4052 = vmatprep.subr.mxu0 0.0
    %4053 = vmatpush1.msra.mxu0 0.0
    %4054 = vmatprep.subr.mxu0 0.0
    %4055 = vmatpush1.msra.mxu0 0.0
    %4056 = vmatprep.subr.mxu0 0.0
    %4057 = vmatpush1.msra.mxu0 0.0
    %4058 = vmatprep.subr.mxu0 0.0
    %4059 = vmatpush1.msra.mxu0 0.0
    %4060 = vmatprep.subr.mxu0 0.0
    %4061 = vmatpush1.msra.mxu0 0.0
    %4062 = vmatprep.subr.mxu0 0.0
    %4063 = vmatpush1.msra.mxu0 0.0
    %4064 = vmatprep.subr.mxu0 0.0
    %4065 = vmatpush1.msra.mxu0 0.0
    %4066 = vmatprep.subr.mxu0 0.0
    %4067 = vmatpush1.msra.mxu0 0.0
    %4068 = vmatprep.subr.mxu0 0.0
    %4069 = vmatpush1.msra.mxu0 0.0
    %4070 = vmatprep.subr.mxu0 0.0
    %4071 = vmatpush1.msra.mxu0 0.0
    %4072 = vmatprep.subr.mxu0 0.0
    %4073 = vmatpush1.msra.mxu0 0.0
    %4074 = vmatprep.subr.mxu0 0.0
    %4075 = vmatpush1.msra.mxu0 0.0
    %4076 = vmatprep.subr.mxu0 0.0
    %4077 = vmatpush1.msra.mxu0 0.0
    %4078 = vmatprep.subr.mxu0 0.0
    %4079 = vmatpush1.msra.mxu0 0.0
    %4080 = vmatprep.subr.mxu0 0.0
    %4081 = vmatpush1.msra.mxu0 0.0
    %4082 = vmatprep.subr.mxu0 0.0
    %4083 = vmatpush1.msra.mxu0 0.0
    %4084 = vmatprep.subr.mxu0 0.0
    %4085 = vmatpush1.msra.mxu0 0.0
    %4086 = vmatprep.subr.mxu0 0.0
    %4087 = vmatpush1.msra.mxu0 0.0
    %4088 = vmatprep.subr.mxu0 0.0
    %4089 = vmatpush1.msra.mxu0 0.0
    %4090 = vmatprep.subr.mxu0 0.0
    %4091 = vmatpush1.msra.mxu0 0.0
    %4092 = vmatprep.subr.mxu0 0.0
    %4093 = vmatpush1.msra.mxu0 0.0
    %4094 = vmatprep.subr.mxu0 0.0
    %4095 = vmatpush1.msra.mxu0 0.0
    %4096 = vmatprep.subr.mxu0 0.0
    %4097 = vmatpush1.msra.mxu0 0.0
    %4098 = vmatprep.subr.mxu0 0.0
    %4099 = vmatpush1.msra.mxu0 0.0
    %4100 = vmatprep.subr.mxu0 0.0
    %4101 = vmatpush1.msra.mxu0 0.0
    %4102 = vmatprep.subr.mxu0 0.0
    %4103 = vmatpush1.msra.mxu0 0.0
    %4104 = vmatprep.subr.mxu0 0.0
    %4105 = vmatpush1.msra.mxu0 0.0
    %4106 = vmatprep.subr.mxu0 0.0
    %4107 = vmatpush1.msra.mxu0 0.0
    %4108 = vmatprep.mubr.f32.mxu0 0.0
    %4109 = vmatmul.mubr.f32.gmra.mrb[0].mxu0 %v3971
    %v4110 = vpop.f32.mrb[0].mxu0
    %v4111 = vadd.f32 0.0, %v4110
    %v4112 = vpop.f32.mrb[0].mxu0
    %v4113 = vadd.f32 0.0, %v4112
    %4114 = vdwg.mxu0
    %v4119 = vcombine.low %v4040, %v4042
    %v4120 = vcombine.low %v4111, %v4113
    %v4122 = vunpack.c.l.s4 1983009808
    %v4123 = vunpack.c.0.s8 %v4122
    %v4124 = vlaneseq
    %v4125 = vshrl.u32 %v4124, 7
    %v4126 = vsub.s32 %v4123, %v4125
    %v4127 = vrot.slane %v4119, %v4126
    %v4129 = vunpack.c.l.s4 1983009808
    %v4130 = vunpack.c.0.s8 %v4129
    %v4131 = vlaneseq
    %v4132 = vshrl.u32 %v4131, 7
    %v4133 = vsub.s32 %v4130, %v4132
    %v4134 = vrot.slane %v4120, %v4133
    %v4135 = vcombine.low %v4127, %v4134
    %v4137 = vadd.f32 %v3969, %v4135
    %v4138 = vmul.f32 %v4137, 0.5
    %v4139 = vtanh.pop %v4138
    %v4140 = vadd.f32 %v4139, 1.0
    %v4141 = vmul.f32 %v4140, 0.5
    %v4143 = vrot.slane %v4137, 2
    %v4145 = vmul.f32 %v4143, 0.5
    %v4146 = vtanh.pop %v4145
    %v4147 = vadd.f32 %v4146, 1.0
    %v4148 = vmul.f32 %v4147, 0.5
    %v4149 = vrot.slane %v4137, 4
    %v4151 = vtanh.pop %v4149
    %v4152 = vrot.slane %v4137, 6
    %v4154 = vmul.f32 %v4152, 0.5
    %v4155 = vtanh.pop %v4154
    %v4156 = vadd.f32 %v4155, 1.0
    %v4157 = vmul.f32 %v4156, 0.5
    %v4158 = vmul.f32 %v4148, %v3966
    %v4159 = vmul.f32 %v4141, %v4151
    %v4160 = vadd.f32 %v4158, %v4159
    %v4161 = vtanh.pop %v4160
    %v4162 = vmul.f32 %v4157, %v4161
    %v4163 = vld [vmem:[%s2130] sm:$0xff]
    %v4165 = vsel %vm77, %v4162, 0
    %4167 = vmatprep.subr.mxu0 %v2372
    %4168 = vmatpush1.msra.mxu0 %v2369
    %4169 = vmatprep.subr.mxu0 %v2382
    %4170 = vmatpush1.msra.mxu0 %v2380
    %4171 = vmatprep.subr.mxu0 %v2390
    %4172 = vmatpush1.msra.mxu0 %v2388
    %4173 = vmatprep.subr.mxu0 %v2398
    %4174 = vmatpush1.msra.mxu0 %v2396
    %4175 = vmatprep.subr.mxu0 0.0
    %4176 = vmatpush1.msra.mxu0 0.0
    %4177 = vmatprep.subr.mxu0 0.0
    %4178 = vmatpush1.msra.mxu0 0.0
    %4179 = vmatprep.subr.mxu0 0.0
    %4180 = vmatpush1.msra.mxu0 0.0
    %4181 = vmatprep.subr.mxu0 0.0
    %4182 = vmatpush1.msra.mxu0 0.0
    %4183 = vmatprep.subr.mxu0 0.0
    %4184 = vmatpush1.msra.mxu0 0.0
    %4185 = vmatprep.subr.mxu0 0.0
    %4186 = vmatpush1.msra.mxu0 0.0
    %4187 = vmatprep.subr.mxu0 0.0
    %4188 = vmatpush1.msra.mxu0 0.0
    %4189 = vmatprep.subr.mxu0 0.0
    %4190 = vmatpush1.msra.mxu0 0.0
    %4191 = vmatprep.subr.mxu0 0.0
    %4192 = vmatpush1.msra.mxu0 0.0
    %4193 = vmatprep.subr.mxu0 0.0
    %4194 = vmatpush1.msra.mxu0 0.0
    %4195 = vmatprep.subr.mxu0 0.0
    %4196 = vmatpush1.msra.mxu0 0.0
    %4197 = vmatprep.subr.mxu0 0.0
    %4198 = vmatpush1.msra.mxu0 0.0
    %4199 = vmatprep.subr.mxu0 0.0
    %4200 = vmatpush1.msra.mxu0 0.0
    %4201 = vmatprep.subr.mxu0 0.0
    %4202 = vmatpush1.msra.mxu0 0.0
    %4203 = vmatprep.subr.mxu0 0.0
    %4204 = vmatpush1.msra.mxu0 0.0
    %4205 = vmatprep.subr.mxu0 0.0
    %4206 = vmatpush1.msra.mxu0 0.0
    %4207 = vmatprep.subr.mxu0 0.0
    %4208 = vmatpush1.msra.mxu0 0.0
    %4209 = vmatprep.subr.mxu0 0.0
    %4210 = vmatpush1.msra.mxu0 0.0
    %4211 = vmatprep.subr.mxu0 0.0
    %4212 = vmatpush1.msra.mxu0 0.0
    %4213 = vmatprep.subr.mxu0 0.0
    %4214 = vmatpush1.msra.mxu0 0.0
    %4215 = vmatprep.subr.mxu0 0.0
    %4216 = vmatpush1.msra.mxu0 0.0
    %4217 = vmatprep.subr.mxu0 0.0
    %4218 = vmatpush1.msra.mxu0 0.0
    %4219 = vmatprep.subr.mxu0 0.0
    %4220 = vmatpush1.msra.mxu0 0.0
    %4221 = vmatprep.subr.mxu0 0.0
    %4222 = vmatpush1.msra.mxu0 0.0
    %4223 = vmatprep.subr.mxu0 0.0
    %4224 = vmatpush1.msra.mxu0 0.0
    %4225 = vmatprep.subr.mxu0 0.0
    %4226 = vmatpush1.msra.mxu0 0.0
    %4227 = vmatprep.subr.mxu0 0.0
    %4228 = vmatpush1.msra.mxu0 0.0
    %4229 = vmatprep.subr.mxu0 0.0
    %4230 = vmatpush1.msra.mxu0 0.0
    %4231 = vmatprep.mubr.f32.mxu0 0.0
    %4232 = vmatmul.mubr.f32.gmra.mrb[0].mxu0 %v4165
    %v4233 = vpop.f32.mrb[0].mxu0
    %v4234 = vadd.f32 0.0, %v4233
    %v4235 = vpop.f32.mrb[0].mxu0
    %v4236 = vadd.f32 0.0, %v4235
    %4237 = vdwg.mxu0
    %4238 = vmatprep.subr.mxu0 %v2378
    %4239 = vmatpush1.msra.mxu0 %v2375
    %4240 = vmatprep.subr.mxu0 %v2386
    %4241 = vmatpush1.msra.mxu0 %v2384
    %4242 = vmatprep.subr.mxu0 %v2394
    %4243 = vmatpush1.msra.mxu0 %v2392
    %4244 = vmatprep.subr.mxu0 %v2402
    %4245 = vmatpush1.msra.mxu0 %v2400
    %4246 = vmatprep.subr.mxu0 0.0
    %4247 = vmatpush1.msra.mxu0 0.0
    %4248 = vmatprep.subr.mxu0 0.0
    %4249 = vmatpush1.msra.mxu0 0.0
    %4250 = vmatprep.subr.mxu0 0.0
    %4251 = vmatpush1.msra.mxu0 0.0
    %4252 = vmatprep.subr.mxu0 0.0
    %4253 = vmatpush1.msra.mxu0 0.0
    %4254 = vmatprep.subr.mxu0 0.0
    %4255 = vmatpush1.msra.mxu0 0.0
    %4256 = vmatprep.subr.mxu0 0.0
    %4257 = vmatpush1.msra.mxu0 0.0
    %4258 = vmatprep.subr.mxu0 0.0
    %4259 = vmatpush1.msra.mxu0 0.0
    %4260 = vmatprep.subr.mxu0 0.0
    %4261 = vmatpush1.msra.mxu0 0.0
    %4262 = vmatprep.subr.mxu0 0.0
    %4263 = vmatpush1.msra.mxu0 0.0
    %4264 = vmatprep.subr.mxu0 0.0
    %4265 = vmatpush1.msra.mxu0 0.0
    %4266 = vmatprep.subr.mxu0 0.0
    %4267 = vmatpush1.msra.mxu0 0.0
    %4268 = vmatprep.subr.mxu0 0.0
    %4269 = vmatpush1.msra.mxu0 0.0
    %4270 = vmatprep.subr.mxu0 0.0
    %4271 = vmatpush1.msra.mxu0 0.0
    %4272 = vmatprep.subr.mxu0 0.0
    %4273 = vmatpush1.msra.mxu0 0.0
    %4274 = vmatprep.subr.mxu0 0.0
    %4275 = vmatpush1.msra.mxu0 0.0
    %4276 = vmatprep.subr.mxu0 0.0
    %4277 = vmatpush1.msra.mxu0 0.0
    %4278 = vmatprep.subr.mxu0 0.0
    %4279 = vmatpush1.msra.mxu0 0.0
    %4280 = vmatprep.subr.mxu0 0.0
    %4281 = vmatpush1.msra.mxu0 0.0
    %4282 = vmatprep.subr.mxu0 0.0
    %4283 = vmatpush1.msra.mxu0 0.0
    %4284 = vmatprep.subr.mxu0 0.0
    %4285 = vmatpush1.msra.mxu0 0.0
    %4286 = vmatprep.subr.mxu0 0.0
    %4287 = vmatpush1.msra.mxu0 0.0
    %4288 = vmatprep.subr.mxu0 0.0
    %4289 = vmatpush1.msra.mxu0 0.0
    %4290 = vmatprep.subr.mxu0 0.0
    %4291 = vmatpush1.msra.mxu0 0.0
    %4292 = vmatprep.subr.mxu0 0.0
    %4293 = vmatpush1.msra.mxu0 0.0
    %4294 = vmatprep.subr.mxu0 0.0
    %4295 = vmatpush1.msra.mxu0 0.0
    %4296 = vmatprep.subr.mxu0 0.0
    %4297 = vmatpush1.msra.mxu0 0.0
    %4298 = vmatprep.subr.mxu0 0.0
    %4299 = vmatpush1.msra.mxu0 0.0
    %4300 = vmatprep.subr.mxu0 0.0
    %4301 = vmatpush1.msra.mxu0 0.0
    %4302 = vmatprep.mubr.f32.mxu0 0.0
    %4303 = vmatmul.mubr.f32.gmra.mrb[0].mxu0 %v4165
    %v4304 = vpop.f32.mrb[0].mxu0
    %v4305 = vadd.f32 0.0, %v4304
    %v4306 = vpop.f32.mrb[0].mxu0
    %v4307 = vadd.f32 0.0, %v4306
    %4308 = vdwg.mxu0
    %v4313 = vcombine.low %v4234, %v4236
    %v4314 = vcombine.low %v4305, %v4307
    %v4316 = vunpack.c.l.s4 1983009808
    %v4317 = vunpack.c.0.s8 %v4316
    %v4318 = vlaneseq
    %v4319 = vshrl.u32 %v4318, 7
    %v4320 = vsub.s32 %v4317, %v4319
    %v4321 = vrot.slane %v4313, %v4320
    %v4323 = vunpack.c.l.s4 1983009808
    %v4324 = vunpack.c.0.s8 %v4323
    %v4325 = vlaneseq
    %v4326 = vshrl.u32 %v4325, 7
    %v4327 = vsub.s32 %v4324, %v4326
    %v4328 = vrot.slane %v4314, %v4327
    %v4329 = vcombine.low %v4321, %v4328
    %v4331 = vadd.f32 %v4163, %v4329
    %v4332 = vmul.f32 %v4331, 0.5
    %v4333 = vtanh.pop %v4332
    %v4334 = vadd.f32 %v4333, 1.0
    %v4335 = vmul.f32 %v4334, 0.5
    %v4337 = vrot.slane %v4331, 2
    %v4339 = vmul.f32 %v4337, 0.5
    %v4340 = vtanh.pop %v4339
    %v4341 = vadd.f32 %v4340, 1.0
    %v4342 = vmul.f32 %v4341, 0.5
    %v4343 = vrot.slane %v4331, 4
    %v4345 = vtanh.pop %v4343
    %v4346 = vrot.slane %v4331, 6
    %v4348 = vmul.f32 %v4346, 0.5
    %v4349 = vtanh.pop %v4348
    %v4350 = vadd.f32 %v4349, 1.0
    %v4351 = vmul.f32 %v4350, 0.5
    %v4352 = vmul.f32 %v4342, %v4160
    %v4353 = vmul.f32 %v4335, %v4345
    %v4354 = vadd.f32 %v4352, %v4353
    %v4355 = vtanh.pop %v4354
    %v4356 = vmul.f32 %v4351, %v4355
    %v4357 = vld [vmem:[%s2166] sm:$0xff]
    %v4359 = vsel %vm77, %v4356, 0
    %4361 = vmatprep.subr.mxu0 %v2372
    %4362 = vmatpush1.msra.mxu0 %v2369
    %4363 = vmatprep.subr.mxu0 %v2382
    %4364 = vmatpush1.msra.mxu0 %v2380
    %4365 = vmatprep.subr.mxu0 %v2390
    %4366 = vmatpush1.msra.mxu0 %v2388
    %4367 = vmatprep.subr.mxu0 %v2398
    %4368 = vmatpush1.msra.mxu0 %v2396
    %4369 = vmatprep.subr.mxu0 0.0
    %4370 = vmatpush1.msra.mxu0 0.0
    %4371 = vmatprep.subr.mxu0 0.0
    %4372 = vmatpush1.msra.mxu0 0.0
    %4373 = vmatprep.subr.mxu0 0.0
    %4374 = vmatpush1.msra.mxu0 0.0
    %4375 = vmatprep.subr.mxu0 0.0
    %4376 = vmatpush1.msra.mxu0 0.0
    %4377 = vmatprep.subr.mxu0 0.0
    %4378 = vmatpush1.msra.mxu0 0.0
    %4379 = vmatprep.subr.mxu0 0.0
    %4380 = vmatpush1.msra.mxu0 0.0
    %4381 = vmatprep.subr.mxu0 0.0
    %4382 = vmatpush1.msra.mxu0 0.0
    %4383 = vmatprep.subr.mxu0 0.0
    %4384 = vmatpush1.msra.mxu0 0.0
    %4385 = vmatprep.subr.mxu0 0.0
    %4386 = vmatpush1.msra.mxu0 0.0
    %4387 = vmatprep.subr.mxu0 0.0
    %4388 = vmatpush1.msra.mxu0 0.0
    %4389 = vmatprep.subr.mxu0 0.0
    %4390 = vmatpush1.msra.mxu0 0.0
    %4391 = vmatprep.subr.mxu0 0.0
    %4392 = vmatpush1.msra.mxu0 0.0
    %4393 = vmatprep.subr.mxu0 0.0
    %4394 = vmatpush1.msra.mxu0 0.0
    %4395 = vmatprep.subr.mxu0 0.0
    %4396 = vmatpush1.msra.mxu0 0.0
    %4397 = vmatprep.subr.mxu0 0.0
    %4398 = vmatpush1.msra.mxu0 0.0
    %4399 = vmatprep.subr.mxu0 0.0
    %4400 = vmatpush1.msra.mxu0 0.0
    %4401 = vmatprep.subr.mxu0 0.0
    %4402 = vmatpush1.msra.mxu0 0.0
    %4403 = vmatprep.subr.mxu0 0.0
    %4404 = vmatpush1.msra.mxu0 0.0
    %4405 = vmatprep.subr.mxu0 0.0
    %4406 = vmatpush1.msra.mxu0 0.0
    %4407 = vmatprep.subr.mxu0 0.0
    %4408 = vmatpush1.msra.mxu0 0.0
    %4409 = vmatprep.subr.mxu0 0.0
    %4410 = vmatpush1.msra.mxu0 0.0
    %4411 = vmatprep.subr.mxu0 0.0
    %4412 = vmatpush1.msra.mxu0 0.0
    %4413 = vmatprep.subr.mxu0 0.0
    %4414 = vmatpush1.msra.mxu0 0.0
    %4415 = vmatprep.subr.mxu0 0.0
    %4416 = vmatpush1.msra.mxu0 0.0
    %4417 = vmatprep.subr.mxu0 0.0
    %4418 = vmatpush1.msra.mxu0 0.0
    %4419 = vmatprep.subr.mxu0 0.0
    %4420 = vmatpush1.msra.mxu0 0.0
    %4421 = vmatprep.subr.mxu0 0.0
    %4422 = vmatpush1.msra.mxu0 0.0
    %4423 = vmatprep.subr.mxu0 0.0
    %4424 = vmatpush1.msra.mxu0 0.0
    %4425 = vmatprep.mubr.f32.mxu0 0.0
    %4426 = vmatmul.mubr.f32.gmra.mrb[0].mxu0 %v4359
    %v4427 = vpop.f32.mrb[0].mxu0
    %v4428 = vadd.f32 0.0, %v4427
    %v4429 = vpop.f32.mrb[0].mxu0
    %v4430 = vadd.f32 0.0, %v4429
    %4431 = vdwg.mxu0
    %4432 = vmatprep.subr.mxu0 %v2378
    %4433 = vmatpush1.msra.mxu0 %v2375
    %4434 = vmatprep.subr.mxu0 %v2386
    %4435 = vmatpush1.msra.mxu0 %v2384
    %4436 = vmatprep.subr.mxu0 %v2394
    %4437 = vmatpush1.msra.mxu0 %v2392
    %4438 = vmatprep.subr.mxu0 %v2402
    %4439 = vmatpush1.msra.mxu0 %v2400
    %4440 = vmatprep.subr.mxu0 0.0
    %4441 = vmatpush1.msra.mxu0 0.0
    %4442 = vmatprep.subr.mxu0 0.0
    %4443 = vmatpush1.msra.mxu0 0.0
    %4444 = vmatprep.subr.mxu0 0.0
    %4445 = vmatpush1.msra.mxu0 0.0
    %4446 = vmatprep.subr.mxu0 0.0
    %4447 = vmatpush1.msra.mxu0 0.0
    %4448 = vmatprep.subr.mxu0 0.0
    %4449 = vmatpush1.msra.mxu0 0.0
    %4450 = vmatprep.subr.mxu0 0.0
    %4451 = vmatpush1.msra.mxu0 0.0
    %4452 = vmatprep.subr.mxu0 0.0
    %4453 = vmatpush1.msra.mxu0 0.0
    %4454 = vmatprep.subr.mxu0 0.0
    %4455 = vmatpush1.msra.mxu0 0.0
    %4456 = vmatprep.subr.mxu0 0.0
    %4457 = vmatpush1.msra.mxu0 0.0
    %4458 = vmatprep.subr.mxu0 0.0
    %4459 = vmatpush1.msra.mxu0 0.0
    %4460 = vmatprep.subr.mxu0 0.0
    %4461 = vmatpush1.msra.mxu0 0.0
    %4462 = vmatprep.subr.mxu0 0.0
    %4463 = vmatpush1.msra.mxu0 0.0
    %4464 = vmatprep.subr.mxu0 0.0
    %4465 = vmatpush1.msra.mxu0 0.0
    %4466 = vmatprep.subr.mxu0 0.0
    %4467 = vmatpush1.msra.mxu0 0.0
    %4468 = vmatprep.subr.mxu0 0.0
    %4469 = vmatpush1.msra.mxu0 0.0
    %4470 = vmatprep.subr.mxu0 0.0
    %4471 = vmatpush1.msra.mxu0 0.0
    %4472 = vmatprep.subr.mxu0 0.0
    %4473 = vmatpush1.msra.mxu0 0.0
    %4474 = vmatprep.subr.mxu0 0.0
    %4475 = vmatpush1.msra.mxu0 0.0
    %4476 = vmatprep.subr.mxu0 0.0
    %4477 = vmatpush1.msra.mxu0 0.0
    %4478 = vmatprep.subr.mxu0 0.0
    %4479 = vmatpush1.msra.mxu0 0.0
    %4480 = vmatprep.subr.mxu0 0.0
    %4481 = vmatpush1.msra.mxu0 0.0
    %4482 = vmatprep.subr.mxu0 0.0
    %4483 = vmatpush1.msra.mxu0 0.0
    %4484 = vmatprep.subr.mxu0 0.0
    %4485 = vmatpush1.msra.mxu0 0.0
    %4486 = vmatprep.subr.mxu0 0.0
    %4487 = vmatpush1.msra.mxu0 0.0
    %4488 = vmatprep.subr.mxu0 0.0
    %4489 = vmatpush1.msra.mxu0 0.0
    %4490 = vmatprep.subr.mxu0 0.0
    %4491 = vmatpush1.msra.mxu0 0.0
    %4492 = vmatprep.subr.mxu0 0.0
    %4493 = vmatpush1.msra.mxu0 0.0
    %4494 = vmatprep.subr.mxu0 0.0
    %4495 = vmatpush1.msra.mxu0 0.0
    %4496 = vmatprep.mubr.f32.mxu0 0.0
    %4497 = vmatmul.mubr.f32.gmra.mrb[0].mxu0 %v4359
    %v4498 = vpop.f32.mrb[0].mxu0
    %v4499 = vadd.f32 0.0, %v4498
    %v4500 = vpop.f32.mrb[0].mxu0
    %v4501 = vadd.f32 0.0, %v4500
    %4502 = vdwg.mxu0
    %v4507 = vcombine.low %v4428, %v4430
    %v4508 = vcombine.low %v4499, %v4501
    %v4510 = vunpack.c.l.s4 1983009808
    %v4511 = vunpack.c.0.s8 %v4510
    %v4512 = vlaneseq
    %v4513 = vshrl.u32 %v4512, 7
    %v4514 = vsub.s32 %v4511, %v4513
    %v4515 = vrot.slane %v4507, %v4514
    %v4517 = vunpack.c.l.s4 1983009808
    %v4518 = vunpack.c.0.s8 %v4517
    %v4519 = vlaneseq
    %v4520 = vshrl.u32 %v4519, 7
    %v4521 = vsub.s32 %v4518, %v4520
    %v4522 = vrot.slane %v4508, %v4521
    %v4523 = vcombine.low %v4515, %v4522
    %v4525 = vadd.f32 %v4357, %v4523
    %v4526 = vmul.f32 %v4525, 0.5
    %v4527 = vtanh.pop %v4526
    %v4528 = vadd.f32 %v4527, 1.0
    %v4529 = vmul.f32 %v4528, 0.5
    %v4531 = vrot.slane %v4525, 2
    %v4533 = vmul.f32 %v4531, 0.5
    %v4534 = vtanh.pop %v4533
    %v4535 = vadd.f32 %v4534, 1.0
    %v4536 = vmul.f32 %v4535, 0.5
    %v4537 = vrot.slane %v4525, 4
    %v4539 = vtanh.pop %v4537
    %v4540 = vrot.slane %v4525, 6
    %v4542 = vmul.f32 %v4540, 0.5
    %v4543 = vtanh.pop %v4542
    %v4544 = vadd.f32 %v4543, 1.0
    %v4545 = vmul.f32 %v4544, 0.5
    %v4546 = vmul.f32 %v4536, %v4354
    %v4547 = vmul.f32 %v4529, %v4539
    %v4548 = vadd.f32 %v4546, %v4547
    %v4549 = vtanh.pop %v4548
    %v4550 = vmul.f32 %v4545, %v4549
    %v4551 = vld [vmem:[%s2202] sm:$0xff]
    %v4553 = vsel %vm77, %v4550, 0
    %4555 = vmatprep.subr.mxu0 %v2372
    %4556 = vmatpush1.msra.mxu0 %v2369
    %4557 = vmatprep.subr.mxu0 %v2382
    %4558 = vmatpush1.msra.mxu0 %v2380
    %4559 = vmatprep.subr.mxu0 %v2390
    %4560 = vmatpush1.msra.mxu0 %v2388
    %4561 = vmatprep.subr.mxu0 %v2398
    %4562 = vmatpush1.msra.mxu0 %v2396
    %4563 = vmatprep.subr.mxu0 0.0
    %4564 = vmatpush1.msra.mxu0 0.0
    %4565 = vmatprep.subr.mxu0 0.0
    %4566 = vmatpush1.msra.mxu0 0.0
    %4567 = vmatprep.subr.mxu0 0.0
    %4568 = vmatpush1.msra.mxu0 0.0
    %4569 = vmatprep.subr.mxu0 0.0
    %4570 = vmatpush1.msra.mxu0 0.0
    %4571 = vmatprep.subr.mxu0 0.0
    %4572 = vmatpush1.msra.mxu0 0.0
    %4573 = vmatprep.subr.mxu0 0.0
    %4574 = vmatpush1.msra.mxu0 0.0
    %4575 = vmatprep.subr.mxu0 0.0
    %4576 = vmatpush1.msra.mxu0 0.0
    %4577 = vmatprep.subr.mxu0 0.0
    %4578 = vmatpush1.msra.mxu0 0.0
    %4579 = vmatprep.subr.mxu0 0.0
    %4580 = vmatpush1.msra.mxu0 0.0
    %4581 = vmatprep.subr.mxu0 0.0
    %4582 = vmatpush1.msra.mxu0 0.0
    %4583 = vmatprep.subr.mxu0 0.0
    %4584 = vmatpush1.msra.mxu0 0.0
    %4585 = vmatprep.subr.mxu0 0.0
    %4586 = vmatpush1.msra.mxu0 0.0
    %4587 = vmatprep.subr.mxu0 0.0
    %4588 = vmatpush1.msra.mxu0 0.0
    %4589 = vmatprep.subr.mxu0 0.0
    %4590 = vmatpush1.msra.mxu0 0.0
    %4591 = vmatprep.subr.mxu0 0.0
    %4592 = vmatpush1.msra.mxu0 0.0
    %4593 = vmatprep.subr.mxu0 0.0
    %4594 = vmatpush1.msra.mxu0 0.0
    %4595 = vmatprep.subr.mxu0 0.0
    %4596 = vmatpush1.msra.mxu0 0.0
    %4597 = vmatprep.subr.mxu0 0.0
    %4598 = vmatpush1.msra.mxu0 0.0
    %4599 = vmatprep.subr.mxu0 0.0
    %4600 = vmatpush1.msra.mxu0 0.0
    %4601 = vmatprep.subr.mxu0 0.0
    %4602 = vmatpush1.msra.mxu0 0.0
    %4603 = vmatprep.subr.mxu0 0.0
    %4604 = vmatpush1.msra.mxu0 0.0
    %4605 = vmatprep.subr.mxu0 0.0
    %4606 = vmatpush1.msra.mxu0 0.0
    %4607 = vmatprep.subr.mxu0 0.0
    %4608 = vmatpush1.msra.mxu0 0.0
    %4609 = vmatprep.subr.mxu0 0.0
    %4610 = vmatpush1.msra.mxu0 0.0
    %4611 = vmatprep.subr.mxu0 0.0
    %4612 = vmatpush1.msra.mxu0 0.0
    %4613 = vmatprep.subr.mxu0 0.0
    %4614 = vmatpush1.msra.mxu0 0.0
    %4615 = vmatprep.subr.mxu0 0.0
    %4616 = vmatpush1.msra.mxu0 0.0
    %4617 = vmatprep.subr.mxu0 0.0
    %4618 = vmatpush1.msra.mxu0 0.0
    %4619 = vmatprep.mubr.f32.mxu0 0.0
    %4620 = vmatmul.mubr.f32.gmra.mrb[0].mxu0 %v4553
    %v4621 = vpop.f32.mrb[0].mxu0
    %v4622 = vadd.f32 0.0, %v4621
    %v4623 = vpop.f32.mrb[0].mxu0
    %v4624 = vadd.f32 0.0, %v4623
    %4625 = vdwg.mxu0
    %4626 = vmatprep.subr.mxu0 %v2378
    %4627 = vmatpush1.msra.mxu0 %v2375
    %4628 = vmatprep.subr.mxu0 %v2386
    %4629 = vmatpush1.msra.mxu0 %v2384
    %4630 = vmatprep.subr.mxu0 %v2394
    %4631 = vmatpush1.msra.mxu0 %v2392
    %4632 = vmatprep.subr.mxu0 %v2402
    %4633 = vmatpush1.msra.mxu0 %v2400
    %4634 = vmatprep.subr.mxu0 0.0
    %4635 = vmatpush1.msra.mxu0 0.0
    %4636 = vmatprep.subr.mxu0 0.0
    %4637 = vmatpush1.msra.mxu0 0.0
    %4638 = vmatprep.subr.mxu0 0.0
    %4639 = vmatpush1.msra.mxu0 0.0
    %4640 = vmatprep.subr.mxu0 0.0
    %4641 = vmatpush1.msra.mxu0 0.0
    %4642 = vmatprep.subr.mxu0 0.0
    %4643 = vmatpush1.msra.mxu0 0.0
    %4644 = vmatprep.subr.mxu0 0.0
    %4645 = vmatpush1.msra.mxu0 0.0
    %4646 = vmatprep.subr.mxu0 0.0
    %4647 = vmatpush1.msra.mxu0 0.0
    %4648 = vmatprep.subr.mxu0 0.0
    %4649 = vmatpush1.msra.mxu0 0.0
    %4650 = vmatprep.subr.mxu0 0.0
    %4651 = vmatpush1.msra.mxu0 0.0
    %4652 = vmatprep.subr.mxu0 0.0
    %4653 = vmatpush1.msra.mxu0 0.0
    %4654 = vmatprep.subr.mxu0 0.0
    %4655 = vmatpush1.msra.mxu0 0.0
    %4656 = vmatprep.subr.mxu0 0.0
    %4657 = vmatpush1.msra.mxu0 0.0
    %4658 = vmatprep.subr.mxu0 0.0
    %4659 = vmatpush1.msra.mxu0 0.0
    %4660 = vmatprep.subr.mxu0 0.0
    %4661 = vmatpush1.msra.mxu0 0.0
    %4662 = vmatprep.subr.mxu0 0.0
    %4663 = vmatpush1.msra.mxu0 0.0
    %4664 = vmatprep.subr.mxu0 0.0
    %4665 = vmatpush1.msra.mxu0 0.0
    %4666 = vmatprep.subr.mxu0 0.0
    %4667 = vmatpush1.msra.mxu0 0.0
    %4668 = vmatprep.subr.mxu0 0.0
    %4669 = vmatpush1.msra.mxu0 0.0
    %4670 = vmatprep.subr.mxu0 0.0
    %4671 = vmatpush1.msra.mxu0 0.0
    %4672 = vmatprep.subr.mxu0 0.0
    %4673 = vmatpush1.msra.mxu0 0.0
    %4674 = vmatprep.subr.mxu0 0.0
    %4675 = vmatpush1.msra.mxu0 0.0
    %4676 = vmatprep.subr.mxu0 0.0
    %4677 = vmatpush1.msra.mxu0 0.0
    %4678 = vmatprep.subr.mxu0 0.0
    %4679 = vmatpush1.msra.mxu0 0.0
    %4680 = vmatprep.subr.mxu0 0.0
    %4681 = vmatpush1.msra.mxu0 0.0
    %4682 = vmatprep.subr.mxu0 0.0
    %4683 = vmatpush1.msra.mxu0 0.0
    %4684 = vmatprep.subr.mxu0 0.0
    %4685 = vmatpush1.msra.mxu0 0.0
    %4686 = vmatprep.subr.mxu0 0.0
    %4687 = vmatpush1.msra.mxu0 0.0
    %4688 = vmatprep.subr.mxu0 0.0
    %4689 = vmatpush1.msra.mxu0 0.0
    %4690 = vmatprep.mubr.f32.mxu0 0.0
    %4691 = vmatmul.mubr.f32.gmra.mrb[0].mxu0 %v4553
    %v4692 = vpop.f32.mrb[0].mxu0
    %v4693 = vadd.f32 0.0, %v4692
    %v4694 = vpop.f32.mrb[0].mxu0
    %v4695 = vadd.f32 0.0, %v4694
    %4696 = vdwg.mxu0
    %v4701 = vcombine.low %v4622, %v4624
    %v4702 = vcombine.low %v4693, %v4695
    %v4704 = vunpack.c.l.s4 1983009808
    %v4705 = vunpack.c.0.s8 %v4704
    %v4706 = vlaneseq
    %v4707 = vshrl.u32 %v4706, 7
    %v4708 = vsub.s32 %v4705, %v4707
    %v4709 = vrot.slane %v4701, %v4708
    %v4711 = vunpack.c.l.s4 1983009808
    %v4712 = vunpack.c.0.s8 %v4711
    %v4713 = vlaneseq
    %v4714 = vshrl.u32 %v4713, 7
    %v4715 = vsub.s32 %v4712, %v4714
    %v4716 = vrot.slane %v4702, %v4715
    %v4717 = vcombine.low %v4709, %v4716
    %v4719 = vadd.f32 %v4551, %v4717
    %v4720 = vmul.f32 %v4719, 0.5
    %v4721 = vtanh.pop %v4720
    %v4722 = vadd.f32 %v4721, 1.0
    %v4723 = vmul.f32 %v4722, 0.5
    %v4725 = vrot.slane %v4719, 2
    %v4727 = vmul.f32 %v4725, 0.5
    %v4728 = vtanh.pop %v4727
    %v4729 = vadd.f32 %v4728, 1.0
    %v4730 = vmul.f32 %v4729, 0.5
    %v4731 = vrot.slane %v4719, 4
    %v4733 = vtanh.pop %v4731
    %v4734 = vrot.slane %v4719, 6
    %v4736 = vmul.f32 %v4734, 0.5
    %v4737 = vtanh.pop %v4736
    %v4738 = vadd.f32 %v4737, 1.0
    %v4739 = vmul.f32 %v4738, 0.5
    %v4740 = vmul.f32 %v4730, %v4548
    %v4741 = vmul.f32 %v4723, %v4733
    %v4742 = vadd.f32 %v4740, %v4741
    %v4743 = vtanh.pop %v4742
    %v4744 = vmul.f32 %v4739, %v4743
    %v4745 = vld [vmem:[%s2238] sm:$0xff]
    %v4747 = vsel %vm77, %v4744, 0
    %4749 = vmatprep.subr.mxu0 %v2372
    %4750 = vmatpush1.msra.mxu0 %v2369
    %4751 = vmatprep.subr.mxu0 %v2382
    %4752 = vmatpush1.msra.mxu0 %v2380
    %4753 = vmatprep.subr.mxu0 %v2390
    %4754 = vmatpush1.msra.mxu0 %v2388
    %4755 = vmatprep.subr.mxu0 %v2398
    %4756 = vmatpush1.msra.mxu0 %v2396
    %4757 = vmatprep.subr.mxu0 0.0
    %4758 = vmatpush1.msra.mxu0 0.0
    %4759 = vmatprep.subr.mxu0 0.0
    %4760 = vmatpush1.msra.mxu0 0.0
    %4761 = vmatprep.subr.mxu0 0.0
    %4762 = vmatpush1.msra.mxu0 0.0
    %4763 = vmatprep.subr.mxu0 0.0
    %4764 = vmatpush1.msra.mxu0 0.0
    %4765 = vmatprep.subr.mxu0 0.0
    %4766 = vmatpush1.msra.mxu0 0.0
    %4767 = vmatprep.subr.mxu0 0.0
    %4768 = vmatpush1.msra.mxu0 0.0
    %4769 = vmatprep.subr.mxu0 0.0
    %4770 = vmatpush1.msra.mxu0 0.0
    %4771 = vmatprep.subr.mxu0 0.0
    %4772 = vmatpush1.msra.mxu0 0.0
    %4773 = vmatprep.subr.mxu0 0.0
    %4774 = vmatpush1.msra.mxu0 0.0
    %4775 = vmatprep.subr.mxu0 0.0
    %4776 = vmatpush1.msra.mxu0 0.0
    %4777 = vmatprep.subr.mxu0 0.0
    %4778 = vmatpush1.msra.mxu0 0.0
    %4779 = vmatprep.subr.mxu0 0.0
    %4780 = vmatpush1.msra.mxu0 0.0
    %4781 = vmatprep.subr.mxu0 0.0
    %4782 = vmatpush1.msra.mxu0 0.0
    %4783 = vmatprep.subr.mxu0 0.0
    %4784 = vmatpush1.msra.mxu0 0.0
    %4785 = vmatprep.subr.mxu0 0.0
    %4786 = vmatpush1.msra.mxu0 0.0
    %4787 = vmatprep.subr.mxu0 0.0
    %4788 = vmatpush1.msra.mxu0 0.0
    %4789 = vmatprep.subr.mxu0 0.0
    %4790 = vmatpush1.msra.mxu0 0.0
    %4791 = vmatprep.subr.mxu0 0.0
    %4792 = vmatpush1.msra.mxu0 0.0
    %4793 = vmatprep.subr.mxu0 0.0
    %4794 = vmatpush1.msra.mxu0 0.0
    %4795 = vmatprep.subr.mxu0 0.0
    %4796 = vmatpush1.msra.mxu0 0.0
    %4797 = vmatprep.subr.mxu0 0.0
    %4798 = vmatpush1.msra.mxu0 0.0
    %4799 = vmatprep.subr.mxu0 0.0
    %4800 = vmatpush1.msra.mxu0 0.0
    %4801 = vmatprep.subr.mxu0 0.0
    %4802 = vmatpush1.msra.mxu0 0.0
    %4803 = vmatprep.subr.mxu0 0.0
    %4804 = vmatpush1.msra.mxu0 0.0
    %4805 = vmatprep.subr.mxu0 0.0
    %4806 = vmatpush1.msra.mxu0 0.0
    %4807 = vmatprep.subr.mxu0 0.0
    %4808 = vmatpush1.msra.mxu0 0.0
    %4809 = vmatprep.subr.mxu0 0.0
    %4810 = vmatpush1.msra.mxu0 0.0
    %4811 = vmatprep.subr.mxu0 0.0
    %4812 = vmatpush1.msra.mxu0 0.0
    %4813 = vmatprep.mubr.f32.mxu0 0.0
    %4814 = vmatmul.mubr.f32.gmra.mrb[0].mxu0 %v4747
    %v4815 = vpop.f32.mrb[0].mxu0
    %v4816 = vadd.f32 0.0, %v4815
    %v4817 = vpop.f32.mrb[0].mxu0
    %v4818 = vadd.f32 0.0, %v4817
    %4819 = vdwg.mxu0
    %4820 = vmatprep.subr.mxu0 %v2378
    %4821 = vmatpush1.msra.mxu0 %v2375
    %4822 = vmatprep.subr.mxu0 %v2386
    %4823 = vmatpush1.msra.mxu0 %v2384
    %4824 = vmatprep.subr.mxu0 %v2394
    %4825 = vmatpush1.msra.mxu0 %v2392
    %4826 = vmatprep.subr.mxu0 %v2402
    %4827 = vmatpush1.msra.mxu0 %v2400
    %4828 = vmatprep.subr.mxu0 0.0
    %4829 = vmatpush1.msra.mxu0 0.0
    %4830 = vmatprep.subr.mxu0 0.0
    %4831 = vmatpush1.msra.mxu0 0.0
    %4832 = vmatprep.subr.mxu0 0.0
    %4833 = vmatpush1.msra.mxu0 0.0
    %4834 = vmatprep.subr.mxu0 0.0
    %4835 = vmatpush1.msra.mxu0 0.0
    %4836 = vmatprep.subr.mxu0 0.0
    %4837 = vmatpush1.msra.mxu0 0.0
    %4838 = vmatprep.subr.mxu0 0.0
    %4839 = vmatpush1.msra.mxu0 0.0
    %4840 = vmatprep.subr.mxu0 0.0
    %4841 = vmatpush1.msra.mxu0 0.0
    %4842 = vmatprep.subr.mxu0 0.0
    %4843 = vmatpush1.msra.mxu0 0.0
    %4844 = vmatprep.subr.mxu0 0.0
    %4845 = vmatpush1.msra.mxu0 0.0
    %4846 = vmatprep.subr.mxu0 0.0
    %4847 = vmatpush1.msra.mxu0 0.0
    %4848 = vmatprep.subr.mxu0 0.0
    %4849 = vmatpush1.msra.mxu0 0.0
    %4850 = vmatprep.subr.mxu0 0.0
    %4851 = vmatpush1.msra.mxu0 0.0
    %4852 = vmatprep.subr.mxu0 0.0
    %4853 = vmatpush1.msra.mxu0 0.0
    %4854 = vmatprep.subr.mxu0 0.0
    %4855 = vmatpush1.msra.mxu0 0.0
    %4856 = vmatprep.subr.mxu0 0.0
    %4857 = vmatpush1.msra.mxu0 0.0
    %4858 = vmatprep.subr.mxu0 0.0
    %4859 = vmatpush1.msra.mxu0 0.0
    %4860 = vmatprep.subr.mxu0 0.0
    %4861 = vmatpush1.msra.mxu0 0.0
    %4862 = vmatprep.subr.mxu0 0.0
    %4863 = vmatpush1.msra.mxu0 0.0
    %4864 = vmatprep.subr.mxu0 0.0
    %4865 = vmatpush1.msra.mxu0 0.0
    %4866 = vmatprep.subr.mxu0 0.0
    %4867 = vmatpush1.msra.mxu0 0.0
    %4868 = vmatprep.subr.mxu0 0.0
    %4869 = vmatpush1.msra.mxu0 0.0
    %4870 = vmatprep.subr.mxu0 0.0
    %4871 = vmatpush1.msra.mxu0 0.0
    %4872 = vmatprep.subr.mxu0 0.0
    %4873 = vmatpush1.msra.mxu0 0.0
    %4874 = vmatprep.subr.mxu0 0.0
    %4875 = vmatpush1.msra.mxu0 0.0
    %4876 = vmatprep.subr.mxu0 0.0
    %4877 = vmatpush1.msra.mxu0 0.0
    %4878 = vmatprep.subr.mxu0 0.0
    %4879 = vmatpush1.msra.mxu0 0.0
    %4880 = vmatprep.subr.mxu0 0.0
    %4881 = vmatpush1.msra.mxu0 0.0
    %4882 = vmatprep.subr.mxu0 0.0
    %4883 = vmatpush1.msra.mxu0 0.0
    %4884 = vmatprep.mubr.f32.mxu0 0.0
    %4885 = vmatmul.mubr.f32.gmra.mrb[0].mxu0 %v4747
    %v4886 = vpop.f32.mrb[0].mxu0
    %v4887 = vadd.f32 0.0, %v4886
    %v4888 = vpop.f32.mrb[0].mxu0
    %v4889 = vadd.f32 0.0, %v4888
    %4890 = vdwg.mxu0
    %v4895 = vcombine.low %v4816, %v4818
    %v4896 = vcombine.low %v4887, %v4889
    %v4898 = vunpack.c.l.s4 1983009808
    %v4899 = vunpack.c.0.s8 %v4898
    %v4900 = vlaneseq
    %v4901 = vshrl.u32 %v4900, 7
    %v4902 = vsub.s32 %v4899, %v4901
    %v4903 = vrot.slane %v4895, %v4902
    %v4905 = vunpack.c.l.s4 1983009808
    %v4906 = vunpack.c.0.s8 %v4905
    %v4907 = vlaneseq
    %v4908 = vshrl.u32 %v4907, 7
    %v4909 = vsub.s32 %v4906, %v4908
    %v4910 = vrot.slane %v4896, %v4909
    %v4911 = vcombine.low %v4903, %v4910
    %v4913 = vadd.f32 %v4745, %v4911
    %v4914 = vmul.f32 %v4913, 0.5
    %v4915 = vtanh.pop %v4914
    %v4916 = vadd.f32 %v4915, 1.0
    %v4917 = vmul.f32 %v4916, 0.5
    %v4919 = vrot.slane %v4913, 2
    %v4921 = vmul.f32 %v4919, 0.5
    %v4922 = vtanh.pop %v4921
    %v4923 = vadd.f32 %v4922, 1.0
    %v4924 = vmul.f32 %v4923, 0.5
    %v4925 = vrot.slane %v4913, 4
    %v4927 = vtanh.pop %v4925
    %v4928 = vrot.slane %v4913, 6
    %v4930 = vmul.f32 %v4928, 0.5
    %v4931 = vtanh.pop %v4930
    %v4932 = vadd.f32 %v4931, 1.0
    %v4933 = vmul.f32 %v4932, 0.5
    %v4934 = vmul.f32 %v4924, %v4742
    %v4935 = vmul.f32 %v4917, %v4927
    %v4936 = vadd.f32 %v4934, %v4935
    %v4937 = vtanh.pop %v4936
    %v4938 = vmul.f32 %v4933, %v4937
    %v4939 = vld [vmem:[%s2274] sm:$0xff]
    %v4941 = vsel %vm77, %v4938, 0
    %4943 = vmatprep.subr.mxu0 %v2372
    %4944 = vmatpush1.msra.mxu0 %v2369
    %4945 = vmatprep.subr.mxu0 %v2382
    %4946 = vmatpush1.msra.mxu0 %v2380
    %4947 = vmatprep.subr.mxu0 %v2390
    %4948 = vmatpush1.msra.mxu0 %v2388
    %4949 = vmatprep.subr.mxu0 %v2398
    %4950 = vmatpush1.msra.mxu0 %v2396
    %4951 = vmatprep.subr.mxu0 0.0
    %4952 = vmatpush1.msra.mxu0 0.0
    %4953 = vmatprep.subr.mxu0 0.0
    %4954 = vmatpush1.msra.mxu0 0.0
    %4955 = vmatprep.subr.mxu0 0.0
    %4956 = vmatpush1.msra.mxu0 0.0
    %4957 = vmatprep.subr.mxu0 0.0
    %4958 = vmatpush1.msra.mxu0 0.0
    %4959 = vmatprep.subr.mxu0 0.0
    %4960 = vmatpush1.msra.mxu0 0.0
    %4961 = vmatprep.subr.mxu0 0.0
    %4962 = vmatpush1.msra.mxu0 0.0
    %4963 = vmatprep.subr.mxu0 0.0
    %4964 = vmatpush1.msra.mxu0 0.0
    %4965 = vmatprep.subr.mxu0 0.0
    %4966 = vmatpush1.msra.mxu0 0.0
    %4967 = vmatprep.subr.mxu0 0.0
    %4968 = vmatpush1.msra.mxu0 0.0
    %4969 = vmatprep.subr.mxu0 0.0
    %4970 = vmatpush1.msra.mxu0 0.0
    %4971 = vmatprep.subr.mxu0 0.0
    %4972 = vmatpush1.msra.mxu0 0.0
    %4973 = vmatprep.subr.mxu0 0.0
    %4974 = vmatpush1.msra.mxu0 0.0
    %4975 = vmatprep.subr.mxu0 0.0
    %4976 = vmatpush1.msra.mxu0 0.0
    %4977 = vmatprep.subr.mxu0 0.0
    %4978 = vmatpush1.msra.mxu0 0.0
    %4979 = vmatprep.subr.mxu0 0.0
    %4980 = vmatpush1.msra.mxu0 0.0
    %4981 = vmatprep.subr.mxu0 0.0
    %4982 = vmatpush1.msra.mxu0 0.0
    %4983 = vmatprep.subr.mxu0 0.0
    %4984 = vmatpush1.msra.mxu0 0.0
    %4985 = vmatprep.subr.mxu0 0.0
    %4986 = vmatpush1.msra.mxu0 0.0
    %4987 = vmatprep.subr.mxu0 0.0
    %4988 = vmatpush1.msra.mxu0 0.0
    %4989 = vmatprep.subr.mxu0 0.0
    %4990 = vmatpush1.msra.mxu0 0.0
    %4991 = vmatprep.subr.mxu0 0.0
    %4992 = vmatpush1.msra.mxu0 0.0
    %4993 = vmatprep.subr.mxu0 0.0
    %4994 = vmatpush1.msra.mxu0 0.0
    %4995 = vmatprep.subr.mxu0 0.0
    %4996 = vmatpush1.msra.mxu0 0.0
    %4997 = vmatprep.subr.mxu0 0.0
    %4998 = vmatpush1.msra.mxu0 0.0
    %4999 = vmatprep.subr.mxu0 0.0
    %5000 = vmatpush1.msra.mxu0 0.0
    %5001 = vmatprep.subr.mxu0 0.0
    %5002 = vmatpush1.msra.mxu0 0.0
    %5003 = vmatprep.subr.mxu0 0.0
    %5004 = vmatpush1.msra.mxu0 0.0
    %5005 = vmatprep.subr.mxu0 0.0
    %5006 = vmatpush1.msra.mxu0 0.0
    %5007 = vmatprep.mubr.f32.mxu0 0.0
    %5008 = vmatmul.mubr.f32.gmra.mrb[0].mxu0 %v4941
    %v5009 = vpop.f32.mrb[0].mxu0
    %v5010 = vadd.f32 0.0, %v5009
    %v5011 = vpop.f32.mrb[0].mxu0
    %v5012 = vadd.f32 0.0, %v5011
    %5013 = vdwg.mxu0
    %5014 = vmatprep.subr.mxu0 %v2378
    %5015 = vmatpush1.msra.mxu0 %v2375
    %5016 = vmatprep.subr.mxu0 %v2386
    %5017 = vmatpush1.msra.mxu0 %v2384
    %5018 = vmatprep.subr.mxu0 %v2394
    %5019 = vmatpush1.msra.mxu0 %v2392
    %5020 = vmatprep.subr.mxu0 %v2402
    %5021 = vmatpush1.msra.mxu0 %v2400
    %5022 = vmatprep.subr.mxu0 0.0
    %5023 = vmatpush1.msra.mxu0 0.0
    %5024 = vmatprep.subr.mxu0 0.0
    %5025 = vmatpush1.msra.mxu0 0.0
    %5026 = vmatprep.subr.mxu0 0.0
    %5027 = vmatpush1.msra.mxu0 0.0
    %5028 = vmatprep.subr.mxu0 0.0
    %5029 = vmatpush1.msra.mxu0 0.0
    %5030 = vmatprep.subr.mxu0 0.0
    %5031 = vmatpush1.msra.mxu0 0.0
    %5032 = vmatprep.subr.mxu0 0.0
    %5033 = vmatpush1.msra.mxu0 0.0
    %5034 = vmatprep.subr.mxu0 0.0
    %5035 = vmatpush1.msra.mxu0 0.0
    %5036 = vmatprep.subr.mxu0 0.0
    %5037 = vmatpush1.msra.mxu0 0.0
    %5038 = vmatprep.subr.mxu0 0.0
    %5039 = vmatpush1.msra.mxu0 0.0
    %5040 = vmatprep.subr.mxu0 0.0
    %5041 = vmatpush1.msra.mxu0 0.0
    %5042 = vmatprep.subr.mxu0 0.0
    %5043 = vmatpush1.msra.mxu0 0.0
    %5044 = vmatprep.subr.mxu0 0.0
    %5045 = vmatpush1.msra.mxu0 0.0
    %5046 = vmatprep.subr.mxu0 0.0
    %5047 = vmatpush1.msra.mxu0 0.0
    %5048 = vmatprep.subr.mxu0 0.0
    %5049 = vmatpush1.msra.mxu0 0.0
    %5050 = vmatprep.subr.mxu0 0.0
    %5051 = vmatpush1.msra.mxu0 0.0
    %5052 = vmatprep.subr.mxu0 0.0
    %5053 = vmatpush1.msra.mxu0 0.0
    %5054 = vmatprep.subr.mxu0 0.0
    %5055 = vmatpush1.msra.mxu0 0.0
    %5056 = vmatprep.subr.mxu0 0.0
    %5057 = vmatpush1.msra.mxu0 0.0
    %5058 = vmatprep.subr.mxu0 0.0
    %5059 = vmatpush1.msra.mxu0 0.0
    %5060 = vmatprep.subr.mxu0 0.0
    %5061 = vmatpush1.msra.mxu0 0.0
    %5062 = vmatprep.subr.mxu0 0.0
    %5063 = vmatpush1.msra.mxu0 0.0
    %5064 = vmatprep.subr.mxu0 0.0
    %5065 = vmatpush1.msra.mxu0 0.0
    %5066 = vmatprep.subr.mxu0 0.0
    %5067 = vmatpush1.msra.mxu0 0.0
    %5068 = vmatprep.subr.mxu0 0.0
    %5069 = vmatpush1.msra.mxu0 0.0
    %5070 = vmatprep.subr.mxu0 0.0
    %5071 = vmatpush1.msra.mxu0 0.0
    %5072 = vmatprep.subr.mxu0 0.0
    %5073 = vmatpush1.msra.mxu0 0.0
    %5074 = vmatprep.subr.mxu0 0.0
    %5075 = vmatpush1.msra.mxu0 0.0
    %5076 = vmatprep.subr.mxu0 0.0
    %5077 = vmatpush1.msra.mxu0 0.0
    %5078 = vmatprep.mubr.f32.mxu0 0.0
    %5079 = vmatmul.mubr.f32.gmra.mrb[0].mxu0 %v4941
    %v5080 = vpop.f32.mrb[0].mxu0
    %v5081 = vadd.f32 0.0, %v5080
    %v5082 = vpop.f32.mrb[0].mxu0
    %v5083 = vadd.f32 0.0, %v5082
    %5084 = vdwg.mxu0
    %v5089 = vcombine.low %v5010, %v5012
    %v5090 = vcombine.low %v5081, %v5083
    %v5092 = vunpack.c.l.s4 1983009808
    %v5093 = vunpack.c.0.s8 %v5092
    %v5094 = vlaneseq
    %v5095 = vshrl.u32 %v5094, 7
    %v5096 = vsub.s32 %v5093, %v5095
    %v5097 = vrot.slane %v5089, %v5096
    %v5099 = vunpack.c.l.s4 1983009808
    %v5100 = vunpack.c.0.s8 %v5099
    %v5101 = vlaneseq
    %v5102 = vshrl.u32 %v5101, 7
    %v5103 = vsub.s32 %v5100, %v5102
    %v5104 = vrot.slane %v5090, %v5103
    %v5105 = vcombine.low %v5097, %v5104
    %v5107 = vadd.f32 %v4939, %v5105
    %v5108 = vmul.f32 %v5107, 0.5
    %v5109 = vtanh.pop %v5108
    %v5110 = vadd.f32 %v5109, 1.0
    %v5111 = vmul.f32 %v5110, 0.5
    %v5113 = vrot.slane %v5107, 2
    %v5115 = vmul.f32 %v5113, 0.5
    %v5116 = vtanh.pop %v5115
    %v5117 = vadd.f32 %v5116, 1.0
    %v5118 = vmul.f32 %v5117, 0.5
    %v5119 = vrot.slane %v5107, 4
    %v5121 = vtanh.pop %v5119
    %v5122 = vrot.slane %v5107, 6
    %v5124 = vmul.f32 %v5122, 0.5
    %v5125 = vtanh.pop %v5124
    %v5126 = vadd.f32 %v5125, 1.0
    %v5127 = vmul.f32 %v5126, 0.5
    %v5128 = vmul.f32 %v5118, %v4936
    %v5129 = vmul.f32 %v5111, %v5121
    %v5130 = vadd.f32 %v5128, %v5129
    %v5131 = vtanh.pop %v5130
    %v5132 = vmul.f32 %v5127, %v5131
    %v5133 = vld [vmem:[%s2310] sm:$0xff]
    %v5135 = vsel %vm77, %v5132, 0
    %5137 = vmatprep.subr.mxu0 %v2372
    %5138 = vmatpush1.msra.mxu0 %v2369
    %5139 = vmatprep.subr.mxu0 %v2382
    %5140 = vmatpush1.msra.mxu0 %v2380
    %5141 = vmatprep.subr.mxu0 %v2390
    %5142 = vmatpush1.msra.mxu0 %v2388
    %5143 = vmatprep.subr.mxu0 %v2398
    %5144 = vmatpush1.msra.mxu0 %v2396
    %5145 = vmatprep.subr.mxu0 0.0
    %5146 = vmatpush1.msra.mxu0 0.0
    %5147 = vmatprep.subr.mxu0 0.0
    %5148 = vmatpush1.msra.mxu0 0.0
    %5149 = vmatprep.subr.mxu0 0.0
    %5150 = vmatpush1.msra.mxu0 0.0
    %5151 = vmatprep.subr.mxu0 0.0
    %5152 = vmatpush1.msra.mxu0 0.0
    %5153 = vmatprep.subr.mxu0 0.0
    %5154 = vmatpush1.msra.mxu0 0.0
    %5155 = vmatprep.subr.mxu0 0.0
    %5156 = vmatpush1.msra.mxu0 0.0
    %5157 = vmatprep.subr.mxu0 0.0
    %5158 = vmatpush1.msra.mxu0 0.0
    %5159 = vmatprep.subr.mxu0 0.0
    %5160 = vmatpush1.msra.mxu0 0.0
    %5161 = vmatprep.subr.mxu0 0.0
    %5162 = vmatpush1.msra.mxu0 0.0
    %5163 = vmatprep.subr.mxu0 0.0
    %5164 = vmatpush1.msra.mxu0 0.0
    %5165 = vmatprep.subr.mxu0 0.0
    %5166 = vmatpush1.msra.mxu0 0.0
    %5167 = vmatprep.subr.mxu0 0.0
    %5168 = vmatpush1.msra.mxu0 0.0
    %5169 = vmatprep.subr.mxu0 0.0
    %5170 = vmatpush1.msra.mxu0 0.0
    %5171 = vmatprep.subr.mxu0 0.0
    %5172 = vmatpush1.msra.mxu0 0.0
    %5173 = vmatprep.subr.mxu0 0.0
    %5174 = vmatpush1.msra.mxu0 0.0
    %5175 = vmatprep.subr.mxu0 0.0
    %5176 = vmatpush1.msra.mxu0 0.0
    %5177 = vmatprep.subr.mxu0 0.0
    %5178 = vmatpush1.msra.mxu0 0.0
    %5179 = vmatprep.subr.mxu0 0.0
    %5180 = vmatpush1.msra.mxu0 0.0
    %5181 = vmatprep.subr.mxu0 0.0
    %5182 = vmatpush1.msra.mxu0 0.0
    %5183 = vmatprep.subr.mxu0 0.0
    %5184 = vmatpush1.msra.mxu0 0.0
    %5185 = vmatprep.subr.mxu0 0.0
    %5186 = vmatpush1.msra.mxu0 0.0
    %5187 = vmatprep.subr.mxu0 0.0
    %5188 = vmatpush1.msra.mxu0 0.0
    %5189 = vmatprep.subr.mxu0 0.0
    %5190 = vmatpush1.msra.mxu0 0.0
    %5191 = vmatprep.subr.mxu0 0.0
    %5192 = vmatpush1.msra.mxu0 0.0
    %5193 = vmatprep.subr.mxu0 0.0
    %5194 = vmatpush1.msra.mxu0 0.0
    %5195 = vmatprep.subr.mxu0 0.0
    %5196 = vmatpush1.msra.mxu0 0.0
    %5197 = vmatprep.subr.mxu0 0.0
    %5198 = vmatpush1.msra.mxu0 0.0
    %5199 = vmatprep.subr.mxu0 0.0
    %5200 = vmatpush1.msra.mxu0 0.0
    %5201 = vmatprep.mubr.f32.mxu0 0.0
    %5202 = vmatmul.mubr.f32.gmra.mrb[0].mxu0 %v5135
    %v5203 = vpop.f32.mrb[0].mxu0
    %v5204 = vadd.f32 0.0, %v5203
    %v5205 = vpop.f32.mrb[0].mxu0
    %v5206 = vadd.f32 0.0, %v5205
    %5207 = vdwg.mxu0
    %5208 = vmatprep.subr.mxu0 %v2378
    %5209 = vmatpush1.msra.mxu0 %v2375
    %5210 = vmatprep.subr.mxu0 %v2386
    %5211 = vmatpush1.msra.mxu0 %v2384
    %5212 = vmatprep.subr.mxu0 %v2394
    %5213 = vmatpush1.msra.mxu0 %v2392
    %5214 = vmatprep.subr.mxu0 %v2402
    %5215 = vmatpush1.msra.mxu0 %v2400
    %5216 = vmatprep.subr.mxu0 0.0
    %5217 = vmatpush1.msra.mxu0 0.0
    %5218 = vmatprep.subr.mxu0 0.0
    %5219 = vmatpush1.msra.mxu0 0.0
    %5220 = vmatprep.subr.mxu0 0.0
    %5221 = vmatpush1.msra.mxu0 0.0
    %5222 = vmatprep.subr.mxu0 0.0
    %5223 = vmatpush1.msra.mxu0 0.0
    %5224 = vmatprep.subr.mxu0 0.0
    %5225 = vmatpush1.msra.mxu0 0.0
    %5226 = vmatprep.subr.mxu0 0.0
    %5227 = vmatpush1.msra.mxu0 0.0
    %5228 = vmatprep.subr.mxu0 0.0
    %5229 = vmatpush1.msra.mxu0 0.0
    %5230 = vmatprep.subr.mxu0 0.0
    %5231 = vmatpush1.msra.mxu0 0.0
    %5232 = vmatprep.subr.mxu0 0.0
    %5233 = vmatpush1.msra.mxu0 0.0
    %5234 = vmatprep.subr.mxu0 0.0
    %5235 = vmatpush1.msra.mxu0 0.0
    %5236 = vmatprep.subr.mxu0 0.0
    %5237 = vmatpush1.msra.mxu0 0.0
    %5238 = vmatprep.subr.mxu0 0.0
    %5239 = vmatpush1.msra.mxu0 0.0
    %5240 = vmatprep.subr.mxu0 0.0
    %5241 = vmatpush1.msra.mxu0 0.0
    %5242 = vmatprep.subr.mxu0 0.0
    %5243 = vmatpush1.msra.mxu0 0.0
    %5244 = vmatprep.subr.mxu0 0.0
    %5245 = vmatpush1.msra.mxu0 0.0
    %5246 = vmatprep.subr.mxu0 0.0
    %5247 = vmatpush1.msra.mxu0 0.0
    %5248 = vmatprep.subr.mxu0 0.0
    %5249 = vmatpush1.msra.mxu0 0.0
    %5250 = vmatprep.subr.mxu0 0.0
    %5251 = vmatpush1.msra.mxu0 0.0
    %5252 = vmatprep.subr.mxu0 0.0
    %5253 = vmatpush1.msra.mxu0 0.0
    %5254 = vmatprep.subr.mxu0 0.0
    %5255 = vmatpush1.msra.mxu0 0.0
    %5256 = vmatprep.subr.mxu0 0.0
    %5257 = vmatpush1.msra.mxu0 0.0
    %5258 = vmatprep.subr.mxu0 0.0
    %5259 = vmatpush1.msra.mxu0 0.0
    %5260 = vmatprep.subr.mxu0 0.0
    %5261 = vmatpush1.msra.mxu0 0.0
    %5262 = vmatprep.subr.mxu0 0.0
    %5263 = vmatpush1.msra.mxu0 0.0
    %5264 = vmatprep.subr.mxu0 0.0
    %5265 = vmatpush1.msra.mxu0 0.0
    %5266 = vmatprep.subr.mxu0 0.0
    %5267 = vmatpush1.msra.mxu0 0.0
    %5268 = vmatprep.subr.mxu0 0.0
    %5269 = vmatpush1.msra.mxu0 0.0
    %5270 = vmatprep.subr.mxu0 0.0
    %5271 = vmatpush1.msra.mxu0 0.0
    %5272 = vmatprep.mubr.f32.mxu0 0.0
    %5273 = vmatmul.mubr.f32.gmra.mrb[0].mxu0 %v5135
    %v5274 = vpop.f32.mrb[0].mxu0
    %v5275 = vadd.f32 0.0, %v5274
    %v5276 = vpop.f32.mrb[0].mxu0
    %v5277 = vadd.f32 0.0, %v5276
    %5278 = vdwg.mxu0
    %v5283 = vcombine.low %v5204, %v5206
    %v5284 = vcombine.low %v5275, %v5277
    %v5286 = vunpack.c.l.s4 1983009808
    %v5287 = vunpack.c.0.s8 %v5286
    %v5288 = vlaneseq
    %v5289 = vshrl.u32 %v5288, 7
    %v5290 = vsub.s32 %v5287, %v5289
    %v5291 = vrot.slane %v5283, %v5290
    %v5293 = vunpack.c.l.s4 1983009808
    %v5294 = vunpack.c.0.s8 %v5293
    %v5295 = vlaneseq
    %v5296 = vshrl.u32 %v5295, 7
    %v5297 = vsub.s32 %v5294, %v5296
    %v5298 = vrot.slane %v5284, %v5297
    %v5299 = vcombine.low %v5291, %v5298
    %v5301 = vadd.f32 %v5133, %v5299
    %v5302 = vmul.f32 %v5301, 0.5
    %v5303 = vtanh.pop %v5302
    %v5304 = vadd.f32 %v5303, 1.0
    %v5305 = vmul.f32 %v5304, 0.5
    %v5307 = vrot.slane %v5301, 2
    %v5309 = vmul.f32 %v5307, 0.5
    %v5310 = vtanh.pop %v5309
    %v5311 = vadd.f32 %v5310, 1.0
    %v5312 = vmul.f32 %v5311, 0.5
    %v5313 = vrot.slane %v5301, 4
    %v5315 = vtanh.pop %v5313
    %v5316 = vrot.slane %v5301, 6
    %v5318 = vmul.f32 %v5316, 0.5
    %v5319 = vtanh.pop %v5318
    %v5320 = vadd.f32 %v5319, 1.0
    %v5321 = vmul.f32 %v5320, 0.5
    %v5322 = vmul.f32 %v5312, %v5130
    %v5323 = vmul.f32 %v5305, %v5315
    %v5324 = vadd.f32 %v5322, %v5323
    %v5325 = vtanh.pop %v5324
    %v5326 = vmul.f32 %v5321, %v5325
    %v5327 = vld [vmem:[%s2342] sm:$0xff]
    %v5329 = vsel %vm77, %v5326, 0
    %5331 = vmatprep.subr.mxu0 %v2372
    %5332 = vmatpush1.msra.mxu0 %v2369
    %5333 = vmatprep.subr.mxu0 %v2382
    %5334 = vmatpush1.msra.mxu0 %v2380
    %5335 = vmatprep.subr.mxu0 %v2390
    %5336 = vmatpush1.msra.mxu0 %v2388
    %5337 = vmatprep.subr.mxu0 %v2398
    %5338 = vmatpush1.msra.mxu0 %v2396
    %5339 = vmatprep.subr.mxu0 0.0
    %5340 = vmatpush1.msra.mxu0 0.0
    %5341 = vmatprep.subr.mxu0 0.0
    %5342 = vmatpush1.msra.mxu0 0.0
    %5343 = vmatprep.subr.mxu0 0.0
    %5344 = vmatpush1.msra.mxu0 0.0
    %5345 = vmatprep.subr.mxu0 0.0
    %5346 = vmatpush1.msra.mxu0 0.0
    %5347 = vmatprep.subr.mxu0 0.0
    %5348 = vmatpush1.msra.mxu0 0.0
    %5349 = vmatprep.subr.mxu0 0.0
    %5350 = vmatpush1.msra.mxu0 0.0
    %5351 = vmatprep.subr.mxu0 0.0
    %5352 = vmatpush1.msra.mxu0 0.0
    %5353 = vmatprep.subr.mxu0 0.0
    %5354 = vmatpush1.msra.mxu0 0.0
    %5355 = vmatprep.subr.mxu0 0.0
    %5356 = vmatpush1.msra.mxu0 0.0
    %5357 = vmatprep.subr.mxu0 0.0
    %5358 = vmatpush1.msra.mxu0 0.0
    %5359 = vmatprep.subr.mxu0 0.0
    %5360 = vmatpush1.msra.mxu0 0.0
    %5361 = vmatprep.subr.mxu0 0.0
    %5362 = vmatpush1.msra.mxu0 0.0
    %5363 = vmatprep.subr.mxu0 0.0
    %5364 = vmatpush1.msra.mxu0 0.0
    %5365 = vmatprep.subr.mxu0 0.0
    %5366 = vmatpush1.msra.mxu0 0.0
    %5367 = vmatprep.subr.mxu0 0.0
    %5368 = vmatpush1.msra.mxu0 0.0
    %5369 = vmatprep.subr.mxu0 0.0
    %5370 = vmatpush1.msra.mxu0 0.0
    %5371 = vmatprep.subr.mxu0 0.0
    %5372 = vmatpush1.msra.mxu0 0.0
    %5373 = vmatprep.subr.mxu0 0.0
    %5374 = vmatpush1.msra.mxu0 0.0
    %5375 = vmatprep.subr.mxu0 0.0
    %5376 = vmatpush1.msra.mxu0 0.0
    %5377 = vmatprep.subr.mxu0 0.0
    %5378 = vmatpush1.msra.mxu0 0.0
    %5379 = vmatprep.subr.mxu0 0.0
    %5380 = vmatpush1.msra.mxu0 0.0
    %5381 = vmatprep.subr.mxu0 0.0
    %5382 = vmatpush1.msra.mxu0 0.0
    %5383 = vmatprep.subr.mxu0 0.0
    %5384 = vmatpush1.msra.mxu0 0.0
    %5385 = vmatprep.subr.mxu0 0.0
    %5386 = vmatpush1.msra.mxu0 0.0
    %5387 = vmatprep.subr.mxu0 0.0
    %5388 = vmatpush1.msra.mxu0 0.0
    %5389 = vmatprep.subr.mxu0 0.0
    %5390 = vmatpush1.msra.mxu0 0.0
    %5391 = vmatprep.subr.mxu0 0.0
    %5392 = vmatpush1.msra.mxu0 0.0
    %5393 = vmatprep.subr.mxu0 0.0
    %5394 = vmatpush1.msra.mxu0 0.0
    %5395 = vmatprep.mubr.f32.mxu0 0.0
    %5396 = vmatmul.mubr.f32.gmra.mrb[0].mxu0 %v5329
    %v5397 = vpop.f32.mrb[0].mxu0
    %v5398 = vadd.f32 0.0, %v5397
    %v5399 = vpop.f32.mrb[0].mxu0
    %v5400 = vadd.f32 0.0, %v5399
    %5401 = vdwg.mxu0
    %5402 = vmatprep.subr.mxu0 %v2378
    %5403 = vmatpush1.msra.mxu0 %v2375
    %5404 = vmatprep.subr.mxu0 %v2386
    %5405 = vmatpush1.msra.mxu0 %v2384
    %5406 = vmatprep.subr.mxu0 %v2394
    %5407 = vmatpush1.msra.mxu0 %v2392
    %5408 = vmatprep.subr.mxu0 %v2402
    %5409 = vmatpush1.msra.mxu0 %v2400
    %5410 = vmatprep.subr.mxu0 0.0
    %5411 = vmatpush1.msra.mxu0 0.0
    %5412 = vmatprep.subr.mxu0 0.0
    %5413 = vmatpush1.msra.mxu0 0.0
    %5414 = vmatprep.subr.mxu0 0.0
    %5415 = vmatpush1.msra.mxu0 0.0
    %5416 = vmatprep.subr.mxu0 0.0
    %5417 = vmatpush1.msra.mxu0 0.0
    %5418 = vmatprep.subr.mxu0 0.0
    %5419 = vmatpush1.msra.mxu0 0.0
    %5420 = vmatprep.subr.mxu0 0.0
    %5421 = vmatpush1.msra.mxu0 0.0
    %5422 = vmatprep.subr.mxu0 0.0
    %5423 = vmatpush1.msra.mxu0 0.0
    %5424 = vmatprep.subr.mxu0 0.0
    %5425 = vmatpush1.msra.mxu0 0.0
    %5426 = vmatprep.subr.mxu0 0.0
    %5427 = vmatpush1.msra.mxu0 0.0
    %5428 = vmatprep.subr.mxu0 0.0
    %5429 = vmatpush1.msra.mxu0 0.0
    %5430 = vmatprep.subr.mxu0 0.0
    %5431 = vmatpush1.msra.mxu0 0.0
    %5432 = vmatprep.subr.mxu0 0.0
    %5433 = vmatpush1.msra.mxu0 0.0
    %5434 = vmatprep.subr.mxu0 0.0
    %5435 = vmatpush1.msra.mxu0 0.0
    %5436 = vmatprep.subr.mxu0 0.0
    %5437 = vmatpush1.msra.mxu0 0.0
    %5438 = vmatprep.subr.mxu0 0.0
    %5439 = vmatpush1.msra.mxu0 0.0
    %5440 = vmatprep.subr.mxu0 0.0
    %5441 = vmatpush1.msra.mxu0 0.0
    %5442 = vmatprep.subr.mxu0 0.0
    %5443 = vmatpush1.msra.mxu0 0.0
    %5444 = vmatprep.subr.mxu0 0.0
    %5445 = vmatpush1.msra.mxu0 0.0
    %5446 = vmatprep.subr.mxu0 0.0
    %5447 = vmatpush1.msra.mxu0 0.0
    %5448 = vmatprep.subr.mxu0 0.0
    %5449 = vmatpush1.msra.mxu0 0.0
    %5450 = vmatprep.subr.mxu0 0.0
    %5451 = vmatpush1.msra.mxu0 0.0
    %5452 = vmatprep.subr.mxu0 0.0
    %5453 = vmatpush1.msra.mxu0 0.0
    %5454 = vmatprep.subr.mxu0 0.0
    %5455 = vmatpush1.msra.mxu0 0.0
    %5456 = vmatprep.subr.mxu0 0.0
    %5457 = vmatpush1.msra.mxu0 0.0
    %5458 = vmatprep.subr.mxu0 0.0
    %5459 = vmatpush1.msra.mxu0 0.0
    %5460 = vmatprep.subr.mxu0 0.0
    %5461 = vmatpush1.msra.mxu0 0.0
    %5462 = vmatprep.subr.mxu0 0.0
    %5463 = vmatpush1.msra.mxu0 0.0
    %5464 = vmatprep.subr.mxu0 0.0
    %5465 = vmatpush1.msra.mxu0 0.0
    %5466 = vmatprep.mubr.f32.mxu0 0.0
    %5467 = vmatmul.mubr.f32.gmra.mrb[0].mxu0 %v5329
    %v5468 = vpop.f32.mrb[0].mxu0
    %v5469 = vadd.f32 0.0, %v5468
    %v5470 = vpop.f32.mrb[0].mxu0
    %v5471 = vadd.f32 0.0, %v5470
    %5472 = vdwg.mxu0
    %v5477 = vcombine.low %v5398, %v5400
    %v5478 = vcombine.low %v5469, %v5471
    %v5480 = vunpack.c.l.s4 1983009808
    %v5481 = vunpack.c.0.s8 %v5480
    %v5482 = vlaneseq
    %v5483 = vshrl.u32 %v5482, 7
    %v5484 = vsub.s32 %v5481, %v5483
    %v5485 = vrot.slane %v5477, %v5484
    %v5487 = vunpack.c.l.s4 1983009808
    %v5488 = vunpack.c.0.s8 %v5487
    %v5489 = vlaneseq
    %v5490 = vshrl.u32 %v5489, 7
    %v5491 = vsub.s32 %v5488, %v5490
    %v5492 = vrot.slane %v5478, %v5491
    %v5493 = vcombine.low %v5485, %v5492
    %v5495 = vadd.f32 %v5327, %v5493
    %v5496 = vmul.f32 %v5495, 0.5
    %v5497 = vtanh.pop %v5496
    %v5498 = vadd.f32 %v5497, 1.0
    %v5499 = vmul.f32 %v5498, 0.5
    %v5501 = vrot.slane %v5495, 2
    %v5503 = vmul.f32 %v5501, 0.5
    %v5504 = vtanh.pop %v5503
    %v5505 = vadd.f32 %v5504, 1.0
    %v5506 = vmul.f32 %v5505, 0.5
    %v5507 = vrot.slane %v5495, 4
    %v5509 = vtanh.pop %v5507
    %v5510 = vrot.slane %v5495, 6
    %v5512 = vmul.f32 %v5510, 0.5
    %v5513 = vtanh.pop %v5512
    %v5514 = vadd.f32 %v5513, 1.0
    %v5515 = vmul.f32 %v5514, 0.5
    %v5516 = vmul.f32 %v5506, %v5324
    %v5517 = vmul.f32 %v5499, %v5509
    %v5518 = vadd.f32 %v5516, %v5517
    %v5519 = vtanh.pop %v5518
    %v5520 = vmul.f32 %v5515, %v5519
    %v5521 = vld [vmem:[#allocation6 + $0x120] sm:$0xf0]
    %v5522 = vld [vmem:[#allocation6 + $0x140] sm:$0xff]
    %v5523 = vld [vmem:[#allocation6 + $0x160] sm:$0xff]
    %v5524 = vld [vmem:[#allocation6 + $0x180] sm:$0xff]
    %v5525 = vld [vmem:[#allocation6 + $0x1a0] sm:$0xff]
    %v5526 = vld [vmem:[#allocation6 + $0x1c0] sm:$0xff]
    %v5527 = vld [vmem:[#allocation6 + $0x1e0] sm:$0xff]
    %v5528 = vld [vmem:[#allocation6 + $0x200] sm:$0xff]
    %v5529 = vld [vmem:[#allocation6 + $0x220] sm:$0xf]
    %v5530 = vld [vmem:[#allocation6 + $0x224] ss:$0 sm:$0xff]
    %5532 = vrot.lane.b32.xlu0 %v1730, 32
    %v5533 = vpop.permute.xlu0 %5532
    %v5535 = vsel %vm77, %v5520, %v5533
    %v5545 = vrot.slane %v5521, 4
    %v5546 = vrot.slane %v5522, 4
    %v5547 = vsel %vm1509, %v5545, %v5546
    %v5548 = vrot.slane %v5523, 4
    %v5549 = vsel %vm1509, %v5546, %v5548
    %v5550 = vrot.slane %v5524, 4
    %v5551 = vsel %vm1509, %v5548, %v5550
    %v5552 = vrot.slane %v5525, 4
    %v5553 = vsel %vm1509, %v5550, %v5552
    %v5554 = vrot.slane %v5526, 4
    %v5555 = vsel %vm1509, %v5552, %v5554
    %v5556 = vrot.slane %v5527, 4
    %v5557 = vsel %vm1509, %v5554, %v5556
    %v5558 = vrot.slane %v5528, 4
    %v5559 = vsel %vm1509, %v5556, %v5558
    %v5560 = vrot.slane %v5529, 4
    %v5561 = vsel %vm1509, %v5558, %v5560
    %vm5570 = vcmask 523264
    %v5572 = vsel %vm5570, %v5535, 0
    %5574 = vmatprep.subr.mxu0 0.0
    %5575 = vmatpush1.msra.mxu0 %v5547
    %5576 = vmatprep.subr.mxu0 0.0
    %5577 = vmatpush1.msra.mxu0 %v5549
    %5578 = vmatprep.subr.mxu0 0.0
    %5579 = vmatpush1.msra.mxu0 %v5551
    %5580 = vmatprep.subr.mxu0 0.0
    %5581 = vmatpush1.msra.mxu0 %v5553
    %5582 = vmatprep.subr.mxu0 0.0
    %5583 = vmatpush1.msra.mxu0 %v5555
    %5584 = vmatprep.subr.mxu0 0.0
    %5585 = vmatpush1.msra.mxu0 %v5557
    %5586 = vmatprep.subr.mxu0 0.0
    %5587 = vmatpush1.msra.mxu0 %v5559
    %5588 = vmatprep.subr.mxu0 0.0
    %5589 = vmatpush1.msra.mxu0 %v5561
    %5590 = vmatprep.subr.mxu0 0.0
    %5591 = vmatpush1.msra.mxu0 0.0
    %5592 = vmatprep.subr.mxu0 0.0
    %5593 = vmatpush1.msra.mxu0 0.0
    %5594 = vmatprep.subr.mxu0 0.0
    %5595 = vmatpush1.msra.mxu0 0.0
    %5596 = vmatprep.subr.mxu0 0.0
    %5597 = vmatpush1.msra.mxu0 0.0
    %5598 = vmatprep.subr.mxu0 0.0
    %5599 = vmatpush1.msra.mxu0 0.0
    %5600 = vmatprep.subr.mxu0 0.0
    %5601 = vmatpush1.msra.mxu0 0.0
    %5602 = vmatprep.subr.mxu0 0.0
    %5603 = vmatpush1.msra.mxu0 0.0
    %5604 = vmatprep.subr.mxu0 0.0
    %5605 = vmatpush1.msra.mxu0 0.0
    %5606 = vmatprep.subr.mxu0 0.0
    %5607 = vmatpush1.msra.mxu0 0.0
    %5608 = vmatprep.subr.mxu0 0.0
    %5609 = vmatpush1.msra.mxu0 0.0
    %5610 = vmatprep.subr.mxu0 0.0
    %5611 = vmatpush1.msra.mxu0 0.0
    %5612 = vmatprep.subr.mxu0 0.0
    %5613 = vmatpush1.msra.mxu0 0.0
    %5614 = vmatprep.subr.mxu0 0.0
    %5615 = vmatpush1.msra.mxu0 0.0
    %5616 = vmatprep.subr.mxu0 0.0
    %5617 = vmatpush1.msra.mxu0 0.0
    %5618 = vmatprep.subr.mxu0 0.0
    %5619 = vmatpush1.msra.mxu0 0.0
    %5620 = vmatprep.subr.mxu0 0.0
    %5621 = vmatpush1.msra.mxu0 0.0
    %5622 = vmatprep.subr.mxu0 0.0
    %5623 = vmatpush1.msra.mxu0 0.0
    %5624 = vmatprep.subr.mxu0 0.0
    %5625 = vmatpush1.msra.mxu0 0.0
    %5626 = vmatprep.subr.mxu0 0.0
    %5627 = vmatpush1.msra.mxu0 0.0
    %5628 = vmatprep.subr.mxu0 0.0
    %5629 = vmatpush1.msra.mxu0 0.0
    %5630 = vmatprep.subr.mxu0 0.0
    %5631 = vmatpush1.msra.mxu0 0.0
    %5632 = vmatprep.subr.mxu0 0.0
    %5633 = vmatpush1.msra.mxu0 0.0
    %5634 = vmatprep.subr.mxu0 0.0
    %5635 = vmatpush1.msra.mxu0 0.0
    %5636 = vmatprep.subr.mxu0 0.0
    %5637 = vmatpush1.msra.mxu0 0.0
    %5638 = vmatprep.mubr.f32.mxu0 0.0
    %5639 = vmatmul.mubr.f32.gmra.mrb[0].mxu0 %v5572
    %v5640 = vpop.f32.mrb[0].mxu0
    %v5641 = vadd.f32 %v5530, %v5640
    %v5642 = vpop.f32.mrb[0].mxu0
    %5643 = vdwg.mxu0
    %vm5644 = vcmask 17408
    %5645 = vst.msk [vmem:[#allocation8] sm:$0x3] %vm5644, %v5641
    // Predicated region
    $region22: #{forward.1} parent=1 // pred_check
      _
    $region23: #{forward.1} parent=1 // pred_check_branch
      %5647 = sbr.rel (0) target = $region25
    $region24: #{forward.1} parent=1 // pred_region
      %s5649 = ssub.s32 32, 32
      %5650 = vsyncadd [#allocation5], %s5649
      %s5652 = sshll.u32 [#allocation8], 4
      %s5653 = int_to_ptr.vmem [resolvable:$true] %s5652
      %5655 = dma.vmem_to_hbm [thread:$0]  %s5653, 32, %s3, [#allocation5]
    $region25: #{forward.1} parent=1 // pred_fallthru
      _
    // Predicated region
    $region26: #{forward.1} parent=1 // pred_check
      _
    $region27: #{forward.1} parent=1 // pred_check_branch
      %5657 = sbr.rel (0) target = $region29
    $region28: #{forward.1} parent=1 // pred_region
      %5658 = dma.done [#allocation5], 32
    $region29: #{forward.1} parent=1 // pred_fallthru
      _
    %5659 = vsyncpa [#allocation4], 1
    %5660 = vsyncpa [#allocation7], 1
    %5661 = vsyncpa [#allocation5], 1

</llo_original>
